<compile_context>
chip_gen: v5e
topology: v5e:2x2
jax: 0.10.0
libtpu: 0.0.40
codegen_flags: <defaults>
</compile_context>

<pallas_src>
import functools
import math

import numpy as np
import jax
import jax.numpy as jnp
from jax import lax
from jax.experimental import pallas as pl

_LN_EPS = 1e-5
_INV_SQRT2 = 0.7071067811865476


# ----------------------------- in-kernel helpers -----------------------------
def _layernorm(x, gamma, beta):
    mu = jnp.mean(x, axis=-1, keepdims=True)
    var = jnp.mean((x - mu) ** 2, axis=-1, keepdims=True)
    return (x - mu) * lax.rsqrt(var + _LN_EPS) * gamma + beta


# ----------------------------- fused ViT kernel ------------------------------
def vit_fused_kernel(tok_ref, sg_ref, sbeta_ref, sw_ref, sbias_ref,
                     cls_ref, pos_ref,
                     wqkv_ref, wout_ref, bout_ref,
                     w1_ref, b1_ref, w2_ref, b2_ref,
                     hg_ref, hbeta_ref, hw_ref, hbias_ref,
                     o_ref, *, heads, dim_head, attn_scale):
    B, N, Pd = tok_ref.shape          # token slot 0 is a dummy zero patch (cls slot)
    D = sw_ref.shape[1]
    inner = heads * dim_head
    depth = wqkv_ref.shape[0]

    # ---- SPT patch embedding: LayerNorm(patch_dim) -> Linear(patch_dim, dim) ----
    t = tok_ref[...].reshape(B * N, Pd)
    t = _layernorm(t, sg_ref[...], sbeta_ref[...])
    emb = jnp.dot(t, sw_ref[...], preferred_element_type=jnp.float32) + sbias_ref[...]
    emb3 = emb.reshape(B, N, D)

    # ---- insert cls token at slot 0, add positional embedding ----
    is_cls = lax.broadcasted_iota(jnp.int32, (1, N, 1), 1) == 0
    cls3 = cls_ref[...].reshape(1, 1, D)
    x3 = jnp.where(is_cls, cls3, emb3) + pos_ref[...].reshape(1, N, D)
    x = x3.reshape(B * N, D)                                   # (B*N, D), resident

    # diagonal mask (shared across layers/heads)
    row = lax.broadcasted_iota(jnp.int32, (N, N), 0)
    col = lax.broadcasted_iota(jnp.int32, (N, N), 1)
    diag = (row == col).reshape(1, N, N)
    neg_max = jnp.float32(-np.finfo(np.float32).max)
    scale = jnp.float32(attn_scale)                            # == temperature.exp()

    for l in range(depth):
        # ---------------- LSA attention ----------------
        qkv = jnp.dot(x, wqkv_ref[l], preferred_element_type=jnp.float32)  # (B*N, 3*inner)
        qkv3 = qkv.reshape(B, N, 3 * inner)
        wout_l = wout_ref[l]                                               # (inner, D)
        attn_proj = jnp.zeros((B * N, D), jnp.float32)
        for h in range(heads):
            c = h * dim_head
            qh = qkv3[:, :, c:c + dim_head]                                # (B, N, dh)
            kh = qkv3[:, :, inner + c:inner + c + dim_head]
            vh = qkv3[:, :, 2 * inner + c:2 * inner + c + dim_head]
            dots = jnp.einsum('bnd,bmd->bnm', qh, kh,
                              preferred_element_type=jnp.float32) * scale
            dots = jnp.where(diag, neg_max, dots)              # mask self-attention diag
            m = jnp.max(dots, axis=-1, keepdims=True)
            e = jnp.exp(dots - m)
            p = e * pl.reciprocal(jnp.sum(e, axis=-1, keepdims=True), approx=True)
            oh = jnp.einsum('bnm,bmd->bnd', p, vh,
                            preferred_element_type=jnp.float32)            # (B, N, dh)
            # fold head output straight into the output projection (no concat)
            attn_proj = attn_proj + jnp.dot(
                oh.reshape(B * N, dim_head), wout_l[c:c + dim_head, :],
                preferred_element_type=jnp.float32)
        x = x + attn_proj + bout_ref[l]                                    # attn residual

        # ---------------- FeedForward ----------------
        h1 = jnp.dot(x, w1_ref[l], preferred_element_type=jnp.float32) + b1_ref[l]
        g = 0.5 * h1 * (1.0 + lax.erf(h1 * jnp.float32(_INV_SQRT2)))       # exact GELU
        x = x + jnp.dot(g, w2_ref[l], preferred_element_type=jnp.float32) + b2_ref[l]

    # ---------------- pool='cls' -> LayerNorm -> head linear ----------------
    cls_out = x.reshape(B, N, D)[:, 0:1, :].reshape(B, D)
    cls_out = _layernorm(cls_out, hg_ref[...], hbeta_ref[...])
    o_ref[...] = (jnp.dot(cls_out, hw_ref[...], preferred_element_type=jnp.float32)
                  + hbias_ref[...])


# ----------------------------- JAX glue --------------------------------------
def spt_tokens(img, patch_size):
    """Shifted-patch tokenization: 4 shifted copies, concat channels, patchify."""
    B, C, H, W = img.shape
    sr = jnp.pad(img, ((0, 0), (0, 0), (0, 0), (1, 0)))[:, :, :, :W]   # F.pad (1,-1,0,0)
    sl = jnp.pad(img, ((0, 0), (0, 0), (0, 0), (0, 1)))[:, :, :, 1:]   # F.pad (-1,1,0,0)
    sd = jnp.pad(img, ((0, 0), (0, 0), (1, 0), (0, 0)))[:, :, :H, :]   # F.pad (0,0,1,-1)
    su = jnp.pad(img, ((0, 0), (0, 0), (0, 1), (0, 0)))[:, :, 1:, :]   # F.pad (0,0,-1,1)
    x5 = jnp.concatenate([img, sr, sl, sd, su], axis=1)                # (B, 5C, H, W)
    C5 = 5 * C
    hg, wg = H // patch_size, W // patch_size
    tok = x5.reshape(B, C5, hg, patch_size, wg, patch_size)
    tok = tok.transpose(0, 2, 4, 3, 5, 1)                              # b h w p1 p2 c
    return tok.reshape(B, hg * wg, patch_size * patch_size * C5)


def sn_effective_weight(w):
    """SNLinear effective weight: (W / sigma_power_iter) * sigma_param (sigma_param = s[0] at init)."""
    wd = np.asarray(w, dtype=np.float64)
    _, s, vh = np.linalg.svd(wd, full_matrices=False)
    u = vh[0]
    sigma_param = s[0]
    v = wd @ u
    v = v / max(np.linalg.norm(v), 1e-12)
    u2 = wd.T @ v
    u2 = u2 / max(np.linalg.norm(u2), 1e-12)
    sigma_pi = float(v @ (wd @ u2))
    return jnp.asarray(wd / sigma_pi * sigma_param, dtype=jnp.float32)


def init_params(key, cfg):
    dim, heads, dh = cfg["dim"], cfg["heads"], cfg["dim_head"]
    inner = heads * dh
    p, C = cfg["patch_size"], cfg["channels"]
    patch_dim = p * p * 5 * C
    num_patches = (cfg["image_size"] // p) ** 2
    mlp, nc = cfg["mlp_dim"], cfg["num_classes"]

    keys = iter(jax.random.split(key, 8 + cfg["depth"] * 8))

    def lin_init(k, out_f, in_f):
        bound = 1.0 / math.sqrt(in_f)
        kw, kb = jax.random.split(k)
        w = jax.random.uniform(kw, (out_f, in_f), jnp.float32, -bound, bound)
        b = jax.random.uniform(kb, (1, out_f), jnp.float32, -bound, bound)
        return w, b

    params = {}
    params["spt_ln_g"] = jnp.ones((1, patch_dim), jnp.float32)
    params["spt_ln_b"] = jnp.zeros((1, patch_dim), jnp.float32)
    sw, sb = lin_init(next(keys), dim, patch_dim)
    params["spt_w_t"] = sw.T                                   # (patch_dim, dim)
    params["spt_b"] = sb                                       # (1, dim)

    params["cls_token"] = jax.random.normal(next(keys), (1, dim), jnp.float32)
    params["pos_embedding"] = jax.random.normal(next(keys), (num_patches + 1, dim),
                                                jnp.float32)

    wqkv_l, wout_l, bout_l, w1_l, b1_l, w2_l, b2_l = [], [], [], [], [], [], []
    for _ in range(cfg["depth"]):
        wqkv = sn_effective_weight(0.02 * jax.random.normal(next(keys), (3 * inner, dim),
                                                            jnp.float32))
        wout = sn_effective_weight(0.02 * jax.random.normal(next(keys), (dim, inner),
                                                            jnp.float32))
        bnd = 1.0 / math.sqrt(inner)
        bout = jax.random.uniform(next(keys), (1, dim), jnp.float32, -bnd, bnd)
        w1, b1 = lin_init(next(keys), mlp, dim)
        w2, b2 = lin_init(next(keys), dim, mlp)
        wqkv_l.append(wqkv.T)        # (dim, 3*inner)
        wout_l.append(wout.T)        # (inner, dim)
        bout_l.append(bout)
        w1_l.append(w1.T)            # (dim, mlp)
        b1_l.append(b1)
        w2_l.append(w2.T)            # (mlp, dim)
        b2_l.append(b2)
    params["wqkv_t"] = jnp.stack(wqkv_l)   # (depth, dim, 3*inner)
    params["wout_t"] = jnp.stack(wout_l)   # (depth, inner, dim)
    params["bout"] = jnp.stack(bout_l)     # (depth, 1, dim)
    params["w1_t"] = jnp.stack(w1_l)       # (depth, dim, mlp)
    params["b1"] = jnp.stack(b1_l)         # (depth, 1, mlp)
    params["w2_t"] = jnp.stack(w2_l)       # (depth, mlp, dim)
    params["b2"] = jnp.stack(b2_l)         # (depth, 1, dim)

    params["head_ln_g"] = jnp.ones((1, dim), jnp.float32)
    params["head_ln_b"] = jnp.zeros((1, dim), jnp.float32)
    hw, hb = lin_init(next(keys), nc, dim)
    params["head_w_t"] = hw.T              # (dim, num_classes)
    params["head_b"] = hb                  # (1, num_classes)
    return params


def vit_forward(img, params, cfg):
    B = img.shape[0]
    nc = cfg["num_classes"]
    tok = spt_tokens(img, cfg["patch_size"])                  # (B, Np, Pd)
    # reserve token slot 0 (the cls slot) with a dummy zero patch so the kernel can
    # process all N = Np+1 rows uniformly and select the cls parameter with jnp.where
    tok = jnp.pad(tok, ((0, 0), (1, 0), (0, 0)))              # (B, Np+1, Pd)

    kernel = functools.partial(
        vit_fused_kernel,
        heads=cfg["heads"],
        dim_head=cfg["dim_head"],
        attn_scale=float(cfg["dim_head"] ** -0.5))            # == exp(temperature) at init

    # TODO(synk): at larger model sizes, add bf16 MXU inputs (f32 stats) and a
    # parallel batch grid axis to split across the two v7x TensorCores.
    return pl.pallas_call(
        kernel,
        out_shape=jax.ShapeDtypeStruct((B, nc), jnp.float32),
    )(tok,
      params["spt_ln_g"], params["spt_ln_b"], params["spt_w_t"], params["spt_b"],
      params["cls_token"], params["pos_embedding"],
      params["wqkv_t"], params["wout_t"], params["bout"],
      params["w1_t"], params["b1"], params["w2_t"], params["b2"],
      params["head_ln_g"], params["head_ln_b"], params["head_w_t"], params["head_b"])


if __name__ == "__main__":
    cfg = dict(image_size=16, patch_size=4, num_classes=10, dim=32,
               depth=2, heads=4, dim_head=8, mlp_dim=64, channels=3)
    key = jax.random.PRNGKey(0)
    k_img, k_par = jax.random.split(key)
    img = jax.random.normal(k_img, (2, cfg["channels"], cfg["image_size"],
                                    cfg["image_size"]), jnp.float32)
    params = init_params(k_par, cfg)

    @jax.jit
    def fwd(im, p):
        return vit_forward(im, p, cfg)

    logits = fwd(img, params)
    jax.block_until_ready(logits)
    assert logits.shape == (2, cfg["num_classes"])
    assert bool(jnp.all(jnp.isfinite(logits)))
    print("KERNEL_OK")
</pallas_src>

<mosaic_0001>
module attributes {stable_mosaic.version = 11 : i64} {
  func.func @vit_fused_kernel(%arg0: memref<2x17x240xf32, #tpu.memory_space<vmem>>, %arg1: memref<1x240xf32, #tpu.memory_space<vmem>>, %arg2: memref<1x240xf32, #tpu.memory_space<vmem>>, %arg3: memref<240x32xf32, #tpu.memory_space<vmem>>, %arg4: memref<1x32xf32, #tpu.memory_space<vmem>>, %arg5: memref<1x32xf32, #tpu.memory_space<vmem>>, %arg6: memref<17x32xf32, #tpu.memory_space<vmem>>, %arg7: memref<2x32x96xf32, #tpu.memory_space<vmem>>, %arg8: memref<2x32x32xf32, #tpu.memory_space<vmem>>, %arg9: memref<2x1x32xf32, #tpu.memory_space<vmem>>, %arg10: memref<2x32x64xf32, #tpu.memory_space<vmem>>, %arg11: memref<2x1x64xf32, #tpu.memory_space<vmem>>, %arg12: memref<2x64x32xf32, #tpu.memory_space<vmem>>, %arg13: memref<2x1x32xf32, #tpu.memory_space<vmem>>, %arg14: memref<1x32xf32, #tpu.memory_space<vmem>>, %arg15: memref<1x32xf32, #tpu.memory_space<vmem>>, %arg16: memref<32x10xf32, #tpu.memory_space<vmem>>, %arg17: memref<1x10xf32, #tpu.memory_space<vmem>>, %arg18: memref<2x10xf32, #tpu.memory_space<vmem>>) attributes {dimension_semantics = [], scalar_prefetch = 0 : i64, scratch_operands = 0 : i64, tpu.core_type = #tpu.core_type<tc>} {
    %c0 = arith.constant 0 : index
    %c0_0 = arith.constant 0 : index
    %c0_1 = arith.constant 0 : index
    %0 = vector.load %arg0[%c0, %c0_0, %c0_1] : memref<2x17x240xf32, #tpu.memory_space<vmem>>, vector<2x17x240xf32>
    %1 = vector.shape_cast %0 : vector<2x17x240xf32> to vector<34x240xf32>
    %c0_2 = arith.constant 0 : index
    %c0_3 = arith.constant 0 : index
    %2 = vector.load %arg1[%c0_2, %c0_3] : memref<1x240xf32, #tpu.memory_space<vmem>>, vector<1x240xf32>
    %c0_4 = arith.constant 0 : index
    %c0_5 = arith.constant 0 : index
    %3 = vector.load %arg2[%c0_4, %c0_5] : memref<1x240xf32, #tpu.memory_space<vmem>>, vector<1x240xf32>
    %cst = arith.constant dense<0.000000e+00> : vector<34xf32>
    %4 = vector.multi_reduction <add>, %1, %cst [1] : vector<34x240xf32> to vector<34xf32>
    %5 = vector.shape_cast %4 : vector<34xf32> to vector<34x1xf32>
    %cst_6 = arith.constant 2.400000e+02 : f32
    %6 = vector.broadcast %cst_6 : f32 to vector<34x1xf32>
    %7 = arith.divf %5, %6 : vector<34x1xf32>
    %8 = vector.broadcast %7 : vector<34x1xf32> to vector<34x240xf32>
    %9 = arith.subf %1, %8 : vector<34x240xf32>
    %10 = arith.mulf %9, %9 : vector<34x240xf32>
    %cst_7 = arith.constant dense<0.000000e+00> : vector<34xf32>
    %11 = vector.multi_reduction <add>, %10, %cst_7 [1] : vector<34x240xf32> to vector<34xf32>
    %12 = vector.shape_cast %11 : vector<34xf32> to vector<34x1xf32>
    %cst_8 = arith.constant 2.400000e+02 : f32
    %13 = vector.broadcast %cst_8 : f32 to vector<34x1xf32>
    %14 = arith.divf %12, %13 : vector<34x1xf32>
    %15 = vector.broadcast %7 : vector<34x1xf32> to vector<34x240xf32>
    %16 = arith.subf %1, %15 : vector<34x240xf32>
    %cst_9 = arith.constant 9.99999974E-6 : f32
    %17 = vector.broadcast %cst_9 : f32 to vector<34x1xf32>
    %18 = arith.addf %14, %17 : vector<34x1xf32>
    %19 = math.rsqrt %18 : vector<34x1xf32>
    %20 = vector.broadcast %19 : vector<34x1xf32> to vector<34x240xf32>
    %21 = arith.mulf %16, %20 : vector<34x240xf32>
    %22 = vector.broadcast %2 : vector<1x240xf32> to vector<34x240xf32>
    %23 = arith.mulf %21, %22 : vector<34x240xf32>
    %24 = vector.broadcast %3 : vector<1x240xf32> to vector<34x240xf32>
    %25 = arith.addf %23, %24 : vector<34x240xf32>
    %c0_10 = arith.constant 0 : index
    %c0_11 = arith.constant 0 : index
    %26 = vector.load %arg3[%c0_10, %c0_11] : memref<240x32xf32, #tpu.memory_space<vmem>>, vector<240x32xf32>
    %cst_12 = arith.constant dense<0.000000e+00> : vector<34x32xf32>
    %27 = tpu.matmul %25, %26, %cst_12 {dimension_numbers = #tpu.dot_dimension_numbers<[1], [0], [0], [1], [0, 0, 1, 1], [], []>} : vector<34x240xf32>, vector<240x32xf32>, vector<34x32xf32> -> vector<34x32xf32>
    %c0_13 = arith.constant 0 : index
    %c0_14 = arith.constant 0 : index
    %28 = vector.load %arg4[%c0_13, %c0_14] : memref<1x32xf32, #tpu.memory_space<vmem>>, vector<1x32xf32>
    %29 = vector.broadcast %28 : vector<1x32xf32> to vector<34x32xf32>
    %30 = arith.addf %27, %29 : vector<34x32xf32>
    %31 = vector.shape_cast %30 : vector<34x32xf32> to vector<2x17x32xf32>
    %32 = tpu.iota {dimensions = array<i32: 1>} : vector<1x17x1xi32>
    %c0_i32 = arith.constant 0 : i32
    %33 = vector.broadcast %c0_i32 : i32 to vector<1x17x1xi32>
    %34 = arith.cmpi eq, %32, %33 : vector<1x17x1xi32>
    %c0_15 = arith.constant 0 : index
    %c0_16 = arith.constant 0 : index
    %35 = vector.load %arg5[%c0_15, %c0_16] : memref<1x32xf32, #tpu.memory_space<vmem>>, vector<1x32xf32>
    %36 = vector.shape_cast %35 : vector<1x32xf32> to vector<1x1x32xf32>
    %37 = vector.shape_cast %34 : vector<1x17x1xi1> to vector<1x17x1xi1>
    %38 = vector.broadcast %37 : vector<1x17x1xi1> to vector<2x17x32xi1>
    %39 = vector.shape_cast %36 : vector<1x1x32xf32> to vector<1x1x32xf32>
    %40 = vector.broadcast %39 : vector<1x1x32xf32> to vector<2x17x32xf32>
    %41 = arith.select %38, %40, %31 : vector<2x17x32xi1>, vector<2x17x32xf32>
    %c0_17 = arith.constant 0 : index
    %c0_18 = arith.constant 0 : index
    %42 = vector.load %arg6[%c0_17, %c0_18] : memref<17x32xf32, #tpu.memory_space<vmem>>, vector<17x32xf32>
    %43 = vector.shape_cast %42 : vector<17x32xf32> to vector<1x17x32xf32>
    %44 = vector.broadcast %43 : vector<1x17x32xf32> to vector<2x17x32xf32>
    %45 = arith.addf %41, %44 : vector<2x17x32xf32>
    %46 = vector.shape_cast %45 : vector<2x17x32xf32> to vector<34x32xf32>
    %47 = tpu.iota {dimensions = array<i32: 0>} : vector<17x17xi32>
    %48 = tpu.iota {dimensions = array<i32: 1>} : vector<17x17xi32>
    %49 = arith.cmpi eq, %47, %48 : vector<17x17xi32>
    %50 = vector.shape_cast %49 : vector<17x17xi1> to vector<1x17x17xi1>
    %c0_19 = arith.constant 0 : index
    %c0_20 = arith.constant 0 : index
    %c0_21 = arith.constant 0 : index
    %51 = vector.load %arg7[%c0_19, %c0_20, %c0_21] : memref<2x32x96xf32, #tpu.memory_space<vmem>>, vector<1x32x96xf32>
    %52 = vector.shape_cast %51 : vector<1x32x96xf32> to vector<32x96xf32>
    %cst_22 = arith.constant dense<0.000000e+00> : vector<34x96xf32>
    %53 = tpu.matmul %46, %52, %cst_22 {dimension_numbers = #tpu.dot_dimension_numbers<[1], [0], [0], [1], [0, 0, 1, 1], [], []>} : vector<34x32xf32>, vector<32x96xf32>, vector<34x96xf32> -> vector<34x96xf32>
    %54 = vector.shape_cast %53 : vector<34x96xf32> to vector<2x17x96xf32>
    %c0_23 = arith.constant 0 : index
    %c0_24 = arith.constant 0 : index
    %c0_25 = arith.constant 0 : index
    %55 = vector.load %arg8[%c0_23, %c0_24, %c0_25] : memref<2x32x32xf32, #tpu.memory_space<vmem>>, vector<1x32x32xf32>
    %56 = vector.shape_cast %55 : vector<1x32x32xf32> to vector<32x32xf32>
    %cst_26 = arith.constant 0.000000e+00 : f32
    %57 = vector.broadcast %cst_26 : f32 to vector<34x32xf32>
    %58 = vector.extract_strided_slice %54 {offsets = [0, 0, 0], sizes = [2, 17, 8], strides = [1, 1, 1]} : vector<2x17x96xf32> to vector<2x17x8xf32>
    %59 = vector.extract_strided_slice %54 {offsets = [0, 0, 32], sizes = [2, 17, 8], strides = [1, 1, 1]} : vector<2x17x96xf32> to vector<2x17x8xf32>
    %60 = vector.extract_strided_slice %54 {offsets = [0, 0, 64], sizes = [2, 17, 8], strides = [1, 1, 1]} : vector<2x17x96xf32> to vector<2x17x8xf32>
    "tpu.trace_start"() <{level = 10 : i32, message = "bnd,bmd->bnm"}> : () -> ()
    %cst_27 = arith.constant dense<0.000000e+00> : vector<2x17x17xf32>
    %61 = tpu.matmul %58, %59, %cst_27 {dimension_numbers = #tpu.dot_dimension_numbers<[2], [2], [1], [1], [0, 0, 0, 1, 1, 1], [0], [0]>} : vector<2x17x8xf32>, vector<2x17x8xf32>, vector<2x17x17xf32> -> vector<2x17x17xf32>
    "tpu.trace_stop"() : () -> ()
    %cst_28 = arith.constant 0.353553385 : f32
    %62 = vector.broadcast %cst_28 : f32 to vector<2x17x17xf32>
    %63 = arith.mulf %61, %62 : vector<2x17x17xf32>
    %cst_29 = arith.constant -3.40282347E+38 : f32
    %64 = vector.shape_cast %50 : vector<1x17x17xi1> to vector<1x17x17xi1>
    %65 = vector.broadcast %64 : vector<1x17x17xi1> to vector<2x17x17xi1>
    %66 = vector.broadcast %cst_29 : f32 to vector<2x17x17xf32>
    %67 = arith.select %65, %66, %63 : vector<2x17x17xi1>, vector<2x17x17xf32>
    %cst_30 = arith.constant dense<0xFF800000> : vector<2x17xf32>
    %68 = vector.multi_reduction <maximumf>, %67, %cst_30 [2] : vector<2x17x17xf32> to vector<2x17xf32>
    %69 = vector.shape_cast %68 : vector<2x17xf32> to vector<2x17x1xf32>
    %70 = vector.broadcast %69 : vector<2x17x1xf32> to vector<2x17x17xf32>
    %71 = arith.subf %67, %70 : vector<2x17x17xf32>
    %72 = math.exp %71 : vector<2x17x17xf32>
    %cst_31 = arith.constant dense<0.000000e+00> : vector<2x17xf32>
    %73 = vector.multi_reduction <add>, %72, %cst_31 [2] : vector<2x17x17xf32> to vector<2x17xf32>
    %74 = vector.shape_cast %73 : vector<2x17xf32> to vector<2x17x1xf32>
    %75 = tpu.reciprocal %74 {approx = true} : vector<2x17x1xf32> -> vector<2x17x1xf32>
    %76 = vector.broadcast %75 : vector<2x17x1xf32> to vector<2x17x17xf32>
    %77 = arith.mulf %72, %76 : vector<2x17x17xf32>
    "tpu.trace_start"() <{level = 10 : i32, message = "bnm,bmd->bnd"}> : () -> ()
    %cst_32 = arith.constant dense<0.000000e+00> : vector<2x17x8xf32>
    %78 = tpu.matmul %77, %60, %cst_32 {dimension_numbers = #tpu.dot_dimension_numbers<[2], [1], [1], [2], [0, 0, 0, 1, 1, 2], [0], [0]>} : vector<2x17x17xf32>, vector<2x17x8xf32>, vector<2x17x8xf32> -> vector<2x17x8xf32>
    "tpu.trace_stop"() : () -> ()
    %79 = vector.shape_cast %78 : vector<2x17x8xf32> to vector<34x8xf32>
    %80 = vector.extract_strided_slice %56 {offsets = [0, 0], sizes = [8, 32], strides = [1, 1]} : vector<32x32xf32> to vector<8x32xf32>
    %cst_33 = arith.constant dense<0.000000e+00> : vector<34x32xf32>
    %81 = tpu.matmul %79, %80, %cst_33 {dimension_numbers = #tpu.dot_dimension_numbers<[1], [0], [0], [1], [0, 0, 1, 1], [], []>} : vector<34x8xf32>, vector<8x32xf32>, vector<34x32xf32> -> vector<34x32xf32>
    %82 = arith.addf %57, %81 : vector<34x32xf32>
    %83 = vector.extract_strided_slice %54 {offsets = [0, 0, 8], sizes = [2, 17, 8], strides = [1, 1, 1]} : vector<2x17x96xf32> to vector<2x17x8xf32>
    %84 = vector.extract_strided_slice %54 {offsets = [0, 0, 40], sizes = [2, 17, 8], strides = [1, 1, 1]} : vector<2x17x96xf32> to vector<2x17x8xf32>
    %85 = vector.extract_strided_slice %54 {offsets = [0, 0, 72], sizes = [2, 17, 8], strides = [1, 1, 1]} : vector<2x17x96xf32> to vector<2x17x8xf32>
    "tpu.trace_start"() <{level = 10 : i32, message = "bnd,bmd->bnm"}> : () -> ()
    %cst_34 = arith.constant dense<0.000000e+00> : vector<2x17x17xf32>
    %86 = tpu.matmul %83, %84, %cst_34 {dimension_numbers = #tpu.dot_dimension_numbers<[2], [2], [1], [1], [0, 0, 0, 1, 1, 1], [0], [0]>} : vector<2x17x8xf32>, vector<2x17x8xf32>, vector<2x17x17xf32> -> vector<2x17x17xf32>
    "tpu.trace_stop"() : () -> ()
    %cst_35 = arith.constant 0.353553385 : f32
    %87 = vector.broadcast %cst_35 : f32 to vector<2x17x17xf32>
    %88 = arith.mulf %86, %87 : vector<2x17x17xf32>
    %cst_36 = arith.constant -3.40282347E+38 : f32
    %89 = vector.shape_cast %50 : vector<1x17x17xi1> to vector<1x17x17xi1>
    %90 = vector.broadcast %89 : vector<1x17x17xi1> to vector<2x17x17xi1>
    %91 = vector.broadcast %cst_36 : f32 to vector<2x17x17xf32>
    %92 = arith.select %90, %91, %88 : vector<2x17x17xi1>, vector<2x17x17xf32>
    %cst_37 = arith.constant dense<0xFF800000> : vector<2x17xf32>
    %93 = vector.multi_reduction <maximumf>, %92, %cst_37 [2] : vector<2x17x17xf32> to vector<2x17xf32>
    %94 = vector.shape_cast %93 : vector<2x17xf32> to vector<2x17x1xf32>
    %95 = vector.broadcast %94 : vector<2x17x1xf32> to vector<2x17x17xf32>
    %96 = arith.subf %92, %95 : vector<2x17x17xf32>
    %97 = math.exp %96 : vector<2x17x17xf32>
    %cst_38 = arith.constant dense<0.000000e+00> : vector<2x17xf32>
    %98 = vector.multi_reduction <add>, %97, %cst_38 [2] : vector<2x17x17xf32> to vector<2x17xf32>
    %99 = vector.shape_cast %98 : vector<2x17xf32> to vector<2x17x1xf32>
    %100 = tpu.reciprocal %99 {approx = true} : vector<2x17x1xf32> -> vector<2x17x1xf32>
    %101 = vector.broadcast %100 : vector<2x17x1xf32> to vector<2x17x17xf32>
    %102 = arith.mulf %97, %101 : vector<2x17x17xf32>
    "tpu.trace_start"() <{level = 10 : i32, message = "bnm,bmd->bnd"}> : () -> ()
    %cst_39 = arith.constant dense<0.000000e+00> : vector<2x17x8xf32>
    %103 = tpu.matmul %102, %85, %cst_39 {dimension_numbers = #tpu.dot_dimension_numbers<[2], [1], [1], [2], [0, 0, 0, 1, 1, 2], [0], [0]>} : vector<2x17x17xf32>, vector<2x17x8xf32>, vector<2x17x8xf32> -> vector<2x17x8xf32>
    "tpu.trace_stop"() : () -> ()
    %104 = vector.shape_cast %103 : vector<2x17x8xf32> to vector<34x8xf32>
    %105 = vector.extract_strided_slice %56 {offsets = [8, 0], sizes = [8, 32], strides = [1, 1]} : vector<32x32xf32> to vector<8x32xf32>
    %cst_40 = arith.constant dense<0.000000e+00> : vector<34x32xf32>
    %106 = tpu.matmul %104, %105, %cst_40 {dimension_numbers = #tpu.dot_dimension_numbers<[1], [0], [0], [1], [0, 0, 1, 1], [], []>} : vector<34x8xf32>, vector<8x32xf32>, vector<34x32xf32> -> vector<34x32xf32>
    %107 = arith.addf %82, %106 : vector<34x32xf32>
    %108 = vector.extract_strided_slice %54 {offsets = [0, 0, 16], sizes = [2, 17, 8], strides = [1, 1, 1]} : vector<2x17x96xf32> to vector<2x17x8xf32>
    %109 = vector.extract_strided_slice %54 {offsets = [0, 0, 48], sizes = [2, 17, 8], strides = [1, 1, 1]} : vector<2x17x96xf32> to vector<2x17x8xf32>
    %110 = vector.extract_strided_slice %54 {offsets = [0, 0, 80], sizes = [2, 17, 8], strides = [1, 1, 1]} : vector<2x17x96xf32> to vector<2x17x8xf32>
    "tpu.trace_start"() <{level = 10 : i32, message = "bnd,bmd->bnm"}> : () -> ()
    %cst_41 = arith.constant dense<0.000000e+00> : vector<2x17x17xf32>
    %111 = tpu.matmul %108, %109, %cst_41 {dimension_numbers = #tpu.dot_dimension_numbers<[2], [2], [1], [1], [0, 0, 0, 1, 1, 1], [0], [0]>} : vector<2x17x8xf32>, vector<2x17x8xf32>, vector<2x17x17xf32> -> vector<2x17x17xf32>
    "tpu.trace_stop"() : () -> ()
    %cst_42 = arith.constant 0.353553385 : f32
    %112 = vector.broadcast %cst_42 : f32 to vector<2x17x17xf32>
    %113 = arith.mulf %111, %112 : vector<2x17x17xf32>
    %cst_43 = arith.constant -3.40282347E+38 : f32
    %114 = vector.shape_cast %50 : vector<1x17x17xi1> to vector<1x17x17xi1>
    %115 = vector.broadcast %114 : vector<1x17x17xi1> to vector<2x17x17xi1>
    %116 = vector.broadcast %cst_43 : f32 to vector<2x17x17xf32>
    %117 = arith.select %115, %116, %113 : vector<2x17x17xi1>, vector<2x17x17xf32>
    %cst_44 = arith.constant dense<0xFF800000> : vector<2x17xf32>
    %118 = vector.multi_reduction <maximumf>, %117, %cst_44 [2] : vector<2x17x17xf32> to vector<2x17xf32>
    %119 = vector.shape_cast %118 : vector<2x17xf32> to vector<2x17x1xf32>
    %120 = vector.broadcast %119 : vector<2x17x1xf32> to vector<2x17x17xf32>
    %121 = arith.subf %117, %120 : vector<2x17x17xf32>
    %122 = math.exp %121 : vector<2x17x17xf32>
    %cst_45 = arith.constant dense<0.000000e+00> : vector<2x17xf32>
    %123 = vector.multi_reduction <add>, %122, %cst_45 [2] : vector<2x17x17xf32> to vector<2x17xf32>
    %124 = vector.shape_cast %123 : vector<2x17xf32> to vector<2x17x1xf32>
    %125 = tpu.reciprocal %124 {approx = true} : vector<2x17x1xf32> -> vector<2x17x1xf32>
    %126 = vector.broadcast %125 : vector<2x17x1xf32> to vector<2x17x17xf32>
    %127 = arith.mulf %122, %126 : vector<2x17x17xf32>
    "tpu.trace_start"() <{level = 10 : i32, message = "bnm,bmd->bnd"}> : () -> ()
    %cst_46 = arith.constant dense<0.000000e+00> : vector<2x17x8xf32>
    %128 = tpu.matmul %127, %110, %cst_46 {dimension_numbers = #tpu.dot_dimension_numbers<[2], [1], [1], [2], [0, 0, 0, 1, 1, 2], [0], [0]>} : vector<2x17x17xf32>, vector<2x17x8xf32>, vector<2x17x8xf32> -> vector<2x17x8xf32>
    "tpu.trace_stop"() : () -> ()
    %129 = vector.shape_cast %128 : vector<2x17x8xf32> to vector<34x8xf32>
    %130 = vector.extract_strided_slice %56 {offsets = [16, 0], sizes = [8, 32], strides = [1, 1]} : vector<32x32xf32> to vector<8x32xf32>
    %cst_47 = arith.constant dense<0.000000e+00> : vector<34x32xf32>
    %131 = tpu.matmul %129, %130, %cst_47 {dimension_numbers = #tpu.dot_dimension_numbers<[1], [0], [0], [1], [0, 0, 1, 1], [], []>} : vector<34x8xf32>, vector<8x32xf32>, vector<34x32xf32> -> vector<34x32xf32>
    %132 = arith.addf %107, %131 : vector<34x32xf32>
    %133 = vector.extract_strided_slice %54 {offsets = [0, 0, 24], sizes = [2, 17, 8], strides = [1, 1, 1]} : vector<2x17x96xf32> to vector<2x17x8xf32>
    %134 = vector.extract_strided_slice %54 {offsets = [0, 0, 56], sizes = [2, 17, 8], strides = [1, 1, 1]} : vector<2x17x96xf32> to vector<2x17x8xf32>
    %135 = vector.extract_strided_slice %54 {offsets = [0, 0, 88], sizes = [2, 17, 8], strides = [1, 1, 1]} : vector<2x17x96xf32> to vector<2x17x8xf32>
    "tpu.trace_start"() <{level = 10 : i32, message = "bnd,bmd->bnm"}> : () -> ()
    %cst_48 = arith.constant dense<0.000000e+00> : vector<2x17x17xf32>
    %136 = tpu.matmul %133, %134, %cst_48 {dimension_numbers = #tpu.dot_dimension_numbers<[2], [2], [1], [1], [0, 0, 0, 1, 1, 1], [0], [0]>} : vector<2x17x8xf32>, vector<2x17x8xf32>, vector<2x17x17xf32> -> vector<2x17x17xf32>
    "tpu.trace_stop"() : () -> ()
    %cst_49 = arith.constant 0.353553385 : f32
    %137 = vector.broadcast %cst_49 : f32 to vector<2x17x17xf32>
    %138 = arith.mulf %136, %137 : vector<2x17x17xf32>
    %cst_50 = arith.constant -3.40282347E+38 : f32
    %139 = vector.shape_cast %50 : vector<1x17x17xi1> to vector<1x17x17xi1>
    %140 = vector.broadcast %139 : vector<1x17x17xi1> to vector<2x17x17xi1>
    %141 = vector.broadcast %cst_50 : f32 to vector<2x17x17xf32>
    %142 = arith.select %140, %141, %138 : vector<2x17x17xi1>, vector<2x17x17xf32>
    %cst_51 = arith.constant dense<0xFF800000> : vector<2x17xf32>
    %143 = vector.multi_reduction <maximumf>, %142, %cst_51 [2] : vector<2x17x17xf32> to vector<2x17xf32>
    %144 = vector.shape_cast %143 : vector<2x17xf32> to vector<2x17x1xf32>
    %145 = vector.broadcast %144 : vector<2x17x1xf32> to vector<2x17x17xf32>
    %146 = arith.subf %142, %145 : vector<2x17x17xf32>
    %147 = math.exp %146 : vector<2x17x17xf32>
    %cst_52 = arith.constant dense<0.000000e+00> : vector<2x17xf32>
    %148 = vector.multi_reduction <add>, %147, %cst_52 [2] : vector<2x17x17xf32> to vector<2x17xf32>
    %149 = vector.shape_cast %148 : vector<2x17xf32> to vector<2x17x1xf32>
    %150 = tpu.reciprocal %149 {approx = true} : vector<2x17x1xf32> -> vector<2x17x1xf32>
    %151 = vector.broadcast %150 : vector<2x17x1xf32> to vector<2x17x17xf32>
    %152 = arith.mulf %147, %151 : vector<2x17x17xf32>
    "tpu.trace_start"() <{level = 10 : i32, message = "bnm,bmd->bnd"}> : () -> ()
    %cst_53 = arith.constant dense<0.000000e+00> : vector<2x17x8xf32>
    %153 = tpu.matmul %152, %135, %cst_53 {dimension_numbers = #tpu.dot_dimension_numbers<[2], [1], [1], [2], [0, 0, 0, 1, 1, 2], [0], [0]>} : vector<2x17x17xf32>, vector<2x17x8xf32>, vector<2x17x8xf32> -> vector<2x17x8xf32>
    "tpu.trace_stop"() : () -> ()
    %154 = vector.shape_cast %153 : vector<2x17x8xf32> to vector<34x8xf32>
    %155 = vector.extract_strided_slice %56 {offsets = [24, 0], sizes = [8, 32], strides = [1, 1]} : vector<32x32xf32> to vector<8x32xf32>
    %cst_54 = arith.constant dense<0.000000e+00> : vector<34x32xf32>
    %156 = tpu.matmul %154, %155, %cst_54 {dimension_numbers = #tpu.dot_dimension_numbers<[1], [0], [0], [1], [0, 0, 1, 1], [], []>} : vector<34x8xf32>, vector<8x32xf32>, vector<34x32xf32> -> vector<34x32xf32>
    %157 = arith.addf %132, %156 : vector<34x32xf32>
    %158 = arith.addf %46, %157 : vector<34x32xf32>
    %c0_55 = arith.constant 0 : index
    %c0_56 = arith.constant 0 : index
    %c0_57 = arith.constant 0 : index
    %159 = vector.load %arg9[%c0_55, %c0_56, %c0_57] : memref<2x1x32xf32, #tpu.memory_space<vmem>>, vector<1x1x32xf32>
    %160 = vector.shape_cast %159 : vector<1x1x32xf32> to vector<1x32xf32>
    %161 = vector.broadcast %160 : vector<1x32xf32> to vector<34x32xf32>
    %162 = arith.addf %158, %161 : vector<34x32xf32>
    %c0_58 = arith.constant 0 : index
    %c0_59 = arith.constant 0 : index
    %c0_60 = arith.constant 0 : index
    %163 = vector.load %arg10[%c0_58, %c0_59, %c0_60] : memref<2x32x64xf32, #tpu.memory_space<vmem>>, vector<1x32x64xf32>
    %164 = vector.shape_cast %163 : vector<1x32x64xf32> to vector<32x64xf32>
    %cst_61 = arith.constant dense<0.000000e+00> : vector<34x64xf32>
    %165 = tpu.matmul %162, %164, %cst_61 {dimension_numbers = #tpu.dot_dimension_numbers<[1], [0], [0], [1], [0, 0, 1, 1], [], []>} : vector<34x32xf32>, vector<32x64xf32>, vector<34x64xf32> -> vector<34x64xf32>
    %c0_62 = arith.constant 0 : index
    %c0_63 = arith.constant 0 : index
    %c0_64 = arith.constant 0 : index
    %166 = vector.load %arg11[%c0_62, %c0_63, %c0_64] : memref<2x1x64xf32, #tpu.memory_space<vmem>>, vector<1x1x64xf32>
    %167 = vector.shape_cast %166 : vector<1x1x64xf32> to vector<1x64xf32>
    %168 = vector.broadcast %167 : vector<1x64xf32> to vector<34x64xf32>
    %169 = arith.addf %165, %168 : vector<34x64xf32>
    %cst_65 = arith.constant 5.000000e-01 : f32
    %170 = vector.broadcast %cst_65 : f32 to vector<34x64xf32>
    %171 = arith.mulf %170, %169 : vector<34x64xf32>
    %cst_66 = arith.constant 0.707106769 : f32
    %172 = vector.broadcast %cst_66 : f32 to vector<34x64xf32>
    %173 = arith.mulf %169, %172 : vector<34x64xf32>
    %174 = math.erf %173 : vector<34x64xf32>
    %cst_67 = arith.constant 1.000000e+00 : f32
    %175 = vector.broadcast %cst_67 : f32 to vector<34x64xf32>
    %176 = arith.addf %175, %174 : vector<34x64xf32>
    %177 = arith.mulf %171, %176 : vector<34x64xf32>
    %c0_68 = arith.constant 0 : index
    %c0_69 = arith.constant 0 : index
    %c0_70 = arith.constant 0 : index
    %178 = vector.load %arg12[%c0_68, %c0_69, %c0_70] : memref<2x64x32xf32, #tpu.memory_space<vmem>>, vector<1x64x32xf32>
    %179 = vector.shape_cast %178 : vector<1x64x32xf32> to vector<64x32xf32>
    %cst_71 = arith.constant dense<0.000000e+00> : vector<34x32xf32>
    %180 = tpu.matmul %177, %179, %cst_71 {dimension_numbers = #tpu.dot_dimension_numbers<[1], [0], [0], [1], [0, 0, 1, 1], [], []>} : vector<34x64xf32>, vector<64x32xf32>, vector<34x32xf32> -> vector<34x32xf32>
    %181 = arith.addf %162, %180 : vector<34x32xf32>
    %c0_72 = arith.constant 0 : index
    %c0_73 = arith.constant 0 : index
    %c0_74 = arith.constant 0 : index
    %182 = vector.load %arg13[%c0_72, %c0_73, %c0_74] : memref<2x1x32xf32, #tpu.memory_space<vmem>>, vector<1x1x32xf32>
    %183 = vector.shape_cast %182 : vector<1x1x32xf32> to vector<1x32xf32>
    %184 = vector.broadcast %183 : vector<1x32xf32> to vector<34x32xf32>
    %185 = arith.addf %181, %184 : vector<34x32xf32>
    %c1 = arith.constant 1 : index
    %c0_75 = arith.constant 0 : index
    %c0_76 = arith.constant 0 : index
    %186 = vector.load %arg7[%c1, %c0_75, %c0_76] : memref<2x32x96xf32, #tpu.memory_space<vmem>>, vector<1x32x96xf32>
    %187 = vector.shape_cast %186 : vector<1x32x96xf32> to vector<32x96xf32>
    %cst_77 = arith.constant dense<0.000000e+00> : vector<34x96xf32>
    %188 = tpu.matmul %185, %187, %cst_77 {dimension_numbers = #tpu.dot_dimension_numbers<[1], [0], [0], [1], [0, 0, 1, 1], [], []>} : vector<34x32xf32>, vector<32x96xf32>, vector<34x96xf32> -> vector<34x96xf32>
    %189 = vector.shape_cast %188 : vector<34x96xf32> to vector<2x17x96xf32>
    %c1_78 = arith.constant 1 : index
    %c0_79 = arith.constant 0 : index
    %c0_80 = arith.constant 0 : index
    %190 = vector.load %arg8[%c1_78, %c0_79, %c0_80] : memref<2x32x32xf32, #tpu.memory_space<vmem>>, vector<1x32x32xf32>
    %191 = vector.shape_cast %190 : vector<1x32x32xf32> to vector<32x32xf32>
    %cst_81 = arith.constant 0.000000e+00 : f32
    %192 = vector.broadcast %cst_81 : f32 to vector<34x32xf32>
    %193 = vector.extract_strided_slice %189 {offsets = [0, 0, 0], sizes = [2, 17, 8], strides = [1, 1, 1]} : vector<2x17x96xf32> to vector<2x17x8xf32>
    %194 = vector.extract_strided_slice %189 {offsets = [0, 0, 32], sizes = [2, 17, 8], strides = [1, 1, 1]} : vector<2x17x96xf32> to vector<2x17x8xf32>
    %195 = vector.extract_strided_slice %189 {offsets = [0, 0, 64], sizes = [2, 17, 8], strides = [1, 1, 1]} : vector<2x17x96xf32> to vector<2x17x8xf32>
    "tpu.trace_start"() <{level = 10 : i32, message = "bnd,bmd->bnm"}> : () -> ()
    %cst_82 = arith.constant dense<0.000000e+00> : vector<2x17x17xf32>
    %196 = tpu.matmul %193, %194, %cst_82 {dimension_numbers = #tpu.dot_dimension_numbers<[2], [2], [1], [1], [0, 0, 0, 1, 1, 1], [0], [0]>} : vector<2x17x8xf32>, vector<2x17x8xf32>, vector<2x17x17xf32> -> vector<2x17x17xf32>
    "tpu.trace_stop"() : () -> ()
    %cst_83 = arith.constant 0.353553385 : f32
    %197 = vector.broadcast %cst_83 : f32 to vector<2x17x17xf32>
    %198 = arith.mulf %196, %197 : vector<2x17x17xf32>
    %cst_84 = arith.constant -3.40282347E+38 : f32
    %199 = vector.shape_cast %50 : vector<1x17x17xi1> to vector<1x17x17xi1>
    %200 = vector.broadcast %199 : vector<1x17x17xi1> to vector<2x17x17xi1>
    %201 = vector.broadcast %cst_84 : f32 to vector<2x17x17xf32>
    %202 = arith.select %200, %201, %198 : vector<2x17x17xi1>, vector<2x17x17xf32>
    %cst_85 = arith.constant dense<0xFF800000> : vector<2x17xf32>
    %203 = vector.multi_reduction <maximumf>, %202, %cst_85 [2] : vector<2x17x17xf32> to vector<2x17xf32>
    %204 = vector.shape_cast %203 : vector<2x17xf32> to vector<2x17x1xf32>
    %205 = vector.broadcast %204 : vector<2x17x1xf32> to vector<2x17x17xf32>
    %206 = arith.subf %202, %205 : vector<2x17x17xf32>
    %207 = math.exp %206 : vector<2x17x17xf32>
    %cst_86 = arith.constant dense<0.000000e+00> : vector<2x17xf32>
    %208 = vector.multi_reduction <add>, %207, %cst_86 [2] : vector<2x17x17xf32> to vector<2x17xf32>
    %209 = vector.shape_cast %208 : vector<2x17xf32> to vector<2x17x1xf32>
    %210 = tpu.reciprocal %209 {approx = true} : vector<2x17x1xf32> -> vector<2x17x1xf32>
    %211 = vector.broadcast %210 : vector<2x17x1xf32> to vector<2x17x17xf32>
    %212 = arith.mulf %207, %211 : vector<2x17x17xf32>
    "tpu.trace_start"() <{level = 10 : i32, message = "bnm,bmd->bnd"}> : () -> ()
    %cst_87 = arith.constant dense<0.000000e+00> : vector<2x17x8xf32>
    %213 = tpu.matmul %212, %195, %cst_87 {dimension_numbers = #tpu.dot_dimension_numbers<[2], [1], [1], [2], [0, 0, 0, 1, 1, 2], [0], [0]>} : vector<2x17x17xf32>, vector<2x17x8xf32>, vector<2x17x8xf32> -> vector<2x17x8xf32>
    "tpu.trace_stop"() : () -> ()
    %214 = vector.shape_cast %213 : vector<2x17x8xf32> to vector<34x8xf32>
    %215 = vector.extract_strided_slice %191 {offsets = [0, 0], sizes = [8, 32], strides = [1, 1]} : vector<32x32xf32> to vector<8x32xf32>
    %cst_88 = arith.constant dense<0.000000e+00> : vector<34x32xf32>
    %216 = tpu.matmul %214, %215, %cst_88 {dimension_numbers = #tpu.dot_dimension_numbers<[1], [0], [0], [1], [0, 0, 1, 1], [], []>} : vector<34x8xf32>, vector<8x32xf32>, vector<34x32xf32> -> vector<34x32xf32>
    %217 = arith.addf %192, %216 : vector<34x32xf32>
    %218 = vector.extract_strided_slice %189 {offsets = [0, 0, 8], sizes = [2, 17, 8], strides = [1, 1, 1]} : vector<2x17x96xf32> to vector<2x17x8xf32>
    %219 = vector.extract_strided_slice %189 {offsets = [0, 0, 40], sizes = [2, 17, 8], strides = [1, 1, 1]} : vector<2x17x96xf32> to vector<2x17x8xf32>
    %220 = vector.extract_strided_slice %189 {offsets = [0, 0, 72], sizes = [2, 17, 8], strides = [1, 1, 1]} : vector<2x17x96xf32> to vector<2x17x8xf32>
    "tpu.trace_start"() <{level = 10 : i32, message = "bnd,bmd->bnm"}> : () -> ()
    %cst_89 = arith.constant dense<0.000000e+00> : vector<2x17x17xf32>
    %221 = tpu.matmul %218, %219, %cst_89 {dimension_numbers = #tpu.dot_dimension_numbers<[2], [2], [1], [1], [0, 0, 0, 1, 1, 1], [0], [0]>} : vector<2x17x8xf32>, vector<2x17x8xf32>, vector<2x17x17xf32> -> vector<2x17x17xf32>
    "tpu.trace_stop"() : () -> ()
    %cst_90 = arith.constant 0.353553385 : f32
    %222 = vector.broadcast %cst_90 : f32 to vector<2x17x17xf32>
    %223 = arith.mulf %221, %222 : vector<2x17x17xf32>
    %cst_91 = arith.constant -3.40282347E+38 : f32
    %224 = vector.shape_cast %50 : vector<1x17x17xi1> to vector<1x17x17xi1>
    %225 = vector.broadcast %224 : vector<1x17x17xi1> to vector<2x17x17xi1>
    %226 = vector.broadcast %cst_91 : f32 to vector<2x17x17xf32>
    %227 = arith.select %225, %226, %223 : vector<2x17x17xi1>, vector<2x17x17xf32>
    %cst_92 = arith.constant dense<0xFF800000> : vector<2x17xf32>
    %228 = vector.multi_reduction <maximumf>, %227, %cst_92 [2] : vector<2x17x17xf32> to vector<2x17xf32>
    %229 = vector.shape_cast %228 : vector<2x17xf32> to vector<2x17x1xf32>
    %230 = vector.broadcast %229 : vector<2x17x1xf32> to vector<2x17x17xf32>
    %231 = arith.subf %227, %230 : vector<2x17x17xf32>
    %232 = math.exp %231 : vector<2x17x17xf32>
    %cst_93 = arith.constant dense<0.000000e+00> : vector<2x17xf32>
    %233 = vector.multi_reduction <add>, %232, %cst_93 [2] : vector<2x17x17xf32> to vector<2x17xf32>
    %234 = vector.shape_cast %233 : vector<2x17xf32> to vector<2x17x1xf32>
    %235 = tpu.reciprocal %234 {approx = true} : vector<2x17x1xf32> -> vector<2x17x1xf32>
    %236 = vector.broadcast %235 : vector<2x17x1xf32> to vector<2x17x17xf32>
    %237 = arith.mulf %232, %236 : vector<2x17x17xf32>
    "tpu.trace_start"() <{level = 10 : i32, message = "bnm,bmd->bnd"}> : () -> ()
    %cst_94 = arith.constant dense<0.000000e+00> : vector<2x17x8xf32>
    %238 = tpu.matmul %237, %220, %cst_94 {dimension_numbers = #tpu.dot_dimension_numbers<[2], [1], [1], [2], [0, 0, 0, 1, 1, 2], [0], [0]>} : vector<2x17x17xf32>, vector<2x17x8xf32>, vector<2x17x8xf32> -> vector<2x17x8xf32>
    "tpu.trace_stop"() : () -> ()
    %239 = vector.shape_cast %238 : vector<2x17x8xf32> to vector<34x8xf32>
    %240 = vector.extract_strided_slice %191 {offsets = [8, 0], sizes = [8, 32], strides = [1, 1]} : vector<32x32xf32> to vector<8x32xf32>
    %cst_95 = arith.constant dense<0.000000e+00> : vector<34x32xf32>
    %241 = tpu.matmul %239, %240, %cst_95 {dimension_numbers = #tpu.dot_dimension_numbers<[1], [0], [0], [1], [0, 0, 1, 1], [], []>} : vector<34x8xf32>, vector<8x32xf32>, vector<34x32xf32> -> vector<34x32xf32>
    %242 = arith.addf %217, %241 : vector<34x32xf32>
    %243 = vector.extract_strided_slice %189 {offsets = [0, 0, 16], sizes = [2, 17, 8], strides = [1, 1, 1]} : vector<2x17x96xf32> to vector<2x17x8xf32>
    %244 = vector.extract_strided_slice %189 {offsets = [0, 0, 48], sizes = [2, 17, 8], strides = [1, 1, 1]} : vector<2x17x96xf32> to vector<2x17x8xf32>
    %245 = vector.extract_strided_slice %189 {offsets = [0, 0, 80], sizes = [2, 17, 8], strides = [1, 1, 1]} : vector<2x17x96xf32> to vector<2x17x8xf32>
    "tpu.trace_start"() <{level = 10 : i32, message = "bnd,bmd->bnm"}> : () -> ()
    %cst_96 = arith.constant dense<0.000000e+00> : vector<2x17x17xf32>
    %246 = tpu.matmul %243, %244, %cst_96 {dimension_numbers = #tpu.dot_dimension_numbers<[2], [2], [1], [1], [0, 0, 0, 1, 1, 1], [0], [0]>} : vector<2x17x8xf32>, vector<2x17x8xf32>, vector<2x17x17xf32> -> vector<2x17x17xf32>
    "tpu.trace_stop"() : () -> ()
    %cst_97 = arith.constant 0.353553385 : f32
    %247 = vector.broadcast %cst_97 : f32 to vector<2x17x17xf32>
    %248 = arith.mulf %246, %247 : vector<2x17x17xf32>
    %cst_98 = arith.constant -3.40282347E+38 : f32
    %249 = vector.shape_cast %50 : vector<1x17x17xi1> to vector<1x17x17xi1>
    %250 = vector.broadcast %249 : vector<1x17x17xi1> to vector<2x17x17xi1>
    %251 = vector.broadcast %cst_98 : f32 to vector<2x17x17xf32>
    %252 = arith.select %250, %251, %248 : vector<2x17x17xi1>, vector<2x17x17xf32>
    %cst_99 = arith.constant dense<0xFF800000> : vector<2x17xf32>
    %253 = vector.multi_reduction <maximumf>, %252, %cst_99 [2] : vector<2x17x17xf32> to vector<2x17xf32>
    %254 = vector.shape_cast %253 : vector<2x17xf32> to vector<2x17x1xf32>
    %255 = vector.broadcast %254 : vector<2x17x1xf32> to vector<2x17x17xf32>
    %256 = arith.subf %252, %255 : vector<2x17x17xf32>
    %257 = math.exp %256 : vector<2x17x17xf32>
    %cst_100 = arith.constant dense<0.000000e+00> : vector<2x17xf32>
    %258 = vector.multi_reduction <add>, %257, %cst_100 [2] : vector<2x17x17xf32> to vector<2x17xf32>
    %259 = vector.shape_cast %258 : vector<2x17xf32> to vector<2x17x1xf32>
    %260 = tpu.reciprocal %259 {approx = true} : vector<2x17x1xf32> -> vector<2x17x1xf32>
    %261 = vector.broadcast %260 : vector<2x17x1xf32> to vector<2x17x17xf32>
    %262 = arith.mulf %257, %261 : vector<2x17x17xf32>
    "tpu.trace_start"() <{level = 10 : i32, message = "bnm,bmd->bnd"}> : () -> ()
    %cst_101 = arith.constant dense<0.000000e+00> : vector<2x17x8xf32>
    %263 = tpu.matmul %262, %245, %cst_101 {dimension_numbers = #tpu.dot_dimension_numbers<[2], [1], [1], [2], [0, 0, 0, 1, 1, 2], [0], [0]>} : vector<2x17x17xf32>, vector<2x17x8xf32>, vector<2x17x8xf32> -> vector<2x17x8xf32>
    "tpu.trace_stop"() : () -> ()
    %264 = vector.shape_cast %263 : vector<2x17x8xf32> to vector<34x8xf32>
    %265 = vector.extract_strided_slice %191 {offsets = [16, 0], sizes = [8, 32], strides = [1, 1]} : vector<32x32xf32> to vector<8x32xf32>
    %cst_102 = arith.constant dense<0.000000e+00> : vector<34x32xf32>
    %266 = tpu.matmul %264, %265, %cst_102 {dimension_numbers = #tpu.dot_dimension_numbers<[1], [0], [0], [1], [0, 0, 1, 1], [], []>} : vector<34x8xf32>, vector<8x32xf32>, vector<34x32xf32> -> vector<34x32xf32>
    %267 = arith.addf %242, %266 : vector<34x32xf32>
    %268 = vector.extract_strided_slice %189 {offsets = [0, 0, 24], sizes = [2, 17, 8], strides = [1, 1, 1]} : vector<2x17x96xf32> to vector<2x17x8xf32>
    %269 = vector.extract_strided_slice %189 {offsets = [0, 0, 56], sizes = [2, 17, 8], strides = [1, 1, 1]} : vector<2x17x96xf32> to vector<2x17x8xf32>
    %270 = vector.extract_strided_slice %189 {offsets = [0, 0, 88], sizes = [2, 17, 8], strides = [1, 1, 1]} : vector<2x17x96xf32> to vector<2x17x8xf32>
    "tpu.trace_start"() <{level = 10 : i32, message = "bnd,bmd->bnm"}> : () -> ()
    %cst_103 = arith.constant dense<0.000000e+00> : vector<2x17x17xf32>
    %271 = tpu.matmul %268, %269, %cst_103 {dimension_numbers = #tpu.dot_dimension_numbers<[2], [2], [1], [1], [0, 0, 0, 1, 1, 1], [0], [0]>} : vector<2x17x8xf32>, vector<2x17x8xf32>, vector<2x17x17xf32> -> vector<2x17x17xf32>
    "tpu.trace_stop"() : () -> ()
    %cst_104 = arith.constant 0.353553385 : f32
    %272 = vector.broadcast %cst_104 : f32 to vector<2x17x17xf32>
    %273 = arith.mulf %271, %272 : vector<2x17x17xf32>
    %cst_105 = arith.constant -3.40282347E+38 : f32
    %274 = vector.shape_cast %50 : vector<1x17x17xi1> to vector<1x17x17xi1>
    %275 = vector.broadcast %274 : vector<1x17x17xi1> to vector<2x17x17xi1>
    %276 = vector.broadcast %cst_105 : f32 to vector<2x17x17xf32>
    %277 = arith.select %275, %276, %273 : vector<2x17x17xi1>, vector<2x17x17xf32>
    %cst_106 = arith.constant dense<0xFF800000> : vector<2x17xf32>
    %278 = vector.multi_reduction <maximumf>, %277, %cst_106 [2] : vector<2x17x17xf32> to vector<2x17xf32>
    %279 = vector.shape_cast %278 : vector<2x17xf32> to vector<2x17x1xf32>
    %280 = vector.broadcast %279 : vector<2x17x1xf32> to vector<2x17x17xf32>
    %281 = arith.subf %277, %280 : vector<2x17x17xf32>
    %282 = math.exp %281 : vector<2x17x17xf32>
    %cst_107 = arith.constant dense<0.000000e+00> : vector<2x17xf32>
    %283 = vector.multi_reduction <add>, %282, %cst_107 [2] : vector<2x17x17xf32> to vector<2x17xf32>
    %284 = vector.shape_cast %283 : vector<2x17xf32> to vector<2x17x1xf32>
    %285 = tpu.reciprocal %284 {approx = true} : vector<2x17x1xf32> -> vector<2x17x1xf32>
    %286 = vector.broadcast %285 : vector<2x17x1xf32> to vector<2x17x17xf32>
    %287 = arith.mulf %282, %286 : vector<2x17x17xf32>
    "tpu.trace_start"() <{level = 10 : i32, message = "bnm,bmd->bnd"}> : () -> ()
    %cst_108 = arith.constant dense<0.000000e+00> : vector<2x17x8xf32>
    %288 = tpu.matmul %287, %270, %cst_108 {dimension_numbers = #tpu.dot_dimension_numbers<[2], [1], [1], [2], [0, 0, 0, 1, 1, 2], [0], [0]>} : vector<2x17x17xf32>, vector<2x17x8xf32>, vector<2x17x8xf32> -> vector<2x17x8xf32>
    "tpu.trace_stop"() : () -> ()
    %289 = vector.shape_cast %288 : vector<2x17x8xf32> to vector<34x8xf32>
    %290 = vector.extract_strided_slice %191 {offsets = [24, 0], sizes = [8, 32], strides = [1, 1]} : vector<32x32xf32> to vector<8x32xf32>
    %cst_109 = arith.constant dense<0.000000e+00> : vector<34x32xf32>
    %291 = tpu.matmul %289, %290, %cst_109 {dimension_numbers = #tpu.dot_dimension_numbers<[1], [0], [0], [1], [0, 0, 1, 1], [], []>} : vector<34x8xf32>, vector<8x32xf32>, vector<34x32xf32> -> vector<34x32xf32>
    %292 = arith.addf %267, %291 : vector<34x32xf32>
    %293 = arith.addf %185, %292 : vector<34x32xf32>
    %c1_110 = arith.constant 1 : index
    %c0_111 = arith.constant 0 : index
    %c0_112 = arith.constant 0 : index
    %294 = vector.load %arg9[%c1_110, %c0_111, %c0_112] : memref<2x1x32xf32, #tpu.memory_space<vmem>>, vector<1x1x32xf32>
    %295 = vector.shape_cast %294 : vector<1x1x32xf32> to vector<1x32xf32>
    %296 = vector.broadcast %295 : vector<1x32xf32> to vector<34x32xf32>
    %297 = arith.addf %293, %296 : vector<34x32xf32>
    %c1_113 = arith.constant 1 : index
    %c0_114 = arith.constant 0 : index
    %c0_115 = arith.constant 0 : index
    %298 = vector.load %arg10[%c1_113, %c0_114, %c0_115] : memref<2x32x64xf32, #tpu.memory_space<vmem>>, vector<1x32x64xf32>
    %299 = vector.shape_cast %298 : vector<1x32x64xf32> to vector<32x64xf32>
    %cst_116 = arith.constant dense<0.000000e+00> : vector<34x64xf32>
    %300 = tpu.matmul %297, %299, %cst_116 {dimension_numbers = #tpu.dot_dimension_numbers<[1], [0], [0], [1], [0, 0, 1, 1], [], []>} : vector<34x32xf32>, vector<32x64xf32>, vector<34x64xf32> -> vector<34x64xf32>
    %c1_117 = arith.constant 1 : index
    %c0_118 = arith.constant 0 : index
    %c0_119 = arith.constant 0 : index
    %301 = vector.load %arg11[%c1_117, %c0_118, %c0_119] : memref<2x1x64xf32, #tpu.memory_space<vmem>>, vector<1x1x64xf32>
    %302 = vector.shape_cast %301 : vector<1x1x64xf32> to vector<1x64xf32>
    %303 = vector.broadcast %302 : vector<1x64xf32> to vector<34x64xf32>
    %304 = arith.addf %300, %303 : vector<34x64xf32>
    %cst_120 = arith.constant 5.000000e-01 : f32
    %305 = vector.broadcast %cst_120 : f32 to vector<34x64xf32>
    %306 = arith.mulf %305, %304 : vector<34x64xf32>
    %cst_121 = arith.constant 0.707106769 : f32
    %307 = vector.broadcast %cst_121 : f32 to vector<34x64xf32>
    %308 = arith.mulf %304, %307 : vector<34x64xf32>
    %309 = math.erf %308 : vector<34x64xf32>
    %cst_122 = arith.constant 1.000000e+00 : f32
    %310 = vector.broadcast %cst_122 : f32 to vector<34x64xf32>
    %311 = arith.addf %310, %309 : vector<34x64xf32>
    %312 = arith.mulf %306, %311 : vector<34x64xf32>
    %c1_123 = arith.constant 1 : index
    %c0_124 = arith.constant 0 : index
    %c0_125 = arith.constant 0 : index
    %313 = vector.load %arg12[%c1_123, %c0_124, %c0_125] : memref<2x64x32xf32, #tpu.memory_space<vmem>>, vector<1x64x32xf32>
    %314 = vector.shape_cast %313 : vector<1x64x32xf32> to vector<64x32xf32>
    %cst_126 = arith.constant dense<0.000000e+00> : vector<34x32xf32>
    %315 = tpu.matmul %312, %314, %cst_126 {dimension_numbers = #tpu.dot_dimension_numbers<[1], [0], [0], [1], [0, 0, 1, 1], [], []>} : vector<34x64xf32>, vector<64x32xf32>, vector<34x32xf32> -> vector<34x32xf32>
    %316 = arith.addf %297, %315 : vector<34x32xf32>
    %c1_127 = arith.constant 1 : index
    %c0_128 = arith.constant 0 : index
    %c0_129 = arith.constant 0 : index
    %317 = vector.load %arg13[%c1_127, %c0_128, %c0_129] : memref<2x1x32xf32, #tpu.memory_space<vmem>>, vector<1x1x32xf32>
    %318 = vector.shape_cast %317 : vector<1x1x32xf32> to vector<1x32xf32>
    %319 = vector.broadcast %318 : vector<1x32xf32> to vector<34x32xf32>
    %320 = arith.addf %316, %319 : vector<34x32xf32>
    %321 = vector.shape_cast %320 : vector<34x32xf32> to vector<2x17x32xf32>
    %322 = vector.extract_strided_slice %321 {offsets = [0, 0, 0], sizes = [2, 1, 32], strides = [1, 1, 1]} : vector<2x17x32xf32> to vector<2x1x32xf32>
    %323 = vector.shape_cast %322 : vector<2x1x32xf32> to vector<2x32xf32>
    %c0_130 = arith.constant 0 : index
    %c0_131 = arith.constant 0 : index
    %324 = vector.load %arg14[%c0_130, %c0_131] : memref<1x32xf32, #tpu.memory_space<vmem>>, vector<1x32xf32>
    %c0_132 = arith.constant 0 : index
    %c0_133 = arith.constant 0 : index
    %325 = vector.load %arg15[%c0_132, %c0_133] : memref<1x32xf32, #tpu.memory_space<vmem>>, vector<1x32xf32>
    %cst_134 = arith.constant dense<0.000000e+00> : vector<2xf32>
    %326 = vector.multi_reduction <add>, %323, %cst_134 [1] : vector<2x32xf32> to vector<2xf32>
    %327 = vector.shape_cast %326 : vector<2xf32> to vector<2x1xf32>
    %cst_135 = arith.constant 3.200000e+01 : f32
    %328 = vector.broadcast %cst_135 : f32 to vector<2x1xf32>
    %329 = arith.divf %327, %328 : vector<2x1xf32>
    %330 = vector.broadcast %329 : vector<2x1xf32> to vector<2x32xf32>
    %331 = arith.subf %323, %330 : vector<2x32xf32>
    %332 = arith.mulf %331, %331 : vector<2x32xf32>
    %cst_136 = arith.constant dense<0.000000e+00> : vector<2xf32>
    %333 = vector.multi_reduction <add>, %332, %cst_136 [1] : vector<2x32xf32> to vector<2xf32>
    %334 = vector.shape_cast %333 : vector<2xf32> to vector<2x1xf32>
    %cst_137 = arith.constant 3.200000e+01 : f32
    %335 = vector.broadcast %cst_137 : f32 to vector<2x1xf32>
    %336 = arith.divf %334, %335 : vector<2x1xf32>
    %337 = vector.broadcast %329 : vector<2x1xf32> to vector<2x32xf32>
    %338 = arith.subf %323, %337 : vector<2x32xf32>
    %cst_138 = arith.constant 9.99999974E-6 : f32
    %339 = vector.broadcast %cst_138 : f32 to vector<2x1xf32>
    %340 = arith.addf %336, %339 : vector<2x1xf32>
    %341 = math.rsqrt %340 : vector<2x1xf32>
    %342 = vector.broadcast %341 : vector<2x1xf32> to vector<2x32xf32>
    %343 = arith.mulf %338, %342 : vector<2x32xf32>
    %344 = vector.broadcast %324 : vector<1x32xf32> to vector<2x32xf32>
    %345 = arith.mulf %343, %344 : vector<2x32xf32>
    %346 = vector.broadcast %325 : vector<1x32xf32> to vector<2x32xf32>
    %347 = arith.addf %345, %346 : vector<2x32xf32>
    %c0_139 = arith.constant 0 : index
    %c0_140 = arith.constant 0 : index
    %348 = vector.load %arg16[%c0_139, %c0_140] : memref<32x10xf32, #tpu.memory_space<vmem>>, vector<32x10xf32>
    %cst_141 = arith.constant dense<0.000000e+00> : vector<2x10xf32>
    %349 = tpu.matmul %347, %348, %cst_141 {dimension_numbers = #tpu.dot_dimension_numbers<[1], [0], [0], [1], [0, 0, 1, 1], [], []>} : vector<2x32xf32>, vector<32x10xf32>, vector<2x10xf32> -> vector<2x10xf32>
    %c0_142 = arith.constant 0 : index
    %c0_143 = arith.constant 0 : index
    %350 = vector.load %arg17[%c0_142, %c0_143] : memref<1x10xf32, #tpu.memory_space<vmem>>, vector<1x10xf32>
    %351 = vector.broadcast %350 : vector<1x10xf32> to vector<2x10xf32>
    %352 = arith.addf %349, %351 : vector<2x10xf32>
    %c0_144 = arith.constant 0 : index
    %c0_145 = arith.constant 0 : index
    %353 = vector.load %arg18[%c0_144, %c0_145] : memref<2x10xf32, #tpu.memory_space<vmem>>, vector<2x10xf32>
    tpu.vector_store %arg18[%c0_144, %c0_145], %352 {strides = array<i32>} : memref<2x10xf32, #tpu.memory_space<vmem>>, vector<2x10xf32>,
    return
  }
}

</mosaic_0001>

<llo_original>
// kernel: fwd.1
$region0: #{fwd.1}
  #allocation0 [shape = 'u32[]', space=smem, size = 0x4, offset = 0x4, fixed_abs, tag = 'smem constant byte address 0x4 - core index']
  #allocation1 [shape = 'u32[72,128]{1,0:T(1,128)}', space=vmem, size = 0x9000, scoped, tag = 'internal scratch']
  %s0 = inlined_call_operand.vmem [shape: f32[2,17,240], index: 0, kind: input, shape index: {}]
  %s1 = inlined_call_operand.vmem [shape: f32[1,240], index: 1, kind: input, shape index: {}]
  %s2 = inlined_call_operand.vmem [shape: f32[1,240], index: 2, kind: input, shape index: {}]
  %s3 = inlined_call_operand.vmem [shape: f32[240,32], index: 3, kind: input, shape index: {}]
  %s4 = inlined_call_operand.vmem [shape: f32[1,32], index: 4, kind: input, shape index: {}]
  %s5 = inlined_call_operand.vmem [shape: f32[1,32], index: 5, kind: input, shape index: {}]
  %s6 = inlined_call_operand.vmem [shape: f32[17,32], index: 6, kind: input, shape index: {}]
  %s7 = inlined_call_operand.vmem [shape: f32[2,32,96], index: 7, kind: input, shape index: {}]
  %s8 = inlined_call_operand.vmem [shape: f32[2,32,32], index: 8, kind: input, shape index: {}]
  %s9 = inlined_call_operand.vmem [shape: f32[2,1,32], index: 9, kind: input, shape index: {}]
  %s10 = inlined_call_operand.vmem [shape: f32[2,32,64], index: 10, kind: input, shape index: {}]
  %s11 = inlined_call_operand.vmem [shape: f32[2,1,64], index: 11, kind: input, shape index: {}]
  %s12 = inlined_call_operand.vmem [shape: f32[2,64,32], index: 12, kind: input, shape index: {}]
  %s13 = inlined_call_operand.vmem [shape: f32[2,1,32], index: 13, kind: input, shape index: {}]
  %s14 = inlined_call_operand.vmem [shape: f32[1,32], index: 14, kind: input, shape index: {}]
  %s15 = inlined_call_operand.vmem [shape: f32[1,32], index: 15, kind: input, shape index: {}]
  %s16 = inlined_call_operand.vmem [shape: f32[32,10], index: 16, kind: input, shape index: {}]
  %s17 = inlined_call_operand.vmem [shape: f32[1,10], index: 17, kind: input, shape index: {}]
  %s18 = inlined_call_operand.hbm [shape: f32[2,10], index: 18, kind: output, shape index: {}]
  %s19 = sld [smem:[#allocation0]]
  $region82: #{fwd.1} parent=0
    _
  %s21 = ssub.s32 1, %s19
  %s22 = scalar_select 0, %s21, %s19
  $region1: #{fwd.1} parent=0
    #allocation2 [shape = 'u8[1024]{0}', space=vmem, size = 0x400, scoped, tag = 'output window, operand 0, single buffered']
    #allocation3 [shape = 's32[1]{0}', space=sflag, size = 0x4, scoped, tag = 'scoped memory for fwd.1']
    %23 = vsyncpa [#allocation3], 0
    // Predicated region
    $region2: #{fwd.1} parent=1 // pred_check
      _
    $region3: #{fwd.1} parent=1 // pred_check_branch
      %25 = sbr.rel (0) target = $region5
    $region4: #{fwd.1} parent=1 // pred_region
      _
    $region5: #{fwd.1} parent=1 // pred_fallthru
      _
    // Predicated region
    $region6: #{fwd.1} parent=1 // pred_check
      _
    $region7: #{fwd.1} parent=1 // pred_check_branch
      %27 = sbr.rel (0) target = $region9
    $region8: #{fwd.1} parent=1 // pred_region
      _
    $region9: #{fwd.1} parent=1 // pred_fallthru
      _
    // Predicated region
    $region10: #{fwd.1} parent=1 // pred_check
      _
    $region11: #{fwd.1} parent=1 // pred_check_branch
      %29 = sbr.rel (0) target = $region13
    $region12: #{fwd.1} parent=1 // pred_region
      _
    $region13: #{fwd.1} parent=1 // pred_fallthru
      _
    // Predicated region
    $region14: #{fwd.1} parent=1 // pred_check
      _
    $region15: #{fwd.1} parent=1 // pred_check_branch
      %31 = sbr.rel (0) target = $region17
    $region16: #{fwd.1} parent=1 // pred_region
      _
    $region17: #{fwd.1} parent=1 // pred_fallthru
      _
    // Predicated region
    $region18: #{fwd.1} parent=1 // pred_check
      _
    $region19: #{fwd.1} parent=1 // pred_check_branch
      %33 = sbr.rel (0) target = $region21
    $region20: #{fwd.1} parent=1 // pred_region
      _
    $region21: #{fwd.1} parent=1 // pred_fallthru
      _
    // Predicated region
    $region22: #{fwd.1} parent=1 // pred_check
      _
    $region23: #{fwd.1} parent=1 // pred_check_branch
      %35 = sbr.rel (0) target = $region25
    $region24: #{fwd.1} parent=1 // pred_region
      _
    $region25: #{fwd.1} parent=1 // pred_fallthru
      _
    // Predicated region
    $region26: #{fwd.1} parent=1 // pred_check
      _
    $region27: #{fwd.1} parent=1 // pred_check_branch
      %37 = sbr.rel (0) target = $region29
    $region28: #{fwd.1} parent=1 // pred_region
      _
    $region29: #{fwd.1} parent=1 // pred_fallthru
      _
    // Predicated region
    $region30: #{fwd.1} parent=1 // pred_check
      _
    $region31: #{fwd.1} parent=1 // pred_check_branch
      %39 = sbr.rel (0) target = $region33
    $region32: #{fwd.1} parent=1 // pred_region
      _
    $region33: #{fwd.1} parent=1 // pred_fallthru
      _
    // Predicated region
    $region34: #{fwd.1} parent=1 // pred_check
      _
    $region35: #{fwd.1} parent=1 // pred_check_branch
      %41 = sbr.rel (0) target = $region37
    $region36: #{fwd.1} parent=1 // pred_region
      _
    $region37: #{fwd.1} parent=1 // pred_fallthru
      _
    // Predicated region
    $region38: #{fwd.1} parent=1 // pred_check
      _
    $region39: #{fwd.1} parent=1 // pred_check_branch
      %43 = sbr.rel (0) target = $region41
    $region40: #{fwd.1} parent=1 // pred_region
      _
    $region41: #{fwd.1} parent=1 // pred_fallthru
      _
    // Predicated region
    $region42: #{fwd.1} parent=1 // pred_check
      _
    $region43: #{fwd.1} parent=1 // pred_check_branch
      %45 = sbr.rel (0) target = $region45
    $region44: #{fwd.1} parent=1 // pred_region
      _
    $region45: #{fwd.1} parent=1 // pred_fallthru
      _
    // Predicated region
    $region46: #{fwd.1} parent=1 // pred_check
      _
    $region47: #{fwd.1} parent=1 // pred_check_branch
      %47 = sbr.rel (0) target = $region49
    $region48: #{fwd.1} parent=1 // pred_region
      _
    $region49: #{fwd.1} parent=1 // pred_fallthru
      _
    // Predicated region
    $region50: #{fwd.1} parent=1 // pred_check
      _
    $region51: #{fwd.1} parent=1 // pred_check_branch
      %49 = sbr.rel (0) target = $region53
    $region52: #{fwd.1} parent=1 // pred_region
      _
    $region53: #{fwd.1} parent=1 // pred_fallthru
      _
    // Predicated region
    $region54: #{fwd.1} parent=1 // pred_check
      _
    $region55: #{fwd.1} parent=1 // pred_check_branch
      %51 = sbr.rel (0) target = $region57
    $region56: #{fwd.1} parent=1 // pred_region
      _
    $region57: #{fwd.1} parent=1 // pred_fallthru
      _
    // Predicated region
    $region58: #{fwd.1} parent=1 // pred_check
      _
    $region59: #{fwd.1} parent=1 // pred_check_branch
      %53 = sbr.rel (0) target = $region61
    $region60: #{fwd.1} parent=1 // pred_region
      _
    $region61: #{fwd.1} parent=1 // pred_fallthru
      _
    // Predicated region
    $region62: #{fwd.1} parent=1 // pred_check
      _
    $region63: #{fwd.1} parent=1 // pred_check_branch
      %55 = sbr.rel (0) target = $region65
    $region64: #{fwd.1} parent=1 // pred_region
      _
    $region65: #{fwd.1} parent=1 // pred_fallthru
      _
    // Predicated region
    $region66: #{fwd.1} parent=1 // pred_check
      _
    $region67: #{fwd.1} parent=1 // pred_check_branch
      %57 = sbr.rel (0) target = $region69
    $region68: #{fwd.1} parent=1 // pred_region
      _
    $region69: #{fwd.1} parent=1 // pred_fallthru
      _
    // Predicated region
    $region70: #{fwd.1} parent=1 // pred_check
      _
    $region71: #{fwd.1} parent=1 // pred_check_branch
      %59 = sbr.rel (0) target = $region73
    $region72: #{fwd.1} parent=1 // pred_region
      _
    $region73: #{fwd.1} parent=1 // pred_fallthru
      _
    %v60 = vld [vmem:[%s0] sm:$0xff]
    %v61 = vld [vmem:[%s0 + $0x8] sm:$0xff]
    %v62 = vld [vmem:[%s0 + $0x10] sm:$0xff]
    %v63 = vld [vmem:[%s0 + $0x18] sm:$0xff]
    %v64 = vld [vmem:[%s0 + $0x20] sm:$0x1]
    %v65 = vld [vmem:[%s0 + $0x28] sm:$0x1]
    %v66 = vld [vmem:[%s0 + $0x30] sm:$0xff]
    %v67 = vld [vmem:[%s0 + $0x38] sm:$0xff]
    %v68 = vld [vmem:[%s0 + $0x40] sm:$0xff]
    %v69 = vld [vmem:[%s0 + $0x48] sm:$0xff]
    %v70 = vld [vmem:[%s0 + $0x50] sm:$0x1]
    %v71 = vld [vmem:[%s0 + $0x58] sm:$0x1]
    %v84 = vrot.slane %v61, 7
    %v85 = vrot.slane %v63, 7
    %v86 = vrot.slane %v65, 7
    %v87 = vrot.slane %v67, 7
    %v88 = vrot.slane %v69, 7
    %v89 = vrot.slane %v71, 7
    %vm90 = vcmask 1040384
    %v91 = vsel %vm90, %v60, %v84
    %vm92 = vcmask 1041409
    %v93 = vsel %vm92, %v60, %v84
    %v94 = vrot.slane %v93, 1
    %vm95 = vcmask 1042434
    %v96 = vsel %vm95, %v60, %v84
    %v97 = vrot.slane %v96, 2
    %vm98 = vcmask 1043459
    %v99 = vsel %vm98, %v60, %v84
    %v100 = vrot.slane %v99, 3
    %vm101 = vcmask 1044484
    %v102 = vsel %vm101, %v60, %v84
    %v103 = vrot.slane %v102, 4
    %vm104 = vcmask 1045509
    %v105 = vsel %vm104, %v60, %v84
    %v106 = vrot.slane %v105, 5
    %vm107 = vcmask 1046534
    %v108 = vsel %vm107, %v60, %v84
    %v109 = vrot.slane %v108, 6
    %vm110 = vcmask 1046528
    %v111 = vsel %vm110, %v84, %v60
    %v112 = vrot.slane %v111, 7
    %v113 = vsel %vm90, %v62, %v85
    %v114 = vsel %vm92, %v62, %v85
    %v115 = vrot.slane %v114, 1
    %v116 = vsel %vm95, %v62, %v85
    %v117 = vrot.slane %v116, 2
    %v118 = vsel %vm98, %v62, %v85
    %v119 = vrot.slane %v118, 3
    %v120 = vsel %vm101, %v62, %v85
    %v121 = vrot.slane %v120, 4
    %v122 = vsel %vm104, %v62, %v85
    %v123 = vrot.slane %v122, 5
    %v124 = vsel %vm107, %v62, %v85
    %v125 = vrot.slane %v124, 6
    %v126 = vsel %vm110, %v85, %v62
    %v127 = vrot.slane %v126, 7
    %v128 = vsel %vm90, %v64, %v86
    %v129 = vsel %vm90, %v66, %v87
    %v130 = vsel %vm92, %v66, %v87
    %v131 = vrot.slane %v130, 1
    %v132 = vsel %vm95, %v66, %v87
    %v133 = vrot.slane %v132, 2
    %v134 = vsel %vm98, %v66, %v87
    %v135 = vrot.slane %v134, 3
    %v136 = vsel %vm101, %v66, %v87
    %v137 = vrot.slane %v136, 4
    %v138 = vsel %vm104, %v66, %v87
    %v139 = vrot.slane %v138, 5
    %v140 = vsel %vm107, %v66, %v87
    %v141 = vrot.slane %v140, 6
    %v142 = vsel %vm110, %v87, %v66
    %v143 = vrot.slane %v142, 7
    %v144 = vsel %vm90, %v68, %v88
    %v145 = vsel %vm92, %v68, %v88
    %v146 = vrot.slane %v145, 1
    %v147 = vsel %vm95, %v68, %v88
    %v148 = vrot.slane %v147, 2
    %v149 = vsel %vm98, %v68, %v88
    %v150 = vrot.slane %v149, 3
    %v151 = vsel %vm101, %v68, %v88
    %v152 = vrot.slane %v151, 4
    %v153 = vsel %vm104, %v68, %v88
    %v154 = vrot.slane %v153, 5
    %v155 = vsel %vm107, %v68, %v88
    %v156 = vrot.slane %v155, 6
    %v157 = vsel %vm110, %v88, %v68
    %v158 = vrot.slane %v157, 7
    %v159 = vsel %vm90, %v70, %v89
    %v194 = vld [vmem:[%s1] sm:$0x3]
    %v195 = vld [vmem:[%s2] sm:$0x3]
    %196 = vst [vmem:[#allocation1] ss:$9 sm:$0xff] %v91
    %s197 = scalar_lea.vmem [#allocation1], 1
    %198 = vst [vmem:[%s197] ss:$9 sm:$0xff] %v94
    %s199 = scalar_lea.vmem [#allocation1], 2
    %200 = vst [vmem:[%s199] ss:$9 sm:$0xff] %v97
    %s201 = scalar_lea.vmem [#allocation1], 3
    %202 = vst [vmem:[%s201] ss:$9 sm:$0xff] %v100
    %s203 = scalar_lea.vmem [#allocation1], 4
    %204 = vst [vmem:[%s203] ss:$9 sm:$0xff] %v103
    %s205 = scalar_lea.vmem [#allocation1], 5
    %206 = vst [vmem:[%s205] ss:$9 sm:$0xff] %v106
    %s207 = scalar_lea.vmem [#allocation1], 6
    %208 = vst [vmem:[%s207] ss:$9 sm:$0xff] %v109
    %s209 = scalar_lea.vmem [#allocation1], 7
    %210 = vst [vmem:[%s209] ss:$9 sm:$0xff] %v112
    %v211 = vld [vmem:[#allocation1] sm:$0xff]
    %v212 = vld [vmem:[#allocation1 + $0x9] sm:$0xff]
    %213 = vst [vmem:[#allocation1] ss:$9 sm:$0xff] %v113
    %214 = vst [vmem:[%s197] ss:$9 sm:$0xff] %v115
    %215 = vst [vmem:[%s199] ss:$9 sm:$0xff] %v117
    %216 = vst [vmem:[%s201] ss:$9 sm:$0xff] %v119
    %217 = vst [vmem:[%s203] ss:$9 sm:$0xff] %v121
    %218 = vst [vmem:[%s205] ss:$9 sm:$0xff] %v123
    %219 = vst [vmem:[%s207] ss:$9 sm:$0xff] %v125
    %220 = vst [vmem:[%s209] ss:$9 sm:$0xff] %v127
    %v221 = vld [vmem:[#allocation1] sm:$0xff]
    %v222 = vld [vmem:[#allocation1 + $0x9] sm:$0xff]
    %223 = vst [vmem:[#allocation1] ss:$9 sm:$0xff] %v128
    %224 = vst [vmem:[%s197] ss:$9 sm:$0xff] %v129
    %225 = vst [vmem:[%s199] ss:$9 sm:$0xff] %v131
    %226 = vst [vmem:[%s201] ss:$9 sm:$0xff] %v133
    %227 = vst [vmem:[%s203] ss:$9 sm:$0xff] %v135
    %228 = vst [vmem:[%s205] ss:$9 sm:$0xff] %v137
    %229 = vst [vmem:[%s207] ss:$9 sm:$0xff] %v139
    %230 = vst [vmem:[%s209] ss:$9 sm:$0xff] %v141
    %v231 = vld [vmem:[#allocation1] sm:$0xff]
    %v232 = vld [vmem:[#allocation1 + $0x9] sm:$0xff]
    %233 = vst [vmem:[#allocation1] ss:$9 sm:$0xff] %v143
    %234 = vst [vmem:[%s197] ss:$9 sm:$0xff] %v144
    %235 = vst [vmem:[%s199] ss:$9 sm:$0xff] %v146
    %236 = vst [vmem:[%s201] ss:$9 sm:$0xff] %v148
    %237 = vst [vmem:[%s203] ss:$9 sm:$0xff] %v150
    %238 = vst [vmem:[%s205] ss:$9 sm:$0xff] %v152
    %239 = vst [vmem:[%s207] ss:$9 sm:$0xff] %v154
    %240 = vst [vmem:[%s209] ss:$9 sm:$0xff] %v156
    %v241 = vld [vmem:[#allocation1] sm:$0xff]
    %v242 = vld [vmem:[#allocation1 + $0x9] sm:$0xff]
    %243 = vst [vmem:[#allocation1] ss:$9 sm:$0xff] %v158
    %244 = vst [vmem:[%s197] ss:$9 sm:$0xff] %v159
    %v245 = vld [vmem:[#allocation1] sm:$0xff]
    %v246 = vld [vmem:[#allocation1 + $0x9] sm:$0xff]
    %vm257 = vcmask 916480
    %v258 = vsel %vm257, %v212, 0.0
    %v259 = vadd.f32 %v211, %v258
    %260 = vadd.xlane.f32.xlu0 %v259
    %v261 = vpop.xlane.xlu0 %260
    %v262 = vsel %vm257, %v222, 0.0
    %v263 = vadd.f32 %v221, %v262
    %264 = vadd.xlane.f32.xlu0 %v263
    %v265 = vpop.xlane.xlu0 %264
    %v266 = vsel %vm257, %v232, 0.0
    %v267 = vadd.f32 %v231, %v266
    %268 = vadd.xlane.f32.xlu0 %v267
    %v269 = vpop.xlane.xlu0 %268
    %v270 = vsel %vm257, %v242, 0.0
    %v271 = vadd.f32 %v241, %v270
    %272 = vadd.xlane.f32.xlu0 %v271
    %v273 = vpop.xlane.xlu0 %272
    %vm274 = vcmask 1041408
    %v275 = vsel %vm274, %v245, 0.0
    %vm276 = vcmask 910336
    %v277 = vsel %vm276, %v246, 0.0
    %v278 = vadd.f32 %v275, %v277
    %279 = vadd.xlane.f32.xlu0 %v278
    %v280 = vpop.xlane.xlu0 %279
    %v281 = vrcp.pop 240.0
    %v282 = vmul.f32 240.0, %v281
    %v283 = vsub.f32 1.0, %v282
    %v284 = vmul.f32 %v281, %v283
    %v285 = vadd.f32 %v281, %v284
    %vm286 = vweird.f32 %v281
    %v287 = vsel %vm286, %v281, %v285
    %v288 = vmul.f32 %v261, %v287
    %v289 = vmul.f32 %v265, %v287
    %v290 = vmul.f32 %v269, %v287
    %v291 = vmul.f32 %v273, %v287
    %v292 = vmul.f32 %v280, %v287
    %v298 = vperm.slane %v288, 0
    %v299 = vperm.slane %v288, 1
    %v300 = vperm.slane %v288, 2
    %v301 = vperm.slane %v288, 3
    %v302 = vperm.slane %v288, 4
    %v303 = vperm.slane %v288, 5
    %v304 = vperm.slane %v288, 6
    %v305 = vperm.slane %v288, 7
    %v306 = vperm.slane %v289, 0
    %v307 = vperm.slane %v289, 1
    %v308 = vperm.slane %v289, 2
    %v309 = vperm.slane %v289, 3
    %v310 = vperm.slane %v289, 4
    %v311 = vperm.slane %v289, 5
    %v312 = vperm.slane %v289, 6
    %v313 = vperm.slane %v289, 7
    %v314 = vperm.slane %v290, 0
    %v315 = vperm.slane %v290, 1
    %v316 = vperm.slane %v290, 2
    %v317 = vperm.slane %v290, 3
    %v318 = vperm.slane %v290, 4
    %v319 = vperm.slane %v290, 5
    %v320 = vperm.slane %v290, 6
    %v321 = vperm.slane %v290, 7
    %v322 = vperm.slane %v291, 0
    %v323 = vperm.slane %v291, 1
    %v324 = vperm.slane %v291, 2
    %v325 = vperm.slane %v291, 3
    %v326 = vperm.slane %v291, 4
    %v327 = vperm.slane %v291, 5
    %v328 = vperm.slane %v291, 6
    %v329 = vperm.slane %v291, 7
    %v330 = vperm.slane %v292, 0
    %v331 = vperm.slane %v292, 1
    %v366 = vsub.f32 %v91, %v298
    %v367 = vsub.f32 %v94, %v299
    %v368 = vsub.f32 %v97, %v300
    %v369 = vsub.f32 %v100, %v301
    %v370 = vsub.f32 %v103, %v302
    %v371 = vsub.f32 %v106, %v303
    %v372 = vsub.f32 %v109, %v304
    %v373 = vsub.f32 %v112, %v305
    %v374 = vsub.f32 %v113, %v306
    %v375 = vsub.f32 %v115, %v307
    %v376 = vsub.f32 %v117, %v308
    %v377 = vsub.f32 %v119, %v309
    %v378 = vsub.f32 %v121, %v310
    %v379 = vsub.f32 %v123, %v311
    %v380 = vsub.f32 %v125, %v312
    %v381 = vsub.f32 %v127, %v313
    %v382 = vsub.f32 %v128, %v314
    %v383 = vsub.f32 %v129, %v315
    %v384 = vsub.f32 %v131, %v316
    %v385 = vsub.f32 %v133, %v317
    %v386 = vsub.f32 %v135, %v318
    %v387 = vsub.f32 %v137, %v319
    %v388 = vsub.f32 %v139, %v320
    %v389 = vsub.f32 %v141, %v321
    %v390 = vsub.f32 %v143, %v322
    %v391 = vsub.f32 %v144, %v323
    %v392 = vsub.f32 %v146, %v324
    %v393 = vsub.f32 %v148, %v325
    %v394 = vsub.f32 %v150, %v326
    %v395 = vsub.f32 %v152, %v327
    %v396 = vsub.f32 %v154, %v328
    %v397 = vsub.f32 %v156, %v329
    %v398 = vsub.f32 %v158, %v330
    %v399 = vsub.f32 %v159, %v331
    %v400 = vmul.f32 %v366, %v366
    %v401 = vmul.f32 %v367, %v367
    %v402 = vmul.f32 %v368, %v368
    %v403 = vmul.f32 %v369, %v369
    %v404 = vmul.f32 %v370, %v370
    %v405 = vmul.f32 %v371, %v371
    %v406 = vmul.f32 %v372, %v372
    %v407 = vmul.f32 %v373, %v373
    %v408 = vmul.f32 %v374, %v374
    %v409 = vmul.f32 %v375, %v375
    %v410 = vmul.f32 %v376, %v376
    %v411 = vmul.f32 %v377, %v377
    %v412 = vmul.f32 %v378, %v378
    %v413 = vmul.f32 %v379, %v379
    %v414 = vmul.f32 %v380, %v380
    %v415 = vmul.f32 %v381, %v381
    %v416 = vmul.f32 %v382, %v382
    %v417 = vmul.f32 %v383, %v383
    %v418 = vmul.f32 %v384, %v384
    %v419 = vmul.f32 %v385, %v385
    %v420 = vmul.f32 %v386, %v386
    %v421 = vmul.f32 %v387, %v387
    %v422 = vmul.f32 %v388, %v388
    %v423 = vmul.f32 %v389, %v389
    %v424 = vmul.f32 %v390, %v390
    %v425 = vmul.f32 %v391, %v391
    %v426 = vmul.f32 %v392, %v392
    %v427 = vmul.f32 %v393, %v393
    %v428 = vmul.f32 %v394, %v394
    %v429 = vmul.f32 %v395, %v395
    %v430 = vmul.f32 %v396, %v396
    %v431 = vmul.f32 %v397, %v397
    %v432 = vmul.f32 %v398, %v398
    %v433 = vmul.f32 %v399, %v399
    %468 = vst [vmem:[#allocation1] ss:$9 sm:$0xff] %v400
    %s469 = scalar_lea.vmem [#allocation1], 1
    %470 = vst [vmem:[%s469] ss:$9 sm:$0xff] %v401
    %s471 = scalar_lea.vmem [#allocation1], 2
    %472 = vst [vmem:[%s471] ss:$9 sm:$0xff] %v402
    %s473 = scalar_lea.vmem [#allocation1], 3
    %474 = vst [vmem:[%s473] ss:$9 sm:$0xff] %v403
    %s475 = scalar_lea.vmem [#allocation1], 4
    %476 = vst [vmem:[%s475] ss:$9 sm:$0xff] %v404
    %s477 = scalar_lea.vmem [#allocation1], 5
    %478 = vst [vmem:[%s477] ss:$9 sm:$0xff] %v405
    %s479 = scalar_lea.vmem [#allocation1], 6
    %480 = vst [vmem:[%s479] ss:$9 sm:$0xff] %v406
    %s481 = scalar_lea.vmem [#allocation1], 7
    %482 = vst [vmem:[%s481] ss:$9 sm:$0xff] %v407
    %v483 = vld [vmem:[#allocation1] sm:$0xff]
    %v484 = vld [vmem:[#allocation1 + $0x9] sm:$0xff]
    %485 = vst [vmem:[#allocation1] ss:$9 sm:$0xff] %v408
    %486 = vst [vmem:[%s469] ss:$9 sm:$0xff] %v409
    %487 = vst [vmem:[%s471] ss:$9 sm:$0xff] %v410
    %488 = vst [vmem:[%s473] ss:$9 sm:$0xff] %v411
    %489 = vst [vmem:[%s475] ss:$9 sm:$0xff] %v412
    %490 = vst [vmem:[%s477] ss:$9 sm:$0xff] %v413
    %491 = vst [vmem:[%s479] ss:$9 sm:$0xff] %v414
    %492 = vst [vmem:[%s481] ss:$9 sm:$0xff] %v415
    %v493 = vld [vmem:[#allocation1] sm:$0xff]
    %v494 = vld [vmem:[#allocation1 + $0x9] sm:$0xff]
    %495 = vst [vmem:[#allocation1] ss:$9 sm:$0xff] %v416
    %496 = vst [vmem:[%s469] ss:$9 sm:$0xff] %v417
    %497 = vst [vmem:[%s471] ss:$9 sm:$0xff] %v418
    %498 = vst [vmem:[%s473] ss:$9 sm:$0xff] %v419
    %499 = vst [vmem:[%s475] ss:$9 sm:$0xff] %v420
    %500 = vst [vmem:[%s477] ss:$9 sm:$0xff] %v421
    %501 = vst [vmem:[%s479] ss:$9 sm:$0xff] %v422
    %502 = vst [vmem:[%s481] ss:$9 sm:$0xff] %v423
    %v503 = vld [vmem:[#allocation1] sm:$0xff]
    %v504 = vld [vmem:[#allocation1 + $0x9] sm:$0xff]
    %505 = vst [vmem:[#allocation1] ss:$9 sm:$0xff] %v424
    %506 = vst [vmem:[%s469] ss:$9 sm:$0xff] %v425
    %507 = vst [vmem:[%s471] ss:$9 sm:$0xff] %v426
    %508 = vst [vmem:[%s473] ss:$9 sm:$0xff] %v427
    %509 = vst [vmem:[%s475] ss:$9 sm:$0xff] %v428
    %510 = vst [vmem:[%s477] ss:$9 sm:$0xff] %v429
    %511 = vst [vmem:[%s479] ss:$9 sm:$0xff] %v430
    %512 = vst [vmem:[%s481] ss:$9 sm:$0xff] %v431
    %v513 = vld [vmem:[#allocation1] sm:$0xff]
    %v514 = vld [vmem:[#allocation1 + $0x9] sm:$0xff]
    %515 = vst [vmem:[#allocation1] ss:$9 sm:$0xff] %v432
    %516 = vst [vmem:[%s469] ss:$9 sm:$0xff] %v433
    %v517 = vld [vmem:[#allocation1] sm:$0xff]
    %v518 = vld [vmem:[#allocation1 + $0x9] sm:$0xff]
    %v529 = vsel %vm257, %v484, 0.0
    %v530 = vadd.f32 %v483, %v529
    %531 = vadd.xlane.f32.xlu0 %v530
    %v532 = vpop.xlane.xlu0 %531
    %v533 = vsel %vm257, %v494, 0.0
    %v534 = vadd.f32 %v493, %v533
    %535 = vadd.xlane.f32.xlu0 %v534
    %v536 = vpop.xlane.xlu0 %535
    %v537 = vsel %vm257, %v504, 0.0
    %v538 = vadd.f32 %v503, %v537
    %539 = vadd.xlane.f32.xlu0 %v538
    %v540 = vpop.xlane.xlu0 %539
    %v541 = vsel %vm257, %v514, 0.0
    %v542 = vadd.f32 %v513, %v541
    %543 = vadd.xlane.f32.xlu0 %v542
    %v544 = vpop.xlane.xlu0 %543
    %v545 = vsel %vm274, %v517, 0.0
    %v546 = vsel %vm276, %v518, 0.0
    %v547 = vadd.f32 %v545, %v546
    %548 = vadd.xlane.f32.xlu0 %v547
    %v549 = vpop.xlane.xlu0 %548
    %v550 = vmul.f32 %v532, %v287
    %v551 = vmul.f32 %v536, %v287
    %v552 = vmul.f32 %v540, %v287
    %v553 = vmul.f32 %v544, %v287
    %v554 = vmul.f32 %v549, %v287
    %v555 = vadd.f32 %v550, 1e-05
    %v556 = vadd.f32 %v551, 1e-05
    %v557 = vadd.f32 %v552, 1e-05
    %v558 = vadd.f32 %v553, 1e-05
    %v559 = vadd.f32 %v554, 1e-05
    %v560 = vrsqrt.pop %v555
    %v561 = vmul.f32 %v560, %v555
    %v562 = vmul.f32 %v561, %v560
    %v563 = vmul.f32 0.5, %v562
    %v564 = vsub.f32 1.5, %v563
    %v565 = vmul.f32 %v560, %v564
    %vm566 = vweird.f32 %v555
    %vm567 = vweird.f32 %v560
    %vm568 = vmor %vm566, %vm567
    %v569 = vsel %vm568, %v560, %v565
    %v570 = vrsqrt.pop %v556
    %v571 = vmul.f32 %v570, %v556
    %v572 = vmul.f32 %v571, %v570
    %v573 = vmul.f32 0.5, %v572
    %v574 = vsub.f32 1.5, %v573
    %v575 = vmul.f32 %v570, %v574
    %vm576 = vweird.f32 %v556
    %vm577 = vweird.f32 %v570
    %vm578 = vmor %vm576, %vm577
    %v579 = vsel %vm578, %v570, %v575
    %v580 = vrsqrt.pop %v557
    %v581 = vmul.f32 %v580, %v557
    %v582 = vmul.f32 %v581, %v580
    %v583 = vmul.f32 0.5, %v582
    %v584 = vsub.f32 1.5, %v583
    %v585 = vmul.f32 %v580, %v584
    %vm586 = vweird.f32 %v557
    %vm587 = vweird.f32 %v580
    %vm588 = vmor %vm586, %vm587
    %v589 = vsel %vm588, %v580, %v585
    %v590 = vrsqrt.pop %v558
    %v591 = vmul.f32 %v590, %v558
    %v592 = vmul.f32 %v591, %v590
    %v593 = vmul.f32 0.5, %v592
    %v594 = vsub.f32 1.5, %v593
    %v595 = vmul.f32 %v590, %v594
    %vm596 = vweird.f32 %v558
    %vm597 = vweird.f32 %v590
    %vm598 = vmor %vm596, %vm597
    %v599 = vsel %vm598, %v590, %v595
    %v600 = vrsqrt.pop %v559
    %v601 = vmul.f32 %v600, %v559
    %v602 = vmul.f32 %v601, %v600
    %v603 = vmul.f32 0.5, %v602
    %v604 = vsub.f32 1.5, %v603
    %v605 = vmul.f32 %v600, %v604
    %vm606 = vweird.f32 %v559
    %vm607 = vweird.f32 %v600
    %vm608 = vmor %vm606, %vm607
    %v609 = vsel %vm608, %v600, %v605
    %v615 = vperm.slane %v569, 0
    %v616 = vperm.slane %v569, 1
    %v617 = vperm.slane %v569, 2
    %v618 = vperm.slane %v569, 3
    %v619 = vperm.slane %v569, 4
    %v620 = vperm.slane %v569, 5
    %v621 = vperm.slane %v569, 6
    %v622 = vperm.slane %v569, 7
    %v623 = vperm.slane %v579, 0
    %v624 = vperm.slane %v579, 1
    %v625 = vperm.slane %v579, 2
    %v626 = vperm.slane %v579, 3
    %v627 = vperm.slane %v579, 4
    %v628 = vperm.slane %v579, 5
    %v629 = vperm.slane %v579, 6
    %v630 = vperm.slane %v579, 7
    %v631 = vperm.slane %v589, 0
    %v632 = vperm.slane %v589, 1
    %v633 = vperm.slane %v589, 2
    %v634 = vperm.slane %v589, 3
    %v635 = vperm.slane %v589, 4
    %v636 = vperm.slane %v589, 5
    %v637 = vperm.slane %v589, 6
    %v638 = vperm.slane %v589, 7
    %v639 = vperm.slane %v599, 0
    %v640 = vperm.slane %v599, 1
    %v641 = vperm.slane %v599, 2
    %v642 = vperm.slane %v599, 3
    %v643 = vperm.slane %v599, 4
    %v644 = vperm.slane %v599, 5
    %v645 = vperm.slane %v599, 6
    %v646 = vperm.slane %v599, 7
    %v647 = vperm.slane %v609, 0
    %v648 = vperm.slane %v609, 1
    %v683 = vmul.f32 %v366, %v615
    %v684 = vmul.f32 %v367, %v616
    %v685 = vmul.f32 %v368, %v617
    %v686 = vmul.f32 %v369, %v618
    %v687 = vmul.f32 %v370, %v619
    %v688 = vmul.f32 %v371, %v620
    %v689 = vmul.f32 %v372, %v621
    %v690 = vmul.f32 %v373, %v622
    %v691 = vmul.f32 %v374, %v623
    %v692 = vmul.f32 %v375, %v624
    %v693 = vmul.f32 %v376, %v625
    %v694 = vmul.f32 %v377, %v626
    %v695 = vmul.f32 %v378, %v627
    %v696 = vmul.f32 %v379, %v628
    %v697 = vmul.f32 %v380, %v629
    %v698 = vmul.f32 %v381, %v630
    %v699 = vmul.f32 %v382, %v631
    %v700 = vmul.f32 %v383, %v632
    %v701 = vmul.f32 %v384, %v633
    %v702 = vmul.f32 %v385, %v634
    %v703 = vmul.f32 %v386, %v635
    %v704 = vmul.f32 %v387, %v636
    %v705 = vmul.f32 %v388, %v637
    %v706 = vmul.f32 %v389, %v638
    %v707 = vmul.f32 %v390, %v639
    %v708 = vmul.f32 %v391, %v640
    %v709 = vmul.f32 %v392, %v641
    %v710 = vmul.f32 %v393, %v642
    %v711 = vmul.f32 %v394, %v643
    %v712 = vmul.f32 %v395, %v644
    %v713 = vmul.f32 %v396, %v645
    %v714 = vmul.f32 %v397, %v646
    %v715 = vmul.f32 %v398, %v647
    %v716 = vmul.f32 %v399, %v648
    %v718 = vperm.slane %v194, 0
    %v719 = vperm.slane %v194, 1
    %v720 = vrot.slane %v719, 7
    %v721 = vsel %vm90, %v718, %v720
    %v722 = vsel %vm92, %v718, %v720
    %v723 = vrot.slane %v722, 1
    %v724 = vsel %vm95, %v718, %v720
    %v725 = vrot.slane %v724, 2
    %v726 = vsel %vm98, %v718, %v720
    %v727 = vrot.slane %v726, 3
    %v728 = vsel %vm101, %v718, %v720
    %v729 = vrot.slane %v728, 4
    %v730 = vsel %vm104, %v718, %v720
    %v731 = vrot.slane %v730, 5
    %v732 = vsel %vm107, %v718, %v720
    %v733 = vrot.slane %v732, 6
    %v734 = vsel %vm110, %v720, %v718
    %v735 = vrot.slane %v734, 7
    %v744 = vmul.f32 %v683, %v721
    %v745 = vmul.f32 %v684, %v723
    %v746 = vmul.f32 %v685, %v725
    %v747 = vmul.f32 %v686, %v727
    %v748 = vmul.f32 %v687, %v729
    %v749 = vmul.f32 %v688, %v731
    %v750 = vmul.f32 %v689, %v733
    %v751 = vmul.f32 %v690, %v735
    %v752 = vmul.f32 %v691, %v721
    %v753 = vmul.f32 %v692, %v723
    %v754 = vmul.f32 %v693, %v725
    %v755 = vmul.f32 %v694, %v727
    %v756 = vmul.f32 %v695, %v729
    %v757 = vmul.f32 %v696, %v731
    %v758 = vmul.f32 %v697, %v733
    %v759 = vmul.f32 %v698, %v735
    %v760 = vmul.f32 %v699, %v721
    %v761 = vmul.f32 %v700, %v723
    %v762 = vmul.f32 %v701, %v725
    %v763 = vmul.f32 %v702, %v727
    %v764 = vmul.f32 %v703, %v729
    %v765 = vmul.f32 %v704, %v731
    %v766 = vmul.f32 %v705, %v733
    %v767 = vmul.f32 %v706, %v735
    %v768 = vmul.f32 %v707, %v721
    %v769 = vmul.f32 %v708, %v723
    %v770 = vmul.f32 %v709, %v725
    %v771 = vmul.f32 %v710, %v727
    %v772 = vmul.f32 %v711, %v729
    %v773 = vmul.f32 %v712, %v731
    %v774 = vmul.f32 %v713, %v733
    %v775 = vmul.f32 %v714, %v735
    %v776 = vmul.f32 %v715, %v721
    %v777 = vmul.f32 %v716, %v723
    %v779 = vperm.slane %v195, 0
    %v780 = vperm.slane %v195, 1
    %v781 = vrot.slane %v780, 7
    %v782 = vsel %vm90, %v779, %v781
    %v783 = vsel %vm92, %v779, %v781
    %v784 = vrot.slane %v783, 1
    %v785 = vsel %vm95, %v779, %v781
    %v786 = vrot.slane %v785, 2
    %v787 = vsel %vm98, %v779, %v781
    %v788 = vrot.slane %v787, 3
    %v789 = vsel %vm101, %v779, %v781
    %v790 = vrot.slane %v789, 4
    %v791 = vsel %vm104, %v779, %v781
    %v792 = vrot.slane %v791, 5
    %v793 = vsel %vm107, %v779, %v781
    %v794 = vrot.slane %v793, 6
    %v795 = vsel %vm110, %v781, %v779
    %v796 = vrot.slane %v795, 7
    %v805 = vadd.f32 %v744, %v782
    %v806 = vadd.f32 %v745, %v784
    %v807 = vadd.f32 %v746, %v786
    %v808 = vadd.f32 %v747, %v788
    %v809 = vadd.f32 %v748, %v790
    %v810 = vadd.f32 %v749, %v792
    %v811 = vadd.f32 %v750, %v794
    %v812 = vadd.f32 %v751, %v796
    %v813 = vadd.f32 %v752, %v782
    %v814 = vadd.f32 %v753, %v784
    %v815 = vadd.f32 %v754, %v786
    %v816 = vadd.f32 %v755, %v788
    %v817 = vadd.f32 %v756, %v790
    %v818 = vadd.f32 %v757, %v792
    %v819 = vadd.f32 %v758, %v794
    %v820 = vadd.f32 %v759, %v796
    %v821 = vadd.f32 %v760, %v782
    %v822 = vadd.f32 %v761, %v784
    %v823 = vadd.f32 %v762, %v786
    %v824 = vadd.f32 %v763, %v788
    %v825 = vadd.f32 %v764, %v790
    %v826 = vadd.f32 %v765, %v792
    %v827 = vadd.f32 %v766, %v794
    %v828 = vadd.f32 %v767, %v796
    %v829 = vadd.f32 %v768, %v782
    %v830 = vadd.f32 %v769, %v784
    %v831 = vadd.f32 %v770, %v786
    %v832 = vadd.f32 %v771, %v788
    %v833 = vadd.f32 %v772, %v790
    %v834 = vadd.f32 %v773, %v792
    %v835 = vadd.f32 %v774, %v794
    %v836 = vadd.f32 %v775, %v796
    %v837 = vadd.f32 %v776, %v782
    %v838 = vadd.f32 %v777, %v784
    %v839 = vld [vmem:[%s3] sm:$0xff]
    %v840 = vld [vmem:[%s3 + $0x8] sm:$0xff]
    %v841 = vld [vmem:[%s3 + $0x10] sm:$0xff]
    %v842 = vld [vmem:[%s3 + $0x18] sm:$0xff]
    %v843 = vld [vmem:[%s3 + $0x20] sm:$0xff]
    %v844 = vld [vmem:[%s3 + $0x28] sm:$0xff]
    %v845 = vld [vmem:[%s3 + $0x30] sm:$0xff]
    %v846 = vld [vmem:[%s3 + $0x38] sm:$0xff]
    %v847 = vld [vmem:[%s3 + $0x40] sm:$0xff]
    %v848 = vld [vmem:[%s3 + $0x48] sm:$0xff]
    %v849 = vld [vmem:[%s3 + $0x50] sm:$0xff]
    %v850 = vld [vmem:[%s3 + $0x58] sm:$0xff]
    %v851 = vld [vmem:[%s3 + $0x60] sm:$0xff]
    %v852 = vld [vmem:[%s3 + $0x68] sm:$0xff]
    %v853 = vld [vmem:[%s3 + $0x70] sm:$0xff]
    %v854 = vld [vmem:[%s3 + $0x78] sm:$0xff]
    %v855 = vld [vmem:[%s3 + $0x80] sm:$0xff]
    %v856 = vld [vmem:[%s3 + $0x88] sm:$0xff]
    %v857 = vld [vmem:[%s3 + $0x90] sm:$0xff]
    %v858 = vld [vmem:[%s3 + $0x98] sm:$0xff]
    %v859 = vld [vmem:[%s3 + $0xa0] sm:$0xff]
    %v860 = vld [vmem:[%s3 + $0xa8] sm:$0xff]
    %v861 = vld [vmem:[%s3 + $0xb0] sm:$0xff]
    %v862 = vld [vmem:[%s3 + $0xb8] sm:$0xff]
    %v863 = vld [vmem:[%s3 + $0xc0] sm:$0xff]
    %v864 = vld [vmem:[%s3 + $0xc8] sm:$0xff]
    %v865 = vld [vmem:[%s3 + $0xd0] sm:$0xff]
    %v866 = vld [vmem:[%s3 + $0xd8] sm:$0xff]
    %v867 = vld [vmem:[%s3 + $0xe0] sm:$0xff]
    %v868 = vld [vmem:[%s3 + $0xe8] sm:$0xff]
    %v869 = vld [vmem:[%s4] sm:$0x1]
    %v871 = vperm.slane %v869, 0
    %907 = vst [vmem:[#allocation1] ss:$9 sm:$0xff] %v805
    %s908 = scalar_lea.vmem [#allocation1], 1
    %909 = vst [vmem:[%s908] ss:$9 sm:$0xff] %v806
    %s910 = scalar_lea.vmem [#allocation1], 2
    %911 = vst [vmem:[%s910] ss:$9 sm:$0xff] %v807
    %s912 = scalar_lea.vmem [#allocation1], 3
    %913 = vst [vmem:[%s912] ss:$9 sm:$0xff] %v808
    %s914 = scalar_lea.vmem [#allocation1], 4
    %915 = vst [vmem:[%s914] ss:$9 sm:$0xff] %v809
    %s916 = scalar_lea.vmem [#allocation1], 5
    %917 = vst [vmem:[%s916] ss:$9 sm:$0xff] %v810
    %s918 = scalar_lea.vmem [#allocation1], 6
    %919 = vst [vmem:[%s918] ss:$9 sm:$0xff] %v811
    %s920 = scalar_lea.vmem [#allocation1], 7
    %921 = vst [vmem:[%s920] ss:$9 sm:$0xff] %v812
    %v922 = vld [vmem:[#allocation1] sm:$0xff]
    %v923 = vld [vmem:[#allocation1 + $0x9] sm:$0xff]
    %924 = vst [vmem:[#allocation1] ss:$9 sm:$0xff] %v813
    %925 = vst [vmem:[%s908] ss:$9 sm:$0xff] %v814
    %926 = vst [vmem:[%s910] ss:$9 sm:$0xff] %v815
    %927 = vst [vmem:[%s912] ss:$9 sm:$0xff] %v816
    %928 = vst [vmem:[%s914] ss:$9 sm:$0xff] %v817
    %929 = vst [vmem:[%s916] ss:$9 sm:$0xff] %v818
    %930 = vst [vmem:[%s918] ss:$9 sm:$0xff] %v819
    %931 = vst [vmem:[%s920] ss:$9 sm:$0xff] %v820
    %v932 = vld [vmem:[#allocation1] sm:$0xff]
    %v933 = vld [vmem:[#allocation1 + $0x9] sm:$0xff]
    %934 = vst [vmem:[#allocation1] ss:$9 sm:$0xff] %v821
    %935 = vst [vmem:[%s908] ss:$9 sm:$0xff] %v822
    %936 = vst [vmem:[%s910] ss:$9 sm:$0xff] %v823
    %937 = vst [vmem:[%s912] ss:$9 sm:$0xff] %v824
    %938 = vst [vmem:[%s914] ss:$9 sm:$0xff] %v825
    %939 = vst [vmem:[%s916] ss:$9 sm:$0xff] %v826
    %940 = vst [vmem:[%s918] ss:$9 sm:$0xff] %v827
    %941 = vst [vmem:[%s920] ss:$9 sm:$0xff] %v828
    %v942 = vld [vmem:[#allocation1] sm:$0xff]
    %v943 = vld [vmem:[#allocation1 + $0x9] sm:$0xff]
    %944 = vst [vmem:[#allocation1] ss:$9 sm:$0xff] %v829
    %945 = vst [vmem:[%s908] ss:$9 sm:$0xff] %v830
    %946 = vst [vmem:[%s910] ss:$9 sm:$0xff] %v831
    %947 = vst [vmem:[%s912] ss:$9 sm:$0xff] %v832
    %948 = vst [vmem:[%s914] ss:$9 sm:$0xff] %v833
    %949 = vst [vmem:[%s916] ss:$9 sm:$0xff] %v834
    %950 = vst [vmem:[%s918] ss:$9 sm:$0xff] %v835
    %951 = vst [vmem:[%s920] ss:$9 sm:$0xff] %v836
    %v952 = vld [vmem:[#allocation1] sm:$0xff]
    %v953 = vld [vmem:[#allocation1 + $0x9] sm:$0xff]
    %954 = vst [vmem:[#allocation1] ss:$9 sm:$0xff] %v837
    %955 = vst [vmem:[%s908] ss:$9 sm:$0xff] %v838
    %v956 = vld [vmem:[#allocation1] sm:$0xff]
    %v957 = vld [vmem:[#allocation1 + $0x9] sm:$0xff]
    %v963 = vsel %vm257, %v923, 0
    %v965 = vsel %vm257, %v933, 0
    %v967 = vsel %vm257, %v943, 0
    %v969 = vsel %vm257, %v953, 0
    %v971 = vsel %vm257, %v957, 0
    %973 = vmatpush.msra.mxu0 %v854
    %974 = vmatpush.msra.mxu0 %v853
    %975 = vmatpush.msra.mxu0 %v852
    %976 = vmatpush.msra.mxu0 %v851
    %977 = vmatpush.msra.mxu0 %v850
    %978 = vmatpush.msra.mxu0 %v849
    %979 = vmatpush.msra.mxu0 %v848
    %980 = vmatpush.msra.mxu0 %v847
    %981 = vmatpush.msra.mxu0 %v846
    %982 = vmatpush.msra.mxu0 %v845
    %983 = vmatpush.msra.mxu0 %v844
    %984 = vmatpush.msra.mxu0 %v843
    %985 = vmatpush.msra.mxu0 %v842
    %986 = vmatpush.msra.mxu0 %v841
    %987 = vmatpush.msra.mxu0 %v840
    %988 = vmatpush.msra.mxu0 %v839
    %989 = vmatmul.f32.gmra.mxu0 %v922
    %v990 = vpop.f32.mrf.mxu0
    %v991 = vadd.f32 %v871, %v990
    %992 = vmatmul.f32.gmra.mxu0 %v932
    %v993 = vpop.f32.mrf.mxu0
    %v994 = vadd.f32 %v871, %v993
    %995 = vmatmul.f32.gmra.mxu0 %v942
    %v996 = vpop.f32.mrf.mxu0
    %v997 = vadd.f32 %v871, %v996
    %998 = vmatmul.f32.gmra.mxu0 %v952
    %v999 = vpop.f32.mrf.mxu0
    %v1000 = vadd.f32 %v871, %v999
    %1001 = vmatmul.f32.gmra.mxu0 %v956
    %v1002 = vpop.f32.mrf.mxu0
    %v1003 = vadd.f32 %v871, %v1002
    %1004 = vdwg.mxu0
    %1005 = vmatpush.msra.mxu0 0.0
    %1006 = vmatpush.msra.mxu0 0.0
    %1007 = vmatpush.msra.mxu0 %v868
    %1008 = vmatpush.msra.mxu0 %v867
    %1009 = vmatpush.msra.mxu0 %v866
    %1010 = vmatpush.msra.mxu0 %v865
    %1011 = vmatpush.msra.mxu0 %v864
    %1012 = vmatpush.msra.mxu0 %v863
    %1013 = vmatpush.msra.mxu0 %v862
    %1014 = vmatpush.msra.mxu0 %v861
    %1015 = vmatpush.msra.mxu0 %v860
    %1016 = vmatpush.msra.mxu0 %v859
    %1017 = vmatpush.msra.mxu0 %v858
    %1018 = vmatpush.msra.mxu0 %v857
    %1019 = vmatpush.msra.mxu0 %v856
    %1020 = vmatpush.msra.mxu0 %v855
    %1021 = vmatmul.f32.gmra.mxu0 %v963
    %v1022 = vpop.f32.mrf.mxu0
    %v1023 = vadd.f32 %v991, %v1022
    %1024 = vmatmul.f32.gmra.mxu0 %v965
    %v1025 = vpop.f32.mrf.mxu0
    %v1026 = vadd.f32 %v994, %v1025
    %1027 = vmatmul.f32.gmra.mxu0 %v967
    %v1028 = vpop.f32.mrf.mxu0
    %v1029 = vadd.f32 %v997, %v1028
    %1030 = vmatmul.f32.gmra.mxu0 %v969
    %v1031 = vpop.f32.mrf.mxu0
    %v1032 = vadd.f32 %v1000, %v1031
    %1033 = vmatmul.f32.gmra.mxu0 %v971
    %v1034 = vpop.f32.mrf.mxu0
    %v1035 = vadd.f32 %v1003, %v1034
    %1036 = vdwg.mxu0
    %v1042 = vrot.slane %v1023, 1
    %v1043 = vrot.slane %v1023, 2
    %v1044 = vrot.slane %v1023, 3
    %v1045 = vrot.slane %v1023, 4
    %v1046 = vrot.slane %v1023, 5
    %v1047 = vrot.slane %v1023, 6
    %v1048 = vrot.slane %v1023, 7
    %v1049 = vrot.slane %v1026, 1
    %v1050 = vrot.slane %v1026, 2
    %v1051 = vrot.slane %v1026, 3
    %v1052 = vrot.slane %v1026, 4
    %v1053 = vrot.slane %v1026, 5
    %v1054 = vrot.slane %v1026, 6
    %v1055 = vrot.slane %v1026, 7
    %v1056 = vrot.slane %v1029, 1
    %v1057 = vrot.slane %v1029, 2
    %v1058 = vrot.slane %v1029, 3
    %v1059 = vrot.slane %v1029, 4
    %v1060 = vrot.slane %v1029, 5
    %v1061 = vrot.slane %v1029, 6
    %v1062 = vrot.slane %v1029, 7
    %v1063 = vrot.slane %v1032, 1
    %v1064 = vrot.slane %v1032, 2
    %v1065 = vrot.slane %v1032, 3
    %v1066 = vrot.slane %v1032, 4
    %v1067 = vrot.slane %v1032, 5
    %v1068 = vrot.slane %v1032, 6
    %v1069 = vrot.slane %v1032, 7
    %v1070 = vrot.slane %v1035, 1
    %v1071 = vlaneseq
    %v1072 = vshrl.u32 %v1071, 7
    %v1073 = vadd.s32 %v1072, 8
    %v1074 = vadd.s32 %v1072, 16
    %vm1075 = vcmp.eq.s32.totalorder %v1072, 0
    %vm1076 = vcmp.eq.s32.totalorder %v1073, 0
    %vm1077 = vcmp.eq.s32.totalorder %v1074, 0
    %v1078 = vld [vmem:[%s5] sm:$0x1]
    %v1079 = vsel %vm1075, 1, 0
    %v1080 = vsel %vm1076, 1, 0
    %v1081 = vsel %vm1077, 1, 0
    %vm1082 = vcmp.eq.s32.totalorder %v1079, 1
    %vm1083 = vcmp.eq.s32.totalorder %v1080, 1
    %vm1084 = vcmp.eq.s32.totalorder %v1081, 1
    %v1086 = vperm.slane %v1078, 0
    %1088 = vst [vmem:[#allocation1] ss:$9 sm:$0xff] %v1023
    %s1089 = scalar_lea.vmem [#allocation1], 1
    %1090 = vst [vmem:[%s1089] ss:$9 sm:$0xff] %v1042
    %s1091 = scalar_lea.vmem [#allocation1], 2
    %1092 = vst [vmem:[%s1091] ss:$9 sm:$0xff] %v1043
    %s1093 = scalar_lea.vmem [#allocation1], 3
    %1094 = vst [vmem:[%s1093] ss:$9 sm:$0xff] %v1044
    %s1095 = scalar_lea.vmem [#allocation1], 4
    %1096 = vst [vmem:[%s1095] ss:$9 sm:$0xff] %v1045
    %s1097 = scalar_lea.vmem [#allocation1], 5
    %1098 = vst [vmem:[%s1097] ss:$9 sm:$0xff] %v1046
    %s1099 = scalar_lea.vmem [#allocation1], 6
    %1100 = vst [vmem:[%s1099] ss:$9 sm:$0xff] %v1047
    %s1101 = scalar_lea.vmem [#allocation1], 7
    %1102 = vst [vmem:[%s1101] ss:$9 sm:$0xff] %v1048
    %v1103 = vld [vmem:[#allocation1] sm:$0xff]
    %1104 = vst [vmem:[#allocation1] ss:$9 sm:$0xff] %v1026
    %1105 = vst [vmem:[%s1089] ss:$9 sm:$0xff] %v1049
    %1106 = vst [vmem:[%s1091] ss:$9 sm:$0xff] %v1050
    %1107 = vst [vmem:[%s1093] ss:$9 sm:$0xff] %v1051
    %1108 = vst [vmem:[%s1095] ss:$9 sm:$0xff] %v1052
    %1109 = vst [vmem:[%s1097] ss:$9 sm:$0xff] %v1053
    %1110 = vst [vmem:[%s1099] ss:$9 sm:$0xff] %v1054
    %1111 = vst [vmem:[%s1101] ss:$9 sm:$0xff] %v1055
    %v1112 = vld [vmem:[#allocation1] sm:$0xff]
    %1113 = vst [vmem:[#allocation1] ss:$9 sm:$0xff] %v1029
    %v1114 = vld [vmem:[#allocation1] sm:$0xff]
    %1115 = vst [vmem:[#allocation1] ss:$9 sm:$0xff] %v1056
    %1116 = vst [vmem:[%s1089] ss:$9 sm:$0xff] %v1057
    %1117 = vst [vmem:[%s1091] ss:$9 sm:$0xff] %v1058
    %1118 = vst [vmem:[%s1093] ss:$9 sm:$0xff] %v1059
    %1119 = vst [vmem:[%s1095] ss:$9 sm:$0xff] %v1060
    %1120 = vst [vmem:[%s1097] ss:$9 sm:$0xff] %v1061
    %1121 = vst [vmem:[%s1099] ss:$9 sm:$0xff] %v1062
    %1122 = vst [vmem:[%s1101] ss:$9 sm:$0xff] %v1032
    %v1123 = vld [vmem:[#allocation1] sm:$0xff]
    %1124 = vst [vmem:[#allocation1] ss:$9 sm:$0xff] %v1063
    %1125 = vst [vmem:[%s1089] ss:$9 sm:$0xff] %v1064
    %1126 = vst [vmem:[%s1091] ss:$9 sm:$0xff] %v1065
    %1127 = vst [vmem:[%s1093] ss:$9 sm:$0xff] %v1066
    %1128 = vst [vmem:[%s1095] ss:$9 sm:$0xff] %v1067
    %1129 = vst [vmem:[%s1097] ss:$9 sm:$0xff] %v1068
    %1130 = vst [vmem:[%s1099] ss:$9 sm:$0xff] %v1069
    %1131 = vst [vmem:[%s1101] ss:$9 sm:$0xff] %v1035
    %v1132 = vld [vmem:[#allocation1] sm:$0xff]
    %1133 = vst [vmem:[#allocation1] ss:$9 sm:$0xff] %v1070
    %v1134 = vld [vmem:[#allocation1] sm:$0xff]
    %v1141 = vsel %vm1082, %v1086, %v1103
    %v1142 = vsel %vm1083, %v1086, %v1112
    %v1143 = vsel %vm1084, %v1086, %v1114
    %v1144 = vsel %vm1082, %v1086, %v1123
    %v1145 = vsel %vm1083, %v1086, %v1132
    %v1146 = vsel %vm1084, %v1086, %v1134
    %v1147 = vld [vmem:[%s6] sm:$0xff]
    %v1148 = vld [vmem:[%s6 + $0x8] sm:$0xff]
    %v1149 = vld [vmem:[%s6 + $0x10] sm:$0x1]
    %v1150 = vadd.f32 %v1141, %v1147
    %v1151 = vadd.f32 %v1142, %v1148
    %v1152 = vadd.f32 %v1143, %v1149
    %v1153 = vadd.f32 %v1144, %v1147
    %v1154 = vadd.f32 %v1145, %v1148
    %v1155 = vadd.f32 %v1146, %v1149
    %v1162 = vrot.slane %v1150, 1
    %v1163 = vrot.slane %v1150, 2
    %v1164 = vrot.slane %v1150, 3
    %v1165 = vrot.slane %v1150, 4
    %v1166 = vrot.slane %v1150, 5
    %v1167 = vrot.slane %v1150, 6
    %v1168 = vrot.slane %v1150, 7
    %v1169 = vrot.slane %v1151, 1
    %v1170 = vrot.slane %v1151, 2
    %v1171 = vrot.slane %v1151, 3
    %v1172 = vrot.slane %v1151, 4
    %v1173 = vrot.slane %v1151, 5
    %v1174 = vrot.slane %v1151, 6
    %v1175 = vrot.slane %v1151, 7
    %v1176 = vrot.slane %v1153, 1
    %v1177 = vrot.slane %v1153, 2
    %v1178 = vrot.slane %v1153, 3
    %v1179 = vrot.slane %v1153, 4
    %v1180 = vrot.slane %v1153, 5
    %v1181 = vrot.slane %v1153, 6
    %v1182 = vrot.slane %v1153, 7
    %v1183 = vrot.slane %v1154, 1
    %v1184 = vrot.slane %v1154, 2
    %v1185 = vrot.slane %v1154, 3
    %v1186 = vrot.slane %v1154, 4
    %v1187 = vrot.slane %v1154, 5
    %v1188 = vrot.slane %v1154, 6
    %v1189 = vrot.slane %v1154, 7
    %v1218 = vlaneseq
    %v1219 = vand.u32 %v1218, 127
    %vm1220 = vcmp.eq.s32.totalorder %v1072, %v1219
    %vm1221 = vcmp.eq.s32.totalorder %v1073, %v1219
    %vm1222 = vcmp.eq.s32.totalorder %v1074, %v1219
    %v1223 = vld [vmem:[%s7] sm:$0xff]
    %v1224 = vld [vmem:[%s7 + $0x8] sm:$0xff]
    %v1225 = vld [vmem:[%s7 + $0x10] sm:$0xff]
    %v1226 = vld [vmem:[%s7 + $0x18] sm:$0xff]
    %1227 = vst [vmem:[#allocation1] ss:$9 sm:$0xff] %v1150
    %s1228 = scalar_lea.vmem [#allocation1], 1
    %1229 = vst [vmem:[%s1228] ss:$9 sm:$0xff] %v1162
    %s1230 = scalar_lea.vmem [#allocation1], 2
    %1231 = vst [vmem:[%s1230] ss:$9 sm:$0xff] %v1163
    %s1232 = scalar_lea.vmem [#allocation1], 3
    %1233 = vst [vmem:[%s1232] ss:$9 sm:$0xff] %v1164
    %s1234 = scalar_lea.vmem [#allocation1], 4
    %1235 = vst [vmem:[%s1234] ss:$9 sm:$0xff] %v1165
    %s1236 = scalar_lea.vmem [#allocation1], 5
    %1237 = vst [vmem:[%s1236] ss:$9 sm:$0xff] %v1166
    %s1238 = scalar_lea.vmem [#allocation1], 6
    %1239 = vst [vmem:[%s1238] ss:$9 sm:$0xff] %v1167
    %s1240 = scalar_lea.vmem [#allocation1], 7
    %1241 = vst [vmem:[%s1240] ss:$9 sm:$0xff] %v1168
    %v1242 = vld [vmem:[#allocation1] sm:$0xff]
    %1243 = vst [vmem:[#allocation1] ss:$9 sm:$0xff] %v1151
    %1244 = vst [vmem:[%s1228] ss:$9 sm:$0xff] %v1169
    %1245 = vst [vmem:[%s1230] ss:$9 sm:$0xff] %v1170
    %1246 = vst [vmem:[%s1232] ss:$9 sm:$0xff] %v1171
    %1247 = vst [vmem:[%s1234] ss:$9 sm:$0xff] %v1172
    %1248 = vst [vmem:[%s1236] ss:$9 sm:$0xff] %v1173
    %1249 = vst [vmem:[%s1238] ss:$9 sm:$0xff] %v1174
    %1250 = vst [vmem:[%s1240] ss:$9 sm:$0xff] %v1175
    %v1251 = vld [vmem:[#allocation1] sm:$0xff]
    %1252 = vst [vmem:[#allocation1] ss:$9 sm:$0xff] %v1152
    %1253 = vst [vmem:[%s1228] ss:$9 sm:$0xff] %v1153
    %1254 = vst [vmem:[%s1230] ss:$9 sm:$0xff] %v1176
    %1255 = vst [vmem:[%s1232] ss:$9 sm:$0xff] %v1177
    %1256 = vst [vmem:[%s1234] ss:$9 sm:$0xff] %v1178
    %1257 = vst [vmem:[%s1236] ss:$9 sm:$0xff] %v1179
    %1258 = vst [vmem:[%s1238] ss:$9 sm:$0xff] %v1180
    %1259 = vst [vmem:[%s1240] ss:$9 sm:$0xff] %v1181
    %v1260 = vld [vmem:[#allocation1] sm:$0xff]
    %1261 = vst [vmem:[#allocation1] ss:$9 sm:$0xff] %v1182
    %1262 = vst [vmem:[%s1228] ss:$9 sm:$0xff] %v1154
    %1263 = vst [vmem:[%s1230] ss:$9 sm:$0xff] %v1183
    %1264 = vst [vmem:[%s1232] ss:$9 sm:$0xff] %v1184
    %1265 = vst [vmem:[%s1234] ss:$9 sm:$0xff] %v1185
    %1266 = vst [vmem:[%s1236] ss:$9 sm:$0xff] %v1186
    %1267 = vst [vmem:[%s1238] ss:$9 sm:$0xff] %v1187
    %1268 = vst [vmem:[%s1240] ss:$9 sm:$0xff] %v1188
    %v1269 = vld [vmem:[#allocation1] sm:$0xff]
    %1270 = vst [vmem:[#allocation1] ss:$9 sm:$0xff] %v1189
    %1271 = vst [vmem:[%s1228] ss:$9 sm:$0xff] %v1155
    %v1272 = vld [vmem:[#allocation1] sm:$0xff]
    %vm1273 = vcmask 261120
    %v1274 = vsel %vm1273, %v1242, 0
    %v1276 = vsel %vm1273, %v1251, 0
    %v1278 = vsel %vm1273, %v1260, 0
    %v1280 = vsel %vm1273, %v1269, 0
    %v1282 = vsel %vm1273, %v1272, 0
    %1284 = vmatpush.msra.mxu0 0.0
    %1285 = vmatpush.msra.mxu0 0.0
    %1286 = vmatpush.msra.mxu0 0.0
    %1287 = vmatpush.msra.mxu0 0.0
    %1288 = vmatpush.msra.mxu0 0.0
    %1289 = vmatpush.msra.mxu0 0.0
    %1290 = vmatpush.msra.mxu0 0.0
    %1291 = vmatpush.msra.mxu0 0.0
    %1292 = vmatpush.msra.mxu0 0.0
    %1293 = vmatpush.msra.mxu0 0.0
    %1294 = vmatpush.msra.mxu0 0.0
    %1295 = vmatpush.msra.mxu0 0.0
    %1296 = vmatpush.msra.mxu0 %v1226
    %1297 = vmatpush.msra.mxu0 %v1225
    %1298 = vmatpush.msra.mxu0 %v1224
    %1299 = vmatpush.msra.mxu0 %v1223
    %1300 = vmatmul.f32.gmra.mxu0 %v1274
    %v1301 = vpop.f32.mrf.mxu0
    %v1302 = vadd.f32 0.0, %v1301
    %1303 = vmatmul.f32.gmra.mxu0 %v1276
    %v1304 = vpop.f32.mrf.mxu0
    %v1305 = vadd.f32 0.0, %v1304
    %1306 = vmatmul.f32.gmra.mxu0 %v1278
    %v1307 = vpop.f32.mrf.mxu0
    %v1308 = vadd.f32 0.0, %v1307
    %1309 = vmatmul.f32.gmra.mxu0 %v1280
    %v1310 = vpop.f32.mrf.mxu0
    %v1311 = vadd.f32 0.0, %v1310
    %1312 = vmatmul.f32.gmra.mxu0 %v1282
    %v1313 = vpop.f32.mrf.mxu0
    %v1314 = vadd.f32 0.0, %v1313
    %1315 = vdwg.mxu0
    %v1321 = vrot.slane %v1302, 1
    %v1322 = vrot.slane %v1302, 2
    %v1323 = vrot.slane %v1302, 3
    %v1324 = vrot.slane %v1302, 4
    %v1325 = vrot.slane %v1302, 5
    %v1326 = vrot.slane %v1302, 6
    %v1327 = vrot.slane %v1302, 7
    %v1328 = vrot.slane %v1305, 1
    %v1329 = vrot.slane %v1305, 2
    %v1330 = vrot.slane %v1305, 3
    %v1331 = vrot.slane %v1305, 4
    %v1332 = vrot.slane %v1305, 5
    %v1333 = vrot.slane %v1305, 6
    %v1334 = vrot.slane %v1305, 7
    %v1335 = vrot.slane %v1308, 1
    %v1336 = vrot.slane %v1308, 2
    %v1337 = vrot.slane %v1308, 3
    %v1338 = vrot.slane %v1308, 4
    %v1339 = vrot.slane %v1308, 5
    %v1340 = vrot.slane %v1308, 6
    %v1341 = vrot.slane %v1308, 7
    %v1342 = vrot.slane %v1311, 1
    %v1343 = vrot.slane %v1311, 2
    %v1344 = vrot.slane %v1311, 3
    %v1345 = vrot.slane %v1311, 4
    %v1346 = vrot.slane %v1311, 5
    %v1347 = vrot.slane %v1311, 6
    %v1348 = vrot.slane %v1311, 7
    %v1349 = vrot.slane %v1314, 1
    %v1350 = vld [vmem:[%s8] sm:$0xff]
    %v1351 = vld [vmem:[%s8 + $0x8] sm:$0xff]
    %v1352 = vld [vmem:[%s8 + $0x10] sm:$0xff]
    %v1353 = vld [vmem:[%s8 + $0x18] sm:$0xff]
    %1354 = vst [vmem:[#allocation1] ss:$9 sm:$0xff] %v1302
    %s1355 = scalar_lea.vmem [#allocation1], 1
    %1356 = vst [vmem:[%s1355] ss:$9 sm:$0xff] %v1321
    %s1357 = scalar_lea.vmem [#allocation1], 2
    %1358 = vst [vmem:[%s1357] ss:$9 sm:$0xff] %v1322
    %s1359 = scalar_lea.vmem [#allocation1], 3
    %1360 = vst [vmem:[%s1359] ss:$9 sm:$0xff] %v1323
    %s1361 = scalar_lea.vmem [#allocation1], 4
    %1362 = vst [vmem:[%s1361] ss:$9 sm:$0xff] %v1324
    %s1363 = scalar_lea.vmem [#allocation1], 5
    %1364 = vst [vmem:[%s1363] ss:$9 sm:$0xff] %v1325
    %s1365 = scalar_lea.vmem [#allocation1], 6
    %1366 = vst [vmem:[%s1365] ss:$9 sm:$0xff] %v1326
    %s1367 = scalar_lea.vmem [#allocation1], 7
    %1368 = vst [vmem:[%s1367] ss:$9 sm:$0xff] %v1327
    %v1369 = vld [vmem:[#allocation1] sm:$0xff]
    %1370 = vst [vmem:[#allocation1] ss:$9 sm:$0xff] %v1305
    %1371 = vst [vmem:[%s1355] ss:$9 sm:$0xff] %v1328
    %1372 = vst [vmem:[%s1357] ss:$9 sm:$0xff] %v1329
    %1373 = vst [vmem:[%s1359] ss:$9 sm:$0xff] %v1330
    %1374 = vst [vmem:[%s1361] ss:$9 sm:$0xff] %v1331
    %1375 = vst [vmem:[%s1363] ss:$9 sm:$0xff] %v1332
    %1376 = vst [vmem:[%s1365] ss:$9 sm:$0xff] %v1333
    %1377 = vst [vmem:[%s1367] ss:$9 sm:$0xff] %v1334
    %v1378 = vld [vmem:[#allocation1] sm:$0xff]
    %1379 = vst [vmem:[#allocation1] ss:$9 sm:$0xff] %v1308
    %v1380 = vld [vmem:[#allocation1] sm:$0xff]
    %1381 = vst [vmem:[#allocation1] ss:$9 sm:$0xff] %v1302
    %s1382 = scalar_lea.vmem [#allocation1], 1
    %1383 = vst [vmem:[%s1382] ss:$9 sm:$0xff] %v1321
    %s1384 = scalar_lea.vmem [#allocation1], 2
    %1385 = vst [vmem:[%s1384] ss:$9 sm:$0xff] %v1322
    %s1386 = scalar_lea.vmem [#allocation1], 3
    %1387 = vst [vmem:[%s1386] ss:$9 sm:$0xff] %v1323
    %s1388 = scalar_lea.vmem [#allocation1], 4
    %1389 = vst [vmem:[%s1388] ss:$9 sm:$0xff] %v1324
    %s1390 = scalar_lea.vmem [#allocation1], 5
    %1391 = vst [vmem:[%s1390] ss:$9 sm:$0xff] %v1325
    %s1392 = scalar_lea.vmem [#allocation1], 6
    %1393 = vst [vmem:[%s1392] ss:$9 sm:$0xff] %v1326
    %s1394 = scalar_lea.vmem [#allocation1], 7
    %1395 = vst [vmem:[%s1394] ss:$9 sm:$0xff] %v1327
    %v1396 = vld [vmem:[#allocation1] sm:$0xff]
    %1397 = vst [vmem:[#allocation1] ss:$9 sm:$0xff] %v1305
    %1398 = vst [vmem:[%s1382] ss:$9 sm:$0xff] %v1328
    %1399 = vst [vmem:[%s1384] ss:$9 sm:$0xff] %v1329
    %1400 = vst [vmem:[%s1386] ss:$9 sm:$0xff] %v1330
    %1401 = vst [vmem:[%s1388] ss:$9 sm:$0xff] %v1331
    %1402 = vst [vmem:[%s1390] ss:$9 sm:$0xff] %v1332
    %1403 = vst [vmem:[%s1392] ss:$9 sm:$0xff] %v1333
    %1404 = vst [vmem:[%s1394] ss:$9 sm:$0xff] %v1334
    %v1405 = vld [vmem:[#allocation1] sm:$0xff]
    %1406 = vst [vmem:[#allocation1] ss:$9 sm:$0xff] %v1308
    %v1407 = vld [vmem:[#allocation1] sm:$0xff]
    %1408 = vrot.lane.b32.xlu0 %v1396, 96
    %v1409 = vpop.permute.xlu0 %1408
    %1410 = vrot.lane.b32.xlu0 %v1405, 96
    %v1411 = vpop.permute.xlu0 %1410
    %1412 = vrot.lane.b32.xlu0 %v1407, 96
    %v1413 = vpop.permute.xlu0 %1412
    %vm1414 = vcmask 64512
    %v1415 = vsel %vm1414, %v1369, 0
    %v1417 = vsel %vm1414, %v1378, 0
    %v1419 = vsel %vm1414, %v1380, 0
    %v1421 = vsel %vm1414, %v1409, 0
    %v1423 = vsel %vm1414, %v1411, 0
    %v1425 = vsel %vm1414, %v1413, 0
    %1427 = vmatpush.xpose.msra.mxu0 0.0
    %1428 = vmatpush.xpose.msra.mxu0 0.0
    %1429 = vmatpush.xpose.msra.mxu0 0.0
    %1430 = vmatpush.xpose.msra.mxu0 0.0
    %1431 = vmatpush.xpose.msra.mxu0 0.0
    %1432 = vmatpush.xpose.msra.mxu0 0.0
    %1433 = vmatpush.xpose.msra.mxu0 0.0
    %1434 = vmatpush.xpose.msra.mxu0 0.0
    %1435 = vmatpush.xpose.msra.mxu0 0.0
    %1436 = vmatpush.xpose.msra.mxu0 0.0
    %1437 = vmatpush.xpose.msra.mxu0 0.0
    %1438 = vmatpush.xpose.msra.mxu0 0.0
    %1439 = vmatpush.xpose.msra.mxu0 0.0
    %1440 = vmatpush.xpose.msra.mxu0 %v1425
    %1441 = vmatpush.xpose.msra.mxu0 %v1423
    %1442 = vmatpush.xpose.msra.mxu0 %v1421
    %1443 = vmatmul.f32.gmra.mxu0 %v1415
    %v1444 = vpop.f32.mrf.mxu0
    %v1445 = vadd.f32 0.0, %v1444
    %1446 = vmatmul.f32.gmra.mxu0 %v1417
    %v1447 = vpop.f32.mrf.mxu0
    %v1448 = vadd.f32 0.0, %v1447
    %1449 = vmatmul.f32.gmra.mxu0 %v1419
    %v1450 = vpop.f32.mrf.mxu0
    %v1451 = vadd.f32 0.0, %v1450
    %1452 = vdwg.mxu0
    %1453 = vst [vmem:[#allocation1] ss:$9 sm:$0xff] %v1335
    %s1454 = scalar_lea.vmem [#allocation1], 1
    %1455 = vst [vmem:[%s1454] ss:$9 sm:$0xff] %v1336
    %s1456 = scalar_lea.vmem [#allocation1], 2
    %1457 = vst [vmem:[%s1456] ss:$9 sm:$0xff] %v1337
    %s1458 = scalar_lea.vmem [#allocation1], 3
    %1459 = vst [vmem:[%s1458] ss:$9 sm:$0xff] %v1338
    %s1460 = scalar_lea.vmem [#allocation1], 4
    %1461 = vst [vmem:[%s1460] ss:$9 sm:$0xff] %v1339
    %s1462 = scalar_lea.vmem [#allocation1], 5
    %1463 = vst [vmem:[%s1462] ss:$9 sm:$0xff] %v1340
    %s1464 = scalar_lea.vmem [#allocation1], 6
    %1465 = vst [vmem:[%s1464] ss:$9 sm:$0xff] %v1341
    %s1466 = scalar_lea.vmem [#allocation1], 7
    %1467 = vst [vmem:[%s1466] ss:$9 sm:$0xff] %v1311
    %v1468 = vld [vmem:[#allocation1] sm:$0xff]
    %1469 = vst [vmem:[#allocation1] ss:$9 sm:$0xff] %v1342
    %1470 = vst [vmem:[%s1454] ss:$9 sm:$0xff] %v1343
    %1471 = vst [vmem:[%s1456] ss:$9 sm:$0xff] %v1344
    %1472 = vst [vmem:[%s1458] ss:$9 sm:$0xff] %v1345
    %1473 = vst [vmem:[%s1460] ss:$9 sm:$0xff] %v1346
    %1474 = vst [vmem:[%s1462] ss:$9 sm:$0xff] %v1347
    %1475 = vst [vmem:[%s1464] ss:$9 sm:$0xff] %v1348
    %1476 = vst [vmem:[%s1466] ss:$9 sm:$0xff] %v1314
    %v1477 = vld [vmem:[#allocation1] sm:$0xff]
    %1478 = vst [vmem:[#allocation1] ss:$9 sm:$0xff] %v1349
    %v1479 = vld [vmem:[#allocation1] sm:$0xff]
    %1480 = vst [vmem:[#allocation1] ss:$9 sm:$0xff] %v1335
    %s1481 = scalar_lea.vmem [#allocation1], 1
    %1482 = vst [vmem:[%s1481] ss:$9 sm:$0xff] %v1336
    %s1483 = scalar_lea.vmem [#allocation1], 2
    %1484 = vst [vmem:[%s1483] ss:$9 sm:$0xff] %v1337
    %s1485 = scalar_lea.vmem [#allocation1], 3
    %1486 = vst [vmem:[%s1485] ss:$9 sm:$0xff] %v1338
    %s1487 = scalar_lea.vmem [#allocation1], 4
    %1488 = vst [vmem:[%s1487] ss:$9 sm:$0xff] %v1339
    %s1489 = scalar_lea.vmem [#allocation1], 5
    %1490 = vst [vmem:[%s1489] ss:$9 sm:$0xff] %v1340
    %s1491 = scalar_lea.vmem [#allocation1], 6
    %1492 = vst [vmem:[%s1491] ss:$9 sm:$0xff] %v1341
    %s1493 = scalar_lea.vmem [#allocation1], 7
    %1494 = vst [vmem:[%s1493] ss:$9 sm:$0xff] %v1311
    %v1495 = vld [vmem:[#allocation1] sm:$0xff]
    %1496 = vst [vmem:[#allocation1] ss:$9 sm:$0xff] %v1342
    %1497 = vst [vmem:[%s1481] ss:$9 sm:$0xff] %v1343
    %1498 = vst [vmem:[%s1483] ss:$9 sm:$0xff] %v1344
    %1499 = vst [vmem:[%s1485] ss:$9 sm:$0xff] %v1345
    %1500 = vst [vmem:[%s1487] ss:$9 sm:$0xff] %v1346
    %1501 = vst [vmem:[%s1489] ss:$9 sm:$0xff] %v1347
    %1502 = vst [vmem:[%s1491] ss:$9 sm:$0xff] %v1348
    %1503 = vst [vmem:[%s1493] ss:$9 sm:$0xff] %v1314
    %v1504 = vld [vmem:[#allocation1] sm:$0xff]
    %1505 = vst [vmem:[#allocation1] ss:$9 sm:$0xff] %v1349
    %v1506 = vld [vmem:[#allocation1] sm:$0xff]
    %1507 = vrot.lane.b32.xlu0 %v1495, 96
    %v1508 = vpop.permute.xlu0 %1507
    %1509 = vrot.lane.b32.xlu0 %v1504, 96
    %v1510 = vpop.permute.xlu0 %1509
    %1511 = vrot.lane.b32.xlu0 %v1506, 96
    %v1512 = vpop.permute.xlu0 %1511
    %v1513 = vsel %vm1414, %v1468, 0
    %v1515 = vsel %vm1414, %v1477, 0
    %v1517 = vsel %vm1414, %v1479, 0
    %v1519 = vsel %vm1414, %v1508, 0
    %v1521 = vsel %vm1414, %v1510, 0
    %v1523 = vsel %vm1414, %v1512, 0
    %1525 = vmatpush.xpose.msra.mxu0 0.0
    %1526 = vmatpush.xpose.msra.mxu0 0.0
    %1527 = vmatpush.xpose.msra.mxu0 0.0
    %1528 = vmatpush.xpose.msra.mxu0 0.0
    %1529 = vmatpush.xpose.msra.mxu0 0.0
    %1530 = vmatpush.xpose.msra.mxu0 0.0
    %1531 = vmatpush.xpose.msra.mxu0 0.0
    %1532 = vmatpush.xpose.msra.mxu0 0.0
    %1533 = vmatpush.xpose.msra.mxu0 0.0
    %1534 = vmatpush.xpose.msra.mxu0 0.0
    %1535 = vmatpush.xpose.msra.mxu0 0.0
    %1536 = vmatpush.xpose.msra.mxu0 0.0
    %1537 = vmatpush.xpose.msra.mxu0 0.0
    %1538 = vmatpush.xpose.msra.mxu0 %v1523
    %1539 = vmatpush.xpose.msra.mxu0 %v1521
    %1540 = vmatpush.xpose.msra.mxu0 %v1519
    %1541 = vmatmul.f32.gmra.mxu0 %v1513
    %v1542 = vpop.f32.mrf.mxu0
    %v1543 = vadd.f32 0.0, %v1542
    %1544 = vmatmul.f32.gmra.mxu0 %v1515
    %v1545 = vpop.f32.mrf.mxu0
    %v1546 = vadd.f32 0.0, %v1545
    %1547 = vmatmul.f32.gmra.mxu0 %v1517
    %v1548 = vpop.f32.mrf.mxu0
    %v1549 = vadd.f32 0.0, %v1548
    %1550 = vdwg.mxu0
    %v1551 = vmul.f32 %v1445, 0.35355338
    %v1552 = vmul.f32 %v1448, 0.35355338
    %v1553 = vmul.f32 %v1451, 0.35355338
    %v1554 = vmul.f32 %v1543, 0.35355338
    %v1555 = vmul.f32 %v1546, 0.35355338
    %v1556 = vmul.f32 %v1549, 0.35355338
    %v1557 = vsel %vm1220, 1, 0
    %v1558 = vsel %vm1221, 1, 0
    %v1559 = vsel %vm1222, 1, 0
    %vm1560 = vcmp.eq.s32.totalorder %v1557, 1
    %vm1561 = vcmp.eq.s32.totalorder %v1558, 1
    %vm1562 = vcmp.eq.s32.totalorder %v1559, 1
    %v1563 = vsel %vm1560, -3.4028235e+38, %v1551
    %v1564 = vsel %vm1561, -3.4028235e+38, %v1552
    %v1565 = vsel %vm1562, -3.4028235e+38, %v1553
    %v1566 = vsel %vm1560, -3.4028235e+38, %v1554
    %v1567 = vsel %vm1561, -3.4028235e+38, %v1555
    %v1568 = vsel %vm1562, -3.4028235e+38, %v1556
    %vm1569 = vcmask 138240
    %v1570 = vsel %vm1569, %v1563, -inf
    %1571 = vmax.xlane.f32.xlu0 %v1570
    %v1572 = vpop.xlane.xlu0 %1571
    %v1573 = vsel %vm1569, %v1564, -inf
    %1574 = vmax.xlane.f32.xlu0 %v1573
    %v1575 = vpop.xlane.xlu0 %1574
    %vm1576 = vcmask 131072
    %v1577 = vsel %vm1576, %v1565, -inf
    %1578 = vmax.xlane.f32.xlu0 %v1577
    %v1579 = vpop.xlane.xlu0 %1578
    %v1580 = vsel %vm1569, %v1566, -inf
    %1581 = vmax.xlane.f32.xlu0 %v1580
    %v1582 = vpop.xlane.xlu0 %1581
    %v1583 = vsel %vm1569, %v1567, -inf
    %1584 = vmax.xlane.f32.xlu0 %v1583
    %v1585 = vpop.xlane.xlu0 %1584
    %v1586 = vsel %vm1576, %v1568, -inf
    %1587 = vmax.xlane.f32.xlu0 %v1586
    %v1588 = vpop.xlane.xlu0 %1587
    %v1589 = vsub.f32 %v1563, %v1572
    %v1590 = vsub.f32 %v1564, %v1575
    %v1591 = vsub.f32 %v1565, %v1579
    %v1592 = vsub.f32 %v1566, %v1582
    %v1593 = vsub.f32 %v1567, %v1585
    %v1594 = vsub.f32 %v1568, %v1588
    %v1595 = vmul.f32 %v1589, 1.442695
    %v1596 = vpow.pop %v1595
    %v1597 = vmul.f32 %v1590, 1.442695
    %v1598 = vpow.pop %v1597
    %v1599 = vmul.f32 %v1591, 1.442695
    %v1600 = vpow.pop %v1599
    %v1601 = vmul.f32 %v1592, 1.442695
    %v1602 = vpow.pop %v1601
    %v1603 = vmul.f32 %v1593, 1.442695
    %v1604 = vpow.pop %v1603
    %v1605 = vmul.f32 %v1594, 1.442695
    %v1606 = vpow.pop %v1605
    %v1607 = vsel %vm1569, %v1596, 0.0
    %1608 = vadd.xlane.f32.xlu0 %v1607
    %v1609 = vpop.xlane.xlu0 %1608
    %v1610 = vsel %vm1569, %v1598, 0.0
    %1611 = vadd.xlane.f32.xlu0 %v1610
    %v1612 = vpop.xlane.xlu0 %1611
    %v1613 = vsel %vm1576, %v1600, 0.0
    %1614 = vadd.xlane.f32.xlu0 %v1613
    %v1615 = vpop.xlane.xlu0 %1614
    %v1616 = vsel %vm1569, %v1602, 0.0
    %1617 = vadd.xlane.f32.xlu0 %v1616
    %v1618 = vpop.xlane.xlu0 %1617
    %v1619 = vsel %vm1569, %v1604, 0.0
    %1620 = vadd.xlane.f32.xlu0 %v1619
    %v1621 = vpop.xlane.xlu0 %1620
    %v1622 = vsel %vm1576, %v1606, 0.0
    %1623 = vadd.xlane.f32.xlu0 %v1622
    %v1624 = vpop.xlane.xlu0 %1623
    %v1625 = vrcp.pop %v1609
    %v1626 = vrcp.pop %v1612
    %v1627 = vrcp.pop %v1615
    %v1628 = vrcp.pop %v1618
    %v1629 = vrcp.pop %v1621
    %v1630 = vrcp.pop %v1624
    %v1631 = vmul.f32 %v1596, %v1625
    %v1632 = vmul.f32 %v1598, %v1626
    %v1633 = vmul.f32 %v1600, %v1627
    %v1634 = vmul.f32 %v1602, %v1628
    %v1635 = vmul.f32 %v1604, %v1629
    %v1636 = vmul.f32 %v1606, %v1630
    %1637 = vst [vmem:[#allocation1] ss:$9 sm:$0xff] %v1302
    %s1638 = scalar_lea.vmem [#allocation1], 1
    %1639 = vst [vmem:[%s1638] ss:$9 sm:$0xff] %v1321
    %s1640 = scalar_lea.vmem [#allocation1], 2
    %1641 = vst [vmem:[%s1640] ss:$9 sm:$0xff] %v1322
    %s1642 = scalar_lea.vmem [#allocation1], 3
    %1643 = vst [vmem:[%s1642] ss:$9 sm:$0xff] %v1323
    %s1644 = scalar_lea.vmem [#allocation1], 4
    %1645 = vst [vmem:[%s1644] ss:$9 sm:$0xff] %v1324
    %s1646 = scalar_lea.vmem [#allocation1], 5
    %1647 = vst [vmem:[%s1646] ss:$9 sm:$0xff] %v1325
    %s1648 = scalar_lea.vmem [#allocation1], 6
    %1649 = vst [vmem:[%s1648] ss:$9 sm:$0xff] %v1326
    %s1650 = scalar_lea.vmem [#allocation1], 7
    %1651 = vst [vmem:[%s1650] ss:$9 sm:$0xff] %v1327
    %v1652 = vld [vmem:[#allocation1] sm:$0xff]
    %1653 = vst [vmem:[#allocation1] ss:$9 sm:$0xff] %v1305
    %1654 = vst [vmem:[%s1638] ss:$9 sm:$0xff] %v1328
    %1655 = vst [vmem:[%s1640] ss:$9 sm:$0xff] %v1329
    %1656 = vst [vmem:[%s1642] ss:$9 sm:$0xff] %v1330
    %1657 = vst [vmem:[%s1644] ss:$9 sm:$0xff] %v1331
    %1658 = vst [vmem:[%s1646] ss:$9 sm:$0xff] %v1332
    %1659 = vst [vmem:[%s1648] ss:$9 sm:$0xff] %v1333
    %1660 = vst [vmem:[%s1650] ss:$9 sm:$0xff] %v1334
    %v1661 = vld [vmem:[#allocation1] sm:$0xff]
    %1662 = vst [vmem:[#allocation1] ss:$9 sm:$0xff] %v1308
    %v1663 = vld [vmem:[#allocation1] sm:$0xff]
    %1664 = vrot.lane.b32.xlu0 %v1652, 64
    %v1665 = vpop.permute.xlu0 %1664
    %1666 = vrot.lane.b32.xlu0 %v1661, 64
    %v1667 = vpop.permute.xlu0 %1666
    %1668 = vrot.lane.b32.xlu0 %v1663, 64
    %v1669 = vpop.permute.xlu0 %1668
    %v1673 = vsel %vm1569, %v1631, 0
    %v1676 = vsel %vm1569, %v1632, 0
    %v1679 = vsel %vm1569, %v1633, 0
    %v1681 = vsel %vm90, %v1669, 0
    %1683 = vmatpush.msra.mxu0 0.0
    %1684 = vmatpush.msra.mxu0 0.0
    %1685 = vmatpush.msra.mxu0 0.0
    %1686 = vmatpush.msra.mxu0 0.0
    %1687 = vmatpush.msra.mxu0 0.0
    %1688 = vmatpush.msra.mxu0 0.0
    %1689 = vmatpush.msra.mxu0 0.0
    %1690 = vmatpush.msra.mxu0 0.0
    %1691 = vmatpush.msra.mxu0 0.0
    %1692 = vmatpush.msra.mxu0 0.0
    %1693 = vmatpush.msra.mxu0 0.0
    %1694 = vmatpush.msra.mxu0 0.0
    %1695 = vmatpush.msra.mxu0 0.0
    %1696 = vmatpush.msra.mxu0 %v1681
    %1697 = vmatpush.msra.mxu0 %v1667
    %1698 = vmatpush.msra.mxu0 %v1665
    %1699 = vmatmul.f32.gmra.mxu0 %v1673
    %v1700 = vpop.f32.mrf.mxu0
    %v1701 = vadd.f32 0.0, %v1700
    %1702 = vmatmul.f32.gmra.mxu0 %v1676
    %v1703 = vpop.f32.mrf.mxu0
    %v1704 = vadd.f32 0.0, %v1703
    %1705 = vmatmul.f32.gmra.mxu0 %v1679
    %v1706 = vpop.f32.mrf.mxu0
    %v1707 = vadd.f32 0.0, %v1706
    %1708 = vdwg.mxu0
    %1709 = vst [vmem:[#allocation1] ss:$9 sm:$0xff] %v1335
    %s1710 = scalar_lea.vmem [#allocation1], 1
    %1711 = vst [vmem:[%s1710] ss:$9 sm:$0xff] %v1336
    %s1712 = scalar_lea.vmem [#allocation1], 2
    %1713 = vst [vmem:[%s1712] ss:$9 sm:$0xff] %v1337
    %s1714 = scalar_lea.vmem [#allocation1], 3
    %1715 = vst [vmem:[%s1714] ss:$9 sm:$0xff] %v1338
    %s1716 = scalar_lea.vmem [#allocation1], 4
    %1717 = vst [vmem:[%s1716] ss:$9 sm:$0xff] %v1339
    %s1718 = scalar_lea.vmem [#allocation1], 5
    %1719 = vst [vmem:[%s1718] ss:$9 sm:$0xff] %v1340
    %s1720 = scalar_lea.vmem [#allocation1], 6
    %1721 = vst [vmem:[%s1720] ss:$9 sm:$0xff] %v1341
    %s1722 = scalar_lea.vmem [#allocation1], 7
    %1723 = vst [vmem:[%s1722] ss:$9 sm:$0xff] %v1311
    %v1724 = vld [vmem:[#allocation1] sm:$0xff]
    %1725 = vst [vmem:[#allocation1] ss:$9 sm:$0xff] %v1342
    %1726 = vst [vmem:[%s1710] ss:$9 sm:$0xff] %v1343
    %1727 = vst [vmem:[%s1712] ss:$9 sm:$0xff] %v1344
    %1728 = vst [vmem:[%s1714] ss:$9 sm:$0xff] %v1345
    %1729 = vst [vmem:[%s1716] ss:$9 sm:$0xff] %v1346
    %1730 = vst [vmem:[%s1718] ss:$9 sm:$0xff] %v1347
    %1731 = vst [vmem:[%s1720] ss:$9 sm:$0xff] %v1348
    %1732 = vst [vmem:[%s1722] ss:$9 sm:$0xff] %v1314
    %v1733 = vld [vmem:[#allocation1] sm:$0xff]
    %1734 = vst [vmem:[#allocation1] ss:$9 sm:$0xff] %v1349
    %v1735 = vld [vmem:[#allocation1] sm:$0xff]
    %1736 = vrot.lane.b32.xlu0 %v1724, 64
    %v1737 = vpop.permute.xlu0 %1736
    %1738 = vrot.lane.b32.xlu0 %v1733, 64
    %v1739 = vpop.permute.xlu0 %1738
    %1740 = vrot.lane.b32.xlu0 %v1735, 64
    %v1741 = vpop.permute.xlu0 %1740
    %v1745 = vsel %vm1569, %v1634, 0
    %v1748 = vsel %vm1569, %v1635, 0
    %v1751 = vsel %vm1569, %v1636, 0
    %v1753 = vsel %vm90, %v1741, 0
    %1755 = vmatpush.msra.mxu0 0.0
    %1756 = vmatpush.msra.mxu0 0.0
    %1757 = vmatpush.msra.mxu0 0.0
    %1758 = vmatpush.msra.mxu0 0.0
    %1759 = vmatpush.msra.mxu0 0.0
    %1760 = vmatpush.msra.mxu0 0.0
    %1761 = vmatpush.msra.mxu0 0.0
    %1762 = vmatpush.msra.mxu0 0.0
    %1763 = vmatpush.msra.mxu0 0.0
    %1764 = vmatpush.msra.mxu0 0.0
    %1765 = vmatpush.msra.mxu0 0.0
    %1766 = vmatpush.msra.mxu0 0.0
    %1767 = vmatpush.msra.mxu0 0.0
    %1768 = vmatpush.msra.mxu0 %v1753
    %1769 = vmatpush.msra.mxu0 %v1739
    %1770 = vmatpush.msra.mxu0 %v1737
    %1771 = vmatmul.f32.gmra.mxu0 %v1745
    %v1772 = vpop.f32.mrf.mxu0
    %v1773 = vadd.f32 0.0, %v1772
    %1774 = vmatmul.f32.gmra.mxu0 %v1748
    %v1775 = vpop.f32.mrf.mxu0
    %v1776 = vadd.f32 0.0, %v1775
    %1777 = vmatmul.f32.gmra.mxu0 %v1751
    %v1778 = vpop.f32.mrf.mxu0
    %v1779 = vadd.f32 0.0, %v1778
    %1780 = vdwg.mxu0
    %v1787 = vrot.slane %v1701, 1
    %v1788 = vrot.slane %v1701, 2
    %v1789 = vrot.slane %v1701, 3
    %v1790 = vrot.slane %v1701, 4
    %v1791 = vrot.slane %v1701, 5
    %v1792 = vrot.slane %v1701, 6
    %v1793 = vrot.slane %v1701, 7
    %v1794 = vrot.slane %v1704, 1
    %v1795 = vrot.slane %v1704, 2
    %v1796 = vrot.slane %v1704, 3
    %v1797 = vrot.slane %v1704, 4
    %v1798 = vrot.slane %v1704, 5
    %v1799 = vrot.slane %v1704, 6
    %v1800 = vrot.slane %v1704, 7
    %v1801 = vrot.slane %v1773, 1
    %v1802 = vrot.slane %v1773, 2
    %v1803 = vrot.slane %v1773, 3
    %v1804 = vrot.slane %v1773, 4
    %v1805 = vrot.slane %v1773, 5
    %v1806 = vrot.slane %v1773, 6
    %v1807 = vrot.slane %v1773, 7
    %v1808 = vrot.slane %v1776, 1
    %v1809 = vrot.slane %v1776, 2
    %v1810 = vrot.slane %v1776, 3
    %v1811 = vrot.slane %v1776, 4
    %v1812 = vrot.slane %v1776, 5
    %v1813 = vrot.slane %v1776, 6
    %v1814 = vrot.slane %v1776, 7
    %1815 = vst [vmem:[#allocation1] ss:$9 sm:$0xff] %v1302
    %s1816 = scalar_lea.vmem [#allocation1], 1
    %1817 = vst [vmem:[%s1816] ss:$9 sm:$0xff] %v1321
    %s1818 = scalar_lea.vmem [#allocation1], 2
    %1819 = vst [vmem:[%s1818] ss:$9 sm:$0xff] %v1322
    %s1820 = scalar_lea.vmem [#allocation1], 3
    %1821 = vst [vmem:[%s1820] ss:$9 sm:$0xff] %v1323
    %s1822 = scalar_lea.vmem [#allocation1], 4
    %1823 = vst [vmem:[%s1822] ss:$9 sm:$0xff] %v1324
    %s1824 = scalar_lea.vmem [#allocation1], 5
    %1825 = vst [vmem:[%s1824] ss:$9 sm:$0xff] %v1325
    %s1826 = scalar_lea.vmem [#allocation1], 6
    %1827 = vst [vmem:[%s1826] ss:$9 sm:$0xff] %v1326
    %s1828 = scalar_lea.vmem [#allocation1], 7
    %1829 = vst [vmem:[%s1828] ss:$9 sm:$0xff] %v1327
    %v1830 = vld [vmem:[#allocation1] sm:$0xff]
    %1831 = vst [vmem:[#allocation1] ss:$9 sm:$0xff] %v1305
    %1832 = vst [vmem:[%s1816] ss:$9 sm:$0xff] %v1328
    %1833 = vst [vmem:[%s1818] ss:$9 sm:$0xff] %v1329
    %1834 = vst [vmem:[%s1820] ss:$9 sm:$0xff] %v1330
    %1835 = vst [vmem:[%s1822] ss:$9 sm:$0xff] %v1331
    %1836 = vst [vmem:[%s1824] ss:$9 sm:$0xff] %v1332
    %1837 = vst [vmem:[%s1826] ss:$9 sm:$0xff] %v1333
    %1838 = vst [vmem:[%s1828] ss:$9 sm:$0xff] %v1334
    %v1839 = vld [vmem:[#allocation1] sm:$0xff]
    %1840 = vst [vmem:[#allocation1] ss:$9 sm:$0xff] %v1308
    %v1841 = vld [vmem:[#allocation1] sm:$0xff]
    %1842 = vrot.lane.b32.xlu0 %v1830, 120
    %v1843 = vpop.permute.xlu0 %1842
    %1844 = vrot.lane.b32.xlu0 %v1839, 120
    %v1845 = vpop.permute.xlu0 %1844
    %1846 = vrot.lane.b32.xlu0 %v1841, 120
    %v1847 = vpop.permute.xlu0 %1846
    %1848 = vst [vmem:[#allocation1] ss:$9 sm:$0xff] %v1302
    %s1849 = scalar_lea.vmem [#allocation1], 1
    %1850 = vst [vmem:[%s1849] ss:$9 sm:$0xff] %v1321
    %s1851 = scalar_lea.vmem [#allocation1], 2
    %1852 = vst [vmem:[%s1851] ss:$9 sm:$0xff] %v1322
    %s1853 = scalar_lea.vmem [#allocation1], 3
    %1854 = vst [vmem:[%s1853] ss:$9 sm:$0xff] %v1323
    %s1855 = scalar_lea.vmem [#allocation1], 4
    %1856 = vst [vmem:[%s1855] ss:$9 sm:$0xff] %v1324
    %s1857 = scalar_lea.vmem [#allocation1], 5
    %1858 = vst [vmem:[%s1857] ss:$9 sm:$0xff] %v1325
    %s1859 = scalar_lea.vmem [#allocation1], 6
    %1860 = vst [vmem:[%s1859] ss:$9 sm:$0xff] %v1326
    %s1861 = scalar_lea.vmem [#allocation1], 7
    %1862 = vst [vmem:[%s1861] ss:$9 sm:$0xff] %v1327
    %v1863 = vld [vmem:[#allocation1] sm:$0xff]
    %1864 = vst [vmem:[#allocation1] ss:$9 sm:$0xff] %v1305
    %1865 = vst [vmem:[%s1849] ss:$9 sm:$0xff] %v1328
    %1866 = vst [vmem:[%s1851] ss:$9 sm:$0xff] %v1329
    %1867 = vst [vmem:[%s1853] ss:$9 sm:$0xff] %v1330
    %1868 = vst [vmem:[%s1855] ss:$9 sm:$0xff] %v1331
    %1869 = vst [vmem:[%s1857] ss:$9 sm:$0xff] %v1332
    %1870 = vst [vmem:[%s1859] ss:$9 sm:$0xff] %v1333
    %1871 = vst [vmem:[%s1861] ss:$9 sm:$0xff] %v1334
    %v1872 = vld [vmem:[#allocation1] sm:$0xff]
    %1873 = vst [vmem:[#allocation1] ss:$9 sm:$0xff] %v1308
    %v1874 = vld [vmem:[#allocation1] sm:$0xff]
    %1875 = vrot.lane.b32.xlu0 %v1863, 88
    %v1876 = vpop.permute.xlu0 %1875
    %1877 = vrot.lane.b32.xlu0 %v1872, 88
    %v1878 = vpop.permute.xlu0 %1877
    %1879 = vrot.lane.b32.xlu0 %v1874, 88
    %v1880 = vpop.permute.xlu0 %1879
    %v1881 = vsel %vm1414, %v1843, 0
    %v1883 = vsel %vm1414, %v1845, 0
    %v1885 = vsel %vm1414, %v1847, 0
    %v1887 = vsel %vm1414, %v1876, 0
    %v1889 = vsel %vm1414, %v1878, 0
    %v1891 = vsel %vm1414, %v1880, 0
    %1893 = vmatpush.xpose.msra.mxu0 0.0
    %1894 = vmatpush.xpose.msra.mxu0 0.0
    %1895 = vmatpush.xpose.msra.mxu0 0.0
    %1896 = vmatpush.xpose.msra.mxu0 0.0
    %1897 = vmatpush.xpose.msra.mxu0 0.0
    %1898 = vmatpush.xpose.msra.mxu0 0.0
    %1899 = vmatpush.xpose.msra.mxu0 0.0
    %1900 = vmatpush.xpose.msra.mxu0 0.0
    %1901 = vmatpush.xpose.msra.mxu0 0.0
    %1902 = vmatpush.xpose.msra.mxu0 0.0
    %1903 = vmatpush.xpose.msra.mxu0 0.0
    %1904 = vmatpush.xpose.msra.mxu0 0.0
    %1905 = vmatpush.xpose.msra.mxu0 0.0
    %1906 = vmatpush.xpose.msra.mxu0 %v1891
    %1907 = vmatpush.xpose.msra.mxu0 %v1889
    %1908 = vmatpush.xpose.msra.mxu0 %v1887
    %1909 = vmatmul.f32.gmra.mxu0 %v1881
    %v1910 = vpop.f32.mrf.mxu0
    %v1911 = vadd.f32 0.0, %v1910
    %1912 = vmatmul.f32.gmra.mxu0 %v1883
    %v1913 = vpop.f32.mrf.mxu0
    %v1914 = vadd.f32 0.0, %v1913
    %1915 = vmatmul.f32.gmra.mxu0 %v1885
    %v1916 = vpop.f32.mrf.mxu0
    %v1917 = vadd.f32 0.0, %v1916
    %1918 = vdwg.mxu0
    %1919 = vst [vmem:[#allocation1] ss:$9 sm:$0xff] %v1335
    %s1920 = scalar_lea.vmem [#allocation1], 1
    %1921 = vst [vmem:[%s1920] ss:$9 sm:$0xff] %v1336
    %s1922 = scalar_lea.vmem [#allocation1], 2
    %1923 = vst [vmem:[%s1922] ss:$9 sm:$0xff] %v1337
    %s1924 = scalar_lea.vmem [#allocation1], 3
    %1925 = vst [vmem:[%s1924] ss:$9 sm:$0xff] %v1338
    %s1926 = scalar_lea.vmem [#allocation1], 4
    %1927 = vst [vmem:[%s1926] ss:$9 sm:$0xff] %v1339
    %s1928 = scalar_lea.vmem [#allocation1], 5
    %1929 = vst [vmem:[%s1928] ss:$9 sm:$0xff] %v1340
    %s1930 = scalar_lea.vmem [#allocation1], 6
    %1931 = vst [vmem:[%s1930] ss:$9 sm:$0xff] %v1341
    %s1932 = scalar_lea.vmem [#allocation1], 7
    %1933 = vst [vmem:[%s1932] ss:$9 sm:$0xff] %v1311
    %v1934 = vld [vmem:[#allocation1] sm:$0xff]
    %1935 = vst [vmem:[#allocation1] ss:$9 sm:$0xff] %v1342
    %1936 = vst [vmem:[%s1920] ss:$9 sm:$0xff] %v1343
    %1937 = vst [vmem:[%s1922] ss:$9 sm:$0xff] %v1344
    %1938 = vst [vmem:[%s1924] ss:$9 sm:$0xff] %v1345
    %1939 = vst [vmem:[%s1926] ss:$9 sm:$0xff] %v1346
    %1940 = vst [vmem:[%s1928] ss:$9 sm:$0xff] %v1347
    %1941 = vst [vmem:[%s1930] ss:$9 sm:$0xff] %v1348
    %1942 = vst [vmem:[%s1932] ss:$9 sm:$0xff] %v1314
    %v1943 = vld [vmem:[#allocation1] sm:$0xff]
    %1944 = vst [vmem:[#allocation1] ss:$9 sm:$0xff] %v1349
    %v1945 = vld [vmem:[#allocation1] sm:$0xff]
    %1946 = vrot.lane.b32.xlu0 %v1934, 120
    %v1947 = vpop.permute.xlu0 %1946
    %1948 = vrot.lane.b32.xlu0 %v1943, 120
    %v1949 = vpop.permute.xlu0 %1948
    %1950 = vrot.lane.b32.xlu0 %v1945, 120
    %v1951 = vpop.permute.xlu0 %1950
    %1952 = vst [vmem:[#allocation1] ss:$9 sm:$0xff] %v1335
    %s1953 = scalar_lea.vmem [#allocation1], 1
    %1954 = vst [vmem:[%s1953] ss:$9 sm:$0xff] %v1336
    %s1955 = scalar_lea.vmem [#allocation1], 2
    %1956 = vst [vmem:[%s1955] ss:$9 sm:$0xff] %v1337
    %s1957 = scalar_lea.vmem [#allocation1], 3
    %1958 = vst [vmem:[%s1957] ss:$9 sm:$0xff] %v1338
    %s1959 = scalar_lea.vmem [#allocation1], 4
    %1960 = vst [vmem:[%s1959] ss:$9 sm:$0xff] %v1339
    %s1961 = scalar_lea.vmem [#allocation1], 5
    %1962 = vst [vmem:[%s1961] ss:$9 sm:$0xff] %v1340
    %s1963 = scalar_lea.vmem [#allocation1], 6
    %1964 = vst [vmem:[%s1963] ss:$9 sm:$0xff] %v1341
    %s1965 = scalar_lea.vmem [#allocation1], 7
    %1966 = vst [vmem:[%s1965] ss:$9 sm:$0xff] %v1311
    %v1967 = vld [vmem:[#allocation1] sm:$0xff]
    %1968 = vst [vmem:[#allocation1] ss:$9 sm:$0xff] %v1342
    %1969 = vst [vmem:[%s1953] ss:$9 sm:$0xff] %v1343
    %1970 = vst [vmem:[%s1955] ss:$9 sm:$0xff] %v1344
    %1971 = vst [vmem:[%s1957] ss:$9 sm:$0xff] %v1345
    %1972 = vst [vmem:[%s1959] ss:$9 sm:$0xff] %v1346
    %1973 = vst [vmem:[%s1961] ss:$9 sm:$0xff] %v1347
    %1974 = vst [vmem:[%s1963] ss:$9 sm:$0xff] %v1348
    %1975 = vst [vmem:[%s1965] ss:$9 sm:$0xff] %v1314
    %v1976 = vld [vmem:[#allocation1] sm:$0xff]
    %1977 = vst [vmem:[#allocation1] ss:$9 sm:$0xff] %v1349
    %v1978 = vld [vmem:[#allocation1] sm:$0xff]
    %1979 = vrot.lane.b32.xlu0 %v1967, 88
    %v1980 = vpop.permute.xlu0 %1979
    %1981 = vrot.lane.b32.xlu0 %v1976, 88
    %v1982 = vpop.permute.xlu0 %1981
    %1983 = vrot.lane.b32.xlu0 %v1978, 88
    %v1984 = vpop.permute.xlu0 %1983
    %v1985 = vsel %vm1414, %v1947, 0
    %v1987 = vsel %vm1414, %v1949, 0
    %v1989 = vsel %vm1414, %v1951, 0
    %v1991 = vsel %vm1414, %v1980, 0
    %v1993 = vsel %vm1414, %v1982, 0
    %v1995 = vsel %vm1414, %v1984, 0
    %1997 = vmatpush.xpose.msra.mxu0 0.0
    %1998 = vmatpush.xpose.msra.mxu0 0.0
    %1999 = vmatpush.xpose.msra.mxu0 0.0
    %2000 = vmatpush.xpose.msra.mxu0 0.0
    %2001 = vmatpush.xpose.msra.mxu0 0.0
    %2002 = vmatpush.xpose.msra.mxu0 0.0
    %2003 = vmatpush.xpose.msra.mxu0 0.0
    %2004 = vmatpush.xpose.msra.mxu0 0.0
    %2005 = vmatpush.xpose.msra.mxu0 0.0
    %2006 = vmatpush.xpose.msra.mxu0 0.0
    %2007 = vmatpush.xpose.msra.mxu0 0.0
    %2008 = vmatpush.xpose.msra.mxu0 0.0
    %2009 = vmatpush.xpose.msra.mxu0 0.0
    %2010 = vmatpush.xpose.msra.mxu0 %v1995
    %2011 = vmatpush.xpose.msra.mxu0 %v1993
    %2012 = vmatpush.xpose.msra.mxu0 %v1991
    %2013 = vmatmul.f32.gmra.mxu0 %v1985
    %v2014 = vpop.f32.mrf.mxu0
    %v2015 = vadd.f32 0.0, %v2014
    %2016 = vmatmul.f32.gmra.mxu0 %v1987
    %v2017 = vpop.f32.mrf.mxu0
    %v2018 = vadd.f32 0.0, %v2017
    %2019 = vmatmul.f32.gmra.mxu0 %v1989
    %v2020 = vpop.f32.mrf.mxu0
    %v2021 = vadd.f32 0.0, %v2020
    %2022 = vdwg.mxu0
    %v2023 = vmul.f32 %v1911, 0.35355338
    %v2024 = vmul.f32 %v1914, 0.35355338
    %v2025 = vmul.f32 %v1917, 0.35355338
    %v2026 = vmul.f32 %v2015, 0.35355338
    %v2027 = vmul.f32 %v2018, 0.35355338
    %v2028 = vmul.f32 %v2021, 0.35355338
    %v2029 = vsel %vm1560, -3.4028235e+38, %v2023
    %v2030 = vsel %vm1561, -3.4028235e+38, %v2024
    %v2031 = vsel %vm1562, -3.4028235e+38, %v2025
    %v2032 = vsel %vm1560, -3.4028235e+38, %v2026
    %v2033 = vsel %vm1561, -3.4028235e+38, %v2027
    %v2034 = vsel %vm1562, -3.4028235e+38, %v2028
    %v2035 = vsel %vm1569, %v2029, -inf
    %2036 = vmax.xlane.f32.xlu0 %v2035
    %v2037 = vpop.xlane.xlu0 %2036
    %v2038 = vsel %vm1569, %v2030, -inf
    %2039 = vmax.xlane.f32.xlu0 %v2038
    %v2040 = vpop.xlane.xlu0 %2039
    %v2041 = vsel %vm1576, %v2031, -inf
    %2042 = vmax.xlane.f32.xlu0 %v2041
    %v2043 = vpop.xlane.xlu0 %2042
    %v2044 = vsel %vm1569, %v2032, -inf
    %2045 = vmax.xlane.f32.xlu0 %v2044
    %v2046 = vpop.xlane.xlu0 %2045
    %v2047 = vsel %vm1569, %v2033, -inf
    %2048 = vmax.xlane.f32.xlu0 %v2047
    %v2049 = vpop.xlane.xlu0 %2048
    %v2050 = vsel %vm1576, %v2034, -inf
    %2051 = vmax.xlane.f32.xlu0 %v2050
    %v2052 = vpop.xlane.xlu0 %2051
    %v2053 = vsub.f32 %v2029, %v2037
    %v2054 = vsub.f32 %v2030, %v2040
    %v2055 = vsub.f32 %v2031, %v2043
    %v2056 = vsub.f32 %v2032, %v2046
    %v2057 = vsub.f32 %v2033, %v2049
    %v2058 = vsub.f32 %v2034, %v2052
    %v2059 = vmul.f32 %v2053, 1.442695
    %v2060 = vpow.pop %v2059
    %v2061 = vmul.f32 %v2054, 1.442695
    %v2062 = vpow.pop %v2061
    %v2063 = vmul.f32 %v2055, 1.442695
    %v2064 = vpow.pop %v2063
    %v2065 = vmul.f32 %v2056, 1.442695
    %v2066 = vpow.pop %v2065
    %v2067 = vmul.f32 %v2057, 1.442695
    %v2068 = vpow.pop %v2067
    %v2069 = vmul.f32 %v2058, 1.442695
    %v2070 = vpow.pop %v2069
    %v2071 = vsel %vm1569, %v2060, 0.0
    %2072 = vadd.xlane.f32.xlu0 %v2071
    %v2073 = vpop.xlane.xlu0 %2072
    %v2074 = vsel %vm1569, %v2062, 0.0
    %2075 = vadd.xlane.f32.xlu0 %v2074
    %v2076 = vpop.xlane.xlu0 %2075
    %v2077 = vsel %vm1576, %v2064, 0.0
    %2078 = vadd.xlane.f32.xlu0 %v2077
    %v2079 = vpop.xlane.xlu0 %2078
    %v2080 = vsel %vm1569, %v2066, 0.0
    %2081 = vadd.xlane.f32.xlu0 %v2080
    %v2082 = vpop.xlane.xlu0 %2081
    %v2083 = vsel %vm1569, %v2068, 0.0
    %2084 = vadd.xlane.f32.xlu0 %v2083
    %v2085 = vpop.xlane.xlu0 %2084
    %v2086 = vsel %vm1576, %v2070, 0.0
    %2087 = vadd.xlane.f32.xlu0 %v2086
    %v2088 = vpop.xlane.xlu0 %2087
    %v2089 = vrcp.pop %v2073
    %v2090 = vrcp.pop %v2076
    %v2091 = vrcp.pop %v2079
    %v2092 = vrcp.pop %v2082
    %v2093 = vrcp.pop %v2085
    %v2094 = vrcp.pop %v2088
    %v2095 = vmul.f32 %v2060, %v2089
    %v2096 = vmul.f32 %v2062, %v2090
    %v2097 = vmul.f32 %v2064, %v2091
    %v2098 = vmul.f32 %v2066, %v2092
    %v2099 = vmul.f32 %v2068, %v2093
    %v2100 = vmul.f32 %v2070, %v2094
    %2101 = vst [vmem:[#allocation1] ss:$9 sm:$0xff] %v1302
    %s2102 = scalar_lea.vmem [#allocation1], 1
    %2103 = vst [vmem:[%s2102] ss:$9 sm:$0xff] %v1321
    %s2104 = scalar_lea.vmem [#allocation1], 2
    %2105 = vst [vmem:[%s2104] ss:$9 sm:$0xff] %v1322
    %s2106 = scalar_lea.vmem [#allocation1], 3
    %2107 = vst [vmem:[%s2106] ss:$9 sm:$0xff] %v1323
    %s2108 = scalar_lea.vmem [#allocation1], 4
    %2109 = vst [vmem:[%s2108] ss:$9 sm:$0xff] %v1324
    %s2110 = scalar_lea.vmem [#allocation1], 5
    %2111 = vst [vmem:[%s2110] ss:$9 sm:$0xff] %v1325
    %s2112 = scalar_lea.vmem [#allocation1], 6
    %2113 = vst [vmem:[%s2112] ss:$9 sm:$0xff] %v1326
    %s2114 = scalar_lea.vmem [#allocation1], 7
    %2115 = vst [vmem:[%s2114] ss:$9 sm:$0xff] %v1327
    %v2116 = vld [vmem:[#allocation1] sm:$0xff]
    %2117 = vst [vmem:[#allocation1] ss:$9 sm:$0xff] %v1305
    %2118 = vst [vmem:[%s2102] ss:$9 sm:$0xff] %v1328
    %2119 = vst [vmem:[%s2104] ss:$9 sm:$0xff] %v1329
    %2120 = vst [vmem:[%s2106] ss:$9 sm:$0xff] %v1330
    %2121 = vst [vmem:[%s2108] ss:$9 sm:$0xff] %v1331
    %2122 = vst [vmem:[%s2110] ss:$9 sm:$0xff] %v1332
    %2123 = vst [vmem:[%s2112] ss:$9 sm:$0xff] %v1333
    %2124 = vst [vmem:[%s2114] ss:$9 sm:$0xff] %v1334
    %v2125 = vld [vmem:[#allocation1] sm:$0xff]
    %2126 = vst [vmem:[#allocation1] ss:$9 sm:$0xff] %v1308
    %v2127 = vld [vmem:[#allocation1] sm:$0xff]
    %2128 = vrot.lane.b32.xlu0 %v2116, 56
    %v2129 = vpop.permute.xlu0 %2128
    %2130 = vrot.lane.b32.xlu0 %v2125, 56
    %v2131 = vpop.permute.xlu0 %2130
    %2132 = vrot.lane.b32.xlu0 %v2127, 56
    %v2133 = vpop.permute.xlu0 %2132
    %v2137 = vsel %vm1569, %v2095, 0
    %v2140 = vsel %vm1569, %v2096, 0
    %v2143 = vsel %vm1569, %v2097, 0
    %v2145 = vsel %vm90, %v2133, 0
    %2147 = vmatpush.msra.mxu0 0.0
    %2148 = vmatpush.msra.mxu0 0.0
    %2149 = vmatpush.msra.mxu0 0.0
    %2150 = vmatpush.msra.mxu0 0.0
    %2151 = vmatpush.msra.mxu0 0.0
    %2152 = vmatpush.msra.mxu0 0.0
    %2153 = vmatpush.msra.mxu0 0.0
    %2154 = vmatpush.msra.mxu0 0.0
    %2155 = vmatpush.msra.mxu0 0.0
    %2156 = vmatpush.msra.mxu0 0.0
    %2157 = vmatpush.msra.mxu0 0.0
    %2158 = vmatpush.msra.mxu0 0.0
    %2159 = vmatpush.msra.mxu0 0.0
    %2160 = vmatpush.msra.mxu0 %v2145
    %2161 = vmatpush.msra.mxu0 %v2131
    %2162 = vmatpush.msra.mxu0 %v2129
    %2163 = vmatmul.f32.gmra.mxu0 %v2137
    %v2164 = vpop.f32.mrf.mxu0
    %v2165 = vadd.f32 0.0, %v2164
    %2166 = vmatmul.f32.gmra.mxu0 %v2140
    %v2167 = vpop.f32.mrf.mxu0
    %v2168 = vadd.f32 0.0, %v2167
    %2169 = vmatmul.f32.gmra.mxu0 %v2143
    %v2170 = vpop.f32.mrf.mxu0
    %v2171 = vadd.f32 0.0, %v2170
    %2172 = vdwg.mxu0
    %2173 = vst [vmem:[#allocation1] ss:$9 sm:$0xff] %v1335
    %s2174 = scalar_lea.vmem [#allocation1], 1
    %2175 = vst [vmem:[%s2174] ss:$9 sm:$0xff] %v1336
    %s2176 = scalar_lea.vmem [#allocation1], 2
    %2177 = vst [vmem:[%s2176] ss:$9 sm:$0xff] %v1337
    %s2178 = scalar_lea.vmem [#allocation1], 3
    %2179 = vst [vmem:[%s2178] ss:$9 sm:$0xff] %v1338
    %s2180 = scalar_lea.vmem [#allocation1], 4
    %2181 = vst [vmem:[%s2180] ss:$9 sm:$0xff] %v1339
    %s2182 = scalar_lea.vmem [#allocation1], 5
    %2183 = vst [vmem:[%s2182] ss:$9 sm:$0xff] %v1340
    %s2184 = scalar_lea.vmem [#allocation1], 6
    %2185 = vst [vmem:[%s2184] ss:$9 sm:$0xff] %v1341
    %s2186 = scalar_lea.vmem [#allocation1], 7
    %2187 = vst [vmem:[%s2186] ss:$9 sm:$0xff] %v1311
    %v2188 = vld [vmem:[#allocation1] sm:$0xff]
    %2189 = vst [vmem:[#allocation1] ss:$9 sm:$0xff] %v1342
    %2190 = vst [vmem:[%s2174] ss:$9 sm:$0xff] %v1343
    %2191 = vst [vmem:[%s2176] ss:$9 sm:$0xff] %v1344
    %2192 = vst [vmem:[%s2178] ss:$9 sm:$0xff] %v1345
    %2193 = vst [vmem:[%s2180] ss:$9 sm:$0xff] %v1346
    %2194 = vst [vmem:[%s2182] ss:$9 sm:$0xff] %v1347
    %2195 = vst [vmem:[%s2184] ss:$9 sm:$0xff] %v1348
    %2196 = vst [vmem:[%s2186] ss:$9 sm:$0xff] %v1314
    %v2197 = vld [vmem:[#allocation1] sm:$0xff]
    %2198 = vst [vmem:[#allocation1] ss:$9 sm:$0xff] %v1349
    %v2199 = vld [vmem:[#allocation1] sm:$0xff]
    %2200 = vrot.lane.b32.xlu0 %v2188, 56
    %v2201 = vpop.permute.xlu0 %2200
    %2202 = vrot.lane.b32.xlu0 %v2197, 56
    %v2203 = vpop.permute.xlu0 %2202
    %2204 = vrot.lane.b32.xlu0 %v2199, 56
    %v2205 = vpop.permute.xlu0 %2204
    %v2209 = vsel %vm1569, %v2098, 0
    %v2212 = vsel %vm1569, %v2099, 0
    %v2215 = vsel %vm1569, %v2100, 0
    %v2217 = vsel %vm90, %v2205, 0
    %2219 = vmatpush.msra.mxu0 0.0
    %2220 = vmatpush.msra.mxu0 0.0
    %2221 = vmatpush.msra.mxu0 0.0
    %2222 = vmatpush.msra.mxu0 0.0
    %2223 = vmatpush.msra.mxu0 0.0
    %2224 = vmatpush.msra.mxu0 0.0
    %2225 = vmatpush.msra.mxu0 0.0
    %2226 = vmatpush.msra.mxu0 0.0
    %2227 = vmatpush.msra.mxu0 0.0
    %2228 = vmatpush.msra.mxu0 0.0
    %2229 = vmatpush.msra.mxu0 0.0
    %2230 = vmatpush.msra.mxu0 0.0
    %2231 = vmatpush.msra.mxu0 0.0
    %2232 = vmatpush.msra.mxu0 %v2217
    %2233 = vmatpush.msra.mxu0 %v2203
    %2234 = vmatpush.msra.mxu0 %v2201
    %2235 = vmatmul.f32.gmra.mxu0 %v2209
    %v2236 = vpop.f32.mrf.mxu0
    %v2237 = vadd.f32 0.0, %v2236
    %2238 = vmatmul.f32.gmra.mxu0 %v2212
    %v2239 = vpop.f32.mrf.mxu0
    %v2240 = vadd.f32 0.0, %v2239
    %2241 = vmatmul.f32.gmra.mxu0 %v2215
    %v2242 = vpop.f32.mrf.mxu0
    %v2243 = vadd.f32 0.0, %v2242
    %2244 = vdwg.mxu0
    %v2251 = vrot.slane %v2165, 1
    %v2252 = vrot.slane %v2165, 2
    %v2253 = vrot.slane %v2165, 3
    %v2254 = vrot.slane %v2165, 4
    %v2255 = vrot.slane %v2165, 5
    %v2256 = vrot.slane %v2165, 6
    %v2257 = vrot.slane %v2165, 7
    %v2258 = vrot.slane %v2168, 1
    %v2259 = vrot.slane %v2168, 2
    %v2260 = vrot.slane %v2168, 3
    %v2261 = vrot.slane %v2168, 4
    %v2262 = vrot.slane %v2168, 5
    %v2263 = vrot.slane %v2168, 6
    %v2264 = vrot.slane %v2168, 7
    %v2265 = vrot.slane %v2237, 1
    %v2266 = vrot.slane %v2237, 2
    %v2267 = vrot.slane %v2237, 3
    %v2268 = vrot.slane %v2237, 4
    %v2269 = vrot.slane %v2237, 5
    %v2270 = vrot.slane %v2237, 6
    %v2271 = vrot.slane %v2237, 7
    %v2272 = vrot.slane %v2240, 1
    %v2273 = vrot.slane %v2240, 2
    %v2274 = vrot.slane %v2240, 3
    %v2275 = vrot.slane %v2240, 4
    %v2276 = vrot.slane %v2240, 5
    %v2277 = vrot.slane %v2240, 6
    %v2278 = vrot.slane %v2240, 7
    %2279 = vst [vmem:[#allocation1] ss:$9 sm:$0xff] %v2165
    %s2280 = scalar_lea.vmem [#allocation1], 1
    %2281 = vst [vmem:[%s2280] ss:$9 sm:$0xff] %v2251
    %s2282 = scalar_lea.vmem [#allocation1], 2
    %2283 = vst [vmem:[%s2282] ss:$9 sm:$0xff] %v2252
    %s2284 = scalar_lea.vmem [#allocation1], 3
    %2285 = vst [vmem:[%s2284] ss:$9 sm:$0xff] %v2253
    %s2286 = scalar_lea.vmem [#allocation1], 4
    %2287 = vst [vmem:[%s2286] ss:$9 sm:$0xff] %v2254
    %s2288 = scalar_lea.vmem [#allocation1], 5
    %2289 = vst [vmem:[%s2288] ss:$9 sm:$0xff] %v2255
    %s2290 = scalar_lea.vmem [#allocation1], 6
    %2291 = vst [vmem:[%s2290] ss:$9 sm:$0xff] %v2256
    %s2292 = scalar_lea.vmem [#allocation1], 7
    %2293 = vst [vmem:[%s2292] ss:$9 sm:$0xff] %v2257
    %v2294 = vld [vmem:[#allocation1] sm:$0xff]
    %2295 = vst [vmem:[#allocation1] ss:$9 sm:$0xff] %v2168
    %2296 = vst [vmem:[%s2280] ss:$9 sm:$0xff] %v2258
    %2297 = vst [vmem:[%s2282] ss:$9 sm:$0xff] %v2259
    %2298 = vst [vmem:[%s2284] ss:$9 sm:$0xff] %v2260
    %2299 = vst [vmem:[%s2286] ss:$9 sm:$0xff] %v2261
    %2300 = vst [vmem:[%s2288] ss:$9 sm:$0xff] %v2262
    %2301 = vst [vmem:[%s2290] ss:$9 sm:$0xff] %v2263
    %2302 = vst [vmem:[%s2292] ss:$9 sm:$0xff] %v2264
    %v2303 = vld [vmem:[#allocation1] sm:$0xff]
    %2304 = vst [vmem:[#allocation1] ss:$9 sm:$0xff] %v2171
    %2305 = vst [vmem:[%s2280] ss:$9 sm:$0xff] %v2237
    %2306 = vst [vmem:[%s2282] ss:$9 sm:$0xff] %v2265
    %2307 = vst [vmem:[%s2284] ss:$9 sm:$0xff] %v2266
    %2308 = vst [vmem:[%s2286] ss:$9 sm:$0xff] %v2267
    %2309 = vst [vmem:[%s2288] ss:$9 sm:$0xff] %v2268
    %2310 = vst [vmem:[%s2290] ss:$9 sm:$0xff] %v2269
    %2311 = vst [vmem:[%s2292] ss:$9 sm:$0xff] %v2270
    %v2312 = vld [vmem:[#allocation1] sm:$0xff]
    %2313 = vst [vmem:[#allocation1] ss:$9 sm:$0xff] %v2271
    %2314 = vst [vmem:[%s2280] ss:$9 sm:$0xff] %v2240
    %2315 = vst [vmem:[%s2282] ss:$9 sm:$0xff] %v2272
    %2316 = vst [vmem:[%s2284] ss:$9 sm:$0xff] %v2273
    %2317 = vst [vmem:[%s2286] ss:$9 sm:$0xff] %v2274
    %2318 = vst [vmem:[%s2288] ss:$9 sm:$0xff] %v2275
    %2319 = vst [vmem:[%s2290] ss:$9 sm:$0xff] %v2276
    %2320 = vst [vmem:[%s2292] ss:$9 sm:$0xff] %v2277
    %v2321 = vld [vmem:[#allocation1] sm:$0xff]
    %2322 = vst [vmem:[#allocation1] ss:$9 sm:$0xff] %v2278
    %2323 = vst [vmem:[%s2280] ss:$9 sm:$0xff] %v2243
    %v2324 = vld [vmem:[#allocation1] sm:$0xff]
    %v2325 = vsel %vm1414, %v2294, 0
    %v2327 = vsel %vm1414, %v2303, 0
    %v2329 = vsel %vm1414, %v2312, 0
    %v2331 = vsel %vm1414, %v2321, 0
    %v2333 = vsel %vm1414, %v2324, 0
    %2335 = vmatpush.msra.mxu0 0.0
    %2336 = vmatpush.msra.mxu0 0.0
    %2337 = vmatpush.msra.mxu0 0.0
    %2338 = vmatpush.msra.mxu0 0.0
    %2339 = vmatpush.msra.mxu0 0.0
    %2340 = vmatpush.msra.mxu0 0.0
    %2341 = vmatpush.msra.mxu0 0.0
    %2342 = vmatpush.msra.mxu0 0.0
    %2343 = vmatpush.msra.mxu0 0.0
    %2344 = vmatpush.msra.mxu0 0.0
    %2345 = vmatpush.msra.mxu0 0.0
    %2346 = vmatpush.msra.mxu0 0.0
    %2347 = vmatpush.msra.mxu0 0.0
    %2348 = vmatpush.msra.mxu0 0.0
    %2349 = vmatpush.msra.mxu0 0.0
    %2350 = vmatpush.msra.mxu0 %v1351
    %2351 = vmatmul.f32.gmra.mxu0 %v2325
    %v2352 = vpop.f32.mrf.mxu0
    %v2353 = vadd.f32 0.0, %v2352
    %2354 = vmatmul.f32.gmra.mxu0 %v2327
    %v2355 = vpop.f32.mrf.mxu0
    %v2356 = vadd.f32 0.0, %v2355
    %2357 = vmatmul.f32.gmra.mxu0 %v2329
    %v2358 = vpop.f32.mrf.mxu0
    %v2359 = vadd.f32 0.0, %v2358
    %2360 = vmatmul.f32.gmra.mxu0 %v2331
    %v2361 = vpop.f32.mrf.mxu0
    %v2362 = vadd.f32 0.0, %v2361
    %2363 = vmatmul.f32.gmra.mxu0 %v2333
    %v2364 = vpop.f32.mrf.mxu0
    %v2365 = vadd.f32 0.0, %v2364
    %2366 = vdwg.mxu0
    %2367 = vst [vmem:[#allocation1] ss:$9 sm:$0xff] %v1701
    %s2368 = scalar_lea.vmem [#allocation1], 1
    %2369 = vst [vmem:[%s2368] ss:$9 sm:$0xff] %v1787
    %s2370 = scalar_lea.vmem [#allocation1], 2
    %2371 = vst [vmem:[%s2370] ss:$9 sm:$0xff] %v1788
    %s2372 = scalar_lea.vmem [#allocation1], 3
    %2373 = vst [vmem:[%s2372] ss:$9 sm:$0xff] %v1789
    %s2374 = scalar_lea.vmem [#allocation1], 4
    %2375 = vst [vmem:[%s2374] ss:$9 sm:$0xff] %v1790
    %s2376 = scalar_lea.vmem [#allocation1], 5
    %2377 = vst [vmem:[%s2376] ss:$9 sm:$0xff] %v1791
    %s2378 = scalar_lea.vmem [#allocation1], 6
    %2379 = vst [vmem:[%s2378] ss:$9 sm:$0xff] %v1792
    %s2380 = scalar_lea.vmem [#allocation1], 7
    %2381 = vst [vmem:[%s2380] ss:$9 sm:$0xff] %v1793
    %v2382 = vld [vmem:[#allocation1] sm:$0xff]
    %2383 = vst [vmem:[#allocation1] ss:$9 sm:$0xff] %v1704
    %2384 = vst [vmem:[%s2368] ss:$9 sm:$0xff] %v1794
    %2385 = vst [vmem:[%s2370] ss:$9 sm:$0xff] %v1795
    %2386 = vst [vmem:[%s2372] ss:$9 sm:$0xff] %v1796
    %2387 = vst [vmem:[%s2374] ss:$9 sm:$0xff] %v1797
    %2388 = vst [vmem:[%s2376] ss:$9 sm:$0xff] %v1798
    %2389 = vst [vmem:[%s2378] ss:$9 sm:$0xff] %v1799
    %2390 = vst [vmem:[%s2380] ss:$9 sm:$0xff] %v1800
    %v2391 = vld [vmem:[#allocation1] sm:$0xff]
    %2392 = vst [vmem:[#allocation1] ss:$9 sm:$0xff] %v1707
    %2393 = vst [vmem:[%s2368] ss:$9 sm:$0xff] %v1773
    %2394 = vst [vmem:[%s2370] ss:$9 sm:$0xff] %v1801
    %2395 = vst [vmem:[%s2372] ss:$9 sm:$0xff] %v1802
    %2396 = vst [vmem:[%s2374] ss:$9 sm:$0xff] %v1803
    %2397 = vst [vmem:[%s2376] ss:$9 sm:$0xff] %v1804
    %2398 = vst [vmem:[%s2378] ss:$9 sm:$0xff] %v1805
    %2399 = vst [vmem:[%s2380] ss:$9 sm:$0xff] %v1806
    %v2400 = vld [vmem:[#allocation1] sm:$0xff]
    %2401 = vst [vmem:[#allocation1] ss:$9 sm:$0xff] %v1807
    %2402 = vst [vmem:[%s2368] ss:$9 sm:$0xff] %v1776
    %2403 = vst [vmem:[%s2370] ss:$9 sm:$0xff] %v1808
    %2404 = vst [vmem:[%s2372] ss:$9 sm:$0xff] %v1809
    %2405 = vst [vmem:[%s2374] ss:$9 sm:$0xff] %v1810
    %2406 = vst [vmem:[%s2376] ss:$9 sm:$0xff] %v1811
    %2407 = vst [vmem:[%s2378] ss:$9 sm:$0xff] %v1812
    %2408 = vst [vmem:[%s2380] ss:$9 sm:$0xff] %v1813
    %v2409 = vld [vmem:[#allocation1] sm:$0xff]
    %2410 = vst [vmem:[#allocation1] ss:$9 sm:$0xff] %v1814
    %2411 = vst [vmem:[%s2368] ss:$9 sm:$0xff] %v1779
    %v2412 = vld [vmem:[#allocation1] sm:$0xff]
    %v2413 = vsel %vm1414, %v2382, 0
    %v2415 = vsel %vm1414, %v2391, 0
    %v2417 = vsel %vm1414, %v2400, 0
    %v2419 = vsel %vm1414, %v2409, 0
    %v2421 = vsel %vm1414, %v2412, 0
    %2423 = vmatpush.msra.mxu0 0.0
    %2424 = vmatpush.msra.mxu0 0.0
    %2425 = vmatpush.msra.mxu0 0.0
    %2426 = vmatpush.msra.mxu0 0.0
    %2427 = vmatpush.msra.mxu0 0.0
    %2428 = vmatpush.msra.mxu0 0.0
    %2429 = vmatpush.msra.mxu0 0.0
    %2430 = vmatpush.msra.mxu0 0.0
    %2431 = vmatpush.msra.mxu0 0.0
    %2432 = vmatpush.msra.mxu0 0.0
    %2433 = vmatpush.msra.mxu0 0.0
    %2434 = vmatpush.msra.mxu0 0.0
    %2435 = vmatpush.msra.mxu0 0.0
    %2436 = vmatpush.msra.mxu0 0.0
    %2437 = vmatpush.msra.mxu0 0.0
    %2438 = vmatpush.msra.mxu0 %v1350
    %2439 = vmatmul.f32.gmra.mxu0 %v2413
    %v2440 = vpop.f32.mrf.mxu0
    %v2441 = vadd.f32 %v2353, %v2440
    %2442 = vmatmul.f32.gmra.mxu0 %v2415
    %v2443 = vpop.f32.mrf.mxu0
    %v2444 = vadd.f32 %v2356, %v2443
    %2445 = vmatmul.f32.gmra.mxu0 %v2417
    %v2446 = vpop.f32.mrf.mxu0
    %v2447 = vadd.f32 %v2359, %v2446
    %2448 = vmatmul.f32.gmra.mxu0 %v2419
    %v2449 = vpop.f32.mrf.mxu0
    %v2450 = vadd.f32 %v2362, %v2449
    %2451 = vmatmul.f32.gmra.mxu0 %v2421
    %v2452 = vpop.f32.mrf.mxu0
    %v2453 = vadd.f32 %v2365, %v2452
    %2454 = vdwg.mxu0
    %2455 = vst [vmem:[#allocation1] ss:$9 sm:$0xff] %v1302
    %s2456 = scalar_lea.vmem [#allocation1], 1
    %2457 = vst [vmem:[%s2456] ss:$9 sm:$0xff] %v1321
    %s2458 = scalar_lea.vmem [#allocation1], 2
    %2459 = vst [vmem:[%s2458] ss:$9 sm:$0xff] %v1322
    %s2460 = scalar_lea.vmem [#allocation1], 3
    %2461 = vst [vmem:[%s2460] ss:$9 sm:$0xff] %v1323
    %s2462 = scalar_lea.vmem [#allocation1], 4
    %2463 = vst [vmem:[%s2462] ss:$9 sm:$0xff] %v1324
    %s2464 = scalar_lea.vmem [#allocation1], 5
    %2465 = vst [vmem:[%s2464] ss:$9 sm:$0xff] %v1325
    %s2466 = scalar_lea.vmem [#allocation1], 6
    %2467 = vst [vmem:[%s2466] ss:$9 sm:$0xff] %v1326
    %s2468 = scalar_lea.vmem [#allocation1], 7
    %2469 = vst [vmem:[%s2468] ss:$9 sm:$0xff] %v1327
    %v2470 = vld [vmem:[#allocation1] sm:$0xff]
    %2471 = vst [vmem:[#allocation1] ss:$9 sm:$0xff] %v1305
    %2472 = vst [vmem:[%s2456] ss:$9 sm:$0xff] %v1328
    %2473 = vst [vmem:[%s2458] ss:$9 sm:$0xff] %v1329
    %2474 = vst [vmem:[%s2460] ss:$9 sm:$0xff] %v1330
    %2475 = vst [vmem:[%s2462] ss:$9 sm:$0xff] %v1331
    %2476 = vst [vmem:[%s2464] ss:$9 sm:$0xff] %v1332
    %2477 = vst [vmem:[%s2466] ss:$9 sm:$0xff] %v1333
    %2478 = vst [vmem:[%s2468] ss:$9 sm:$0xff] %v1334
    %v2479 = vld [vmem:[#allocation1] sm:$0xff]
    %2480 = vst [vmem:[#allocation1] ss:$9 sm:$0xff] %v1308
    %v2481 = vld [vmem:[#allocation1] sm:$0xff]
    %2482 = vrot.lane.b32.xlu0 %v2470, 112
    %v2483 = vpop.permute.xlu0 %2482
    %2484 = vrot.lane.b32.xlu0 %v2479, 112
    %v2485 = vpop.permute.xlu0 %2484
    %2486 = vrot.lane.b32.xlu0 %v2481, 112
    %v2487 = vpop.permute.xlu0 %2486
    %2488 = vst [vmem:[#allocation1] ss:$9 sm:$0xff] %v1302
    %s2489 = scalar_lea.vmem [#allocation1], 1
    %2490 = vst [vmem:[%s2489] ss:$9 sm:$0xff] %v1321
    %s2491 = scalar_lea.vmem [#allocation1], 2
    %2492 = vst [vmem:[%s2491] ss:$9 sm:$0xff] %v1322
    %s2493 = scalar_lea.vmem [#allocation1], 3
    %2494 = vst [vmem:[%s2493] ss:$9 sm:$0xff] %v1323
    %s2495 = scalar_lea.vmem [#allocation1], 4
    %2496 = vst [vmem:[%s2495] ss:$9 sm:$0xff] %v1324
    %s2497 = scalar_lea.vmem [#allocation1], 5
    %2498 = vst [vmem:[%s2497] ss:$9 sm:$0xff] %v1325
    %s2499 = scalar_lea.vmem [#allocation1], 6
    %2500 = vst [vmem:[%s2499] ss:$9 sm:$0xff] %v1326
    %s2501 = scalar_lea.vmem [#allocation1], 7
    %2502 = vst [vmem:[%s2501] ss:$9 sm:$0xff] %v1327
    %v2503 = vld [vmem:[#allocation1] sm:$0xff]
    %2504 = vst [vmem:[#allocation1] ss:$9 sm:$0xff] %v1305
    %2505 = vst [vmem:[%s2489] ss:$9 sm:$0xff] %v1328
    %2506 = vst [vmem:[%s2491] ss:$9 sm:$0xff] %v1329
    %2507 = vst [vmem:[%s2493] ss:$9 sm:$0xff] %v1330
    %2508 = vst [vmem:[%s2495] ss:$9 sm:$0xff] %v1331
    %2509 = vst [vmem:[%s2497] ss:$9 sm:$0xff] %v1332
    %2510 = vst [vmem:[%s2499] ss:$9 sm:$0xff] %v1333
    %2511 = vst [vmem:[%s2501] ss:$9 sm:$0xff] %v1334
    %v2512 = vld [vmem:[#allocation1] sm:$0xff]
    %2513 = vst [vmem:[#allocation1] ss:$9 sm:$0xff] %v1308
    %v2514 = vld [vmem:[#allocation1] sm:$0xff]
    %2515 = vrot.lane.b32.xlu0 %v2503, 80
    %v2516 = vpop.permute.xlu0 %2515
    %2517 = vrot.lane.b32.xlu0 %v2512, 80
    %v2518 = vpop.permute.xlu0 %2517
    %2519 = vrot.lane.b32.xlu0 %v2514, 80
    %v2520 = vpop.permute.xlu0 %2519
    %v2521 = vsel %vm1414, %v2483, 0
    %v2523 = vsel %vm1414, %v2485, 0
    %v2525 = vsel %vm1414, %v2487, 0
    %v2527 = vsel %vm1414, %v2516, 0
    %v2529 = vsel %vm1414, %v2518, 0
    %v2531 = vsel %vm1414, %v2520, 0
    %2533 = vmatpush.xpose.msra.mxu0 0.0
    %2534 = vmatpush.xpose.msra.mxu0 0.0
    %2535 = vmatpush.xpose.msra.mxu0 0.0
    %2536 = vmatpush.xpose.msra.mxu0 0.0
    %2537 = vmatpush.xpose.msra.mxu0 0.0
    %2538 = vmatpush.xpose.msra.mxu0 0.0
    %2539 = vmatpush.xpose.msra.mxu0 0.0
    %2540 = vmatpush.xpose.msra.mxu0 0.0
    %2541 = vmatpush.xpose.msra.mxu0 0.0
    %2542 = vmatpush.xpose.msra.mxu0 0.0
    %2543 = vmatpush.xpose.msra.mxu0 0.0
    %2544 = vmatpush.xpose.msra.mxu0 0.0
    %2545 = vmatpush.xpose.msra.mxu0 0.0
    %2546 = vmatpush.xpose.msra.mxu0 %v2531
    %2547 = vmatpush.xpose.msra.mxu0 %v2529
    %2548 = vmatpush.xpose.msra.mxu0 %v2527
    %2549 = vmatmul.f32.gmra.mxu0 %v2521
    %v2550 = vpop.f32.mrf.mxu0
    %v2551 = vadd.f32 0.0, %v2550
    %2552 = vmatmul.f32.gmra.mxu0 %v2523
    %v2553 = vpop.f32.mrf.mxu0
    %v2554 = vadd.f32 0.0, %v2553
    %2555 = vmatmul.f32.gmra.mxu0 %v2525
    %v2556 = vpop.f32.mrf.mxu0
    %v2557 = vadd.f32 0.0, %v2556
    %2558 = vdwg.mxu0
    %2559 = vst [vmem:[#allocation1] ss:$9 sm:$0xff] %v1335
    %s2560 = scalar_lea.vmem [#allocation1], 1
    %2561 = vst [vmem:[%s2560] ss:$9 sm:$0xff] %v1336
    %s2562 = scalar_lea.vmem [#allocation1], 2
    %2563 = vst [vmem:[%s2562] ss:$9 sm:$0xff] %v1337
    %s2564 = scalar_lea.vmem [#allocation1], 3
    %2565 = vst [vmem:[%s2564] ss:$9 sm:$0xff] %v1338
    %s2566 = scalar_lea.vmem [#allocation1], 4
    %2567 = vst [vmem:[%s2566] ss:$9 sm:$0xff] %v1339
    %s2568 = scalar_lea.vmem [#allocation1], 5
    %2569 = vst [vmem:[%s2568] ss:$9 sm:$0xff] %v1340
    %s2570 = scalar_lea.vmem [#allocation1], 6
    %2571 = vst [vmem:[%s2570] ss:$9 sm:$0xff] %v1341
    %s2572 = scalar_lea.vmem [#allocation1], 7
    %2573 = vst [vmem:[%s2572] ss:$9 sm:$0xff] %v1311
    %v2574 = vld [vmem:[#allocation1] sm:$0xff]
    %2575 = vst [vmem:[#allocation1] ss:$9 sm:$0xff] %v1342
    %2576 = vst [vmem:[%s2560] ss:$9 sm:$0xff] %v1343
    %2577 = vst [vmem:[%s2562] ss:$9 sm:$0xff] %v1344
    %2578 = vst [vmem:[%s2564] ss:$9 sm:$0xff] %v1345
    %2579 = vst [vmem:[%s2566] ss:$9 sm:$0xff] %v1346
    %2580 = vst [vmem:[%s2568] ss:$9 sm:$0xff] %v1347
    %2581 = vst [vmem:[%s2570] ss:$9 sm:$0xff] %v1348
    %2582 = vst [vmem:[%s2572] ss:$9 sm:$0xff] %v1314
    %v2583 = vld [vmem:[#allocation1] sm:$0xff]
    %2584 = vst [vmem:[#allocation1] ss:$9 sm:$0xff] %v1349
    %v2585 = vld [vmem:[#allocation1] sm:$0xff]
    %2586 = vrot.lane.b32.xlu0 %v2574, 112
    %v2587 = vpop.permute.xlu0 %2586
    %2588 = vrot.lane.b32.xlu0 %v2583, 112
    %v2589 = vpop.permute.xlu0 %2588
    %2590 = vrot.lane.b32.xlu0 %v2585, 112
    %v2591 = vpop.permute.xlu0 %2590
    %2592 = vst [vmem:[#allocation1] ss:$9 sm:$0xff] %v1335
    %s2593 = scalar_lea.vmem [#allocation1], 1
    %2594 = vst [vmem:[%s2593] ss:$9 sm:$0xff] %v1336
    %s2595 = scalar_lea.vmem [#allocation1], 2
    %2596 = vst [vmem:[%s2595] ss:$9 sm:$0xff] %v1337
    %s2597 = scalar_lea.vmem [#allocation1], 3
    %2598 = vst [vmem:[%s2597] ss:$9 sm:$0xff] %v1338
    %s2599 = scalar_lea.vmem [#allocation1], 4
    %2600 = vst [vmem:[%s2599] ss:$9 sm:$0xff] %v1339
    %s2601 = scalar_lea.vmem [#allocation1], 5
    %2602 = vst [vmem:[%s2601] ss:$9 sm:$0xff] %v1340
    %s2603 = scalar_lea.vmem [#allocation1], 6
    %2604 = vst [vmem:[%s2603] ss:$9 sm:$0xff] %v1341
    %s2605 = scalar_lea.vmem [#allocation1], 7
    %2606 = vst [vmem:[%s2605] ss:$9 sm:$0xff] %v1311
    %v2607 = vld [vmem:[#allocation1] sm:$0xff]
    %2608 = vst [vmem:[#allocation1] ss:$9 sm:$0xff] %v1342
    %2609 = vst [vmem:[%s2593] ss:$9 sm:$0xff] %v1343
    %2610 = vst [vmem:[%s2595] ss:$9 sm:$0xff] %v1344
    %2611 = vst [vmem:[%s2597] ss:$9 sm:$0xff] %v1345
    %2612 = vst [vmem:[%s2599] ss:$9 sm:$0xff] %v1346
    %2613 = vst [vmem:[%s2601] ss:$9 sm:$0xff] %v1347
    %2614 = vst [vmem:[%s2603] ss:$9 sm:$0xff] %v1348
    %2615 = vst [vmem:[%s2605] ss:$9 sm:$0xff] %v1314
    %v2616 = vld [vmem:[#allocation1] sm:$0xff]
    %2617 = vst [vmem:[#allocation1] ss:$9 sm:$0xff] %v1349
    %v2618 = vld [vmem:[#allocation1] sm:$0xff]
    %2619 = vrot.lane.b32.xlu0 %v2607, 80
    %v2620 = vpop.permute.xlu0 %2619
    %2621 = vrot.lane.b32.xlu0 %v2616, 80
    %v2622 = vpop.permute.xlu0 %2621
    %2623 = vrot.lane.b32.xlu0 %v2618, 80
    %v2624 = vpop.permute.xlu0 %2623
    %v2625 = vsel %vm1414, %v2587, 0
    %v2627 = vsel %vm1414, %v2589, 0
    %v2629 = vsel %vm1414, %v2591, 0
    %v2631 = vsel %vm1414, %v2620, 0
    %v2633 = vsel %vm1414, %v2622, 0
    %v2635 = vsel %vm1414, %v2624, 0
    %2637 = vmatpush.xpose.msra.mxu0 0.0
    %2638 = vmatpush.xpose.msra.mxu0 0.0
    %2639 = vmatpush.xpose.msra.mxu0 0.0
    %2640 = vmatpush.xpose.msra.mxu0 0.0
    %2641 = vmatpush.xpose.msra.mxu0 0.0
    %2642 = vmatpush.xpose.msra.mxu0 0.0
    %2643 = vmatpush.xpose.msra.mxu0 0.0
    %2644 = vmatpush.xpose.msra.mxu0 0.0
    %2645 = vmatpush.xpose.msra.mxu0 0.0
    %2646 = vmatpush.xpose.msra.mxu0 0.0
    %2647 = vmatpush.xpose.msra.mxu0 0.0
    %2648 = vmatpush.xpose.msra.mxu0 0.0
    %2649 = vmatpush.xpose.msra.mxu0 0.0
    %2650 = vmatpush.xpose.msra.mxu0 %v2635
    %2651 = vmatpush.xpose.msra.mxu0 %v2633
    %2652 = vmatpush.xpose.msra.mxu0 %v2631
    %2653 = vmatmul.f32.gmra.mxu0 %v2625
    %v2654 = vpop.f32.mrf.mxu0
    %v2655 = vadd.f32 0.0, %v2654
    %2656 = vmatmul.f32.gmra.mxu0 %v2627
    %v2657 = vpop.f32.mrf.mxu0
    %v2658 = vadd.f32 0.0, %v2657
    %2659 = vmatmul.f32.gmra.mxu0 %v2629
    %v2660 = vpop.f32.mrf.mxu0
    %v2661 = vadd.f32 0.0, %v2660
    %2662 = vdwg.mxu0
    %v2663 = vmul.f32 %v2551, 0.35355338
    %v2664 = vmul.f32 %v2554, 0.35355338
    %v2665 = vmul.f32 %v2557, 0.35355338
    %v2666 = vmul.f32 %v2655, 0.35355338
    %v2667 = vmul.f32 %v2658, 0.35355338
    %v2668 = vmul.f32 %v2661, 0.35355338
    %v2669 = vsel %vm1560, -3.4028235e+38, %v2663
    %v2670 = vsel %vm1561, -3.4028235e+38, %v2664
    %v2671 = vsel %vm1562, -3.4028235e+38, %v2665
    %v2672 = vsel %vm1560, -3.4028235e+38, %v2666
    %v2673 = vsel %vm1561, -3.4028235e+38, %v2667
    %v2674 = vsel %vm1562, -3.4028235e+38, %v2668
    %v2675 = vsel %vm1569, %v2669, -inf
    %2676 = vmax.xlane.f32.xlu0 %v2675
    %v2677 = vpop.xlane.xlu0 %2676
    %v2678 = vsel %vm1569, %v2670, -inf
    %2679 = vmax.xlane.f32.xlu0 %v2678
    %v2680 = vpop.xlane.xlu0 %2679
    %v2681 = vsel %vm1576, %v2671, -inf
    %2682 = vmax.xlane.f32.xlu0 %v2681
    %v2683 = vpop.xlane.xlu0 %2682
    %v2684 = vsel %vm1569, %v2672, -inf
    %2685 = vmax.xlane.f32.xlu0 %v2684
    %v2686 = vpop.xlane.xlu0 %2685
    %v2687 = vsel %vm1569, %v2673, -inf
    %2688 = vmax.xlane.f32.xlu0 %v2687
    %v2689 = vpop.xlane.xlu0 %2688
    %v2690 = vsel %vm1576, %v2674, -inf
    %2691 = vmax.xlane.f32.xlu0 %v2690
    %v2692 = vpop.xlane.xlu0 %2691
    %v2693 = vsub.f32 %v2669, %v2677
    %v2694 = vsub.f32 %v2670, %v2680
    %v2695 = vsub.f32 %v2671, %v2683
    %v2696 = vsub.f32 %v2672, %v2686
    %v2697 = vsub.f32 %v2673, %v2689
    %v2698 = vsub.f32 %v2674, %v2692
    %v2699 = vmul.f32 %v2693, 1.442695
    %v2700 = vpow.pop %v2699
    %v2701 = vmul.f32 %v2694, 1.442695
    %v2702 = vpow.pop %v2701
    %v2703 = vmul.f32 %v2695, 1.442695
    %v2704 = vpow.pop %v2703
    %v2705 = vmul.f32 %v2696, 1.442695
    %v2706 = vpow.pop %v2705
    %v2707 = vmul.f32 %v2697, 1.442695
    %v2708 = vpow.pop %v2707
    %v2709 = vmul.f32 %v2698, 1.442695
    %v2710 = vpow.pop %v2709
    %v2711 = vsel %vm1569, %v2700, 0.0
    %2712 = vadd.xlane.f32.xlu0 %v2711
    %v2713 = vpop.xlane.xlu0 %2712
    %v2714 = vsel %vm1569, %v2702, 0.0
    %2715 = vadd.xlane.f32.xlu0 %v2714
    %v2716 = vpop.xlane.xlu0 %2715
    %v2717 = vsel %vm1576, %v2704, 0.0
    %2718 = vadd.xlane.f32.xlu0 %v2717
    %v2719 = vpop.xlane.xlu0 %2718
    %v2720 = vsel %vm1569, %v2706, 0.0
    %2721 = vadd.xlane.f32.xlu0 %v2720
    %v2722 = vpop.xlane.xlu0 %2721
    %v2723 = vsel %vm1569, %v2708, 0.0
    %2724 = vadd.xlane.f32.xlu0 %v2723
    %v2725 = vpop.xlane.xlu0 %2724
    %v2726 = vsel %vm1576, %v2710, 0.0
    %2727 = vadd.xlane.f32.xlu0 %v2726
    %v2728 = vpop.xlane.xlu0 %2727
    %v2729 = vrcp.pop %v2713
    %v2730 = vrcp.pop %v2716
    %v2731 = vrcp.pop %v2719
    %v2732 = vrcp.pop %v2722
    %v2733 = vrcp.pop %v2725
    %v2734 = vrcp.pop %v2728
    %v2735 = vmul.f32 %v2700, %v2729
    %v2736 = vmul.f32 %v2702, %v2730
    %v2737 = vmul.f32 %v2704, %v2731
    %v2738 = vmul.f32 %v2706, %v2732
    %v2739 = vmul.f32 %v2708, %v2733
    %v2740 = vmul.f32 %v2710, %v2734
    %2741 = vst [vmem:[#allocation1] ss:$9 sm:$0xff] %v1302
    %s2742 = scalar_lea.vmem [#allocation1], 1
    %2743 = vst [vmem:[%s2742] ss:$9 sm:$0xff] %v1321
    %s2744 = scalar_lea.vmem [#allocation1], 2
    %2745 = vst [vmem:[%s2744] ss:$9 sm:$0xff] %v1322
    %s2746 = scalar_lea.vmem [#allocation1], 3
    %2747 = vst [vmem:[%s2746] ss:$9 sm:$0xff] %v1323
    %s2748 = scalar_lea.vmem [#allocation1], 4
    %2749 = vst [vmem:[%s2748] ss:$9 sm:$0xff] %v1324
    %s2750 = scalar_lea.vmem [#allocation1], 5
    %2751 = vst [vmem:[%s2750] ss:$9 sm:$0xff] %v1325
    %s2752 = scalar_lea.vmem [#allocation1], 6
    %2753 = vst [vmem:[%s2752] ss:$9 sm:$0xff] %v1326
    %s2754 = scalar_lea.vmem [#allocation1], 7
    %2755 = vst [vmem:[%s2754] ss:$9 sm:$0xff] %v1327
    %v2756 = vld [vmem:[#allocation1] sm:$0xff]
    %2757 = vst [vmem:[#allocation1] ss:$9 sm:$0xff] %v1305
    %2758 = vst [vmem:[%s2742] ss:$9 sm:$0xff] %v1328
    %2759 = vst [vmem:[%s2744] ss:$9 sm:$0xff] %v1329
    %2760 = vst [vmem:[%s2746] ss:$9 sm:$0xff] %v1330
    %2761 = vst [vmem:[%s2748] ss:$9 sm:$0xff] %v1331
    %2762 = vst [vmem:[%s2750] ss:$9 sm:$0xff] %v1332
    %2763 = vst [vmem:[%s2752] ss:$9 sm:$0xff] %v1333
    %2764 = vst [vmem:[%s2754] ss:$9 sm:$0xff] %v1334
    %v2765 = vld [vmem:[#allocation1] sm:$0xff]
    %2766 = vst [vmem:[#allocation1] ss:$9 sm:$0xff] %v1308
    %v2767 = vld [vmem:[#allocation1] sm:$0xff]
    %2768 = vrot.lane.b32.xlu0 %v2756, 48
    %v2769 = vpop.permute.xlu0 %2768
    %2770 = vrot.lane.b32.xlu0 %v2765, 48
    %v2771 = vpop.permute.xlu0 %2770
    %2772 = vrot.lane.b32.xlu0 %v2767, 48
    %v2773 = vpop.permute.xlu0 %2772
    %v2777 = vsel %vm1569, %v2735, 0
    %v2780 = vsel %vm1569, %v2736, 0
    %v2783 = vsel %vm1569, %v2737, 0
    %v2785 = vsel %vm90, %v2773, 0
    %2787 = vmatpush.msra.mxu0 0.0
    %2788 = vmatpush.msra.mxu0 0.0
    %2789 = vmatpush.msra.mxu0 0.0
    %2790 = vmatpush.msra.mxu0 0.0
    %2791 = vmatpush.msra.mxu0 0.0
    %2792 = vmatpush.msra.mxu0 0.0
    %2793 = vmatpush.msra.mxu0 0.0
    %2794 = vmatpush.msra.mxu0 0.0
    %2795 = vmatpush.msra.mxu0 0.0
    %2796 = vmatpush.msra.mxu0 0.0
    %2797 = vmatpush.msra.mxu0 0.0
    %2798 = vmatpush.msra.mxu0 0.0
    %2799 = vmatpush.msra.mxu0 0.0
    %2800 = vmatpush.msra.mxu0 %v2785
    %2801 = vmatpush.msra.mxu0 %v2771
    %2802 = vmatpush.msra.mxu0 %v2769
    %2803 = vmatmul.f32.gmra.mxu0 %v2777
    %v2804 = vpop.f32.mrf.mxu0
    %v2805 = vadd.f32 0.0, %v2804
    %2806 = vmatmul.f32.gmra.mxu0 %v2780
    %v2807 = vpop.f32.mrf.mxu0
    %v2808 = vadd.f32 0.0, %v2807
    %2809 = vmatmul.f32.gmra.mxu0 %v2783
    %v2810 = vpop.f32.mrf.mxu0
    %v2811 = vadd.f32 0.0, %v2810
    %2812 = vdwg.mxu0
    %2813 = vst [vmem:[#allocation1] ss:$9 sm:$0xff] %v1335
    %s2814 = scalar_lea.vmem [#allocation1], 1
    %2815 = vst [vmem:[%s2814] ss:$9 sm:$0xff] %v1336
    %s2816 = scalar_lea.vmem [#allocation1], 2
    %2817 = vst [vmem:[%s2816] ss:$9 sm:$0xff] %v1337
    %s2818 = scalar_lea.vmem [#allocation1], 3
    %2819 = vst [vmem:[%s2818] ss:$9 sm:$0xff] %v1338
    %s2820 = scalar_lea.vmem [#allocation1], 4
    %2821 = vst [vmem:[%s2820] ss:$9 sm:$0xff] %v1339
    %s2822 = scalar_lea.vmem [#allocation1], 5
    %2823 = vst [vmem:[%s2822] ss:$9 sm:$0xff] %v1340
    %s2824 = scalar_lea.vmem [#allocation1], 6
    %2825 = vst [vmem:[%s2824] ss:$9 sm:$0xff] %v1341
    %s2826 = scalar_lea.vmem [#allocation1], 7
    %2827 = vst [vmem:[%s2826] ss:$9 sm:$0xff] %v1311
    %v2828 = vld [vmem:[#allocation1] sm:$0xff]
    %2829 = vst [vmem:[#allocation1] ss:$9 sm:$0xff] %v1342
    %2830 = vst [vmem:[%s2814] ss:$9 sm:$0xff] %v1343
    %2831 = vst [vmem:[%s2816] ss:$9 sm:$0xff] %v1344
    %2832 = vst [vmem:[%s2818] ss:$9 sm:$0xff] %v1345
    %2833 = vst [vmem:[%s2820] ss:$9 sm:$0xff] %v1346
    %2834 = vst [vmem:[%s2822] ss:$9 sm:$0xff] %v1347
    %2835 = vst [vmem:[%s2824] ss:$9 sm:$0xff] %v1348
    %2836 = vst [vmem:[%s2826] ss:$9 sm:$0xff] %v1314
    %v2837 = vld [vmem:[#allocation1] sm:$0xff]
    %2838 = vst [vmem:[#allocation1] ss:$9 sm:$0xff] %v1349
    %v2839 = vld [vmem:[#allocation1] sm:$0xff]
    %2840 = vrot.lane.b32.xlu0 %v2828, 48
    %v2841 = vpop.permute.xlu0 %2840
    %2842 = vrot.lane.b32.xlu0 %v2837, 48
    %v2843 = vpop.permute.xlu0 %2842
    %2844 = vrot.lane.b32.xlu0 %v2839, 48
    %v2845 = vpop.permute.xlu0 %2844
    %v2849 = vsel %vm1569, %v2738, 0
    %v2852 = vsel %vm1569, %v2739, 0
    %v2855 = vsel %vm1569, %v2740, 0
    %v2857 = vsel %vm90, %v2845, 0
    %2859 = vmatpush.msra.mxu0 0.0
    %2860 = vmatpush.msra.mxu0 0.0
    %2861 = vmatpush.msra.mxu0 0.0
    %2862 = vmatpush.msra.mxu0 0.0
    %2863 = vmatpush.msra.mxu0 0.0
    %2864 = vmatpush.msra.mxu0 0.0
    %2865 = vmatpush.msra.mxu0 0.0
    %2866 = vmatpush.msra.mxu0 0.0
    %2867 = vmatpush.msra.mxu0 0.0
    %2868 = vmatpush.msra.mxu0 0.0
    %2869 = vmatpush.msra.mxu0 0.0
    %2870 = vmatpush.msra.mxu0 0.0
    %2871 = vmatpush.msra.mxu0 0.0
    %2872 = vmatpush.msra.mxu0 %v2857
    %2873 = vmatpush.msra.mxu0 %v2843
    %2874 = vmatpush.msra.mxu0 %v2841
    %2875 = vmatmul.f32.gmra.mxu0 %v2849
    %v2876 = vpop.f32.mrf.mxu0
    %v2877 = vadd.f32 0.0, %v2876
    %2878 = vmatmul.f32.gmra.mxu0 %v2852
    %v2879 = vpop.f32.mrf.mxu0
    %v2880 = vadd.f32 0.0, %v2879
    %2881 = vmatmul.f32.gmra.mxu0 %v2855
    %v2882 = vpop.f32.mrf.mxu0
    %v2883 = vadd.f32 0.0, %v2882
    %2884 = vdwg.mxu0
    %v2891 = vrot.slane %v2805, 1
    %v2892 = vrot.slane %v2805, 2
    %v2893 = vrot.slane %v2805, 3
    %v2894 = vrot.slane %v2805, 4
    %v2895 = vrot.slane %v2805, 5
    %v2896 = vrot.slane %v2805, 6
    %v2897 = vrot.slane %v2805, 7
    %v2898 = vrot.slane %v2808, 1
    %v2899 = vrot.slane %v2808, 2
    %v2900 = vrot.slane %v2808, 3
    %v2901 = vrot.slane %v2808, 4
    %v2902 = vrot.slane %v2808, 5
    %v2903 = vrot.slane %v2808, 6
    %v2904 = vrot.slane %v2808, 7
    %v2905 = vrot.slane %v2877, 1
    %v2906 = vrot.slane %v2877, 2
    %v2907 = vrot.slane %v2877, 3
    %v2908 = vrot.slane %v2877, 4
    %v2909 = vrot.slane %v2877, 5
    %v2910 = vrot.slane %v2877, 6
    %v2911 = vrot.slane %v2877, 7
    %v2912 = vrot.slane %v2880, 1
    %v2913 = vrot.slane %v2880, 2
    %v2914 = vrot.slane %v2880, 3
    %v2915 = vrot.slane %v2880, 4
    %v2916 = vrot.slane %v2880, 5
    %v2917 = vrot.slane %v2880, 6
    %v2918 = vrot.slane %v2880, 7
    %2919 = vst [vmem:[#allocation1] ss:$9 sm:$0xff] %v2805
    %s2920 = scalar_lea.vmem [#allocation1], 1
    %2921 = vst [vmem:[%s2920] ss:$9 sm:$0xff] %v2891
    %s2922 = scalar_lea.vmem [#allocation1], 2
    %2923 = vst [vmem:[%s2922] ss:$9 sm:$0xff] %v2892
    %s2924 = scalar_lea.vmem [#allocation1], 3
    %2925 = vst [vmem:[%s2924] ss:$9 sm:$0xff] %v2893
    %s2926 = scalar_lea.vmem [#allocation1], 4
    %2927 = vst [vmem:[%s2926] ss:$9 sm:$0xff] %v2894
    %s2928 = scalar_lea.vmem [#allocation1], 5
    %2929 = vst [vmem:[%s2928] ss:$9 sm:$0xff] %v2895
    %s2930 = scalar_lea.vmem [#allocation1], 6
    %2931 = vst [vmem:[%s2930] ss:$9 sm:$0xff] %v2896
    %s2932 = scalar_lea.vmem [#allocation1], 7
    %2933 = vst [vmem:[%s2932] ss:$9 sm:$0xff] %v2897
    %v2934 = vld [vmem:[#allocation1] sm:$0xff]
    %2935 = vst [vmem:[#allocation1] ss:$9 sm:$0xff] %v2808
    %2936 = vst [vmem:[%s2920] ss:$9 sm:$0xff] %v2898
    %2937 = vst [vmem:[%s2922] ss:$9 sm:$0xff] %v2899
    %2938 = vst [vmem:[%s2924] ss:$9 sm:$0xff] %v2900
    %2939 = vst [vmem:[%s2926] ss:$9 sm:$0xff] %v2901
    %2940 = vst [vmem:[%s2928] ss:$9 sm:$0xff] %v2902
    %2941 = vst [vmem:[%s2930] ss:$9 sm:$0xff] %v2903
    %2942 = vst [vmem:[%s2932] ss:$9 sm:$0xff] %v2904
    %v2943 = vld [vmem:[#allocation1] sm:$0xff]
    %2944 = vst [vmem:[#allocation1] ss:$9 sm:$0xff] %v2811
    %2945 = vst [vmem:[%s2920] ss:$9 sm:$0xff] %v2877
    %2946 = vst [vmem:[%s2922] ss:$9 sm:$0xff] %v2905
    %2947 = vst [vmem:[%s2924] ss:$9 sm:$0xff] %v2906
    %2948 = vst [vmem:[%s2926] ss:$9 sm:$0xff] %v2907
    %2949 = vst [vmem:[%s2928] ss:$9 sm:$0xff] %v2908
    %2950 = vst [vmem:[%s2930] ss:$9 sm:$0xff] %v2909
    %2951 = vst [vmem:[%s2932] ss:$9 sm:$0xff] %v2910
    %v2952 = vld [vmem:[#allocation1] sm:$0xff]
    %2953 = vst [vmem:[#allocation1] ss:$9 sm:$0xff] %v2911
    %2954 = vst [vmem:[%s2920] ss:$9 sm:$0xff] %v2880
    %2955 = vst [vmem:[%s2922] ss:$9 sm:$0xff] %v2912
    %2956 = vst [vmem:[%s2924] ss:$9 sm:$0xff] %v2913
    %2957 = vst [vmem:[%s2926] ss:$9 sm:$0xff] %v2914
    %2958 = vst [vmem:[%s2928] ss:$9 sm:$0xff] %v2915
    %2959 = vst [vmem:[%s2930] ss:$9 sm:$0xff] %v2916
    %2960 = vst [vmem:[%s2932] ss:$9 sm:$0xff] %v2917
    %v2961 = vld [vmem:[#allocation1] sm:$0xff]
    %2962 = vst [vmem:[#allocation1] ss:$9 sm:$0xff] %v2918
    %2963 = vst [vmem:[%s2920] ss:$9 sm:$0xff] %v2883
    %v2964 = vld [vmem:[#allocation1] sm:$0xff]
    %v2965 = vsel %vm1414, %v2934, 0
    %v2967 = vsel %vm1414, %v2943, 0
    %v2969 = vsel %vm1414, %v2952, 0
    %v2971 = vsel %vm1414, %v2961, 0
    %v2973 = vsel %vm1414, %v2964, 0
    %2975 = vmatpush.msra.mxu0 0.0
    %2976 = vmatpush.msra.mxu0 0.0
    %2977 = vmatpush.msra.mxu0 0.0
    %2978 = vmatpush.msra.mxu0 0.0
    %2979 = vmatpush.msra.mxu0 0.0
    %2980 = vmatpush.msra.mxu0 0.0
    %2981 = vmatpush.msra.mxu0 0.0
    %2982 = vmatpush.msra.mxu0 0.0
    %2983 = vmatpush.msra.mxu0 0.0
    %2984 = vmatpush.msra.mxu0 0.0
    %2985 = vmatpush.msra.mxu0 0.0
    %2986 = vmatpush.msra.mxu0 0.0
    %2987 = vmatpush.msra.mxu0 0.0
    %2988 = vmatpush.msra.mxu0 0.0
    %2989 = vmatpush.msra.mxu0 0.0
    %2990 = vmatpush.msra.mxu0 %v1352
    %2991 = vmatmul.f32.gmra.mxu0 %v2965
    %v2992 = vpop.f32.mrf.mxu0
    %v2993 = vadd.f32 0.0, %v2992
    %2994 = vmatmul.f32.gmra.mxu0 %v2967
    %v2995 = vpop.f32.mrf.mxu0
    %v2996 = vadd.f32 0.0, %v2995
    %2997 = vmatmul.f32.gmra.mxu0 %v2969
    %v2998 = vpop.f32.mrf.mxu0
    %v2999 = vadd.f32 0.0, %v2998
    %3000 = vmatmul.f32.gmra.mxu0 %v2971
    %v3001 = vpop.f32.mrf.mxu0
    %v3002 = vadd.f32 0.0, %v3001
    %3003 = vmatmul.f32.gmra.mxu0 %v2973
    %v3004 = vpop.f32.mrf.mxu0
    %v3005 = vadd.f32 0.0, %v3004
    %3006 = vdwg.mxu0
    %v3007 = vadd.f32 %v2441, %v2993
    %v3008 = vadd.f32 %v2444, %v2996
    %v3009 = vadd.f32 %v2447, %v2999
    %v3010 = vadd.f32 %v2450, %v3002
    %v3011 = vadd.f32 %v2453, %v3005
    %3012 = vst [vmem:[#allocation1] ss:$9 sm:$0xff] %v1302
    %s3013 = scalar_lea.vmem [#allocation1], 1
    %3014 = vst [vmem:[%s3013] ss:$9 sm:$0xff] %v1321
    %s3015 = scalar_lea.vmem [#allocation1], 2
    %3016 = vst [vmem:[%s3015] ss:$9 sm:$0xff] %v1322
    %s3017 = scalar_lea.vmem [#allocation1], 3
    %3018 = vst [vmem:[%s3017] ss:$9 sm:$0xff] %v1323
    %s3019 = scalar_lea.vmem [#allocation1], 4
    %3020 = vst [vmem:[%s3019] ss:$9 sm:$0xff] %v1324
    %s3021 = scalar_lea.vmem [#allocation1], 5
    %3022 = vst [vmem:[%s3021] ss:$9 sm:$0xff] %v1325
    %s3023 = scalar_lea.vmem [#allocation1], 6
    %3024 = vst [vmem:[%s3023] ss:$9 sm:$0xff] %v1326
    %s3025 = scalar_lea.vmem [#allocation1], 7
    %3026 = vst [vmem:[%s3025] ss:$9 sm:$0xff] %v1327
    %v3027 = vld [vmem:[#allocation1] sm:$0xff]
    %3028 = vst [vmem:[#allocation1] ss:$9 sm:$0xff] %v1305
    %3029 = vst [vmem:[%s3013] ss:$9 sm:$0xff] %v1328
    %3030 = vst [vmem:[%s3015] ss:$9 sm:$0xff] %v1329
    %3031 = vst [vmem:[%s3017] ss:$9 sm:$0xff] %v1330
    %3032 = vst [vmem:[%s3019] ss:$9 sm:$0xff] %v1331
    %3033 = vst [vmem:[%s3021] ss:$9 sm:$0xff] %v1332
    %3034 = vst [vmem:[%s3023] ss:$9 sm:$0xff] %v1333
    %3035 = vst [vmem:[%s3025] ss:$9 sm:$0xff] %v1334
    %v3036 = vld [vmem:[#allocation1] sm:$0xff]
    %3037 = vst [vmem:[#allocation1] ss:$9 sm:$0xff] %v1308
    %v3038 = vld [vmem:[#allocation1] sm:$0xff]
    %3039 = vrot.lane.b32.xlu0 %v3027, 104
    %v3040 = vpop.permute.xlu0 %3039
    %3041 = vrot.lane.b32.xlu0 %v3036, 104
    %v3042 = vpop.permute.xlu0 %3041
    %3043 = vrot.lane.b32.xlu0 %v3038, 104
    %v3044 = vpop.permute.xlu0 %3043
    %3045 = vst [vmem:[#allocation1] ss:$9 sm:$0xff] %v1302
    %s3046 = scalar_lea.vmem [#allocation1], 1
    %3047 = vst [vmem:[%s3046] ss:$9 sm:$0xff] %v1321
    %s3048 = scalar_lea.vmem [#allocation1], 2
    %3049 = vst [vmem:[%s3048] ss:$9 sm:$0xff] %v1322
    %s3050 = scalar_lea.vmem [#allocation1], 3
    %3051 = vst [vmem:[%s3050] ss:$9 sm:$0xff] %v1323
    %s3052 = scalar_lea.vmem [#allocation1], 4
    %3053 = vst [vmem:[%s3052] ss:$9 sm:$0xff] %v1324
    %s3054 = scalar_lea.vmem [#allocation1], 5
    %3055 = vst [vmem:[%s3054] ss:$9 sm:$0xff] %v1325
    %s3056 = scalar_lea.vmem [#allocation1], 6
    %3057 = vst [vmem:[%s3056] ss:$9 sm:$0xff] %v1326
    %s3058 = scalar_lea.vmem [#allocation1], 7
    %3059 = vst [vmem:[%s3058] ss:$9 sm:$0xff] %v1327
    %v3060 = vld [vmem:[#allocation1] sm:$0xff]
    %3061 = vst [vmem:[#allocation1] ss:$9 sm:$0xff] %v1305
    %3062 = vst [vmem:[%s3046] ss:$9 sm:$0xff] %v1328
    %3063 = vst [vmem:[%s3048] ss:$9 sm:$0xff] %v1329
    %3064 = vst [vmem:[%s3050] ss:$9 sm:$0xff] %v1330
    %3065 = vst [vmem:[%s3052] ss:$9 sm:$0xff] %v1331
    %3066 = vst [vmem:[%s3054] ss:$9 sm:$0xff] %v1332
    %3067 = vst [vmem:[%s3056] ss:$9 sm:$0xff] %v1333
    %3068 = vst [vmem:[%s3058] ss:$9 sm:$0xff] %v1334
    %v3069 = vld [vmem:[#allocation1] sm:$0xff]
    %3070 = vst [vmem:[#allocation1] ss:$9 sm:$0xff] %v1308
    %v3071 = vld [vmem:[#allocation1] sm:$0xff]
    %3072 = vrot.lane.b32.xlu0 %v3060, 72
    %v3073 = vpop.permute.xlu0 %3072
    %3074 = vrot.lane.b32.xlu0 %v3069, 72
    %v3075 = vpop.permute.xlu0 %3074
    %3076 = vrot.lane.b32.xlu0 %v3071, 72
    %v3077 = vpop.permute.xlu0 %3076
    %v3078 = vsel %vm1414, %v3040, 0
    %v3080 = vsel %vm1414, %v3042, 0
    %v3082 = vsel %vm1414, %v3044, 0
    %v3084 = vsel %vm1414, %v3073, 0
    %v3086 = vsel %vm1414, %v3075, 0
    %v3088 = vsel %vm1414, %v3077, 0
    %3090 = vmatpush.xpose.msra.mxu0 0.0
    %3091 = vmatpush.xpose.msra.mxu0 0.0
    %3092 = vmatpush.xpose.msra.mxu0 0.0
    %3093 = vmatpush.xpose.msra.mxu0 0.0
    %3094 = vmatpush.xpose.msra.mxu0 0.0
    %3095 = vmatpush.xpose.msra.mxu0 0.0
    %3096 = vmatpush.xpose.msra.mxu0 0.0
    %3097 = vmatpush.xpose.msra.mxu0 0.0
    %3098 = vmatpush.xpose.msra.mxu0 0.0
    %3099 = vmatpush.xpose.msra.mxu0 0.0
    %3100 = vmatpush.xpose.msra.mxu0 0.0
    %3101 = vmatpush.xpose.msra.mxu0 0.0
    %3102 = vmatpush.xpose.msra.mxu0 0.0
    %3103 = vmatpush.xpose.msra.mxu0 %v3088
    %3104 = vmatpush.xpose.msra.mxu0 %v3086
    %3105 = vmatpush.xpose.msra.mxu0 %v3084
    %3106 = vmatmul.f32.gmra.mxu0 %v3078
    %v3107 = vpop.f32.mrf.mxu0
    %v3108 = vadd.f32 0.0, %v3107
    %3109 = vmatmul.f32.gmra.mxu0 %v3080
    %v3110 = vpop.f32.mrf.mxu0
    %v3111 = vadd.f32 0.0, %v3110
    %3112 = vmatmul.f32.gmra.mxu0 %v3082
    %v3113 = vpop.f32.mrf.mxu0
    %v3114 = vadd.f32 0.0, %v3113
    %3115 = vdwg.mxu0
    %3116 = vst [vmem:[#allocation1] ss:$9 sm:$0xff] %v1335
    %s3117 = scalar_lea.vmem [#allocation1], 1
    %3118 = vst [vmem:[%s3117] ss:$9 sm:$0xff] %v1336
    %s3119 = scalar_lea.vmem [#allocation1], 2
    %3120 = vst [vmem:[%s3119] ss:$9 sm:$0xff] %v1337
    %s3121 = scalar_lea.vmem [#allocation1], 3
    %3122 = vst [vmem:[%s3121] ss:$9 sm:$0xff] %v1338
    %s3123 = scalar_lea.vmem [#allocation1], 4
    %3124 = vst [vmem:[%s3123] ss:$9 sm:$0xff] %v1339
    %s3125 = scalar_lea.vmem [#allocation1], 5
    %3126 = vst [vmem:[%s3125] ss:$9 sm:$0xff] %v1340
    %s3127 = scalar_lea.vmem [#allocation1], 6
    %3128 = vst [vmem:[%s3127] ss:$9 sm:$0xff] %v1341
    %s3129 = scalar_lea.vmem [#allocation1], 7
    %3130 = vst [vmem:[%s3129] ss:$9 sm:$0xff] %v1311
    %v3131 = vld [vmem:[#allocation1] sm:$0xff]
    %3132 = vst [vmem:[#allocation1] ss:$9 sm:$0xff] %v1342
    %3133 = vst [vmem:[%s3117] ss:$9 sm:$0xff] %v1343
    %3134 = vst [vmem:[%s3119] ss:$9 sm:$0xff] %v1344
    %3135 = vst [vmem:[%s3121] ss:$9 sm:$0xff] %v1345
    %3136 = vst [vmem:[%s3123] ss:$9 sm:$0xff] %v1346
    %3137 = vst [vmem:[%s3125] ss:$9 sm:$0xff] %v1347
    %3138 = vst [vmem:[%s3127] ss:$9 sm:$0xff] %v1348
    %3139 = vst [vmem:[%s3129] ss:$9 sm:$0xff] %v1314
    %v3140 = vld [vmem:[#allocation1] sm:$0xff]
    %3141 = vst [vmem:[#allocation1] ss:$9 sm:$0xff] %v1349
    %v3142 = vld [vmem:[#allocation1] sm:$0xff]
    %3143 = vrot.lane.b32.xlu0 %v3131, 104
    %v3144 = vpop.permute.xlu0 %3143
    %3145 = vrot.lane.b32.xlu0 %v3140, 104
    %v3146 = vpop.permute.xlu0 %3145
    %3147 = vrot.lane.b32.xlu0 %v3142, 104
    %v3148 = vpop.permute.xlu0 %3147
    %3149 = vst [vmem:[#allocation1] ss:$9 sm:$0xff] %v1335
    %s3150 = scalar_lea.vmem [#allocation1], 1
    %3151 = vst [vmem:[%s3150] ss:$9 sm:$0xff] %v1336
    %s3152 = scalar_lea.vmem [#allocation1], 2
    %3153 = vst [vmem:[%s3152] ss:$9 sm:$0xff] %v1337
    %s3154 = scalar_lea.vmem [#allocation1], 3
    %3155 = vst [vmem:[%s3154] ss:$9 sm:$0xff] %v1338
    %s3156 = scalar_lea.vmem [#allocation1], 4
    %3157 = vst [vmem:[%s3156] ss:$9 sm:$0xff] %v1339
    %s3158 = scalar_lea.vmem [#allocation1], 5
    %3159 = vst [vmem:[%s3158] ss:$9 sm:$0xff] %v1340
    %s3160 = scalar_lea.vmem [#allocation1], 6
    %3161 = vst [vmem:[%s3160] ss:$9 sm:$0xff] %v1341
    %s3162 = scalar_lea.vmem [#allocation1], 7
    %3163 = vst [vmem:[%s3162] ss:$9 sm:$0xff] %v1311
    %v3164 = vld [vmem:[#allocation1] sm:$0xff]
    %3165 = vst [vmem:[#allocation1] ss:$9 sm:$0xff] %v1342
    %3166 = vst [vmem:[%s3150] ss:$9 sm:$0xff] %v1343
    %3167 = vst [vmem:[%s3152] ss:$9 sm:$0xff] %v1344
    %3168 = vst [vmem:[%s3154] ss:$9 sm:$0xff] %v1345
    %3169 = vst [vmem:[%s3156] ss:$9 sm:$0xff] %v1346
    %3170 = vst [vmem:[%s3158] ss:$9 sm:$0xff] %v1347
    %3171 = vst [vmem:[%s3160] ss:$9 sm:$0xff] %v1348
    %3172 = vst [vmem:[%s3162] ss:$9 sm:$0xff] %v1314
    %v3173 = vld [vmem:[#allocation1] sm:$0xff]
    %3174 = vst [vmem:[#allocation1] ss:$9 sm:$0xff] %v1349
    %v3175 = vld [vmem:[#allocation1] sm:$0xff]
    %3176 = vrot.lane.b32.xlu0 %v3164, 72
    %v3177 = vpop.permute.xlu0 %3176
    %3178 = vrot.lane.b32.xlu0 %v3173, 72
    %v3179 = vpop.permute.xlu0 %3178
    %3180 = vrot.lane.b32.xlu0 %v3175, 72
    %v3181 = vpop.permute.xlu0 %3180
    %v3182 = vsel %vm1414, %v3144, 0
    %v3184 = vsel %vm1414, %v3146, 0
    %v3186 = vsel %vm1414, %v3148, 0
    %v3188 = vsel %vm1414, %v3177, 0
    %v3190 = vsel %vm1414, %v3179, 0
    %v3192 = vsel %vm1414, %v3181, 0
    %3194 = vmatpush.xpose.msra.mxu0 0.0
    %3195 = vmatpush.xpose.msra.mxu0 0.0
    %3196 = vmatpush.xpose.msra.mxu0 0.0
    %3197 = vmatpush.xpose.msra.mxu0 0.0
    %3198 = vmatpush.xpose.msra.mxu0 0.0
    %3199 = vmatpush.xpose.msra.mxu0 0.0
    %3200 = vmatpush.xpose.msra.mxu0 0.0
    %3201 = vmatpush.xpose.msra.mxu0 0.0
    %3202 = vmatpush.xpose.msra.mxu0 0.0
    %3203 = vmatpush.xpose.msra.mxu0 0.0
    %3204 = vmatpush.xpose.msra.mxu0 0.0
    %3205 = vmatpush.xpose.msra.mxu0 0.0
    %3206 = vmatpush.xpose.msra.mxu0 0.0
    %3207 = vmatpush.xpose.msra.mxu0 %v3192
    %3208 = vmatpush.xpose.msra.mxu0 %v3190
    %3209 = vmatpush.xpose.msra.mxu0 %v3188
    %3210 = vmatmul.f32.gmra.mxu0 %v3182
    %v3211 = vpop.f32.mrf.mxu0
    %v3212 = vadd.f32 0.0, %v3211
    %3213 = vmatmul.f32.gmra.mxu0 %v3184
    %v3214 = vpop.f32.mrf.mxu0
    %v3215 = vadd.f32 0.0, %v3214
    %3216 = vmatmul.f32.gmra.mxu0 %v3186
    %v3217 = vpop.f32.mrf.mxu0
    %v3218 = vadd.f32 0.0, %v3217
    %3219 = vdwg.mxu0
    %v3220 = vmul.f32 %v3108, 0.35355338
    %v3221 = vmul.f32 %v3111, 0.35355338
    %v3222 = vmul.f32 %v3114, 0.35355338
    %v3223 = vmul.f32 %v3212, 0.35355338
    %v3224 = vmul.f32 %v3215, 0.35355338
    %v3225 = vmul.f32 %v3218, 0.35355338
    %v3226 = vsel %vm1560, -3.4028235e+38, %v3220
    %v3227 = vsel %vm1561, -3.4028235e+38, %v3221
    %v3228 = vsel %vm1562, -3.4028235e+38, %v3222
    %v3229 = vsel %vm1560, -3.4028235e+38, %v3223
    %v3230 = vsel %vm1561, -3.4028235e+38, %v3224
    %v3231 = vsel %vm1562, -3.4028235e+38, %v3225
    %v3232 = vsel %vm1569, %v3226, -inf
    %3233 = vmax.xlane.f32.xlu0 %v3232
    %v3234 = vpop.xlane.xlu0 %3233
    %v3235 = vsel %vm1569, %v3227, -inf
    %3236 = vmax.xlane.f32.xlu0 %v3235
    %v3237 = vpop.xlane.xlu0 %3236
    %v3238 = vsel %vm1576, %v3228, -inf
    %3239 = vmax.xlane.f32.xlu0 %v3238
    %v3240 = vpop.xlane.xlu0 %3239
    %v3241 = vsel %vm1569, %v3229, -inf
    %3242 = vmax.xlane.f32.xlu0 %v3241
    %v3243 = vpop.xlane.xlu0 %3242
    %v3244 = vsel %vm1569, %v3230, -inf
    %3245 = vmax.xlane.f32.xlu0 %v3244
    %v3246 = vpop.xlane.xlu0 %3245
    %v3247 = vsel %vm1576, %v3231, -inf
    %3248 = vmax.xlane.f32.xlu0 %v3247
    %v3249 = vpop.xlane.xlu0 %3248
    %v3250 = vsub.f32 %v3226, %v3234
    %v3251 = vsub.f32 %v3227, %v3237
    %v3252 = vsub.f32 %v3228, %v3240
    %v3253 = vsub.f32 %v3229, %v3243
    %v3254 = vsub.f32 %v3230, %v3246
    %v3255 = vsub.f32 %v3231, %v3249
    %v3256 = vmul.f32 %v3250, 1.442695
    %v3257 = vpow.pop %v3256
    %v3258 = vmul.f32 %v3251, 1.442695
    %v3259 = vpow.pop %v3258
    %v3260 = vmul.f32 %v3252, 1.442695
    %v3261 = vpow.pop %v3260
    %v3262 = vmul.f32 %v3253, 1.442695
    %v3263 = vpow.pop %v3262
    %v3264 = vmul.f32 %v3254, 1.442695
    %v3265 = vpow.pop %v3264
    %v3266 = vmul.f32 %v3255, 1.442695
    %v3267 = vpow.pop %v3266
    %v3268 = vsel %vm1569, %v3257, 0.0
    %3269 = vadd.xlane.f32.xlu0 %v3268
    %v3270 = vpop.xlane.xlu0 %3269
    %v3271 = vsel %vm1569, %v3259, 0.0
    %3272 = vadd.xlane.f32.xlu0 %v3271
    %v3273 = vpop.xlane.xlu0 %3272
    %v3274 = vsel %vm1576, %v3261, 0.0
    %3275 = vadd.xlane.f32.xlu0 %v3274
    %v3276 = vpop.xlane.xlu0 %3275
    %v3277 = vsel %vm1569, %v3263, 0.0
    %3278 = vadd.xlane.f32.xlu0 %v3277
    %v3279 = vpop.xlane.xlu0 %3278
    %v3280 = vsel %vm1569, %v3265, 0.0
    %3281 = vadd.xlane.f32.xlu0 %v3280
    %v3282 = vpop.xlane.xlu0 %3281
    %v3283 = vsel %vm1576, %v3267, 0.0
    %3284 = vadd.xlane.f32.xlu0 %v3283
    %v3285 = vpop.xlane.xlu0 %3284
    %v3286 = vrcp.pop %v3270
    %v3287 = vrcp.pop %v3273
    %v3288 = vrcp.pop %v3276
    %v3289 = vrcp.pop %v3279
    %v3290 = vrcp.pop %v3282
    %v3291 = vrcp.pop %v3285
    %v3292 = vmul.f32 %v3257, %v3286
    %v3293 = vmul.f32 %v3259, %v3287
    %v3294 = vmul.f32 %v3261, %v3288
    %v3295 = vmul.f32 %v3263, %v3289
    %v3296 = vmul.f32 %v3265, %v3290
    %v3297 = vmul.f32 %v3267, %v3291
    %3298 = vst [vmem:[#allocation1] ss:$9 sm:$0xff] %v1302
    %s3299 = scalar_lea.vmem [#allocation1], 1
    %3300 = vst [vmem:[%s3299] ss:$9 sm:$0xff] %v1321
    %s3301 = scalar_lea.vmem [#allocation1], 2
    %3302 = vst [vmem:[%s3301] ss:$9 sm:$0xff] %v1322
    %s3303 = scalar_lea.vmem [#allocation1], 3
    %3304 = vst [vmem:[%s3303] ss:$9 sm:$0xff] %v1323
    %s3305 = scalar_lea.vmem [#allocation1], 4
    %3306 = vst [vmem:[%s3305] ss:$9 sm:$0xff] %v1324
    %s3307 = scalar_lea.vmem [#allocation1], 5
    %3308 = vst [vmem:[%s3307] ss:$9 sm:$0xff] %v1325
    %s3309 = scalar_lea.vmem [#allocation1], 6
    %3310 = vst [vmem:[%s3309] ss:$9 sm:$0xff] %v1326
    %s3311 = scalar_lea.vmem [#allocation1], 7
    %3312 = vst [vmem:[%s3311] ss:$9 sm:$0xff] %v1327
    %v3313 = vld [vmem:[#allocation1] sm:$0xff]
    %3314 = vst [vmem:[#allocation1] ss:$9 sm:$0xff] %v1305
    %3315 = vst [vmem:[%s3299] ss:$9 sm:$0xff] %v1328
    %3316 = vst [vmem:[%s3301] ss:$9 sm:$0xff] %v1329
    %3317 = vst [vmem:[%s3303] ss:$9 sm:$0xff] %v1330
    %3318 = vst [vmem:[%s3305] ss:$9 sm:$0xff] %v1331
    %3319 = vst [vmem:[%s3307] ss:$9 sm:$0xff] %v1332
    %3320 = vst [vmem:[%s3309] ss:$9 sm:$0xff] %v1333
    %3321 = vst [vmem:[%s3311] ss:$9 sm:$0xff] %v1334
    %v3322 = vld [vmem:[#allocation1] sm:$0xff]
    %3323 = vst [vmem:[#allocation1] ss:$9 sm:$0xff] %v1308
    %v3324 = vld [vmem:[#allocation1] sm:$0xff]
    %3325 = vrot.lane.b32.xlu0 %v3313, 40
    %v3326 = vpop.permute.xlu0 %3325
    %3327 = vrot.lane.b32.xlu0 %v3322, 40
    %v3328 = vpop.permute.xlu0 %3327
    %3329 = vrot.lane.b32.xlu0 %v3324, 40
    %v3330 = vpop.permute.xlu0 %3329
    %v3334 = vsel %vm1569, %v3292, 0
    %v3337 = vsel %vm1569, %v3293, 0
    %v3340 = vsel %vm1569, %v3294, 0
    %v3342 = vsel %vm90, %v3330, 0
    %3344 = vmatpush.msra.mxu0 0.0
    %3345 = vmatpush.msra.mxu0 0.0
    %3346 = vmatpush.msra.mxu0 0.0
    %3347 = vmatpush.msra.mxu0 0.0
    %3348 = vmatpush.msra.mxu0 0.0
    %3349 = vmatpush.msra.mxu0 0.0
    %3350 = vmatpush.msra.mxu0 0.0
    %3351 = vmatpush.msra.mxu0 0.0
    %3352 = vmatpush.msra.mxu0 0.0
    %3353 = vmatpush.msra.mxu0 0.0
    %3354 = vmatpush.msra.mxu0 0.0
    %3355 = vmatpush.msra.mxu0 0.0
    %3356 = vmatpush.msra.mxu0 0.0
    %3357 = vmatpush.msra.mxu0 %v3342
    %3358 = vmatpush.msra.mxu0 %v3328
    %3359 = vmatpush.msra.mxu0 %v3326
    %3360 = vmatmul.f32.gmra.mxu0 %v3334
    %v3361 = vpop.f32.mrf.mxu0
    %v3362 = vadd.f32 0.0, %v3361
    %3363 = vmatmul.f32.gmra.mxu0 %v3337
    %v3364 = vpop.f32.mrf.mxu0
    %v3365 = vadd.f32 0.0, %v3364
    %3366 = vmatmul.f32.gmra.mxu0 %v3340
    %v3367 = vpop.f32.mrf.mxu0
    %v3368 = vadd.f32 0.0, %v3367
    %3369 = vdwg.mxu0
    %3370 = vst [vmem:[#allocation1] ss:$9 sm:$0xff] %v1335
    %s3371 = scalar_lea.vmem [#allocation1], 1
    %3372 = vst [vmem:[%s3371] ss:$9 sm:$0xff] %v1336
    %s3373 = scalar_lea.vmem [#allocation1], 2
    %3374 = vst [vmem:[%s3373] ss:$9 sm:$0xff] %v1337
    %s3375 = scalar_lea.vmem [#allocation1], 3
    %3376 = vst [vmem:[%s3375] ss:$9 sm:$0xff] %v1338
    %s3377 = scalar_lea.vmem [#allocation1], 4
    %3378 = vst [vmem:[%s3377] ss:$9 sm:$0xff] %v1339
    %s3379 = scalar_lea.vmem [#allocation1], 5
    %3380 = vst [vmem:[%s3379] ss:$9 sm:$0xff] %v1340
    %s3381 = scalar_lea.vmem [#allocation1], 6
    %3382 = vst [vmem:[%s3381] ss:$9 sm:$0xff] %v1341
    %s3383 = scalar_lea.vmem [#allocation1], 7
    %3384 = vst [vmem:[%s3383] ss:$9 sm:$0xff] %v1311
    %v3385 = vld [vmem:[#allocation1] sm:$0xff]
    %3386 = vst [vmem:[#allocation1] ss:$9 sm:$0xff] %v1342
    %3387 = vst [vmem:[%s3371] ss:$9 sm:$0xff] %v1343
    %3388 = vst [vmem:[%s3373] ss:$9 sm:$0xff] %v1344
    %3389 = vst [vmem:[%s3375] ss:$9 sm:$0xff] %v1345
    %3390 = vst [vmem:[%s3377] ss:$9 sm:$0xff] %v1346
    %3391 = vst [vmem:[%s3379] ss:$9 sm:$0xff] %v1347
    %3392 = vst [vmem:[%s3381] ss:$9 sm:$0xff] %v1348
    %3393 = vst [vmem:[%s3383] ss:$9 sm:$0xff] %v1314
    %v3394 = vld [vmem:[#allocation1] sm:$0xff]
    %3395 = vst [vmem:[#allocation1] ss:$9 sm:$0xff] %v1349
    %v3396 = vld [vmem:[#allocation1] sm:$0xff]
    %3397 = vrot.lane.b32.xlu0 %v3385, 40
    %v3398 = vpop.permute.xlu0 %3397
    %3399 = vrot.lane.b32.xlu0 %v3394, 40
    %v3400 = vpop.permute.xlu0 %3399
    %3401 = vrot.lane.b32.xlu0 %v3396, 40
    %v3402 = vpop.permute.xlu0 %3401
    %v3406 = vsel %vm1569, %v3295, 0
    %v3409 = vsel %vm1569, %v3296, 0
    %v3412 = vsel %vm1569, %v3297, 0
    %v3414 = vsel %vm90, %v3402, 0
    %3416 = vmatpush.msra.mxu0 0.0
    %3417 = vmatpush.msra.mxu0 0.0
    %3418 = vmatpush.msra.mxu0 0.0
    %3419 = vmatpush.msra.mxu0 0.0
    %3420 = vmatpush.msra.mxu0 0.0
    %3421 = vmatpush.msra.mxu0 0.0
    %3422 = vmatpush.msra.mxu0 0.0
    %3423 = vmatpush.msra.mxu0 0.0
    %3424 = vmatpush.msra.mxu0 0.0
    %3425 = vmatpush.msra.mxu0 0.0
    %3426 = vmatpush.msra.mxu0 0.0
    %3427 = vmatpush.msra.mxu0 0.0
    %3428 = vmatpush.msra.mxu0 0.0
    %3429 = vmatpush.msra.mxu0 %v3414
    %3430 = vmatpush.msra.mxu0 %v3400
    %3431 = vmatpush.msra.mxu0 %v3398
    %3432 = vmatmul.f32.gmra.mxu0 %v3406
    %v3433 = vpop.f32.mrf.mxu0
    %v3434 = vadd.f32 0.0, %v3433
    %3435 = vmatmul.f32.gmra.mxu0 %v3409
    %v3436 = vpop.f32.mrf.mxu0
    %v3437 = vadd.f32 0.0, %v3436
    %3438 = vmatmul.f32.gmra.mxu0 %v3412
    %v3439 = vpop.f32.mrf.mxu0
    %v3440 = vadd.f32 0.0, %v3439
    %3441 = vdwg.mxu0
    %v3448 = vrot.slane %v3362, 1
    %v3449 = vrot.slane %v3362, 2
    %v3450 = vrot.slane %v3362, 3
    %v3451 = vrot.slane %v3362, 4
    %v3452 = vrot.slane %v3362, 5
    %v3453 = vrot.slane %v3362, 6
    %v3454 = vrot.slane %v3362, 7
    %v3455 = vrot.slane %v3365, 1
    %v3456 = vrot.slane %v3365, 2
    %v3457 = vrot.slane %v3365, 3
    %v3458 = vrot.slane %v3365, 4
    %v3459 = vrot.slane %v3365, 5
    %v3460 = vrot.slane %v3365, 6
    %v3461 = vrot.slane %v3365, 7
    %v3462 = vrot.slane %v3434, 1
    %v3463 = vrot.slane %v3434, 2
    %v3464 = vrot.slane %v3434, 3
    %v3465 = vrot.slane %v3434, 4
    %v3466 = vrot.slane %v3434, 5
    %v3467 = vrot.slane %v3434, 6
    %v3468 = vrot.slane %v3434, 7
    %v3469 = vrot.slane %v3437, 1
    %v3470 = vrot.slane %v3437, 2
    %v3471 = vrot.slane %v3437, 3
    %v3472 = vrot.slane %v3437, 4
    %v3473 = vrot.slane %v3437, 5
    %v3474 = vrot.slane %v3437, 6
    %v3475 = vrot.slane %v3437, 7
    %3476 = vst [vmem:[#allocation1] ss:$9 sm:$0xff] %v3362
    %s3477 = scalar_lea.vmem [#allocation1], 1
    %3478 = vst [vmem:[%s3477] ss:$9 sm:$0xff] %v3448
    %s3479 = scalar_lea.vmem [#allocation1], 2
    %3480 = vst [vmem:[%s3479] ss:$9 sm:$0xff] %v3449
    %s3481 = scalar_lea.vmem [#allocation1], 3
    %3482 = vst [vmem:[%s3481] ss:$9 sm:$0xff] %v3450
    %s3483 = scalar_lea.vmem [#allocation1], 4
    %3484 = vst [vmem:[%s3483] ss:$9 sm:$0xff] %v3451
    %s3485 = scalar_lea.vmem [#allocation1], 5
    %3486 = vst [vmem:[%s3485] ss:$9 sm:$0xff] %v3452
    %s3487 = scalar_lea.vmem [#allocation1], 6
    %3488 = vst [vmem:[%s3487] ss:$9 sm:$0xff] %v3453
    %s3489 = scalar_lea.vmem [#allocation1], 7
    %3490 = vst [vmem:[%s3489] ss:$9 sm:$0xff] %v3454
    %v3491 = vld [vmem:[#allocation1] sm:$0xff]
    %3492 = vst [vmem:[#allocation1] ss:$9 sm:$0xff] %v3365
    %3493 = vst [vmem:[%s3477] ss:$9 sm:$0xff] %v3455
    %3494 = vst [vmem:[%s3479] ss:$9 sm:$0xff] %v3456
    %3495 = vst [vmem:[%s3481] ss:$9 sm:$0xff] %v3457
    %3496 = vst [vmem:[%s3483] ss:$9 sm:$0xff] %v3458
    %3497 = vst [vmem:[%s3485] ss:$9 sm:$0xff] %v3459
    %3498 = vst [vmem:[%s3487] ss:$9 sm:$0xff] %v3460
    %3499 = vst [vmem:[%s3489] ss:$9 sm:$0xff] %v3461
    %v3500 = vld [vmem:[#allocation1] sm:$0xff]
    %3501 = vst [vmem:[#allocation1] ss:$9 sm:$0xff] %v3368
    %3502 = vst [vmem:[%s3477] ss:$9 sm:$0xff] %v3434
    %3503 = vst [vmem:[%s3479] ss:$9 sm:$0xff] %v3462
    %3504 = vst [vmem:[%s3481] ss:$9 sm:$0xff] %v3463
    %3505 = vst [vmem:[%s3483] ss:$9 sm:$0xff] %v3464
    %3506 = vst [vmem:[%s3485] ss:$9 sm:$0xff] %v3465
    %3507 = vst [vmem:[%s3487] ss:$9 sm:$0xff] %v3466
    %3508 = vst [vmem:[%s3489] ss:$9 sm:$0xff] %v3467
    %v3509 = vld [vmem:[#allocation1] sm:$0xff]
    %3510 = vst [vmem:[#allocation1] ss:$9 sm:$0xff] %v3468
    %3511 = vst [vmem:[%s3477] ss:$9 sm:$0xff] %v3437
    %3512 = vst [vmem:[%s3479] ss:$9 sm:$0xff] %v3469
    %3513 = vst [vmem:[%s3481] ss:$9 sm:$0xff] %v3470
    %3514 = vst [vmem:[%s3483] ss:$9 sm:$0xff] %v3471
    %3515 = vst [vmem:[%s3485] ss:$9 sm:$0xff] %v3472
    %3516 = vst [vmem:[%s3487] ss:$9 sm:$0xff] %v3473
    %3517 = vst [vmem:[%s3489] ss:$9 sm:$0xff] %v3474
    %v3518 = vld [vmem:[#allocation1] sm:$0xff]
    %3519 = vst [vmem:[#allocation1] ss:$9 sm:$0xff] %v3475
    %3520 = vst [vmem:[%s3477] ss:$9 sm:$0xff] %v3440
    %v3521 = vld [vmem:[#allocation1] sm:$0xff]
    %v3522 = vsel %vm1414, %v3491, 0
    %v3524 = vsel %vm1414, %v3500, 0
    %v3526 = vsel %vm1414, %v3509, 0
    %v3528 = vsel %vm1414, %v3518, 0
    %v3530 = vsel %vm1414, %v3521, 0
    %3532 = vmatpush.msra.mxu0 0.0
    %3533 = vmatpush.msra.mxu0 0.0
    %3534 = vmatpush.msra.mxu0 0.0
    %3535 = vmatpush.msra.mxu0 0.0
    %3536 = vmatpush.msra.mxu0 0.0
    %3537 = vmatpush.msra.mxu0 0.0
    %3538 = vmatpush.msra.mxu0 0.0
    %3539 = vmatpush.msra.mxu0 0.0
    %3540 = vmatpush.msra.mxu0 0.0
    %3541 = vmatpush.msra.mxu0 0.0
    %3542 = vmatpush.msra.mxu0 0.0
    %3543 = vmatpush.msra.mxu0 0.0
    %3544 = vmatpush.msra.mxu0 0.0
    %3545 = vmatpush.msra.mxu0 0.0
    %3546 = vmatpush.msra.mxu0 0.0
    %3547 = vmatpush.msra.mxu0 %v1353
    %3548 = vmatmul.f32.gmra.mxu0 %v3522
    %v3549 = vpop.f32.mrf.mxu0
    %v3550 = vadd.f32 0.0, %v3549
    %3551 = vmatmul.f32.gmra.mxu0 %v3524
    %v3552 = vpop.f32.mrf.mxu0
    %v3553 = vadd.f32 0.0, %v3552
    %3554 = vmatmul.f32.gmra.mxu0 %v3526
    %v3555 = vpop.f32.mrf.mxu0
    %v3556 = vadd.f32 0.0, %v3555
    %3557 = vmatmul.f32.gmra.mxu0 %v3528
    %v3558 = vpop.f32.mrf.mxu0
    %v3559 = vadd.f32 0.0, %v3558
    %3560 = vmatmul.f32.gmra.mxu0 %v3530
    %v3561 = vpop.f32.mrf.mxu0
    %v3562 = vadd.f32 0.0, %v3561
    %3563 = vdwg.mxu0
    %v3564 = vadd.f32 %v3007, %v3550
    %v3565 = vadd.f32 %v3008, %v3553
    %v3566 = vadd.f32 %v3009, %v3556
    %v3567 = vadd.f32 %v3010, %v3559
    %v3568 = vadd.f32 %v3011, %v3562
    %v3574 = vrot.slane %v3564, 1
    %v3575 = vrot.slane %v3564, 2
    %v3576 = vrot.slane %v3564, 3
    %v3577 = vrot.slane %v3564, 4
    %v3578 = vrot.slane %v3564, 5
    %v3579 = vrot.slane %v3564, 6
    %v3580 = vrot.slane %v3564, 7
    %v3581 = vrot.slane %v3565, 1
    %v3582 = vrot.slane %v3565, 2
    %v3583 = vrot.slane %v3565, 3
    %v3584 = vrot.slane %v3565, 4
    %v3585 = vrot.slane %v3565, 5
    %v3586 = vrot.slane %v3565, 6
    %v3587 = vrot.slane %v3565, 7
    %v3588 = vrot.slane %v3566, 1
    %v3589 = vrot.slane %v3566, 2
    %v3590 = vrot.slane %v3566, 3
    %v3591 = vrot.slane %v3566, 4
    %v3592 = vrot.slane %v3566, 5
    %v3593 = vrot.slane %v3566, 6
    %v3594 = vrot.slane %v3566, 7
    %v3595 = vrot.slane %v3567, 1
    %v3596 = vrot.slane %v3567, 2
    %v3597 = vrot.slane %v3567, 3
    %v3598 = vrot.slane %v3567, 4
    %v3599 = vrot.slane %v3567, 5
    %v3600 = vrot.slane %v3567, 6
    %v3601 = vrot.slane %v3567, 7
    %v3602 = vrot.slane %v3568, 1
    %v3632 = vadd.f32 %v1150, %v3564
    %v3633 = vadd.f32 %v1162, %v3574
    %v3634 = vadd.f32 %v1163, %v3575
    %v3635 = vadd.f32 %v1164, %v3576
    %v3636 = vadd.f32 %v1165, %v3577
    %v3637 = vadd.f32 %v1166, %v3578
    %v3638 = vadd.f32 %v1167, %v3579
    %v3639 = vadd.f32 %v1168, %v3580
    %v3640 = vadd.f32 %v1151, %v3565
    %v3641 = vadd.f32 %v1169, %v3581
    %v3642 = vadd.f32 %v1170, %v3582
    %v3643 = vadd.f32 %v1171, %v3583
    %v3644 = vadd.f32 %v1172, %v3584
    %v3645 = vadd.f32 %v1173, %v3585
    %v3646 = vadd.f32 %v1174, %v3586
    %v3647 = vadd.f32 %v1175, %v3587
    %v3648 = vadd.f32 %v1152, %v3566
    %v3649 = vadd.f32 %v1153, %v3588
    %v3650 = vadd.f32 %v1176, %v3589
    %v3651 = vadd.f32 %v1177, %v3590
    %v3652 = vadd.f32 %v1178, %v3591
    %v3653 = vadd.f32 %v1179, %v3592
    %v3654 = vadd.f32 %v1180, %v3593
    %v3655 = vadd.f32 %v1181, %v3594
    %v3656 = vadd.f32 %v1182, %v3567
    %v3657 = vadd.f32 %v1154, %v3595
    %v3658 = vadd.f32 %v1183, %v3596
    %v3659 = vadd.f32 %v1184, %v3597
    %v3660 = vadd.f32 %v1185, %v3598
    %v3661 = vadd.f32 %v1186, %v3599
    %v3662 = vadd.f32 %v1187, %v3600
    %v3663 = vadd.f32 %v1188, %v3601
    %v3664 = vadd.f32 %v1189, %v3568
    %v3665 = vadd.f32 %v1155, %v3602
    %v3666 = vld [vmem:[%s9] sm:$0x1]
    %v3668 = vperm.slane %v3666, 0
    %v3670 = vrot.slane %v3668, 1
    %v3671 = vrot.slane %v3668, 2
    %v3672 = vrot.slane %v3668, 3
    %v3673 = vrot.slane %v3668, 4
    %v3674 = vrot.slane %v3668, 5
    %v3675 = vrot.slane %v3668, 6
    %v3676 = vrot.slane %v3668, 7
    %v3684 = vadd.f32 %v3632, %v3668
    %v3685 = vadd.f32 %v3633, %v3670
    %v3686 = vadd.f32 %v3634, %v3671
    %v3687 = vadd.f32 %v3635, %v3672
    %v3688 = vadd.f32 %v3636, %v3673
    %v3689 = vadd.f32 %v3637, %v3674
    %v3690 = vadd.f32 %v3638, %v3675
    %v3691 = vadd.f32 %v3639, %v3676
    %v3692 = vadd.f32 %v3640, %v3668
    %v3693 = vadd.f32 %v3641, %v3670
    %v3694 = vadd.f32 %v3642, %v3671
    %v3695 = vadd.f32 %v3643, %v3672
    %v3696 = vadd.f32 %v3644, %v3673
    %v3697 = vadd.f32 %v3645, %v3674
    %v3698 = vadd.f32 %v3646, %v3675
    %v3699 = vadd.f32 %v3647, %v3676
    %v3700 = vadd.f32 %v3648, %v3668
    %v3701 = vadd.f32 %v3649, %v3670
    %v3702 = vadd.f32 %v3650, %v3671
    %v3703 = vadd.f32 %v3651, %v3672
    %v3704 = vadd.f32 %v3652, %v3673
    %v3705 = vadd.f32 %v3653, %v3674
    %v3706 = vadd.f32 %v3654, %v3675
    %v3707 = vadd.f32 %v3655, %v3676
    %v3708 = vadd.f32 %v3656, %v3668
    %v3709 = vadd.f32 %v3657, %v3670
    %v3710 = vadd.f32 %v3658, %v3671
    %v3711 = vadd.f32 %v3659, %v3672
    %v3712 = vadd.f32 %v3660, %v3673
    %v3713 = vadd.f32 %v3661, %v3674
    %v3714 = vadd.f32 %v3662, %v3675
    %v3715 = vadd.f32 %v3663, %v3676
    %v3716 = vadd.f32 %v3664, %v3668
    %v3717 = vadd.f32 %v3665, %v3670
    %v3718 = vld [vmem:[%s10] sm:$0xff]
    %v3719 = vld [vmem:[%s10 + $0x8] sm:$0xff]
    %v3720 = vld [vmem:[%s10 + $0x10] sm:$0xff]
    %v3721 = vld [vmem:[%s10 + $0x18] sm:$0xff]
    %v3722 = vld [vmem:[%s11] sm:$0x1]
    %v3724 = vperm.slane %v3722, 0
    %3760 = vst [vmem:[#allocation1] ss:$9 sm:$0xff] %v3684
    %s3761 = scalar_lea.vmem [#allocation1], 1
    %3762 = vst [vmem:[%s3761] ss:$9 sm:$0xff] %v3685
    %s3763 = scalar_lea.vmem [#allocation1], 2
    %3764 = vst [vmem:[%s3763] ss:$9 sm:$0xff] %v3686
    %s3765 = scalar_lea.vmem [#allocation1], 3
    %3766 = vst [vmem:[%s3765] ss:$9 sm:$0xff] %v3687
    %s3767 = scalar_lea.vmem [#allocation1], 4
    %3768 = vst [vmem:[%s3767] ss:$9 sm:$0xff] %v3688
    %s3769 = scalar_lea.vmem [#allocation1], 5
    %3770 = vst [vmem:[%s3769] ss:$9 sm:$0xff] %v3689
    %s3771 = scalar_lea.vmem [#allocation1], 6
    %3772 = vst [vmem:[%s3771] ss:$9 sm:$0xff] %v3690
    %s3773 = scalar_lea.vmem [#allocation1], 7
    %3774 = vst [vmem:[%s3773] ss:$9 sm:$0xff] %v3691
    %v3775 = vld [vmem:[#allocation1] sm:$0xff]
    %3776 = vst [vmem:[#allocation1] ss:$9 sm:$0xff] %v3692
    %3777 = vst [vmem:[%s3761] ss:$9 sm:$0xff] %v3693
    %3778 = vst [vmem:[%s3763] ss:$9 sm:$0xff] %v3694
    %3779 = vst [vmem:[%s3765] ss:$9 sm:$0xff] %v3695
    %3780 = vst [vmem:[%s3767] ss:$9 sm:$0xff] %v3696
    %3781 = vst [vmem:[%s3769] ss:$9 sm:$0xff] %v3697
    %3782 = vst [vmem:[%s3771] ss:$9 sm:$0xff] %v3698
    %3783 = vst [vmem:[%s3773] ss:$9 sm:$0xff] %v3699
    %v3784 = vld [vmem:[#allocation1] sm:$0xff]
    %3785 = vst [vmem:[#allocation1] ss:$9 sm:$0xff] %v3700
    %3786 = vst [vmem:[%s3761] ss:$9 sm:$0xff] %v3701
    %3787 = vst [vmem:[%s3763] ss:$9 sm:$0xff] %v3702
    %3788 = vst [vmem:[%s3765] ss:$9 sm:$0xff] %v3703
    %3789 = vst [vmem:[%s3767] ss:$9 sm:$0xff] %v3704
    %3790 = vst [vmem:[%s3769] ss:$9 sm:$0xff] %v3705
    %3791 = vst [vmem:[%s3771] ss:$9 sm:$0xff] %v3706
    %3792 = vst [vmem:[%s3773] ss:$9 sm:$0xff] %v3707
    %v3793 = vld [vmem:[#allocation1] sm:$0xff]
    %3794 = vst [vmem:[#allocation1] ss:$9 sm:$0xff] %v3708
    %3795 = vst [vmem:[%s3761] ss:$9 sm:$0xff] %v3709
    %3796 = vst [vmem:[%s3763] ss:$9 sm:$0xff] %v3710
    %3797 = vst [vmem:[%s3765] ss:$9 sm:$0xff] %v3711
    %3798 = vst [vmem:[%s3767] ss:$9 sm:$0xff] %v3712
    %3799 = vst [vmem:[%s3769] ss:$9 sm:$0xff] %v3713
    %3800 = vst [vmem:[%s3771] ss:$9 sm:$0xff] %v3714
    %3801 = vst [vmem:[%s3773] ss:$9 sm:$0xff] %v3715
    %v3802 = vld [vmem:[#allocation1] sm:$0xff]
    %3803 = vst [vmem:[#allocation1] ss:$9 sm:$0xff] %v3716
    %3804 = vst [vmem:[%s3761] ss:$9 sm:$0xff] %v3717
    %v3805 = vld [vmem:[#allocation1] sm:$0xff]
    %v3806 = vsel %vm1273, %v3775, 0
    %v3808 = vsel %vm1273, %v3784, 0
    %v3810 = vsel %vm1273, %v3793, 0
    %v3812 = vsel %vm1273, %v3802, 0
    %v3814 = vsel %vm1273, %v3805, 0
    %3816 = vmatpush.msra.mxu0 0.0
    %3817 = vmatpush.msra.mxu0 0.0
    %3818 = vmatpush.msra.mxu0 0.0
    %3819 = vmatpush.msra.mxu0 0.0
    %3820 = vmatpush.msra.mxu0 0.0
    %3821 = vmatpush.msra.mxu0 0.0
    %3822 = vmatpush.msra.mxu0 0.0
    %3823 = vmatpush.msra.mxu0 0.0
    %3824 = vmatpush.msra.mxu0 0.0
    %3825 = vmatpush.msra.mxu0 0.0
    %3826 = vmatpush.msra.mxu0 0.0
    %3827 = vmatpush.msra.mxu0 0.0
    %3828 = vmatpush.msra.mxu0 %v3721
    %3829 = vmatpush.msra.mxu0 %v3720
    %3830 = vmatpush.msra.mxu0 %v3719
    %3831 = vmatpush.msra.mxu0 %v3718
    %3832 = vmatmul.f32.gmra.mxu0 %v3806
    %v3833 = vpop.f32.mrf.mxu0
    %v3834 = vadd.f32 %v3724, %v3833
    %3835 = vmatmul.f32.gmra.mxu0 %v3808
    %v3836 = vpop.f32.mrf.mxu0
    %v3837 = vadd.f32 %v3724, %v3836
    %3838 = vmatmul.f32.gmra.mxu0 %v3810
    %v3839 = vpop.f32.mrf.mxu0
    %v3840 = vadd.f32 %v3724, %v3839
    %3841 = vmatmul.f32.gmra.mxu0 %v3812
    %v3842 = vpop.f32.mrf.mxu0
    %v3843 = vadd.f32 %v3724, %v3842
    %3844 = vmatmul.f32.gmra.mxu0 %v3814
    %v3845 = vpop.f32.mrf.mxu0
    %v3846 = vadd.f32 %v3724, %v3845
    %3847 = vdwg.mxu0
    %v3848 = vmul.f32 %v3834, 0.5
    %v3849 = vmul.f32 %v3837, 0.5
    %v3850 = vmul.f32 %v3840, 0.5
    %v3851 = vmul.f32 %v3843, 0.5
    %v3852 = vmul.f32 %v3846, 0.5
    %v3853 = vmul.f32 %v3834, 0.70710677
    %v3854 = vmul.f32 %v3837, 0.70710677
    %v3855 = vmul.f32 %v3840, 0.70710677
    %v3856 = vmul.f32 %v3843, 0.70710677
    %v3857 = vmul.f32 %v3846, 0.70710677
    %v3858 = vmul.f32 %v3853, %v3853
    %v3859 = vmin.f32 16.0, %v3858
    %v3860 = vmul.f32 %v3859, 2.1237322e-06
    %v3861 = vadd.f32 %v3860, 0.00028619796
    %v3862 = vmul.f32 %v3859, %v3861
    %v3863 = vadd.f32 %v3862, 0.0036580483
    %v3864 = vmul.f32 %v3859, %v3863
    %v3865 = vadd.f32 %v3864, 0.05243302
    %v3866 = vmul.f32 %v3859, %v3865
    %v3867 = vadd.f32 %v3866, 0.18741608
    %v3868 = vmul.f32 %v3859, %v3867
    %v3869 = vadd.f32 %v3868, 1.1283791
    %v3870 = vmul.f32 %v3853, %v3869
    %v3871 = vmul.f32 %v3859, 3.8918573e-05
    %v3872 = vadd.f32 %v3871, 0.001143296
    %v3873 = vmul.f32 %v3859, %v3872
    %v3874 = vadd.f32 %v3873, 0.014752088
    %v3875 = vmul.f32 %v3859, %v3874
    %v3876 = vadd.f32 %v3875, 0.112945676
    %v3877 = vmul.f32 %v3859, %v3876
    %v3878 = vadd.f32 %v3877, 0.4994258
    %v3879 = vmul.f32 %v3859, %v3878
    %v3880 = vadd.f32 %v3879, 1.0
    %v3881 = vrcp.pop %v3880
    %v3882 = vmul.f32 %v3880, %v3881
    %v3883 = vsub.f32 1.0, %v3882
    %v3884 = vmul.f32 %v3881, %v3883
    %v3885 = vadd.f32 %v3881, %v3884
    %vm3886 = vweird.f32 %v3880
    %vm3887 = vweird.f32 %v3881
    %vm3888 = vmor %vm3886, %vm3887
    %v3889 = vsel %vm3888, %v3881, %v3885
    %v3890 = vand.u32 2147483647, %v3880
    %vm3891 = vcmp.eq.f32.partialorder %v3890, 8.507059e+37
    %v3892 = vand.u32 %v3880, 2147483648
    %v3893 = vor.u32 1.1754944e-38, %v3892
    %v3894 = vsel %vm3891, %v3893, %v3889
    %v3895 = vmul.f32 %v3870, %v3894
    %v3896 = vmin.f32 %v3895, 1.0
    %v3897 = vmax.f32 %v3896, -1.0
    %v3898 = vmul.f32 %v3854, %v3854
    %v3899 = vmin.f32 16.0, %v3898
    %v3900 = vmul.f32 %v3899, 2.1237322e-06
    %v3901 = vadd.f32 %v3900, 0.00028619796
    %v3902 = vmul.f32 %v3899, %v3901
    %v3903 = vadd.f32 %v3902, 0.0036580483
    %v3904 = vmul.f32 %v3899, %v3903
    %v3905 = vadd.f32 %v3904, 0.05243302
    %v3906 = vmul.f32 %v3899, %v3905
    %v3907 = vadd.f32 %v3906, 0.18741608
    %v3908 = vmul.f32 %v3899, %v3907
    %v3909 = vadd.f32 %v3908, 1.1283791
    %v3910 = vmul.f32 %v3854, %v3909
    %v3911 = vmul.f32 %v3899, 3.8918573e-05
    %v3912 = vadd.f32 %v3911, 0.001143296
    %v3913 = vmul.f32 %v3899, %v3912
    %v3914 = vadd.f32 %v3913, 0.014752088
    %v3915 = vmul.f32 %v3899, %v3914
    %v3916 = vadd.f32 %v3915, 0.112945676
    %v3917 = vmul.f32 %v3899, %v3916
    %v3918 = vadd.f32 %v3917, 0.4994258
    %v3919 = vmul.f32 %v3899, %v3918
    %v3920 = vadd.f32 %v3919, 1.0
    %v3921 = vrcp.pop %v3920
    %v3922 = vmul.f32 %v3920, %v3921
    %v3923 = vsub.f32 1.0, %v3922
    %v3924 = vmul.f32 %v3921, %v3923
    %v3925 = vadd.f32 %v3921, %v3924
    %vm3926 = vweird.f32 %v3920
    %vm3927 = vweird.f32 %v3921
    %vm3928 = vmor %vm3926, %vm3927
    %v3929 = vsel %vm3928, %v3921, %v3925
    %v3930 = vand.u32 2147483647, %v3920
    %vm3931 = vcmp.eq.f32.partialorder %v3930, 8.507059e+37
    %v3932 = vand.u32 %v3920, 2147483648
    %v3933 = vor.u32 1.1754944e-38, %v3932
    %v3934 = vsel %vm3931, %v3933, %v3929
    %v3935 = vmul.f32 %v3910, %v3934
    %v3936 = vmin.f32 %v3935, 1.0
    %v3937 = vmax.f32 %v3936, -1.0
    %v3938 = vmul.f32 %v3855, %v3855
    %v3939 = vmin.f32 16.0, %v3938
    %v3940 = vmul.f32 %v3939, 2.1237322e-06
    %v3941 = vadd.f32 %v3940, 0.00028619796
    %v3942 = vmul.f32 %v3939, %v3941
    %v3943 = vadd.f32 %v3942, 0.0036580483
    %v3944 = vmul.f32 %v3939, %v3943
    %v3945 = vadd.f32 %v3944, 0.05243302
    %v3946 = vmul.f32 %v3939, %v3945
    %v3947 = vadd.f32 %v3946, 0.18741608
    %v3948 = vmul.f32 %v3939, %v3947
    %v3949 = vadd.f32 %v3948, 1.1283791
    %v3950 = vmul.f32 %v3855, %v3949
    %v3951 = vmul.f32 %v3939, 3.8918573e-05
    %v3952 = vadd.f32 %v3951, 0.001143296
    %v3953 = vmul.f32 %v3939, %v3952
    %v3954 = vadd.f32 %v3953, 0.014752088
    %v3955 = vmul.f32 %v3939, %v3954
    %v3956 = vadd.f32 %v3955, 0.112945676
    %v3957 = vmul.f32 %v3939, %v3956
    %v3958 = vadd.f32 %v3957, 0.4994258
    %v3959 = vmul.f32 %v3939, %v3958
    %v3960 = vadd.f32 %v3959, 1.0
    %v3961 = vrcp.pop %v3960
    %v3962 = vmul.f32 %v3960, %v3961
    %v3963 = vsub.f32 1.0, %v3962
    %v3964 = vmul.f32 %v3961, %v3963
    %v3965 = vadd.f32 %v3961, %v3964
    %vm3966 = vweird.f32 %v3960
    %vm3967 = vweird.f32 %v3961
    %vm3968 = vmor %vm3966, %vm3967
    %v3969 = vsel %vm3968, %v3961, %v3965
    %v3970 = vand.u32 2147483647, %v3960
    %vm3971 = vcmp.eq.f32.partialorder %v3970, 8.507059e+37
    %v3972 = vand.u32 %v3960, 2147483648
    %v3973 = vor.u32 1.1754944e-38, %v3972
    %v3974 = vsel %vm3971, %v3973, %v3969
    %v3975 = vmul.f32 %v3950, %v3974
    %v3976 = vmin.f32 %v3975, 1.0
    %v3977 = vmax.f32 %v3976, -1.0
    %v3978 = vmul.f32 %v3856, %v3856
    %v3979 = vmin.f32 16.0, %v3978
    %v3980 = vmul.f32 %v3979, 2.1237322e-06
    %v3981 = vadd.f32 %v3980, 0.00028619796
    %v3982 = vmul.f32 %v3979, %v3981
    %v3983 = vadd.f32 %v3982, 0.0036580483
    %v3984 = vmul.f32 %v3979, %v3983
    %v3985 = vadd.f32 %v3984, 0.05243302
    %v3986 = vmul.f32 %v3979, %v3985
    %v3987 = vadd.f32 %v3986, 0.18741608
    %v3988 = vmul.f32 %v3979, %v3987
    %v3989 = vadd.f32 %v3988, 1.1283791
    %v3990 = vmul.f32 %v3856, %v3989
    %v3991 = vmul.f32 %v3979, 3.8918573e-05
    %v3992 = vadd.f32 %v3991, 0.001143296
    %v3993 = vmul.f32 %v3979, %v3992
    %v3994 = vadd.f32 %v3993, 0.014752088
    %v3995 = vmul.f32 %v3979, %v3994
    %v3996 = vadd.f32 %v3995, 0.112945676
    %v3997 = vmul.f32 %v3979, %v3996
    %v3998 = vadd.f32 %v3997, 0.4994258
    %v3999 = vmul.f32 %v3979, %v3998
    %v4000 = vadd.f32 %v3999, 1.0
    %v4001 = vrcp.pop %v4000
    %v4002 = vmul.f32 %v4000, %v4001
    %v4003 = vsub.f32 1.0, %v4002
    %v4004 = vmul.f32 %v4001, %v4003
    %v4005 = vadd.f32 %v4001, %v4004
    %vm4006 = vweird.f32 %v4000
    %vm4007 = vweird.f32 %v4001
    %vm4008 = vmor %vm4006, %vm4007
    %v4009 = vsel %vm4008, %v4001, %v4005
    %v4010 = vand.u32 2147483647, %v4000
    %vm4011 = vcmp.eq.f32.partialorder %v4010, 8.507059e+37
    %v4012 = vand.u32 %v4000, 2147483648
    %v4013 = vor.u32 1.1754944e-38, %v4012
    %v4014 = vsel %vm4011, %v4013, %v4009
    %v4015 = vmul.f32 %v3990, %v4014
    %v4016 = vmin.f32 %v4015, 1.0
    %v4017 = vmax.f32 %v4016, -1.0
    %v4018 = vmul.f32 %v3857, %v3857
    %v4019 = vmin.f32 16.0, %v4018
    %v4020 = vmul.f32 %v4019, 2.1237322e-06
    %v4021 = vadd.f32 %v4020, 0.00028619796
    %v4022 = vmul.f32 %v4019, %v4021
    %v4023 = vadd.f32 %v4022, 0.0036580483
    %v4024 = vmul.f32 %v4019, %v4023
    %v4025 = vadd.f32 %v4024, 0.05243302
    %v4026 = vmul.f32 %v4019, %v4025
    %v4027 = vadd.f32 %v4026, 0.18741608
    %v4028 = vmul.f32 %v4019, %v4027
    %v4029 = vadd.f32 %v4028, 1.1283791
    %v4030 = vmul.f32 %v3857, %v4029
    %v4031 = vmul.f32 %v4019, 3.8918573e-05
    %v4032 = vadd.f32 %v4031, 0.001143296
    %v4033 = vmul.f32 %v4019, %v4032
    %v4034 = vadd.f32 %v4033, 0.014752088
    %v4035 = vmul.f32 %v4019, %v4034
    %v4036 = vadd.f32 %v4035, 0.112945676
    %v4037 = vmul.f32 %v4019, %v4036
    %v4038 = vadd.f32 %v4037, 0.4994258
    %v4039 = vmul.f32 %v4019, %v4038
    %v4040 = vadd.f32 %v4039, 1.0
    %v4041 = vrcp.pop %v4040
    %v4042 = vmul.f32 %v4040, %v4041
    %v4043 = vsub.f32 1.0, %v4042
    %v4044 = vmul.f32 %v4041, %v4043
    %v4045 = vadd.f32 %v4041, %v4044
    %vm4046 = vweird.f32 %v4040
    %vm4047 = vweird.f32 %v4041
    %vm4048 = vmor %vm4046, %vm4047
    %v4049 = vsel %vm4048, %v4041, %v4045
    %v4050 = vand.u32 2147483647, %v4040
    %vm4051 = vcmp.eq.f32.partialorder %v4050, 8.507059e+37
    %v4052 = vand.u32 %v4040, 2147483648
    %v4053 = vor.u32 1.1754944e-38, %v4052
    %v4054 = vsel %vm4051, %v4053, %v4049
    %v4055 = vmul.f32 %v4030, %v4054
    %v4056 = vmin.f32 %v4055, 1.0
    %v4057 = vmax.f32 %v4056, -1.0
    %v4058 = vadd.f32 %v3897, 1.0
    %v4059 = vadd.f32 %v3937, 1.0
    %v4060 = vadd.f32 %v3977, 1.0
    %v4061 = vadd.f32 %v4017, 1.0
    %v4062 = vadd.f32 %v4057, 1.0
    %v4063 = vmul.f32 %v3848, %v4058
    %v4064 = vmul.f32 %v3849, %v4059
    %v4065 = vmul.f32 %v3850, %v4060
    %v4066 = vmul.f32 %v3851, %v4061
    %v4067 = vmul.f32 %v3852, %v4062
    %v4068 = vld [vmem:[%s12] sm:$0xff]
    %v4069 = vld [vmem:[%s12 + $0x8] sm:$0xff]
    %v4070 = vld [vmem:[%s12 + $0x10] sm:$0xff]
    %v4071 = vld [vmem:[%s12 + $0x18] sm:$0xff]
    %v4072 = vld [vmem:[%s12 + $0x20] sm:$0xff]
    %v4073 = vld [vmem:[%s12 + $0x28] sm:$0xff]
    %v4074 = vld [vmem:[%s12 + $0x30] sm:$0xff]
    %v4075 = vld [vmem:[%s12 + $0x38] sm:$0xff]
    %vm4076 = vcmask 523264
    %v4078 = vsel %vm4076, %v4063, 0
    %v4081 = vsel %vm4076, %v4064, 0
    %v4084 = vsel %vm4076, %v4065, 0
    %v4087 = vsel %vm4076, %v4066, 0
    %v4090 = vsel %vm4076, %v4067, 0
    %4092 = vmatpush.msra.mxu0 0.0
    %4093 = vmatpush.msra.mxu0 0.0
    %4094 = vmatpush.msra.mxu0 0.0
    %4095 = vmatpush.msra.mxu0 0.0
    %4096 = vmatpush.msra.mxu0 0.0
    %4097 = vmatpush.msra.mxu0 0.0
    %4098 = vmatpush.msra.mxu0 0.0
    %4099 = vmatpush.msra.mxu0 0.0
    %4100 = vmatpush.msra.mxu0 %v4075
    %4101 = vmatpush.msra.mxu0 %v4074
    %4102 = vmatpush.msra.mxu0 %v4073
    %4103 = vmatpush.msra.mxu0 %v4072
    %4104 = vmatpush.msra.mxu0 %v4071
    %4105 = vmatpush.msra.mxu0 %v4070
    %4106 = vmatpush.msra.mxu0 %v4069
    %4107 = vmatpush.msra.mxu0 %v4068
    %4108 = vmatmul.f32.gmra.mxu0 %v4078
    %v4109 = vpop.f32.mrf.mxu0
    %v4110 = vadd.f32 0.0, %v4109
    %4111 = vmatmul.f32.gmra.mxu0 %v4081
    %v4112 = vpop.f32.mrf.mxu0
    %v4113 = vadd.f32 0.0, %v4112
    %4114 = vmatmul.f32.gmra.mxu0 %v4084
    %v4115 = vpop.f32.mrf.mxu0
    %v4116 = vadd.f32 0.0, %v4115
    %4117 = vmatmul.f32.gmra.mxu0 %v4087
    %v4118 = vpop.f32.mrf.mxu0
    %v4119 = vadd.f32 0.0, %v4118
    %4120 = vmatmul.f32.gmra.mxu0 %v4090
    %v4121 = vpop.f32.mrf.mxu0
    %v4122 = vadd.f32 0.0, %v4121
    %4123 = vdwg.mxu0
    %v4129 = vrot.slane %v4110, 1
    %v4130 = vrot.slane %v4110, 2
    %v4131 = vrot.slane %v4110, 3
    %v4132 = vrot.slane %v4110, 4
    %v4133 = vrot.slane %v4110, 5
    %v4134 = vrot.slane %v4110, 6
    %v4135 = vrot.slane %v4110, 7
    %v4136 = vrot.slane %v4113, 1
    %v4137 = vrot.slane %v4113, 2
    %v4138 = vrot.slane %v4113, 3
    %v4139 = vrot.slane %v4113, 4
    %v4140 = vrot.slane %v4113, 5
    %v4141 = vrot.slane %v4113, 6
    %v4142 = vrot.slane %v4113, 7
    %v4143 = vrot.slane %v4116, 1
    %v4144 = vrot.slane %v4116, 2
    %v4145 = vrot.slane %v4116, 3
    %v4146 = vrot.slane %v4116, 4
    %v4147 = vrot.slane %v4116, 5
    %v4148 = vrot.slane %v4116, 6
    %v4149 = vrot.slane %v4116, 7
    %v4150 = vrot.slane %v4119, 1
    %v4151 = vrot.slane %v4119, 2
    %v4152 = vrot.slane %v4119, 3
    %v4153 = vrot.slane %v4119, 4
    %v4154 = vrot.slane %v4119, 5
    %v4155 = vrot.slane %v4119, 6
    %v4156 = vrot.slane %v4119, 7
    %v4157 = vrot.slane %v4122, 1
    %v4187 = vadd.f32 %v3684, %v4110
    %v4188 = vadd.f32 %v3685, %v4129
    %v4189 = vadd.f32 %v3686, %v4130
    %v4190 = vadd.f32 %v3687, %v4131
    %v4191 = vadd.f32 %v3688, %v4132
    %v4192 = vadd.f32 %v3689, %v4133
    %v4193 = vadd.f32 %v3690, %v4134
    %v4194 = vadd.f32 %v3691, %v4135
    %v4195 = vadd.f32 %v3692, %v4113
    %v4196 = vadd.f32 %v3693, %v4136
    %v4197 = vadd.f32 %v3694, %v4137
    %v4198 = vadd.f32 %v3695, %v4138
    %v4199 = vadd.f32 %v3696, %v4139
    %v4200 = vadd.f32 %v3697, %v4140
    %v4201 = vadd.f32 %v3698, %v4141
    %v4202 = vadd.f32 %v3699, %v4142
    %v4203 = vadd.f32 %v3700, %v4116
    %v4204 = vadd.f32 %v3701, %v4143
    %v4205 = vadd.f32 %v3702, %v4144
    %v4206 = vadd.f32 %v3703, %v4145
    %v4207 = vadd.f32 %v3704, %v4146
    %v4208 = vadd.f32 %v3705, %v4147
    %v4209 = vadd.f32 %v3706, %v4148
    %v4210 = vadd.f32 %v3707, %v4149
    %v4211 = vadd.f32 %v3708, %v4119
    %v4212 = vadd.f32 %v3709, %v4150
    %v4213 = vadd.f32 %v3710, %v4151
    %v4214 = vadd.f32 %v3711, %v4152
    %v4215 = vadd.f32 %v3712, %v4153
    %v4216 = vadd.f32 %v3713, %v4154
    %v4217 = vadd.f32 %v3714, %v4155
    %v4218 = vadd.f32 %v3715, %v4156
    %v4219 = vadd.f32 %v3716, %v4122
    %v4220 = vadd.f32 %v3717, %v4157
    %v4221 = vld [vmem:[%s13] sm:$0x1]
    %v4223 = vperm.slane %v4221, 0
    %v4225 = vrot.slane %v4223, 1
    %v4226 = vrot.slane %v4223, 2
    %v4227 = vrot.slane %v4223, 3
    %v4228 = vrot.slane %v4223, 4
    %v4229 = vrot.slane %v4223, 5
    %v4230 = vrot.slane %v4223, 6
    %v4231 = vrot.slane %v4223, 7
    %v4239 = vadd.f32 %v4187, %v4223
    %v4240 = vadd.f32 %v4188, %v4225
    %v4241 = vadd.f32 %v4189, %v4226
    %v4242 = vadd.f32 %v4190, %v4227
    %v4243 = vadd.f32 %v4191, %v4228
    %v4244 = vadd.f32 %v4192, %v4229
    %v4245 = vadd.f32 %v4193, %v4230
    %v4246 = vadd.f32 %v4194, %v4231
    %v4247 = vadd.f32 %v4195, %v4223
    %v4248 = vadd.f32 %v4196, %v4225
    %v4249 = vadd.f32 %v4197, %v4226
    %v4250 = vadd.f32 %v4198, %v4227
    %v4251 = vadd.f32 %v4199, %v4228
    %v4252 = vadd.f32 %v4200, %v4229
    %v4253 = vadd.f32 %v4201, %v4230
    %v4254 = vadd.f32 %v4202, %v4231
    %v4255 = vadd.f32 %v4203, %v4223
    %v4256 = vadd.f32 %v4204, %v4225
    %v4257 = vadd.f32 %v4205, %v4226
    %v4258 = vadd.f32 %v4206, %v4227
    %v4259 = vadd.f32 %v4207, %v4228
    %v4260 = vadd.f32 %v4208, %v4229
    %v4261 = vadd.f32 %v4209, %v4230
    %v4262 = vadd.f32 %v4210, %v4231
    %v4263 = vadd.f32 %v4211, %v4223
    %v4264 = vadd.f32 %v4212, %v4225
    %v4265 = vadd.f32 %v4213, %v4226
    %v4266 = vadd.f32 %v4214, %v4227
    %v4267 = vadd.f32 %v4215, %v4228
    %v4268 = vadd.f32 %v4216, %v4229
    %v4269 = vadd.f32 %v4217, %v4230
    %v4270 = vadd.f32 %v4218, %v4231
    %v4271 = vadd.f32 %v4219, %v4223
    %v4272 = vadd.f32 %v4220, %v4225
    %s4273 = scalar_lea.vmem %s7, 32
    %v4274 = vld [vmem:[%s4273] sm:$0xff]
    %v4275 = vld [vmem:[%s4273 + $0x8] sm:$0xff]
    %v4276 = vld [vmem:[%s4273 + $0x10] sm:$0xff]
    %v4277 = vld [vmem:[%s4273 + $0x18] sm:$0xff]
    %4312 = vst [vmem:[#allocation1] ss:$9 sm:$0xff] %v4239
    %s4313 = scalar_lea.vmem [#allocation1], 1
    %4314 = vst [vmem:[%s4313] ss:$9 sm:$0xff] %v4240
    %s4315 = scalar_lea.vmem [#allocation1], 2
    %4316 = vst [vmem:[%s4315] ss:$9 sm:$0xff] %v4241
    %s4317 = scalar_lea.vmem [#allocation1], 3
    %4318 = vst [vmem:[%s4317] ss:$9 sm:$0xff] %v4242
    %s4319 = scalar_lea.vmem [#allocation1], 4
    %4320 = vst [vmem:[%s4319] ss:$9 sm:$0xff] %v4243
    %s4321 = scalar_lea.vmem [#allocation1], 5
    %4322 = vst [vmem:[%s4321] ss:$9 sm:$0xff] %v4244
    %s4323 = scalar_lea.vmem [#allocation1], 6
    %4324 = vst [vmem:[%s4323] ss:$9 sm:$0xff] %v4245
    %s4325 = scalar_lea.vmem [#allocation1], 7
    %4326 = vst [vmem:[%s4325] ss:$9 sm:$0xff] %v4246
    %v4327 = vld [vmem:[#allocation1] sm:$0xff]
    %4328 = vst [vmem:[#allocation1] ss:$9 sm:$0xff] %v4247
    %4329 = vst [vmem:[%s4313] ss:$9 sm:$0xff] %v4248
    %4330 = vst [vmem:[%s4315] ss:$9 sm:$0xff] %v4249
    %4331 = vst [vmem:[%s4317] ss:$9 sm:$0xff] %v4250
    %4332 = vst [vmem:[%s4319] ss:$9 sm:$0xff] %v4251
    %4333 = vst [vmem:[%s4321] ss:$9 sm:$0xff] %v4252
    %4334 = vst [vmem:[%s4323] ss:$9 sm:$0xff] %v4253
    %4335 = vst [vmem:[%s4325] ss:$9 sm:$0xff] %v4254
    %v4336 = vld [vmem:[#allocation1] sm:$0xff]
    %4337 = vst [vmem:[#allocation1] ss:$9 sm:$0xff] %v4255
    %4338 = vst [vmem:[%s4313] ss:$9 sm:$0xff] %v4256
    %4339 = vst [vmem:[%s4315] ss:$9 sm:$0xff] %v4257
    %4340 = vst [vmem:[%s4317] ss:$9 sm:$0xff] %v4258
    %4341 = vst [vmem:[%s4319] ss:$9 sm:$0xff] %v4259
    %4342 = vst [vmem:[%s4321] ss:$9 sm:$0xff] %v4260
    %4343 = vst [vmem:[%s4323] ss:$9 sm:$0xff] %v4261
    %4344 = vst [vmem:[%s4325] ss:$9 sm:$0xff] %v4262
    %v4345 = vld [vmem:[#allocation1] sm:$0xff]
    %4346 = vst [vmem:[#allocation1] ss:$9 sm:$0xff] %v4263
    %4347 = vst [vmem:[%s4313] ss:$9 sm:$0xff] %v4264
    %4348 = vst [vmem:[%s4315] ss:$9 sm:$0xff] %v4265
    %4349 = vst [vmem:[%s4317] ss:$9 sm:$0xff] %v4266
    %4350 = vst [vmem:[%s4319] ss:$9 sm:$0xff] %v4267
    %4351 = vst [vmem:[%s4321] ss:$9 sm:$0xff] %v4268
    %4352 = vst [vmem:[%s4323] ss:$9 sm:$0xff] %v4269
    %4353 = vst [vmem:[%s4325] ss:$9 sm:$0xff] %v4270
    %v4354 = vld [vmem:[#allocation1] sm:$0xff]
    %4355 = vst [vmem:[#allocation1] ss:$9 sm:$0xff] %v4271
    %4356 = vst [vmem:[%s4313] ss:$9 sm:$0xff] %v4272
    %v4357 = vld [vmem:[#allocation1] sm:$0xff]
    %v4358 = vsel %vm1273, %v4327, 0
    %v4360 = vsel %vm1273, %v4336, 0
    %v4362 = vsel %vm1273, %v4345, 0
    %v4364 = vsel %vm1273, %v4354, 0
    %v4366 = vsel %vm1273, %v4357, 0
    %4368 = vmatpush.msra.mxu0 0.0
    %4369 = vmatpush.msra.mxu0 0.0
    %4370 = vmatpush.msra.mxu0 0.0
    %4371 = vmatpush.msra.mxu0 0.0
    %4372 = vmatpush.msra.mxu0 0.0
    %4373 = vmatpush.msra.mxu0 0.0
    %4374 = vmatpush.msra.mxu0 0.0
    %4375 = vmatpush.msra.mxu0 0.0
    %4376 = vmatpush.msra.mxu0 0.0
    %4377 = vmatpush.msra.mxu0 0.0
    %4378 = vmatpush.msra.mxu0 0.0
    %4379 = vmatpush.msra.mxu0 0.0
    %4380 = vmatpush.msra.mxu0 %v4277
    %4381 = vmatpush.msra.mxu0 %v4276
    %4382 = vmatpush.msra.mxu0 %v4275
    %4383 = vmatpush.msra.mxu0 %v4274
    %4384 = vmatmul.f32.gmra.mxu0 %v4358
    %v4385 = vpop.f32.mrf.mxu0
    %v4386 = vadd.f32 0.0, %v4385
    %4387 = vmatmul.f32.gmra.mxu0 %v4360
    %v4388 = vpop.f32.mrf.mxu0
    %v4389 = vadd.f32 0.0, %v4388
    %4390 = vmatmul.f32.gmra.mxu0 %v4362
    %v4391 = vpop.f32.mrf.mxu0
    %v4392 = vadd.f32 0.0, %v4391
    %4393 = vmatmul.f32.gmra.mxu0 %v4364
    %v4394 = vpop.f32.mrf.mxu0
    %v4395 = vadd.f32 0.0, %v4394
    %4396 = vmatmul.f32.gmra.mxu0 %v4366
    %v4397 = vpop.f32.mrf.mxu0
    %v4398 = vadd.f32 0.0, %v4397
    %4399 = vdwg.mxu0
    %v4405 = vrot.slane %v4386, 1
    %v4406 = vrot.slane %v4386, 2
    %v4407 = vrot.slane %v4386, 3
    %v4408 = vrot.slane %v4386, 4
    %v4409 = vrot.slane %v4386, 5
    %v4410 = vrot.slane %v4386, 6
    %v4411 = vrot.slane %v4386, 7
    %v4412 = vrot.slane %v4389, 1
    %v4413 = vrot.slane %v4389, 2
    %v4414 = vrot.slane %v4389, 3
    %v4415 = vrot.slane %v4389, 4
    %v4416 = vrot.slane %v4389, 5
    %v4417 = vrot.slane %v4389, 6
    %v4418 = vrot.slane %v4389, 7
    %v4419 = vrot.slane %v4392, 1
    %v4420 = vrot.slane %v4392, 2
    %v4421 = vrot.slane %v4392, 3
    %v4422 = vrot.slane %v4392, 4
    %v4423 = vrot.slane %v4392, 5
    %v4424 = vrot.slane %v4392, 6
    %v4425 = vrot.slane %v4392, 7
    %v4426 = vrot.slane %v4395, 1
    %v4427 = vrot.slane %v4395, 2
    %v4428 = vrot.slane %v4395, 3
    %v4429 = vrot.slane %v4395, 4
    %v4430 = vrot.slane %v4395, 5
    %v4431 = vrot.slane %v4395, 6
    %v4432 = vrot.slane %v4395, 7
    %v4433 = vrot.slane %v4398, 1
    %s4434 = scalar_lea.vmem %s8, 32
    %v4435 = vld [vmem:[%s4434] sm:$0xff]
    %v4436 = vld [vmem:[%s4434 + $0x8] sm:$0xff]
    %v4437 = vld [vmem:[%s4434 + $0x10] sm:$0xff]
    %v4438 = vld [vmem:[%s4434 + $0x18] sm:$0xff]
    %4439 = vst [vmem:[#allocation1] ss:$9 sm:$0xff] %v4386
    %s4440 = scalar_lea.vmem [#allocation1], 1
    %4441 = vst [vmem:[%s4440] ss:$9 sm:$0xff] %v4405
    %s4442 = scalar_lea.vmem [#allocation1], 2
    %4443 = vst [vmem:[%s4442] ss:$9 sm:$0xff] %v4406
    %s4444 = scalar_lea.vmem [#allocation1], 3
    %4445 = vst [vmem:[%s4444] ss:$9 sm:$0xff] %v4407
    %s4446 = scalar_lea.vmem [#allocation1], 4
    %4447 = vst [vmem:[%s4446] ss:$9 sm:$0xff] %v4408
    %s4448 = scalar_lea.vmem [#allocation1], 5
    %4449 = vst [vmem:[%s4448] ss:$9 sm:$0xff] %v4409
    %s4450 = scalar_lea.vmem [#allocation1], 6
    %4451 = vst [vmem:[%s4450] ss:$9 sm:$0xff] %v4410
    %s4452 = scalar_lea.vmem [#allocation1], 7
    %4453 = vst [vmem:[%s4452] ss:$9 sm:$0xff] %v4411
    %v4454 = vld [vmem:[#allocation1] sm:$0xff]
    %4455 = vst [vmem:[#allocation1] ss:$9 sm:$0xff] %v4389
    %4456 = vst [vmem:[%s4440] ss:$9 sm:$0xff] %v4412
    %4457 = vst [vmem:[%s4442] ss:$9 sm:$0xff] %v4413
    %4458 = vst [vmem:[%s4444] ss:$9 sm:$0xff] %v4414
    %4459 = vst [vmem:[%s4446] ss:$9 sm:$0xff] %v4415
    %4460 = vst [vmem:[%s4448] ss:$9 sm:$0xff] %v4416
    %4461 = vst [vmem:[%s4450] ss:$9 sm:$0xff] %v4417
    %4462 = vst [vmem:[%s4452] ss:$9 sm:$0xff] %v4418
    %v4463 = vld [vmem:[#allocation1] sm:$0xff]
    %4464 = vst [vmem:[#allocation1] ss:$9 sm:$0xff] %v4392
    %v4465 = vld [vmem:[#allocation1] sm:$0xff]
    %4466 = vst [vmem:[#allocation1] ss:$9 sm:$0xff] %v4386
    %s4467 = scalar_lea.vmem [#allocation1], 1
    %4468 = vst [vmem:[%s4467] ss:$9 sm:$0xff] %v4405
    %s4469 = scalar_lea.vmem [#allocation1], 2
    %4470 = vst [vmem:[%s4469] ss:$9 sm:$0xff] %v4406
    %s4471 = scalar_lea.vmem [#allocation1], 3
    %4472 = vst [vmem:[%s4471] ss:$9 sm:$0xff] %v4407
    %s4473 = scalar_lea.vmem [#allocation1], 4
    %4474 = vst [vmem:[%s4473] ss:$9 sm:$0xff] %v4408
    %s4475 = scalar_lea.vmem [#allocation1], 5
    %4476 = vst [vmem:[%s4475] ss:$9 sm:$0xff] %v4409
    %s4477 = scalar_lea.vmem [#allocation1], 6
    %4478 = vst [vmem:[%s4477] ss:$9 sm:$0xff] %v4410
    %s4479 = scalar_lea.vmem [#allocation1], 7
    %4480 = vst [vmem:[%s4479] ss:$9 sm:$0xff] %v4411
    %v4481 = vld [vmem:[#allocation1] sm:$0xff]
    %4482 = vst [vmem:[#allocation1] ss:$9 sm:$0xff] %v4389
    %4483 = vst [vmem:[%s4467] ss:$9 sm:$0xff] %v4412
    %4484 = vst [vmem:[%s4469] ss:$9 sm:$0xff] %v4413
    %4485 = vst [vmem:[%s4471] ss:$9 sm:$0xff] %v4414
    %4486 = vst [vmem:[%s4473] ss:$9 sm:$0xff] %v4415
    %4487 = vst [vmem:[%s4475] ss:$9 sm:$0xff] %v4416
    %4488 = vst [vmem:[%s4477] ss:$9 sm:$0xff] %v4417
    %4489 = vst [vmem:[%s4479] ss:$9 sm:$0xff] %v4418
    %v4490 = vld [vmem:[#allocation1] sm:$0xff]
    %4491 = vst [vmem:[#allocation1] ss:$9 sm:$0xff] %v4392
    %v4492 = vld [vmem:[#allocation1] sm:$0xff]
    %4493 = vrot.lane.b32.xlu0 %v4481, 96
    %v4494 = vpop.permute.xlu0 %4493
    %4495 = vrot.lane.b32.xlu0 %v4490, 96
    %v4496 = vpop.permute.xlu0 %4495
    %4497 = vrot.lane.b32.xlu0 %v4492, 96
    %v4498 = vpop.permute.xlu0 %4497
    %v4499 = vsel %vm1414, %v4454, 0
    %v4501 = vsel %vm1414, %v4463, 0
    %v4503 = vsel %vm1414, %v4465, 0
    %v4505 = vsel %vm1414, %v4494, 0
    %v4507 = vsel %vm1414, %v4496, 0
    %v4509 = vsel %vm1414, %v4498, 0
    %4511 = vmatpush.xpose.msra.mxu0 0.0
    %4512 = vmatpush.xpose.msra.mxu0 0.0
    %4513 = vmatpush.xpose.msra.mxu0 0.0
    %4514 = vmatpush.xpose.msra.mxu0 0.0
    %4515 = vmatpush.xpose.msra.mxu0 0.0
    %4516 = vmatpush.xpose.msra.mxu0 0.0
    %4517 = vmatpush.xpose.msra.mxu0 0.0
    %4518 = vmatpush.xpose.msra.mxu0 0.0
    %4519 = vmatpush.xpose.msra.mxu0 0.0
    %4520 = vmatpush.xpose.msra.mxu0 0.0
    %4521 = vmatpush.xpose.msra.mxu0 0.0
    %4522 = vmatpush.xpose.msra.mxu0 0.0
    %4523 = vmatpush.xpose.msra.mxu0 0.0
    %4524 = vmatpush.xpose.msra.mxu0 %v4509
    %4525 = vmatpush.xpose.msra.mxu0 %v4507
    %4526 = vmatpush.xpose.msra.mxu0 %v4505
    %4527 = vmatmul.f32.gmra.mxu0 %v4499
    %v4528 = vpop.f32.mrf.mxu0
    %v4529 = vadd.f32 0.0, %v4528
    %4530 = vmatmul.f32.gmra.mxu0 %v4501
    %v4531 = vpop.f32.mrf.mxu0
    %v4532 = vadd.f32 0.0, %v4531
    %4533 = vmatmul.f32.gmra.mxu0 %v4503
    %v4534 = vpop.f32.mrf.mxu0
    %v4535 = vadd.f32 0.0, %v4534
    %4536 = vdwg.mxu0
    %4537 = vst [vmem:[#allocation1] ss:$9 sm:$0xff] %v4419
    %s4538 = scalar_lea.vmem [#allocation1], 1
    %4539 = vst [vmem:[%s4538] ss:$9 sm:$0xff] %v4420
    %s4540 = scalar_lea.vmem [#allocation1], 2
    %4541 = vst [vmem:[%s4540] ss:$9 sm:$0xff] %v4421
    %s4542 = scalar_lea.vmem [#allocation1], 3
    %4543 = vst [vmem:[%s4542] ss:$9 sm:$0xff] %v4422
    %s4544 = scalar_lea.vmem [#allocation1], 4
    %4545 = vst [vmem:[%s4544] ss:$9 sm:$0xff] %v4423
    %s4546 = scalar_lea.vmem [#allocation1], 5
    %4547 = vst [vmem:[%s4546] ss:$9 sm:$0xff] %v4424
    %s4548 = scalar_lea.vmem [#allocation1], 6
    %4549 = vst [vmem:[%s4548] ss:$9 sm:$0xff] %v4425
    %s4550 = scalar_lea.vmem [#allocation1], 7
    %4551 = vst [vmem:[%s4550] ss:$9 sm:$0xff] %v4395
    %v4552 = vld [vmem:[#allocation1] sm:$0xff]
    %4553 = vst [vmem:[#allocation1] ss:$9 sm:$0xff] %v4426
    %4554 = vst [vmem:[%s4538] ss:$9 sm:$0xff] %v4427
    %4555 = vst [vmem:[%s4540] ss:$9 sm:$0xff] %v4428
    %4556 = vst [vmem:[%s4542] ss:$9 sm:$0xff] %v4429
    %4557 = vst [vmem:[%s4544] ss:$9 sm:$0xff] %v4430
    %4558 = vst [vmem:[%s4546] ss:$9 sm:$0xff] %v4431
    %4559 = vst [vmem:[%s4548] ss:$9 sm:$0xff] %v4432
    %4560 = vst [vmem:[%s4550] ss:$9 sm:$0xff] %v4398
    %v4561 = vld [vmem:[#allocation1] sm:$0xff]
    %4562 = vst [vmem:[#allocation1] ss:$9 sm:$0xff] %v4433
    %v4563 = vld [vmem:[#allocation1] sm:$0xff]
    %4564 = vst [vmem:[#allocation1] ss:$9 sm:$0xff] %v4419
    %s4565 = scalar_lea.vmem [#allocation1], 1
    %4566 = vst [vmem:[%s4565] ss:$9 sm:$0xff] %v4420
    %s4567 = scalar_lea.vmem [#allocation1], 2
    %4568 = vst [vmem:[%s4567] ss:$9 sm:$0xff] %v4421
    %s4569 = scalar_lea.vmem [#allocation1], 3
    %4570 = vst [vmem:[%s4569] ss:$9 sm:$0xff] %v4422
    %s4571 = scalar_lea.vmem [#allocation1], 4
    %4572 = vst [vmem:[%s4571] ss:$9 sm:$0xff] %v4423
    %s4573 = scalar_lea.vmem [#allocation1], 5
    %4574 = vst [vmem:[%s4573] ss:$9 sm:$0xff] %v4424
    %s4575 = scalar_lea.vmem [#allocation1], 6
    %4576 = vst [vmem:[%s4575] ss:$9 sm:$0xff] %v4425
    %s4577 = scalar_lea.vmem [#allocation1], 7
    %4578 = vst [vmem:[%s4577] ss:$9 sm:$0xff] %v4395
    %v4579 = vld [vmem:[#allocation1] sm:$0xff]
    %4580 = vst [vmem:[#allocation1] ss:$9 sm:$0xff] %v4426
    %4581 = vst [vmem:[%s4565] ss:$9 sm:$0xff] %v4427
    %4582 = vst [vmem:[%s4567] ss:$9 sm:$0xff] %v4428
    %4583 = vst [vmem:[%s4569] ss:$9 sm:$0xff] %v4429
    %4584 = vst [vmem:[%s4571] ss:$9 sm:$0xff] %v4430
    %4585 = vst [vmem:[%s4573] ss:$9 sm:$0xff] %v4431
    %4586 = vst [vmem:[%s4575] ss:$9 sm:$0xff] %v4432
    %4587 = vst [vmem:[%s4577] ss:$9 sm:$0xff] %v4398
    %v4588 = vld [vmem:[#allocation1] sm:$0xff]
    %4589 = vst [vmem:[#allocation1] ss:$9 sm:$0xff] %v4433
    %v4590 = vld [vmem:[#allocation1] sm:$0xff]
    %4591 = vrot.lane.b32.xlu0 %v4579, 96
    %v4592 = vpop.permute.xlu0 %4591
    %4593 = vrot.lane.b32.xlu0 %v4588, 96
    %v4594 = vpop.permute.xlu0 %4593
    %4595 = vrot.lane.b32.xlu0 %v4590, 96
    %v4596 = vpop.permute.xlu0 %4595
    %v4597 = vsel %vm1414, %v4552, 0
    %v4599 = vsel %vm1414, %v4561, 0
    %v4601 = vsel %vm1414, %v4563, 0
    %v4603 = vsel %vm1414, %v4592, 0
    %v4605 = vsel %vm1414, %v4594, 0
    %v4607 = vsel %vm1414, %v4596, 0
    %4609 = vmatpush.xpose.msra.mxu0 0.0
    %4610 = vmatpush.xpose.msra.mxu0 0.0
    %4611 = vmatpush.xpose.msra.mxu0 0.0
    %4612 = vmatpush.xpose.msra.mxu0 0.0
    %4613 = vmatpush.xpose.msra.mxu0 0.0
    %4614 = vmatpush.xpose.msra.mxu0 0.0
    %4615 = vmatpush.xpose.msra.mxu0 0.0
    %4616 = vmatpush.xpose.msra.mxu0 0.0
    %4617 = vmatpush.xpose.msra.mxu0 0.0
    %4618 = vmatpush.xpose.msra.mxu0 0.0
    %4619 = vmatpush.xpose.msra.mxu0 0.0
    %4620 = vmatpush.xpose.msra.mxu0 0.0
    %4621 = vmatpush.xpose.msra.mxu0 0.0
    %4622 = vmatpush.xpose.msra.mxu0 %v4607
    %4623 = vmatpush.xpose.msra.mxu0 %v4605
    %4624 = vmatpush.xpose.msra.mxu0 %v4603
    %4625 = vmatmul.f32.gmra.mxu0 %v4597
    %v4626 = vpop.f32.mrf.mxu0
    %v4627 = vadd.f32 0.0, %v4626
    %4628 = vmatmul.f32.gmra.mxu0 %v4599
    %v4629 = vpop.f32.mrf.mxu0
    %v4630 = vadd.f32 0.0, %v4629
    %4631 = vmatmul.f32.gmra.mxu0 %v4601
    %v4632 = vpop.f32.mrf.mxu0
    %v4633 = vadd.f32 0.0, %v4632
    %4634 = vdwg.mxu0
    %v4635 = vmul.f32 %v4529, 0.35355338
    %v4636 = vmul.f32 %v4532, 0.35355338
    %v4637 = vmul.f32 %v4535, 0.35355338
    %v4638 = vmul.f32 %v4627, 0.35355338
    %v4639 = vmul.f32 %v4630, 0.35355338
    %v4640 = vmul.f32 %v4633, 0.35355338
    %v4641 = vsel %vm1560, -3.4028235e+38, %v4635
    %v4642 = vsel %vm1561, -3.4028235e+38, %v4636
    %v4643 = vsel %vm1562, -3.4028235e+38, %v4637
    %v4644 = vsel %vm1560, -3.4028235e+38, %v4638
    %v4645 = vsel %vm1561, -3.4028235e+38, %v4639
    %v4646 = vsel %vm1562, -3.4028235e+38, %v4640
    %v4647 = vsel %vm1569, %v4641, -inf
    %4648 = vmax.xlane.f32.xlu0 %v4647
    %v4649 = vpop.xlane.xlu0 %4648
    %v4650 = vsel %vm1569, %v4642, -inf
    %4651 = vmax.xlane.f32.xlu0 %v4650
    %v4652 = vpop.xlane.xlu0 %4651
    %v4653 = vsel %vm1576, %v4643, -inf
    %4654 = vmax.xlane.f32.xlu0 %v4653
    %v4655 = vpop.xlane.xlu0 %4654
    %v4656 = vsel %vm1569, %v4644, -inf
    %4657 = vmax.xlane.f32.xlu0 %v4656
    %v4658 = vpop.xlane.xlu0 %4657
    %v4659 = vsel %vm1569, %v4645, -inf
    %4660 = vmax.xlane.f32.xlu0 %v4659
    %v4661 = vpop.xlane.xlu0 %4660
    %v4662 = vsel %vm1576, %v4646, -inf
    %4663 = vmax.xlane.f32.xlu0 %v4662
    %v4664 = vpop.xlane.xlu0 %4663
    %v4665 = vsub.f32 %v4641, %v4649
    %v4666 = vsub.f32 %v4642, %v4652
    %v4667 = vsub.f32 %v4643, %v4655
    %v4668 = vsub.f32 %v4644, %v4658
    %v4669 = vsub.f32 %v4645, %v4661
    %v4670 = vsub.f32 %v4646, %v4664
    %v4671 = vmul.f32 %v4665, 1.442695
    %v4672 = vpow.pop %v4671
    %v4673 = vmul.f32 %v4666, 1.442695
    %v4674 = vpow.pop %v4673
    %v4675 = vmul.f32 %v4667, 1.442695
    %v4676 = vpow.pop %v4675
    %v4677 = vmul.f32 %v4668, 1.442695
    %v4678 = vpow.pop %v4677
    %v4679 = vmul.f32 %v4669, 1.442695
    %v4680 = vpow.pop %v4679
    %v4681 = vmul.f32 %v4670, 1.442695
    %v4682 = vpow.pop %v4681
    %v4683 = vsel %vm1569, %v4672, 0.0
    %4684 = vadd.xlane.f32.xlu0 %v4683
    %v4685 = vpop.xlane.xlu0 %4684
    %v4686 = vsel %vm1569, %v4674, 0.0
    %4687 = vadd.xlane.f32.xlu0 %v4686
    %v4688 = vpop.xlane.xlu0 %4687
    %v4689 = vsel %vm1576, %v4676, 0.0
    %4690 = vadd.xlane.f32.xlu0 %v4689
    %v4691 = vpop.xlane.xlu0 %4690
    %v4692 = vsel %vm1569, %v4678, 0.0
    %4693 = vadd.xlane.f32.xlu0 %v4692
    %v4694 = vpop.xlane.xlu0 %4693
    %v4695 = vsel %vm1569, %v4680, 0.0
    %4696 = vadd.xlane.f32.xlu0 %v4695
    %v4697 = vpop.xlane.xlu0 %4696
    %v4698 = vsel %vm1576, %v4682, 0.0
    %4699 = vadd.xlane.f32.xlu0 %v4698
    %v4700 = vpop.xlane.xlu0 %4699
    %v4701 = vrcp.pop %v4685
    %v4702 = vrcp.pop %v4688
    %v4703 = vrcp.pop %v4691
    %v4704 = vrcp.pop %v4694
    %v4705 = vrcp.pop %v4697
    %v4706 = vrcp.pop %v4700
    %v4707 = vmul.f32 %v4672, %v4701
    %v4708 = vmul.f32 %v4674, %v4702
    %v4709 = vmul.f32 %v4676, %v4703
    %v4710 = vmul.f32 %v4678, %v4704
    %v4711 = vmul.f32 %v4680, %v4705
    %v4712 = vmul.f32 %v4682, %v4706
    %4713 = vst [vmem:[#allocation1] ss:$9 sm:$0xff] %v4386
    %s4714 = scalar_lea.vmem [#allocation1], 1
    %4715 = vst [vmem:[%s4714] ss:$9 sm:$0xff] %v4405
    %s4716 = scalar_lea.vmem [#allocation1], 2
    %4717 = vst [vmem:[%s4716] ss:$9 sm:$0xff] %v4406
    %s4718 = scalar_lea.vmem [#allocation1], 3
    %4719 = vst [vmem:[%s4718] ss:$9 sm:$0xff] %v4407
    %s4720 = scalar_lea.vmem [#allocation1], 4
    %4721 = vst [vmem:[%s4720] ss:$9 sm:$0xff] %v4408
    %s4722 = scalar_lea.vmem [#allocation1], 5
    %4723 = vst [vmem:[%s4722] ss:$9 sm:$0xff] %v4409
    %s4724 = scalar_lea.vmem [#allocation1], 6
    %4725 = vst [vmem:[%s4724] ss:$9 sm:$0xff] %v4410
    %s4726 = scalar_lea.vmem [#allocation1], 7
    %4727 = vst [vmem:[%s4726] ss:$9 sm:$0xff] %v4411
    %v4728 = vld [vmem:[#allocation1] sm:$0xff]
    %4729 = vst [vmem:[#allocation1] ss:$9 sm:$0xff] %v4389
    %4730 = vst [vmem:[%s4714] ss:$9 sm:$0xff] %v4412
    %4731 = vst [vmem:[%s4716] ss:$9 sm:$0xff] %v4413
    %4732 = vst [vmem:[%s4718] ss:$9 sm:$0xff] %v4414
    %4733 = vst [vmem:[%s4720] ss:$9 sm:$0xff] %v4415
    %4734 = vst [vmem:[%s4722] ss:$9 sm:$0xff] %v4416
    %4735 = vst [vmem:[%s4724] ss:$9 sm:$0xff] %v4417
    %4736 = vst [vmem:[%s4726] ss:$9 sm:$0xff] %v4418
    %v4737 = vld [vmem:[#allocation1] sm:$0xff]
    %4738 = vst [vmem:[#allocation1] ss:$9 sm:$0xff] %v4392
    %v4739 = vld [vmem:[#allocation1] sm:$0xff]
    %4740 = vrot.lane.b32.xlu0 %v4728, 64
    %v4741 = vpop.permute.xlu0 %4740
    %4742 = vrot.lane.b32.xlu0 %v4737, 64
    %v4743 = vpop.permute.xlu0 %4742
    %4744 = vrot.lane.b32.xlu0 %v4739, 64
    %v4745 = vpop.permute.xlu0 %4744
    %v4749 = vsel %vm1569, %v4707, 0
    %v4752 = vsel %vm1569, %v4708, 0
    %v4755 = vsel %vm1569, %v4709, 0
    %v4757 = vsel %vm90, %v4745, 0
    %4759 = vmatpush.msra.mxu0 0.0
    %4760 = vmatpush.msra.mxu0 0.0
    %4761 = vmatpush.msra.mxu0 0.0
    %4762 = vmatpush.msra.mxu0 0.0
    %4763 = vmatpush.msra.mxu0 0.0
    %4764 = vmatpush.msra.mxu0 0.0
    %4765 = vmatpush.msra.mxu0 0.0
    %4766 = vmatpush.msra.mxu0 0.0
    %4767 = vmatpush.msra.mxu0 0.0
    %4768 = vmatpush.msra.mxu0 0.0
    %4769 = vmatpush.msra.mxu0 0.0
    %4770 = vmatpush.msra.mxu0 0.0
    %4771 = vmatpush.msra.mxu0 0.0
    %4772 = vmatpush.msra.mxu0 %v4757
    %4773 = vmatpush.msra.mxu0 %v4743
    %4774 = vmatpush.msra.mxu0 %v4741
    %4775 = vmatmul.f32.gmra.mxu0 %v4749
    %v4776 = vpop.f32.mrf.mxu0
    %v4777 = vadd.f32 0.0, %v4776
    %4778 = vmatmul.f32.gmra.mxu0 %v4752
    %v4779 = vpop.f32.mrf.mxu0
    %v4780 = vadd.f32 0.0, %v4779
    %4781 = vmatmul.f32.gmra.mxu0 %v4755
    %v4782 = vpop.f32.mrf.mxu0
    %v4783 = vadd.f32 0.0, %v4782
    %4784 = vdwg.mxu0
    %4785 = vst [vmem:[#allocation1] ss:$9 sm:$0xff] %v4419
    %s4786 = scalar_lea.vmem [#allocation1], 1
    %4787 = vst [vmem:[%s4786] ss:$9 sm:$0xff] %v4420
    %s4788 = scalar_lea.vmem [#allocation1], 2
    %4789 = vst [vmem:[%s4788] ss:$9 sm:$0xff] %v4421
    %s4790 = scalar_lea.vmem [#allocation1], 3
    %4791 = vst [vmem:[%s4790] ss:$9 sm:$0xff] %v4422
    %s4792 = scalar_lea.vmem [#allocation1], 4
    %4793 = vst [vmem:[%s4792] ss:$9 sm:$0xff] %v4423
    %s4794 = scalar_lea.vmem [#allocation1], 5
    %4795 = vst [vmem:[%s4794] ss:$9 sm:$0xff] %v4424
    %s4796 = scalar_lea.vmem [#allocation1], 6
    %4797 = vst [vmem:[%s4796] ss:$9 sm:$0xff] %v4425
    %s4798 = scalar_lea.vmem [#allocation1], 7
    %4799 = vst [vmem:[%s4798] ss:$9 sm:$0xff] %v4395
    %v4800 = vld [vmem:[#allocation1] sm:$0xff]
    %4801 = vst [vmem:[#allocation1] ss:$9 sm:$0xff] %v4426
    %4802 = vst [vmem:[%s4786] ss:$9 sm:$0xff] %v4427
    %4803 = vst [vmem:[%s4788] ss:$9 sm:$0xff] %v4428
    %4804 = vst [vmem:[%s4790] ss:$9 sm:$0xff] %v4429
    %4805 = vst [vmem:[%s4792] ss:$9 sm:$0xff] %v4430
    %4806 = vst [vmem:[%s4794] ss:$9 sm:$0xff] %v4431
    %4807 = vst [vmem:[%s4796] ss:$9 sm:$0xff] %v4432
    %4808 = vst [vmem:[%s4798] ss:$9 sm:$0xff] %v4398
    %v4809 = vld [vmem:[#allocation1] sm:$0xff]
    %4810 = vst [vmem:[#allocation1] ss:$9 sm:$0xff] %v4433
    %v4811 = vld [vmem:[#allocation1] sm:$0xff]
    %4812 = vrot.lane.b32.xlu0 %v4800, 64
    %v4813 = vpop.permute.xlu0 %4812
    %4814 = vrot.lane.b32.xlu0 %v4809, 64
    %v4815 = vpop.permute.xlu0 %4814
    %4816 = vrot.lane.b32.xlu0 %v4811, 64
    %v4817 = vpop.permute.xlu0 %4816
    %v4821 = vsel %vm1569, %v4710, 0
    %v4824 = vsel %vm1569, %v4711, 0
    %v4827 = vsel %vm1569, %v4712, 0
    %v4829 = vsel %vm90, %v4817, 0
    %4831 = vmatpush.msra.mxu0 0.0
    %4832 = vmatpush.msra.mxu0 0.0
    %4833 = vmatpush.msra.mxu0 0.0
    %4834 = vmatpush.msra.mxu0 0.0
    %4835 = vmatpush.msra.mxu0 0.0
    %4836 = vmatpush.msra.mxu0 0.0
    %4837 = vmatpush.msra.mxu0 0.0
    %4838 = vmatpush.msra.mxu0 0.0
    %4839 = vmatpush.msra.mxu0 0.0
    %4840 = vmatpush.msra.mxu0 0.0
    %4841 = vmatpush.msra.mxu0 0.0
    %4842 = vmatpush.msra.mxu0 0.0
    %4843 = vmatpush.msra.mxu0 0.0
    %4844 = vmatpush.msra.mxu0 %v4829
    %4845 = vmatpush.msra.mxu0 %v4815
    %4846 = vmatpush.msra.mxu0 %v4813
    %4847 = vmatmul.f32.gmra.mxu0 %v4821
    %v4848 = vpop.f32.mrf.mxu0
    %v4849 = vadd.f32 0.0, %v4848
    %4850 = vmatmul.f32.gmra.mxu0 %v4824
    %v4851 = vpop.f32.mrf.mxu0
    %v4852 = vadd.f32 0.0, %v4851
    %4853 = vmatmul.f32.gmra.mxu0 %v4827
    %v4854 = vpop.f32.mrf.mxu0
    %v4855 = vadd.f32 0.0, %v4854
    %4856 = vdwg.mxu0
    %v4863 = vrot.slane %v4777, 1
    %v4864 = vrot.slane %v4777, 2
    %v4865 = vrot.slane %v4777, 3
    %v4866 = vrot.slane %v4777, 4
    %v4867 = vrot.slane %v4777, 5
    %v4868 = vrot.slane %v4777, 6
    %v4869 = vrot.slane %v4777, 7
    %v4870 = vrot.slane %v4780, 1
    %v4871 = vrot.slane %v4780, 2
    %v4872 = vrot.slane %v4780, 3
    %v4873 = vrot.slane %v4780, 4
    %v4874 = vrot.slane %v4780, 5
    %v4875 = vrot.slane %v4780, 6
    %v4876 = vrot.slane %v4780, 7
    %v4877 = vrot.slane %v4849, 1
    %v4878 = vrot.slane %v4849, 2
    %v4879 = vrot.slane %v4849, 3
    %v4880 = vrot.slane %v4849, 4
    %v4881 = vrot.slane %v4849, 5
    %v4882 = vrot.slane %v4849, 6
    %v4883 = vrot.slane %v4849, 7
    %v4884 = vrot.slane %v4852, 1
    %v4885 = vrot.slane %v4852, 2
    %v4886 = vrot.slane %v4852, 3
    %v4887 = vrot.slane %v4852, 4
    %v4888 = vrot.slane %v4852, 5
    %v4889 = vrot.slane %v4852, 6
    %v4890 = vrot.slane %v4852, 7
    %4891 = vst [vmem:[#allocation1] ss:$9 sm:$0xff] %v4386
    %s4892 = scalar_lea.vmem [#allocation1], 1
    %4893 = vst [vmem:[%s4892] ss:$9 sm:$0xff] %v4405
    %s4894 = scalar_lea.vmem [#allocation1], 2
    %4895 = vst [vmem:[%s4894] ss:$9 sm:$0xff] %v4406
    %s4896 = scalar_lea.vmem [#allocation1], 3
    %4897 = vst [vmem:[%s4896] ss:$9 sm:$0xff] %v4407
    %s4898 = scalar_lea.vmem [#allocation1], 4
    %4899 = vst [vmem:[%s4898] ss:$9 sm:$0xff] %v4408
    %s4900 = scalar_lea.vmem [#allocation1], 5
    %4901 = vst [vmem:[%s4900] ss:$9 sm:$0xff] %v4409
    %s4902 = scalar_lea.vmem [#allocation1], 6
    %4903 = vst [vmem:[%s4902] ss:$9 sm:$0xff] %v4410
    %s4904 = scalar_lea.vmem [#allocation1], 7
    %4905 = vst [vmem:[%s4904] ss:$9 sm:$0xff] %v4411
    %v4906 = vld [vmem:[#allocation1] sm:$0xff]
    %4907 = vst [vmem:[#allocation1] ss:$9 sm:$0xff] %v4389
    %4908 = vst [vmem:[%s4892] ss:$9 sm:$0xff] %v4412
    %4909 = vst [vmem:[%s4894] ss:$9 sm:$0xff] %v4413
    %4910 = vst [vmem:[%s4896] ss:$9 sm:$0xff] %v4414
    %4911 = vst [vmem:[%s4898] ss:$9 sm:$0xff] %v4415
    %4912 = vst [vmem:[%s4900] ss:$9 sm:$0xff] %v4416
    %4913 = vst [vmem:[%s4902] ss:$9 sm:$0xff] %v4417
    %4914 = vst [vmem:[%s4904] ss:$9 sm:$0xff] %v4418
    %v4915 = vld [vmem:[#allocation1] sm:$0xff]
    %4916 = vst [vmem:[#allocation1] ss:$9 sm:$0xff] %v4392
    %v4917 = vld [vmem:[#allocation1] sm:$0xff]
    %4918 = vrot.lane.b32.xlu0 %v4906, 120
    %v4919 = vpop.permute.xlu0 %4918
    %4920 = vrot.lane.b32.xlu0 %v4915, 120
    %v4921 = vpop.permute.xlu0 %4920
    %4922 = vrot.lane.b32.xlu0 %v4917, 120
    %v4923 = vpop.permute.xlu0 %4922
    %4924 = vst [vmem:[#allocation1] ss:$9 sm:$0xff] %v4386
    %s4925 = scalar_lea.vmem [#allocation1], 1
    %4926 = vst [vmem:[%s4925] ss:$9 sm:$0xff] %v4405
    %s4927 = scalar_lea.vmem [#allocation1], 2
    %4928 = vst [vmem:[%s4927] ss:$9 sm:$0xff] %v4406
    %s4929 = scalar_lea.vmem [#allocation1], 3
    %4930 = vst [vmem:[%s4929] ss:$9 sm:$0xff] %v4407
    %s4931 = scalar_lea.vmem [#allocation1], 4
    %4932 = vst [vmem:[%s4931] ss:$9 sm:$0xff] %v4408
    %s4933 = scalar_lea.vmem [#allocation1], 5
    %4934 = vst [vmem:[%s4933] ss:$9 sm:$0xff] %v4409
    %s4935 = scalar_lea.vmem [#allocation1], 6
    %4936 = vst [vmem:[%s4935] ss:$9 sm:$0xff] %v4410
    %s4937 = scalar_lea.vmem [#allocation1], 7
    %4938 = vst [vmem:[%s4937] ss:$9 sm:$0xff] %v4411
    %v4939 = vld [vmem:[#allocation1] sm:$0xff]
    %4940 = vst [vmem:[#allocation1] ss:$9 sm:$0xff] %v4389
    %4941 = vst [vmem:[%s4925] ss:$9 sm:$0xff] %v4412
    %4942 = vst [vmem:[%s4927] ss:$9 sm:$0xff] %v4413
    %4943 = vst [vmem:[%s4929] ss:$9 sm:$0xff] %v4414
    %4944 = vst [vmem:[%s4931] ss:$9 sm:$0xff] %v4415
    %4945 = vst [vmem:[%s4933] ss:$9 sm:$0xff] %v4416
    %4946 = vst [vmem:[%s4935] ss:$9 sm:$0xff] %v4417
    %4947 = vst [vmem:[%s4937] ss:$9 sm:$0xff] %v4418
    %v4948 = vld [vmem:[#allocation1] sm:$0xff]
    %4949 = vst [vmem:[#allocation1] ss:$9 sm:$0xff] %v4392
    %v4950 = vld [vmem:[#allocation1] sm:$0xff]
    %4951 = vrot.lane.b32.xlu0 %v4939, 88
    %v4952 = vpop.permute.xlu0 %4951
    %4953 = vrot.lane.b32.xlu0 %v4948, 88
    %v4954 = vpop.permute.xlu0 %4953
    %4955 = vrot.lane.b32.xlu0 %v4950, 88
    %v4956 = vpop.permute.xlu0 %4955
    %v4957 = vsel %vm1414, %v4919, 0
    %v4959 = vsel %vm1414, %v4921, 0
    %v4961 = vsel %vm1414, %v4923, 0
    %v4963 = vsel %vm1414, %v4952, 0
    %v4965 = vsel %vm1414, %v4954, 0
    %v4967 = vsel %vm1414, %v4956, 0
    %4969 = vmatpush.xpose.msra.mxu0 0.0
    %4970 = vmatpush.xpose.msra.mxu0 0.0
    %4971 = vmatpush.xpose.msra.mxu0 0.0
    %4972 = vmatpush.xpose.msra.mxu0 0.0
    %4973 = vmatpush.xpose.msra.mxu0 0.0
    %4974 = vmatpush.xpose.msra.mxu0 0.0
    %4975 = vmatpush.xpose.msra.mxu0 0.0
    %4976 = vmatpush.xpose.msra.mxu0 0.0
    %4977 = vmatpush.xpose.msra.mxu0 0.0
    %4978 = vmatpush.xpose.msra.mxu0 0.0
    %4979 = vmatpush.xpose.msra.mxu0 0.0
    %4980 = vmatpush.xpose.msra.mxu0 0.0
    %4981 = vmatpush.xpose.msra.mxu0 0.0
    %4982 = vmatpush.xpose.msra.mxu0 %v4967
    %4983 = vmatpush.xpose.msra.mxu0 %v4965
    %4984 = vmatpush.xpose.msra.mxu0 %v4963
    %4985 = vmatmul.f32.gmra.mxu0 %v4957
    %v4986 = vpop.f32.mrf.mxu0
    %v4987 = vadd.f32 0.0, %v4986
    %4988 = vmatmul.f32.gmra.mxu0 %v4959
    %v4989 = vpop.f32.mrf.mxu0
    %v4990 = vadd.f32 0.0, %v4989
    %4991 = vmatmul.f32.gmra.mxu0 %v4961
    %v4992 = vpop.f32.mrf.mxu0
    %v4993 = vadd.f32 0.0, %v4992
    %4994 = vdwg.mxu0
    %4995 = vst [vmem:[#allocation1] ss:$9 sm:$0xff] %v4419
    %s4996 = scalar_lea.vmem [#allocation1], 1
    %4997 = vst [vmem:[%s4996] ss:$9 sm:$0xff] %v4420
    %s4998 = scalar_lea.vmem [#allocation1], 2
    %4999 = vst [vmem:[%s4998] ss:$9 sm:$0xff] %v4421
    %s5000 = scalar_lea.vmem [#allocation1], 3
    %5001 = vst [vmem:[%s5000] ss:$9 sm:$0xff] %v4422
    %s5002 = scalar_lea.vmem [#allocation1], 4
    %5003 = vst [vmem:[%s5002] ss:$9 sm:$0xff] %v4423
    %s5004 = scalar_lea.vmem [#allocation1], 5
    %5005 = vst [vmem:[%s5004] ss:$9 sm:$0xff] %v4424
    %s5006 = scalar_lea.vmem [#allocation1], 6
    %5007 = vst [vmem:[%s5006] ss:$9 sm:$0xff] %v4425
    %s5008 = scalar_lea.vmem [#allocation1], 7
    %5009 = vst [vmem:[%s5008] ss:$9 sm:$0xff] %v4395
    %v5010 = vld [vmem:[#allocation1] sm:$0xff]
    %5011 = vst [vmem:[#allocation1] ss:$9 sm:$0xff] %v4426
    %5012 = vst [vmem:[%s4996] ss:$9 sm:$0xff] %v4427
    %5013 = vst [vmem:[%s4998] ss:$9 sm:$0xff] %v4428
    %5014 = vst [vmem:[%s5000] ss:$9 sm:$0xff] %v4429
    %5015 = vst [vmem:[%s5002] ss:$9 sm:$0xff] %v4430
    %5016 = vst [vmem:[%s5004] ss:$9 sm:$0xff] %v4431
    %5017 = vst [vmem:[%s5006] ss:$9 sm:$0xff] %v4432
    %5018 = vst [vmem:[%s5008] ss:$9 sm:$0xff] %v4398
    %v5019 = vld [vmem:[#allocation1] sm:$0xff]
    %5020 = vst [vmem:[#allocation1] ss:$9 sm:$0xff] %v4433
    %v5021 = vld [vmem:[#allocation1] sm:$0xff]
    %5022 = vrot.lane.b32.xlu0 %v5010, 120
    %v5023 = vpop.permute.xlu0 %5022
    %5024 = vrot.lane.b32.xlu0 %v5019, 120
    %v5025 = vpop.permute.xlu0 %5024
    %5026 = vrot.lane.b32.xlu0 %v5021, 120
    %v5027 = vpop.permute.xlu0 %5026
    %5028 = vst [vmem:[#allocation1] ss:$9 sm:$0xff] %v4419
    %s5029 = scalar_lea.vmem [#allocation1], 1
    %5030 = vst [vmem:[%s5029] ss:$9 sm:$0xff] %v4420
    %s5031 = scalar_lea.vmem [#allocation1], 2
    %5032 = vst [vmem:[%s5031] ss:$9 sm:$0xff] %v4421
    %s5033 = scalar_lea.vmem [#allocation1], 3
    %5034 = vst [vmem:[%s5033] ss:$9 sm:$0xff] %v4422
    %s5035 = scalar_lea.vmem [#allocation1], 4
    %5036 = vst [vmem:[%s5035] ss:$9 sm:$0xff] %v4423
    %s5037 = scalar_lea.vmem [#allocation1], 5
    %5038 = vst [vmem:[%s5037] ss:$9 sm:$0xff] %v4424
    %s5039 = scalar_lea.vmem [#allocation1], 6
    %5040 = vst [vmem:[%s5039] ss:$9 sm:$0xff] %v4425
    %s5041 = scalar_lea.vmem [#allocation1], 7
    %5042 = vst [vmem:[%s5041] ss:$9 sm:$0xff] %v4395
    %v5043 = vld [vmem:[#allocation1] sm:$0xff]
    %5044 = vst [vmem:[#allocation1] ss:$9 sm:$0xff] %v4426
    %5045 = vst [vmem:[%s5029] ss:$9 sm:$0xff] %v4427
    %5046 = vst [vmem:[%s5031] ss:$9 sm:$0xff] %v4428
    %5047 = vst [vmem:[%s5033] ss:$9 sm:$0xff] %v4429
    %5048 = vst [vmem:[%s5035] ss:$9 sm:$0xff] %v4430
    %5049 = vst [vmem:[%s5037] ss:$9 sm:$0xff] %v4431
    %5050 = vst [vmem:[%s5039] ss:$9 sm:$0xff] %v4432
    %5051 = vst [vmem:[%s5041] ss:$9 sm:$0xff] %v4398
    %v5052 = vld [vmem:[#allocation1] sm:$0xff]
    %5053 = vst [vmem:[#allocation1] ss:$9 sm:$0xff] %v4433
    %v5054 = vld [vmem:[#allocation1] sm:$0xff]
    %5055 = vrot.lane.b32.xlu0 %v5043, 88
    %v5056 = vpop.permute.xlu0 %5055
    %5057 = vrot.lane.b32.xlu0 %v5052, 88
    %v5058 = vpop.permute.xlu0 %5057
    %5059 = vrot.lane.b32.xlu0 %v5054, 88
    %v5060 = vpop.permute.xlu0 %5059
    %v5061 = vsel %vm1414, %v5023, 0
    %v5063 = vsel %vm1414, %v5025, 0
    %v5065 = vsel %vm1414, %v5027, 0
    %v5067 = vsel %vm1414, %v5056, 0
    %v5069 = vsel %vm1414, %v5058, 0
    %v5071 = vsel %vm1414, %v5060, 0
    %5073 = vmatpush.xpose.msra.mxu0 0.0
    %5074 = vmatpush.xpose.msra.mxu0 0.0
    %5075 = vmatpush.xpose.msra.mxu0 0.0
    %5076 = vmatpush.xpose.msra.mxu0 0.0
    %5077 = vmatpush.xpose.msra.mxu0 0.0
    %5078 = vmatpush.xpose.msra.mxu0 0.0
    %5079 = vmatpush.xpose.msra.mxu0 0.0
    %5080 = vmatpush.xpose.msra.mxu0 0.0
    %5081 = vmatpush.xpose.msra.mxu0 0.0
    %5082 = vmatpush.xpose.msra.mxu0 0.0
    %5083 = vmatpush.xpose.msra.mxu0 0.0
    %5084 = vmatpush.xpose.msra.mxu0 0.0
    %5085 = vmatpush.xpose.msra.mxu0 0.0
    %5086 = vmatpush.xpose.msra.mxu0 %v5071
    %5087 = vmatpush.xpose.msra.mxu0 %v5069
    %5088 = vmatpush.xpose.msra.mxu0 %v5067
    %5089 = vmatmul.f32.gmra.mxu0 %v5061
    %v5090 = vpop.f32.mrf.mxu0
    %v5091 = vadd.f32 0.0, %v5090
    %5092 = vmatmul.f32.gmra.mxu0 %v5063
    %v5093 = vpop.f32.mrf.mxu0
    %v5094 = vadd.f32 0.0, %v5093
    %5095 = vmatmul.f32.gmra.mxu0 %v5065
    %v5096 = vpop.f32.mrf.mxu0
    %v5097 = vadd.f32 0.0, %v5096
    %5098 = vdwg.mxu0
    %v5099 = vmul.f32 %v4987, 0.35355338
    %v5100 = vmul.f32 %v4990, 0.35355338
    %v5101 = vmul.f32 %v4993, 0.35355338
    %v5102 = vmul.f32 %v5091, 0.35355338
    %v5103 = vmul.f32 %v5094, 0.35355338
    %v5104 = vmul.f32 %v5097, 0.35355338
    %v5105 = vsel %vm1560, -3.4028235e+38, %v5099
    %v5106 = vsel %vm1561, -3.4028235e+38, %v5100
    %v5107 = vsel %vm1562, -3.4028235e+38, %v5101
    %v5108 = vsel %vm1560, -3.4028235e+38, %v5102
    %v5109 = vsel %vm1561, -3.4028235e+38, %v5103
    %v5110 = vsel %vm1562, -3.4028235e+38, %v5104
    %v5111 = vsel %vm1569, %v5105, -inf
    %5112 = vmax.xlane.f32.xlu0 %v5111
    %v5113 = vpop.xlane.xlu0 %5112
    %v5114 = vsel %vm1569, %v5106, -inf
    %5115 = vmax.xlane.f32.xlu0 %v5114
    %v5116 = vpop.xlane.xlu0 %5115
    %v5117 = vsel %vm1576, %v5107, -inf
    %5118 = vmax.xlane.f32.xlu0 %v5117
    %v5119 = vpop.xlane.xlu0 %5118
    %v5120 = vsel %vm1569, %v5108, -inf
    %5121 = vmax.xlane.f32.xlu0 %v5120
    %v5122 = vpop.xlane.xlu0 %5121
    %v5123 = vsel %vm1569, %v5109, -inf
    %5124 = vmax.xlane.f32.xlu0 %v5123
    %v5125 = vpop.xlane.xlu0 %5124
    %v5126 = vsel %vm1576, %v5110, -inf
    %5127 = vmax.xlane.f32.xlu0 %v5126
    %v5128 = vpop.xlane.xlu0 %5127
    %v5129 = vsub.f32 %v5105, %v5113
    %v5130 = vsub.f32 %v5106, %v5116
    %v5131 = vsub.f32 %v5107, %v5119
    %v5132 = vsub.f32 %v5108, %v5122
    %v5133 = vsub.f32 %v5109, %v5125
    %v5134 = vsub.f32 %v5110, %v5128
    %v5135 = vmul.f32 %v5129, 1.442695
    %v5136 = vpow.pop %v5135
    %v5137 = vmul.f32 %v5130, 1.442695
    %v5138 = vpow.pop %v5137
    %v5139 = vmul.f32 %v5131, 1.442695
    %v5140 = vpow.pop %v5139
    %v5141 = vmul.f32 %v5132, 1.442695
    %v5142 = vpow.pop %v5141
    %v5143 = vmul.f32 %v5133, 1.442695
    %v5144 = vpow.pop %v5143
    %v5145 = vmul.f32 %v5134, 1.442695
    %v5146 = vpow.pop %v5145
    %v5147 = vsel %vm1569, %v5136, 0.0
    %5148 = vadd.xlane.f32.xlu0 %v5147
    %v5149 = vpop.xlane.xlu0 %5148
    %v5150 = vsel %vm1569, %v5138, 0.0
    %5151 = vadd.xlane.f32.xlu0 %v5150
    %v5152 = vpop.xlane.xlu0 %5151
    %v5153 = vsel %vm1576, %v5140, 0.0
    %5154 = vadd.xlane.f32.xlu0 %v5153
    %v5155 = vpop.xlane.xlu0 %5154
    %v5156 = vsel %vm1569, %v5142, 0.0
    %5157 = vadd.xlane.f32.xlu0 %v5156
    %v5158 = vpop.xlane.xlu0 %5157
    %v5159 = vsel %vm1569, %v5144, 0.0
    %5160 = vadd.xlane.f32.xlu0 %v5159
    %v5161 = vpop.xlane.xlu0 %5160
    %v5162 = vsel %vm1576, %v5146, 0.0
    %5163 = vadd.xlane.f32.xlu0 %v5162
    %v5164 = vpop.xlane.xlu0 %5163
    %v5165 = vrcp.pop %v5149
    %v5166 = vrcp.pop %v5152
    %v5167 = vrcp.pop %v5155
    %v5168 = vrcp.pop %v5158
    %v5169 = vrcp.pop %v5161
    %v5170 = vrcp.pop %v5164
    %v5171 = vmul.f32 %v5136, %v5165
    %v5172 = vmul.f32 %v5138, %v5166
    %v5173 = vmul.f32 %v5140, %v5167
    %v5174 = vmul.f32 %v5142, %v5168
    %v5175 = vmul.f32 %v5144, %v5169
    %v5176 = vmul.f32 %v5146, %v5170
    %5177 = vst [vmem:[#allocation1] ss:$9 sm:$0xff] %v4386
    %s5178 = scalar_lea.vmem [#allocation1], 1
    %5179 = vst [vmem:[%s5178] ss:$9 sm:$0xff] %v4405
    %s5180 = scalar_lea.vmem [#allocation1], 2
    %5181 = vst [vmem:[%s5180] ss:$9 sm:$0xff] %v4406
    %s5182 = scalar_lea.vmem [#allocation1], 3
    %5183 = vst [vmem:[%s5182] ss:$9 sm:$0xff] %v4407
    %s5184 = scalar_lea.vmem [#allocation1], 4
    %5185 = vst [vmem:[%s5184] ss:$9 sm:$0xff] %v4408
    %s5186 = scalar_lea.vmem [#allocation1], 5
    %5187 = vst [vmem:[%s5186] ss:$9 sm:$0xff] %v4409
    %s5188 = scalar_lea.vmem [#allocation1], 6
    %5189 = vst [vmem:[%s5188] ss:$9 sm:$0xff] %v4410
    %s5190 = scalar_lea.vmem [#allocation1], 7
    %5191 = vst [vmem:[%s5190] ss:$9 sm:$0xff] %v4411
    %v5192 = vld [vmem:[#allocation1] sm:$0xff]
    %5193 = vst [vmem:[#allocation1] ss:$9 sm:$0xff] %v4389
    %5194 = vst [vmem:[%s5178] ss:$9 sm:$0xff] %v4412
    %5195 = vst [vmem:[%s5180] ss:$9 sm:$0xff] %v4413
    %5196 = vst [vmem:[%s5182] ss:$9 sm:$0xff] %v4414
    %5197 = vst [vmem:[%s5184] ss:$9 sm:$0xff] %v4415
    %5198 = vst [vmem:[%s5186] ss:$9 sm:$0xff] %v4416
    %5199 = vst [vmem:[%s5188] ss:$9 sm:$0xff] %v4417
    %5200 = vst [vmem:[%s5190] ss:$9 sm:$0xff] %v4418
    %v5201 = vld [vmem:[#allocation1] sm:$0xff]
    %5202 = vst [vmem:[#allocation1] ss:$9 sm:$0xff] %v4392
    %v5203 = vld [vmem:[#allocation1] sm:$0xff]
    %5204 = vrot.lane.b32.xlu0 %v5192, 56
    %v5205 = vpop.permute.xlu0 %5204
    %5206 = vrot.lane.b32.xlu0 %v5201, 56
    %v5207 = vpop.permute.xlu0 %5206
    %5208 = vrot.lane.b32.xlu0 %v5203, 56
    %v5209 = vpop.permute.xlu0 %5208
    %v5213 = vsel %vm1569, %v5171, 0
    %v5216 = vsel %vm1569, %v5172, 0
    %v5219 = vsel %vm1569, %v5173, 0
    %v5221 = vsel %vm90, %v5209, 0
    %5223 = vmatpush.msra.mxu0 0.0
    %5224 = vmatpush.msra.mxu0 0.0
    %5225 = vmatpush.msra.mxu0 0.0
    %5226 = vmatpush.msra.mxu0 0.0
    %5227 = vmatpush.msra.mxu0 0.0
    %5228 = vmatpush.msra.mxu0 0.0
    %5229 = vmatpush.msra.mxu0 0.0
    %5230 = vmatpush.msra.mxu0 0.0
    %5231 = vmatpush.msra.mxu0 0.0
    %5232 = vmatpush.msra.mxu0 0.0
    %5233 = vmatpush.msra.mxu0 0.0
    %5234 = vmatpush.msra.mxu0 0.0
    %5235 = vmatpush.msra.mxu0 0.0
    %5236 = vmatpush.msra.mxu0 %v5221
    %5237 = vmatpush.msra.mxu0 %v5207
    %5238 = vmatpush.msra.mxu0 %v5205
    %5239 = vmatmul.f32.gmra.mxu0 %v5213
    %v5240 = vpop.f32.mrf.mxu0
    %v5241 = vadd.f32 0.0, %v5240
    %5242 = vmatmul.f32.gmra.mxu0 %v5216
    %v5243 = vpop.f32.mrf.mxu0
    %v5244 = vadd.f32 0.0, %v5243
    %5245 = vmatmul.f32.gmra.mxu0 %v5219
    %v5246 = vpop.f32.mrf.mxu0
    %v5247 = vadd.f32 0.0, %v5246
    %5248 = vdwg.mxu0
    %5249 = vst [vmem:[#allocation1] ss:$9 sm:$0xff] %v4419
    %s5250 = scalar_lea.vmem [#allocation1], 1
    %5251 = vst [vmem:[%s5250] ss:$9 sm:$0xff] %v4420
    %s5252 = scalar_lea.vmem [#allocation1], 2
    %5253 = vst [vmem:[%s5252] ss:$9 sm:$0xff] %v4421
    %s5254 = scalar_lea.vmem [#allocation1], 3
    %5255 = vst [vmem:[%s5254] ss:$9 sm:$0xff] %v4422
    %s5256 = scalar_lea.vmem [#allocation1], 4
    %5257 = vst [vmem:[%s5256] ss:$9 sm:$0xff] %v4423
    %s5258 = scalar_lea.vmem [#allocation1], 5
    %5259 = vst [vmem:[%s5258] ss:$9 sm:$0xff] %v4424
    %s5260 = scalar_lea.vmem [#allocation1], 6
    %5261 = vst [vmem:[%s5260] ss:$9 sm:$0xff] %v4425
    %s5262 = scalar_lea.vmem [#allocation1], 7
    %5263 = vst [vmem:[%s5262] ss:$9 sm:$0xff] %v4395
    %v5264 = vld [vmem:[#allocation1] sm:$0xff]
    %5265 = vst [vmem:[#allocation1] ss:$9 sm:$0xff] %v4426
    %5266 = vst [vmem:[%s5250] ss:$9 sm:$0xff] %v4427
    %5267 = vst [vmem:[%s5252] ss:$9 sm:$0xff] %v4428
    %5268 = vst [vmem:[%s5254] ss:$9 sm:$0xff] %v4429
    %5269 = vst [vmem:[%s5256] ss:$9 sm:$0xff] %v4430
    %5270 = vst [vmem:[%s5258] ss:$9 sm:$0xff] %v4431
    %5271 = vst [vmem:[%s5260] ss:$9 sm:$0xff] %v4432
    %5272 = vst [vmem:[%s5262] ss:$9 sm:$0xff] %v4398
    %v5273 = vld [vmem:[#allocation1] sm:$0xff]
    %5274 = vst [vmem:[#allocation1] ss:$9 sm:$0xff] %v4433
    %v5275 = vld [vmem:[#allocation1] sm:$0xff]
    %5276 = vrot.lane.b32.xlu0 %v5264, 56
    %v5277 = vpop.permute.xlu0 %5276
    %5278 = vrot.lane.b32.xlu0 %v5273, 56
    %v5279 = vpop.permute.xlu0 %5278
    %5280 = vrot.lane.b32.xlu0 %v5275, 56
    %v5281 = vpop.permute.xlu0 %5280
    %v5285 = vsel %vm1569, %v5174, 0
    %v5288 = vsel %vm1569, %v5175, 0
    %v5291 = vsel %vm1569, %v5176, 0
    %v5293 = vsel %vm90, %v5281, 0
    %5295 = vmatpush.msra.mxu0 0.0
    %5296 = vmatpush.msra.mxu0 0.0
    %5297 = vmatpush.msra.mxu0 0.0
    %5298 = vmatpush.msra.mxu0 0.0
    %5299 = vmatpush.msra.mxu0 0.0
    %5300 = vmatpush.msra.mxu0 0.0
    %5301 = vmatpush.msra.mxu0 0.0
    %5302 = vmatpush.msra.mxu0 0.0
    %5303 = vmatpush.msra.mxu0 0.0
    %5304 = vmatpush.msra.mxu0 0.0
    %5305 = vmatpush.msra.mxu0 0.0
    %5306 = vmatpush.msra.mxu0 0.0
    %5307 = vmatpush.msra.mxu0 0.0
    %5308 = vmatpush.msra.mxu0 %v5293
    %5309 = vmatpush.msra.mxu0 %v5279
    %5310 = vmatpush.msra.mxu0 %v5277
    %5311 = vmatmul.f32.gmra.mxu0 %v5285
    %v5312 = vpop.f32.mrf.mxu0
    %v5313 = vadd.f32 0.0, %v5312
    %5314 = vmatmul.f32.gmra.mxu0 %v5288
    %v5315 = vpop.f32.mrf.mxu0
    %v5316 = vadd.f32 0.0, %v5315
    %5317 = vmatmul.f32.gmra.mxu0 %v5291
    %v5318 = vpop.f32.mrf.mxu0
    %v5319 = vadd.f32 0.0, %v5318
    %5320 = vdwg.mxu0
    %v5327 = vrot.slane %v5241, 1
    %v5328 = vrot.slane %v5241, 2
    %v5329 = vrot.slane %v5241, 3
    %v5330 = vrot.slane %v5241, 4
    %v5331 = vrot.slane %v5241, 5
    %v5332 = vrot.slane %v5241, 6
    %v5333 = vrot.slane %v5241, 7
    %v5334 = vrot.slane %v5244, 1
    %v5335 = vrot.slane %v5244, 2
    %v5336 = vrot.slane %v5244, 3
    %v5337 = vrot.slane %v5244, 4
    %v5338 = vrot.slane %v5244, 5
    %v5339 = vrot.slane %v5244, 6
    %v5340 = vrot.slane %v5244, 7
    %v5341 = vrot.slane %v5313, 1
    %v5342 = vrot.slane %v5313, 2
    %v5343 = vrot.slane %v5313, 3
    %v5344 = vrot.slane %v5313, 4
    %v5345 = vrot.slane %v5313, 5
    %v5346 = vrot.slane %v5313, 6
    %v5347 = vrot.slane %v5313, 7
    %v5348 = vrot.slane %v5316, 1
    %v5349 = vrot.slane %v5316, 2
    %v5350 = vrot.slane %v5316, 3
    %v5351 = vrot.slane %v5316, 4
    %v5352 = vrot.slane %v5316, 5
    %v5353 = vrot.slane %v5316, 6
    %v5354 = vrot.slane %v5316, 7
    %5355 = vst [vmem:[#allocation1] ss:$9 sm:$0xff] %v5241
    %s5356 = scalar_lea.vmem [#allocation1], 1
    %5357 = vst [vmem:[%s5356] ss:$9 sm:$0xff] %v5327
    %s5358 = scalar_lea.vmem [#allocation1], 2
    %5359 = vst [vmem:[%s5358] ss:$9 sm:$0xff] %v5328
    %s5360 = scalar_lea.vmem [#allocation1], 3
    %5361 = vst [vmem:[%s5360] ss:$9 sm:$0xff] %v5329
    %s5362 = scalar_lea.vmem [#allocation1], 4
    %5363 = vst [vmem:[%s5362] ss:$9 sm:$0xff] %v5330
    %s5364 = scalar_lea.vmem [#allocation1], 5
    %5365 = vst [vmem:[%s5364] ss:$9 sm:$0xff] %v5331
    %s5366 = scalar_lea.vmem [#allocation1], 6
    %5367 = vst [vmem:[%s5366] ss:$9 sm:$0xff] %v5332
    %s5368 = scalar_lea.vmem [#allocation1], 7
    %5369 = vst [vmem:[%s5368] ss:$9 sm:$0xff] %v5333
    %v5370 = vld [vmem:[#allocation1] sm:$0xff]
    %5371 = vst [vmem:[#allocation1] ss:$9 sm:$0xff] %v5244
    %5372 = vst [vmem:[%s5356] ss:$9 sm:$0xff] %v5334
    %5373 = vst [vmem:[%s5358] ss:$9 sm:$0xff] %v5335
    %5374 = vst [vmem:[%s5360] ss:$9 sm:$0xff] %v5336
    %5375 = vst [vmem:[%s5362] ss:$9 sm:$0xff] %v5337
    %5376 = vst [vmem:[%s5364] ss:$9 sm:$0xff] %v5338
    %5377 = vst [vmem:[%s5366] ss:$9 sm:$0xff] %v5339
    %5378 = vst [vmem:[%s5368] ss:$9 sm:$0xff] %v5340
    %v5379 = vld [vmem:[#allocation1] sm:$0xff]
    %5380 = vst [vmem:[#allocation1] ss:$9 sm:$0xff] %v5247
    %5381 = vst [vmem:[%s5356] ss:$9 sm:$0xff] %v5313
    %5382 = vst [vmem:[%s5358] ss:$9 sm:$0xff] %v5341
    %5383 = vst [vmem:[%s5360] ss:$9 sm:$0xff] %v5342
    %5384 = vst [vmem:[%s5362] ss:$9 sm:$0xff] %v5343
    %5385 = vst [vmem:[%s5364] ss:$9 sm:$0xff] %v5344
    %5386 = vst [vmem:[%s5366] ss:$9 sm:$0xff] %v5345
    %5387 = vst [vmem:[%s5368] ss:$9 sm:$0xff] %v5346
    %v5388 = vld [vmem:[#allocation1] sm:$0xff]
    %5389 = vst [vmem:[#allocation1] ss:$9 sm:$0xff] %v5347
    %5390 = vst [vmem:[%s5356] ss:$9 sm:$0xff] %v5316
    %5391 = vst [vmem:[%s5358] ss:$9 sm:$0xff] %v5348
    %5392 = vst [vmem:[%s5360] ss:$9 sm:$0xff] %v5349
    %5393 = vst [vmem:[%s5362] ss:$9 sm:$0xff] %v5350
    %5394 = vst [vmem:[%s5364] ss:$9 sm:$0xff] %v5351
    %5395 = vst [vmem:[%s5366] ss:$9 sm:$0xff] %v5352
    %5396 = vst [vmem:[%s5368] ss:$9 sm:$0xff] %v5353
    %v5397 = vld [vmem:[#allocation1] sm:$0xff]
    %5398 = vst [vmem:[#allocation1] ss:$9 sm:$0xff] %v5354
    %5399 = vst [vmem:[%s5356] ss:$9 sm:$0xff] %v5319
    %v5400 = vld [vmem:[#allocation1] sm:$0xff]
    %v5401 = vsel %vm1414, %v5370, 0
    %v5403 = vsel %vm1414, %v5379, 0
    %v5405 = vsel %vm1414, %v5388, 0
    %v5407 = vsel %vm1414, %v5397, 0
    %v5409 = vsel %vm1414, %v5400, 0
    %5411 = vmatpush.msra.mxu0 0.0
    %5412 = vmatpush.msra.mxu0 0.0
    %5413 = vmatpush.msra.mxu0 0.0
    %5414 = vmatpush.msra.mxu0 0.0
    %5415 = vmatpush.msra.mxu0 0.0
    %5416 = vmatpush.msra.mxu0 0.0
    %5417 = vmatpush.msra.mxu0 0.0
    %5418 = vmatpush.msra.mxu0 0.0
    %5419 = vmatpush.msra.mxu0 0.0
    %5420 = vmatpush.msra.mxu0 0.0
    %5421 = vmatpush.msra.mxu0 0.0
    %5422 = vmatpush.msra.mxu0 0.0
    %5423 = vmatpush.msra.mxu0 0.0
    %5424 = vmatpush.msra.mxu0 0.0
    %5425 = vmatpush.msra.mxu0 0.0
    %5426 = vmatpush.msra.mxu0 %v4436
    %5427 = vmatmul.f32.gmra.mxu0 %v5401
    %v5428 = vpop.f32.mrf.mxu0
    %v5429 = vadd.f32 0.0, %v5428
    %5430 = vmatmul.f32.gmra.mxu0 %v5403
    %v5431 = vpop.f32.mrf.mxu0
    %v5432 = vadd.f32 0.0, %v5431
    %5433 = vmatmul.f32.gmra.mxu0 %v5405
    %v5434 = vpop.f32.mrf.mxu0
    %v5435 = vadd.f32 0.0, %v5434
    %5436 = vmatmul.f32.gmra.mxu0 %v5407
    %v5437 = vpop.f32.mrf.mxu0
    %v5438 = vadd.f32 0.0, %v5437
    %5439 = vmatmul.f32.gmra.mxu0 %v5409
    %v5440 = vpop.f32.mrf.mxu0
    %v5441 = vadd.f32 0.0, %v5440
    %5442 = vdwg.mxu0
    %5443 = vst [vmem:[#allocation1] ss:$9 sm:$0xff] %v4777
    %s5444 = scalar_lea.vmem [#allocation1], 1
    %5445 = vst [vmem:[%s5444] ss:$9 sm:$0xff] %v4863
    %s5446 = scalar_lea.vmem [#allocation1], 2
    %5447 = vst [vmem:[%s5446] ss:$9 sm:$0xff] %v4864
    %s5448 = scalar_lea.vmem [#allocation1], 3
    %5449 = vst [vmem:[%s5448] ss:$9 sm:$0xff] %v4865
    %s5450 = scalar_lea.vmem [#allocation1], 4
    %5451 = vst [vmem:[%s5450] ss:$9 sm:$0xff] %v4866
    %s5452 = scalar_lea.vmem [#allocation1], 5
    %5453 = vst [vmem:[%s5452] ss:$9 sm:$0xff] %v4867
    %s5454 = scalar_lea.vmem [#allocation1], 6
    %5455 = vst [vmem:[%s5454] ss:$9 sm:$0xff] %v4868
    %s5456 = scalar_lea.vmem [#allocation1], 7
    %5457 = vst [vmem:[%s5456] ss:$9 sm:$0xff] %v4869
    %v5458 = vld [vmem:[#allocation1] sm:$0xff]
    %5459 = vst [vmem:[#allocation1] ss:$9 sm:$0xff] %v4780
    %5460 = vst [vmem:[%s5444] ss:$9 sm:$0xff] %v4870
    %5461 = vst [vmem:[%s5446] ss:$9 sm:$0xff] %v4871
    %5462 = vst [vmem:[%s5448] ss:$9 sm:$0xff] %v4872
    %5463 = vst [vmem:[%s5450] ss:$9 sm:$0xff] %v4873
    %5464 = vst [vmem:[%s5452] ss:$9 sm:$0xff] %v4874
    %5465 = vst [vmem:[%s5454] ss:$9 sm:$0xff] %v4875
    %5466 = vst [vmem:[%s5456] ss:$9 sm:$0xff] %v4876
    %v5467 = vld [vmem:[#allocation1] sm:$0xff]
    %5468 = vst [vmem:[#allocation1] ss:$9 sm:$0xff] %v4783
    %5469 = vst [vmem:[%s5444] ss:$9 sm:$0xff] %v4849
    %5470 = vst [vmem:[%s5446] ss:$9 sm:$0xff] %v4877
    %5471 = vst [vmem:[%s5448] ss:$9 sm:$0xff] %v4878
    %5472 = vst [vmem:[%s5450] ss:$9 sm:$0xff] %v4879
    %5473 = vst [vmem:[%s5452] ss:$9 sm:$0xff] %v4880
    %5474 = vst [vmem:[%s5454] ss:$9 sm:$0xff] %v4881
    %5475 = vst [vmem:[%s5456] ss:$9 sm:$0xff] %v4882
    %v5476 = vld [vmem:[#allocation1] sm:$0xff]
    %5477 = vst [vmem:[#allocation1] ss:$9 sm:$0xff] %v4883
    %5478 = vst [vmem:[%s5444] ss:$9 sm:$0xff] %v4852
    %5479 = vst [vmem:[%s5446] ss:$9 sm:$0xff] %v4884
    %5480 = vst [vmem:[%s5448] ss:$9 sm:$0xff] %v4885
    %5481 = vst [vmem:[%s5450] ss:$9 sm:$0xff] %v4886
    %5482 = vst [vmem:[%s5452] ss:$9 sm:$0xff] %v4887
    %5483 = vst [vmem:[%s5454] ss:$9 sm:$0xff] %v4888
    %5484 = vst [vmem:[%s5456] ss:$9 sm:$0xff] %v4889
    %v5485 = vld [vmem:[#allocation1] sm:$0xff]
    %5486 = vst [vmem:[#allocation1] ss:$9 sm:$0xff] %v4890
    %5487 = vst [vmem:[%s5444] ss:$9 sm:$0xff] %v4855
    %v5488 = vld [vmem:[#allocation1] sm:$0xff]
    %v5489 = vsel %vm1414, %v5458, 0
    %v5491 = vsel %vm1414, %v5467, 0
    %v5493 = vsel %vm1414, %v5476, 0
    %v5495 = vsel %vm1414, %v5485, 0
    %v5497 = vsel %vm1414, %v5488, 0
    %5499 = vmatpush.msra.mxu0 0.0
    %5500 = vmatpush.msra.mxu0 0.0
    %5501 = vmatpush.msra.mxu0 0.0
    %5502 = vmatpush.msra.mxu0 0.0
    %5503 = vmatpush.msra.mxu0 0.0
    %5504 = vmatpush.msra.mxu0 0.0
    %5505 = vmatpush.msra.mxu0 0.0
    %5506 = vmatpush.msra.mxu0 0.0
    %5507 = vmatpush.msra.mxu0 0.0
    %5508 = vmatpush.msra.mxu0 0.0
    %5509 = vmatpush.msra.mxu0 0.0
    %5510 = vmatpush.msra.mxu0 0.0
    %5511 = vmatpush.msra.mxu0 0.0
    %5512 = vmatpush.msra.mxu0 0.0
    %5513 = vmatpush.msra.mxu0 0.0
    %5514 = vmatpush.msra.mxu0 %v4435
    %5515 = vmatmul.f32.gmra.mxu0 %v5489
    %v5516 = vpop.f32.mrf.mxu0
    %v5517 = vadd.f32 %v5429, %v5516
    %5518 = vmatmul.f32.gmra.mxu0 %v5491
    %v5519 = vpop.f32.mrf.mxu0
    %v5520 = vadd.f32 %v5432, %v5519
    %5521 = vmatmul.f32.gmra.mxu0 %v5493
    %v5522 = vpop.f32.mrf.mxu0
    %v5523 = vadd.f32 %v5435, %v5522
    %5524 = vmatmul.f32.gmra.mxu0 %v5495
    %v5525 = vpop.f32.mrf.mxu0
    %v5526 = vadd.f32 %v5438, %v5525
    %5527 = vmatmul.f32.gmra.mxu0 %v5497
    %v5528 = vpop.f32.mrf.mxu0
    %v5529 = vadd.f32 %v5441, %v5528
    %5530 = vdwg.mxu0
    %5531 = vst [vmem:[#allocation1] ss:$9 sm:$0xff] %v4386
    %s5532 = scalar_lea.vmem [#allocation1], 1
    %5533 = vst [vmem:[%s5532] ss:$9 sm:$0xff] %v4405
    %s5534 = scalar_lea.vmem [#allocation1], 2
    %5535 = vst [vmem:[%s5534] ss:$9 sm:$0xff] %v4406
    %s5536 = scalar_lea.vmem [#allocation1], 3
    %5537 = vst [vmem:[%s5536] ss:$9 sm:$0xff] %v4407
    %s5538 = scalar_lea.vmem [#allocation1], 4
    %5539 = vst [vmem:[%s5538] ss:$9 sm:$0xff] %v4408
    %s5540 = scalar_lea.vmem [#allocation1], 5
    %5541 = vst [vmem:[%s5540] ss:$9 sm:$0xff] %v4409
    %s5542 = scalar_lea.vmem [#allocation1], 6
    %5543 = vst [vmem:[%s5542] ss:$9 sm:$0xff] %v4410
    %s5544 = scalar_lea.vmem [#allocation1], 7
    %5545 = vst [vmem:[%s5544] ss:$9 sm:$0xff] %v4411
    %v5546 = vld [vmem:[#allocation1] sm:$0xff]
    %5547 = vst [vmem:[#allocation1] ss:$9 sm:$0xff] %v4389
    %5548 = vst [vmem:[%s5532] ss:$9 sm:$0xff] %v4412
    %5549 = vst [vmem:[%s5534] ss:$9 sm:$0xff] %v4413
    %5550 = vst [vmem:[%s5536] ss:$9 sm:$0xff] %v4414
    %5551 = vst [vmem:[%s5538] ss:$9 sm:$0xff] %v4415
    %5552 = vst [vmem:[%s5540] ss:$9 sm:$0xff] %v4416
    %5553 = vst [vmem:[%s5542] ss:$9 sm:$0xff] %v4417
    %5554 = vst [vmem:[%s5544] ss:$9 sm:$0xff] %v4418
    %v5555 = vld [vmem:[#allocation1] sm:$0xff]
    %5556 = vst [vmem:[#allocation1] ss:$9 sm:$0xff] %v4392
    %v5557 = vld [vmem:[#allocation1] sm:$0xff]
    %5558 = vrot.lane.b32.xlu0 %v5546, 112
    %v5559 = vpop.permute.xlu0 %5558
    %5560 = vrot.lane.b32.xlu0 %v5555, 112
    %v5561 = vpop.permute.xlu0 %5560
    %5562 = vrot.lane.b32.xlu0 %v5557, 112
    %v5563 = vpop.permute.xlu0 %5562
    %5564 = vst [vmem:[#allocation1] ss:$9 sm:$0xff] %v4386
    %s5565 = scalar_lea.vmem [#allocation1], 1
    %5566 = vst [vmem:[%s5565] ss:$9 sm:$0xff] %v4405
    %s5567 = scalar_lea.vmem [#allocation1], 2
    %5568 = vst [vmem:[%s5567] ss:$9 sm:$0xff] %v4406
    %s5569 = scalar_lea.vmem [#allocation1], 3
    %5570 = vst [vmem:[%s5569] ss:$9 sm:$0xff] %v4407
    %s5571 = scalar_lea.vmem [#allocation1], 4
    %5572 = vst [vmem:[%s5571] ss:$9 sm:$0xff] %v4408
    %s5573 = scalar_lea.vmem [#allocation1], 5
    %5574 = vst [vmem:[%s5573] ss:$9 sm:$0xff] %v4409
    %s5575 = scalar_lea.vmem [#allocation1], 6
    %5576 = vst [vmem:[%s5575] ss:$9 sm:$0xff] %v4410
    %s5577 = scalar_lea.vmem [#allocation1], 7
    %5578 = vst [vmem:[%s5577] ss:$9 sm:$0xff] %v4411
    %v5579 = vld [vmem:[#allocation1] sm:$0xff]
    %5580 = vst [vmem:[#allocation1] ss:$9 sm:$0xff] %v4389
    %5581 = vst [vmem:[%s5565] ss:$9 sm:$0xff] %v4412
    %5582 = vst [vmem:[%s5567] ss:$9 sm:$0xff] %v4413
    %5583 = vst [vmem:[%s5569] ss:$9 sm:$0xff] %v4414
    %5584 = vst [vmem:[%s5571] ss:$9 sm:$0xff] %v4415
    %5585 = vst [vmem:[%s5573] ss:$9 sm:$0xff] %v4416
    %5586 = vst [vmem:[%s5575] ss:$9 sm:$0xff] %v4417
    %5587 = vst [vmem:[%s5577] ss:$9 sm:$0xff] %v4418
    %v5588 = vld [vmem:[#allocation1] sm:$0xff]
    %5589 = vst [vmem:[#allocation1] ss:$9 sm:$0xff] %v4392
    %v5590 = vld [vmem:[#allocation1] sm:$0xff]
    %5591 = vrot.lane.b32.xlu0 %v5579, 80
    %v5592 = vpop.permute.xlu0 %5591
    %5593 = vrot.lane.b32.xlu0 %v5588, 80
    %v5594 = vpop.permute.xlu0 %5593
    %5595 = vrot.lane.b32.xlu0 %v5590, 80
    %v5596 = vpop.permute.xlu0 %5595
    %v5597 = vsel %vm1414, %v5559, 0
    %v5599 = vsel %vm1414, %v5561, 0
    %v5601 = vsel %vm1414, %v5563, 0
    %v5603 = vsel %vm1414, %v5592, 0
    %v5605 = vsel %vm1414, %v5594, 0
    %v5607 = vsel %vm1414, %v5596, 0
    %5609 = vmatpush.xpose.msra.mxu0 0.0
    %5610 = vmatpush.xpose.msra.mxu0 0.0
    %5611 = vmatpush.xpose.msra.mxu0 0.0
    %5612 = vmatpush.xpose.msra.mxu0 0.0
    %5613 = vmatpush.xpose.msra.mxu0 0.0
    %5614 = vmatpush.xpose.msra.mxu0 0.0
    %5615 = vmatpush.xpose.msra.mxu0 0.0
    %5616 = vmatpush.xpose.msra.mxu0 0.0
    %5617 = vmatpush.xpose.msra.mxu0 0.0
    %5618 = vmatpush.xpose.msra.mxu0 0.0
    %5619 = vmatpush.xpose.msra.mxu0 0.0
    %5620 = vmatpush.xpose.msra.mxu0 0.0
    %5621 = vmatpush.xpose.msra.mxu0 0.0
    %5622 = vmatpush.xpose.msra.mxu0 %v5607
    %5623 = vmatpush.xpose.msra.mxu0 %v5605
    %5624 = vmatpush.xpose.msra.mxu0 %v5603
    %5625 = vmatmul.f32.gmra.mxu0 %v5597
    %v5626 = vpop.f32.mrf.mxu0
    %v5627 = vadd.f32 0.0, %v5626
    %5628 = vmatmul.f32.gmra.mxu0 %v5599
    %v5629 = vpop.f32.mrf.mxu0
    %v5630 = vadd.f32 0.0, %v5629
    %5631 = vmatmul.f32.gmra.mxu0 %v5601
    %v5632 = vpop.f32.mrf.mxu0
    %v5633 = vadd.f32 0.0, %v5632
    %5634 = vdwg.mxu0
    %5635 = vst [vmem:[#allocation1] ss:$9 sm:$0xff] %v4419
    %s5636 = scalar_lea.vmem [#allocation1], 1
    %5637 = vst [vmem:[%s5636] ss:$9 sm:$0xff] %v4420
    %s5638 = scalar_lea.vmem [#allocation1], 2
    %5639 = vst [vmem:[%s5638] ss:$9 sm:$0xff] %v4421
    %s5640 = scalar_lea.vmem [#allocation1], 3
    %5641 = vst [vmem:[%s5640] ss:$9 sm:$0xff] %v4422
    %s5642 = scalar_lea.vmem [#allocation1], 4
    %5643 = vst [vmem:[%s5642] ss:$9 sm:$0xff] %v4423
    %s5644 = scalar_lea.vmem [#allocation1], 5
    %5645 = vst [vmem:[%s5644] ss:$9 sm:$0xff] %v4424
    %s5646 = scalar_lea.vmem [#allocation1], 6
    %5647 = vst [vmem:[%s5646] ss:$9 sm:$0xff] %v4425
    %s5648 = scalar_lea.vmem [#allocation1], 7
    %5649 = vst [vmem:[%s5648] ss:$9 sm:$0xff] %v4395
    %v5650 = vld [vmem:[#allocation1] sm:$0xff]
    %5651 = vst [vmem:[#allocation1] ss:$9 sm:$0xff] %v4426
    %5652 = vst [vmem:[%s5636] ss:$9 sm:$0xff] %v4427
    %5653 = vst [vmem:[%s5638] ss:$9 sm:$0xff] %v4428
    %5654 = vst [vmem:[%s5640] ss:$9 sm:$0xff] %v4429
    %5655 = vst [vmem:[%s5642] ss:$9 sm:$0xff] %v4430
    %5656 = vst [vmem:[%s5644] ss:$9 sm:$0xff] %v4431
    %5657 = vst [vmem:[%s5646] ss:$9 sm:$0xff] %v4432
    %5658 = vst [vmem:[%s5648] ss:$9 sm:$0xff] %v4398
    %v5659 = vld [vmem:[#allocation1] sm:$0xff]
    %5660 = vst [vmem:[#allocation1] ss:$9 sm:$0xff] %v4433
    %v5661 = vld [vmem:[#allocation1] sm:$0xff]
    %5662 = vrot.lane.b32.xlu0 %v5650, 112
    %v5663 = vpop.permute.xlu0 %5662
    %5664 = vrot.lane.b32.xlu0 %v5659, 112
    %v5665 = vpop.permute.xlu0 %5664
    %5666 = vrot.lane.b32.xlu0 %v5661, 112
    %v5667 = vpop.permute.xlu0 %5666
    %5668 = vst [vmem:[#allocation1] ss:$9 sm:$0xff] %v4419
    %s5669 = scalar_lea.vmem [#allocation1], 1
    %5670 = vst [vmem:[%s5669] ss:$9 sm:$0xff] %v4420
    %s5671 = scalar_lea.vmem [#allocation1], 2
    %5672 = vst [vmem:[%s5671] ss:$9 sm:$0xff] %v4421
    %s5673 = scalar_lea.vmem [#allocation1], 3
    %5674 = vst [vmem:[%s5673] ss:$9 sm:$0xff] %v4422
    %s5675 = scalar_lea.vmem [#allocation1], 4
    %5676 = vst [vmem:[%s5675] ss:$9 sm:$0xff] %v4423
    %s5677 = scalar_lea.vmem [#allocation1], 5
    %5678 = vst [vmem:[%s5677] ss:$9 sm:$0xff] %v4424
    %s5679 = scalar_lea.vmem [#allocation1], 6
    %5680 = vst [vmem:[%s5679] ss:$9 sm:$0xff] %v4425
    %s5681 = scalar_lea.vmem [#allocation1], 7
    %5682 = vst [vmem:[%s5681] ss:$9 sm:$0xff] %v4395
    %v5683 = vld [vmem:[#allocation1] sm:$0xff]
    %5684 = vst [vmem:[#allocation1] ss:$9 sm:$0xff] %v4426
    %5685 = vst [vmem:[%s5669] ss:$9 sm:$0xff] %v4427
    %5686 = vst [vmem:[%s5671] ss:$9 sm:$0xff] %v4428
    %5687 = vst [vmem:[%s5673] ss:$9 sm:$0xff] %v4429
    %5688 = vst [vmem:[%s5675] ss:$9 sm:$0xff] %v4430
    %5689 = vst [vmem:[%s5677] ss:$9 sm:$0xff] %v4431
    %5690 = vst [vmem:[%s5679] ss:$9 sm:$0xff] %v4432
    %5691 = vst [vmem:[%s5681] ss:$9 sm:$0xff] %v4398
    %v5692 = vld [vmem:[#allocation1] sm:$0xff]
    %5693 = vst [vmem:[#allocation1] ss:$9 sm:$0xff] %v4433
    %v5694 = vld [vmem:[#allocation1] sm:$0xff]
    %5695 = vrot.lane.b32.xlu0 %v5683, 80
    %v5696 = vpop.permute.xlu0 %5695
    %5697 = vrot.lane.b32.xlu0 %v5692, 80
    %v5698 = vpop.permute.xlu0 %5697
    %5699 = vrot.lane.b32.xlu0 %v5694, 80
    %v5700 = vpop.permute.xlu0 %5699
    %v5701 = vsel %vm1414, %v5663, 0
    %v5703 = vsel %vm1414, %v5665, 0
    %v5705 = vsel %vm1414, %v5667, 0
    %v5707 = vsel %vm1414, %v5696, 0
    %v5709 = vsel %vm1414, %v5698, 0
    %v5711 = vsel %vm1414, %v5700, 0
    %5713 = vmatpush.xpose.msra.mxu0 0.0
    %5714 = vmatpush.xpose.msra.mxu0 0.0
    %5715 = vmatpush.xpose.msra.mxu0 0.0
    %5716 = vmatpush.xpose.msra.mxu0 0.0
    %5717 = vmatpush.xpose.msra.mxu0 0.0
    %5718 = vmatpush.xpose.msra.mxu0 0.0
    %5719 = vmatpush.xpose.msra.mxu0 0.0
    %5720 = vmatpush.xpose.msra.mxu0 0.0
    %5721 = vmatpush.xpose.msra.mxu0 0.0
    %5722 = vmatpush.xpose.msra.mxu0 0.0
    %5723 = vmatpush.xpose.msra.mxu0 0.0
    %5724 = vmatpush.xpose.msra.mxu0 0.0
    %5725 = vmatpush.xpose.msra.mxu0 0.0
    %5726 = vmatpush.xpose.msra.mxu0 %v5711
    %5727 = vmatpush.xpose.msra.mxu0 %v5709
    %5728 = vmatpush.xpose.msra.mxu0 %v5707
    %5729 = vmatmul.f32.gmra.mxu0 %v5701
    %v5730 = vpop.f32.mrf.mxu0
    %v5731 = vadd.f32 0.0, %v5730
    %5732 = vmatmul.f32.gmra.mxu0 %v5703
    %v5733 = vpop.f32.mrf.mxu0
    %v5734 = vadd.f32 0.0, %v5733
    %5735 = vmatmul.f32.gmra.mxu0 %v5705
    %v5736 = vpop.f32.mrf.mxu0
    %v5737 = vadd.f32 0.0, %v5736
    %5738 = vdwg.mxu0
    %v5739 = vmul.f32 %v5627, 0.35355338
    %v5740 = vmul.f32 %v5630, 0.35355338
    %v5741 = vmul.f32 %v5633, 0.35355338
    %v5742 = vmul.f32 %v5731, 0.35355338
    %v5743 = vmul.f32 %v5734, 0.35355338
    %v5744 = vmul.f32 %v5737, 0.35355338
    %v5745 = vsel %vm1560, -3.4028235e+38, %v5739
    %v5746 = vsel %vm1561, -3.4028235e+38, %v5740
    %v5747 = vsel %vm1562, -3.4028235e+38, %v5741
    %v5748 = vsel %vm1560, -3.4028235e+38, %v5742
    %v5749 = vsel %vm1561, -3.4028235e+38, %v5743
    %v5750 = vsel %vm1562, -3.4028235e+38, %v5744
    %v5751 = vsel %vm1569, %v5745, -inf
    %5752 = vmax.xlane.f32.xlu0 %v5751
    %v5753 = vpop.xlane.xlu0 %5752
    %v5754 = vsel %vm1569, %v5746, -inf
    %5755 = vmax.xlane.f32.xlu0 %v5754
    %v5756 = vpop.xlane.xlu0 %5755
    %v5757 = vsel %vm1576, %v5747, -inf
    %5758 = vmax.xlane.f32.xlu0 %v5757
    %v5759 = vpop.xlane.xlu0 %5758
    %v5760 = vsel %vm1569, %v5748, -inf
    %5761 = vmax.xlane.f32.xlu0 %v5760
    %v5762 = vpop.xlane.xlu0 %5761
    %v5763 = vsel %vm1569, %v5749, -inf
    %5764 = vmax.xlane.f32.xlu0 %v5763
    %v5765 = vpop.xlane.xlu0 %5764
    %v5766 = vsel %vm1576, %v5750, -inf
    %5767 = vmax.xlane.f32.xlu0 %v5766
    %v5768 = vpop.xlane.xlu0 %5767
    %v5769 = vsub.f32 %v5745, %v5753
    %v5770 = vsub.f32 %v5746, %v5756
    %v5771 = vsub.f32 %v5747, %v5759
    %v5772 = vsub.f32 %v5748, %v5762
    %v5773 = vsub.f32 %v5749, %v5765
    %v5774 = vsub.f32 %v5750, %v5768
    %v5775 = vmul.f32 %v5769, 1.442695
    %v5776 = vpow.pop %v5775
    %v5777 = vmul.f32 %v5770, 1.442695
    %v5778 = vpow.pop %v5777
    %v5779 = vmul.f32 %v5771, 1.442695
    %v5780 = vpow.pop %v5779
    %v5781 = vmul.f32 %v5772, 1.442695
    %v5782 = vpow.pop %v5781
    %v5783 = vmul.f32 %v5773, 1.442695
    %v5784 = vpow.pop %v5783
    %v5785 = vmul.f32 %v5774, 1.442695
    %v5786 = vpow.pop %v5785
    %v5787 = vsel %vm1569, %v5776, 0.0
    %5788 = vadd.xlane.f32.xlu0 %v5787
    %v5789 = vpop.xlane.xlu0 %5788
    %v5790 = vsel %vm1569, %v5778, 0.0
    %5791 = vadd.xlane.f32.xlu0 %v5790
    %v5792 = vpop.xlane.xlu0 %5791
    %v5793 = vsel %vm1576, %v5780, 0.0
    %5794 = vadd.xlane.f32.xlu0 %v5793
    %v5795 = vpop.xlane.xlu0 %5794
    %v5796 = vsel %vm1569, %v5782, 0.0
    %5797 = vadd.xlane.f32.xlu0 %v5796
    %v5798 = vpop.xlane.xlu0 %5797
    %v5799 = vsel %vm1569, %v5784, 0.0
    %5800 = vadd.xlane.f32.xlu0 %v5799
    %v5801 = vpop.xlane.xlu0 %5800
    %v5802 = vsel %vm1576, %v5786, 0.0
    %5803 = vadd.xlane.f32.xlu0 %v5802
    %v5804 = vpop.xlane.xlu0 %5803
    %v5805 = vrcp.pop %v5789
    %v5806 = vrcp.pop %v5792
    %v5807 = vrcp.pop %v5795
    %v5808 = vrcp.pop %v5798
    %v5809 = vrcp.pop %v5801
    %v5810 = vrcp.pop %v5804
    %v5811 = vmul.f32 %v5776, %v5805
    %v5812 = vmul.f32 %v5778, %v5806
    %v5813 = vmul.f32 %v5780, %v5807
    %v5814 = vmul.f32 %v5782, %v5808
    %v5815 = vmul.f32 %v5784, %v5809
    %v5816 = vmul.f32 %v5786, %v5810
    %5817 = vst [vmem:[#allocation1] ss:$9 sm:$0xff] %v4386
    %s5818 = scalar_lea.vmem [#allocation1], 1
    %5819 = vst [vmem:[%s5818] ss:$9 sm:$0xff] %v4405
    %s5820 = scalar_lea.vmem [#allocation1], 2
    %5821 = vst [vmem:[%s5820] ss:$9 sm:$0xff] %v4406
    %s5822 = scalar_lea.vmem [#allocation1], 3
    %5823 = vst [vmem:[%s5822] ss:$9 sm:$0xff] %v4407
    %s5824 = scalar_lea.vmem [#allocation1], 4
    %5825 = vst [vmem:[%s5824] ss:$9 sm:$0xff] %v4408
    %s5826 = scalar_lea.vmem [#allocation1], 5
    %5827 = vst [vmem:[%s5826] ss:$9 sm:$0xff] %v4409
    %s5828 = scalar_lea.vmem [#allocation1], 6
    %5829 = vst [vmem:[%s5828] ss:$9 sm:$0xff] %v4410
    %s5830 = scalar_lea.vmem [#allocation1], 7
    %5831 = vst [vmem:[%s5830] ss:$9 sm:$0xff] %v4411
    %v5832 = vld [vmem:[#allocation1] sm:$0xff]
    %5833 = vst [vmem:[#allocation1] ss:$9 sm:$0xff] %v4389
    %5834 = vst [vmem:[%s5818] ss:$9 sm:$0xff] %v4412
    %5835 = vst [vmem:[%s5820] ss:$9 sm:$0xff] %v4413
    %5836 = vst [vmem:[%s5822] ss:$9 sm:$0xff] %v4414
    %5837 = vst [vmem:[%s5824] ss:$9 sm:$0xff] %v4415
    %5838 = vst [vmem:[%s5826] ss:$9 sm:$0xff] %v4416
    %5839 = vst [vmem:[%s5828] ss:$9 sm:$0xff] %v4417
    %5840 = vst [vmem:[%s5830] ss:$9 sm:$0xff] %v4418
    %v5841 = vld [vmem:[#allocation1] sm:$0xff]
    %5842 = vst [vmem:[#allocation1] ss:$9 sm:$0xff] %v4392
    %v5843 = vld [vmem:[#allocation1] sm:$0xff]
    %5844 = vrot.lane.b32.xlu0 %v5832, 48
    %v5845 = vpop.permute.xlu0 %5844
    %5846 = vrot.lane.b32.xlu0 %v5841, 48
    %v5847 = vpop.permute.xlu0 %5846
    %5848 = vrot.lane.b32.xlu0 %v5843, 48
    %v5849 = vpop.permute.xlu0 %5848
    %v5853 = vsel %vm1569, %v5811, 0
    %v5856 = vsel %vm1569, %v5812, 0
    %v5859 = vsel %vm1569, %v5813, 0
    %v5861 = vsel %vm90, %v5849, 0
    %5863 = vmatpush.msra.mxu0 0.0
    %5864 = vmatpush.msra.mxu0 0.0
    %5865 = vmatpush.msra.mxu0 0.0
    %5866 = vmatpush.msra.mxu0 0.0
    %5867 = vmatpush.msra.mxu0 0.0
    %5868 = vmatpush.msra.mxu0 0.0
    %5869 = vmatpush.msra.mxu0 0.0
    %5870 = vmatpush.msra.mxu0 0.0
    %5871 = vmatpush.msra.mxu0 0.0
    %5872 = vmatpush.msra.mxu0 0.0
    %5873 = vmatpush.msra.mxu0 0.0
    %5874 = vmatpush.msra.mxu0 0.0
    %5875 = vmatpush.msra.mxu0 0.0
    %5876 = vmatpush.msra.mxu0 %v5861
    %5877 = vmatpush.msra.mxu0 %v5847
    %5878 = vmatpush.msra.mxu0 %v5845
    %5879 = vmatmul.f32.gmra.mxu0 %v5853
    %v5880 = vpop.f32.mrf.mxu0
    %v5881 = vadd.f32 0.0, %v5880
    %5882 = vmatmul.f32.gmra.mxu0 %v5856
    %v5883 = vpop.f32.mrf.mxu0
    %v5884 = vadd.f32 0.0, %v5883
    %5885 = vmatmul.f32.gmra.mxu0 %v5859
    %v5886 = vpop.f32.mrf.mxu0
    %v5887 = vadd.f32 0.0, %v5886
    %5888 = vdwg.mxu0
    %5889 = vst [vmem:[#allocation1] ss:$9 sm:$0xff] %v4419
    %s5890 = scalar_lea.vmem [#allocation1], 1
    %5891 = vst [vmem:[%s5890] ss:$9 sm:$0xff] %v4420
    %s5892 = scalar_lea.vmem [#allocation1], 2
    %5893 = vst [vmem:[%s5892] ss:$9 sm:$0xff] %v4421
    %s5894 = scalar_lea.vmem [#allocation1], 3
    %5895 = vst [vmem:[%s5894] ss:$9 sm:$0xff] %v4422
    %s5896 = scalar_lea.vmem [#allocation1], 4
    %5897 = vst [vmem:[%s5896] ss:$9 sm:$0xff] %v4423
    %s5898 = scalar_lea.vmem [#allocation1], 5
    %5899 = vst [vmem:[%s5898] ss:$9 sm:$0xff] %v4424
    %s5900 = scalar_lea.vmem [#allocation1], 6
    %5901 = vst [vmem:[%s5900] ss:$9 sm:$0xff] %v4425
    %s5902 = scalar_lea.vmem [#allocation1], 7
    %5903 = vst [vmem:[%s5902] ss:$9 sm:$0xff] %v4395
    %v5904 = vld [vmem:[#allocation1] sm:$0xff]
    %5905 = vst [vmem:[#allocation1] ss:$9 sm:$0xff] %v4426
    %5906 = vst [vmem:[%s5890] ss:$9 sm:$0xff] %v4427
    %5907 = vst [vmem:[%s5892] ss:$9 sm:$0xff] %v4428
    %5908 = vst [vmem:[%s5894] ss:$9 sm:$0xff] %v4429
    %5909 = vst [vmem:[%s5896] ss:$9 sm:$0xff] %v4430
    %5910 = vst [vmem:[%s5898] ss:$9 sm:$0xff] %v4431
    %5911 = vst [vmem:[%s5900] ss:$9 sm:$0xff] %v4432
    %5912 = vst [vmem:[%s5902] ss:$9 sm:$0xff] %v4398
    %v5913 = vld [vmem:[#allocation1] sm:$0xff]
    %5914 = vst [vmem:[#allocation1] ss:$9 sm:$0xff] %v4433
    %v5915 = vld [vmem:[#allocation1] sm:$0xff]
    %5916 = vrot.lane.b32.xlu0 %v5904, 48
    %v5917 = vpop.permute.xlu0 %5916
    %5918 = vrot.lane.b32.xlu0 %v5913, 48
    %v5919 = vpop.permute.xlu0 %5918
    %5920 = vrot.lane.b32.xlu0 %v5915, 48
    %v5921 = vpop.permute.xlu0 %5920
    %v5925 = vsel %vm1569, %v5814, 0
    %v5928 = vsel %vm1569, %v5815, 0
    %v5931 = vsel %vm1569, %v5816, 0
    %v5933 = vsel %vm90, %v5921, 0
    %5935 = vmatpush.msra.mxu0 0.0
    %5936 = vmatpush.msra.mxu0 0.0
    %5937 = vmatpush.msra.mxu0 0.0
    %5938 = vmatpush.msra.mxu0 0.0
    %5939 = vmatpush.msra.mxu0 0.0
    %5940 = vmatpush.msra.mxu0 0.0
    %5941 = vmatpush.msra.mxu0 0.0
    %5942 = vmatpush.msra.mxu0 0.0
    %5943 = vmatpush.msra.mxu0 0.0
    %5944 = vmatpush.msra.mxu0 0.0
    %5945 = vmatpush.msra.mxu0 0.0
    %5946 = vmatpush.msra.mxu0 0.0
    %5947 = vmatpush.msra.mxu0 0.0
    %5948 = vmatpush.msra.mxu0 %v5933
    %5949 = vmatpush.msra.mxu0 %v5919
    %5950 = vmatpush.msra.mxu0 %v5917
    %5951 = vmatmul.f32.gmra.mxu0 %v5925
    %v5952 = vpop.f32.mrf.mxu0
    %v5953 = vadd.f32 0.0, %v5952
    %5954 = vmatmul.f32.gmra.mxu0 %v5928
    %v5955 = vpop.f32.mrf.mxu0
    %v5956 = vadd.f32 0.0, %v5955
    %5957 = vmatmul.f32.gmra.mxu0 %v5931
    %v5958 = vpop.f32.mrf.mxu0
    %v5959 = vadd.f32 0.0, %v5958
    %5960 = vdwg.mxu0
    %v5967 = vrot.slane %v5881, 1
    %v5968 = vrot.slane %v5881, 2
    %v5969 = vrot.slane %v5881, 3
    %v5970 = vrot.slane %v5881, 4
    %v5971 = vrot.slane %v5881, 5
    %v5972 = vrot.slane %v5881, 6
    %v5973 = vrot.slane %v5881, 7
    %v5974 = vrot.slane %v5884, 1
    %v5975 = vrot.slane %v5884, 2
    %v5976 = vrot.slane %v5884, 3
    %v5977 = vrot.slane %v5884, 4
    %v5978 = vrot.slane %v5884, 5
    %v5979 = vrot.slane %v5884, 6
    %v5980 = vrot.slane %v5884, 7
    %v5981 = vrot.slane %v5953, 1
    %v5982 = vrot.slane %v5953, 2
    %v5983 = vrot.slane %v5953, 3
    %v5984 = vrot.slane %v5953, 4
    %v5985 = vrot.slane %v5953, 5
    %v5986 = vrot.slane %v5953, 6
    %v5987 = vrot.slane %v5953, 7
    %v5988 = vrot.slane %v5956, 1
    %v5989 = vrot.slane %v5956, 2
    %v5990 = vrot.slane %v5956, 3
    %v5991 = vrot.slane %v5956, 4
    %v5992 = vrot.slane %v5956, 5
    %v5993 = vrot.slane %v5956, 6
    %v5994 = vrot.slane %v5956, 7
    %5995 = vst [vmem:[#allocation1] ss:$9 sm:$0xff] %v5881
    %s5996 = scalar_lea.vmem [#allocation1], 1
    %5997 = vst [vmem:[%s5996] ss:$9 sm:$0xff] %v5967
    %s5998 = scalar_lea.vmem [#allocation1], 2
    %5999 = vst [vmem:[%s5998] ss:$9 sm:$0xff] %v5968
    %s6000 = scalar_lea.vmem [#allocation1], 3
    %6001 = vst [vmem:[%s6000] ss:$9 sm:$0xff] %v5969
    %s6002 = scalar_lea.vmem [#allocation1], 4
    %6003 = vst [vmem:[%s6002] ss:$9 sm:$0xff] %v5970
    %s6004 = scalar_lea.vmem [#allocation1], 5
    %6005 = vst [vmem:[%s6004] ss:$9 sm:$0xff] %v5971
    %s6006 = scalar_lea.vmem [#allocation1], 6
    %6007 = vst [vmem:[%s6006] ss:$9 sm:$0xff] %v5972
    %s6008 = scalar_lea.vmem [#allocation1], 7
    %6009 = vst [vmem:[%s6008] ss:$9 sm:$0xff] %v5973
    %v6010 = vld [vmem:[#allocation1] sm:$0xff]
    %6011 = vst [vmem:[#allocation1] ss:$9 sm:$0xff] %v5884
    %6012 = vst [vmem:[%s5996] ss:$9 sm:$0xff] %v5974
    %6013 = vst [vmem:[%s5998] ss:$9 sm:$0xff] %v5975
    %6014 = vst [vmem:[%s6000] ss:$9 sm:$0xff] %v5976
    %6015 = vst [vmem:[%s6002] ss:$9 sm:$0xff] %v5977
    %6016 = vst [vmem:[%s6004] ss:$9 sm:$0xff] %v5978
    %6017 = vst [vmem:[%s6006] ss:$9 sm:$0xff] %v5979
    %6018 = vst [vmem:[%s6008] ss:$9 sm:$0xff] %v5980
    %v6019 = vld [vmem:[#allocation1] sm:$0xff]
    %6020 = vst [vmem:[#allocation1] ss:$9 sm:$0xff] %v5887
    %6021 = vst [vmem:[%s5996] ss:$9 sm:$0xff] %v5953
    %6022 = vst [vmem:[%s5998] ss:$9 sm:$0xff] %v5981
    %6023 = vst [vmem:[%s6000] ss:$9 sm:$0xff] %v5982
    %6024 = vst [vmem:[%s6002] ss:$9 sm:$0xff] %v5983
    %6025 = vst [vmem:[%s6004] ss:$9 sm:$0xff] %v5984
    %6026 = vst [vmem:[%s6006] ss:$9 sm:$0xff] %v5985
    %6027 = vst [vmem:[%s6008] ss:$9 sm:$0xff] %v5986
    %v6028 = vld [vmem:[#allocation1] sm:$0xff]
    %6029 = vst [vmem:[#allocation1] ss:$9 sm:$0xff] %v5987
    %6030 = vst [vmem:[%s5996] ss:$9 sm:$0xff] %v5956
    %6031 = vst [vmem:[%s5998] ss:$9 sm:$0xff] %v5988
    %6032 = vst [vmem:[%s6000] ss:$9 sm:$0xff] %v5989
    %6033 = vst [vmem:[%s6002] ss:$9 sm:$0xff] %v5990
    %6034 = vst [vmem:[%s6004] ss:$9 sm:$0xff] %v5991
    %6035 = vst [vmem:[%s6006] ss:$9 sm:$0xff] %v5992
    %6036 = vst [vmem:[%s6008] ss:$9 sm:$0xff] %v5993
    %v6037 = vld [vmem:[#allocation1] sm:$0xff]
    %6038 = vst [vmem:[#allocation1] ss:$9 sm:$0xff] %v5994
    %6039 = vst [vmem:[%s5996] ss:$9 sm:$0xff] %v5959
    %v6040 = vld [vmem:[#allocation1] sm:$0xff]
    %v6041 = vsel %vm1414, %v6010, 0
    %v6043 = vsel %vm1414, %v6019, 0
    %v6045 = vsel %vm1414, %v6028, 0
    %v6047 = vsel %vm1414, %v6037, 0
    %v6049 = vsel %vm1414, %v6040, 0
    %6051 = vmatpush.msra.mxu0 0.0
    %6052 = vmatpush.msra.mxu0 0.0
    %6053 = vmatpush.msra.mxu0 0.0
    %6054 = vmatpush.msra.mxu0 0.0
    %6055 = vmatpush.msra.mxu0 0.0
    %6056 = vmatpush.msra.mxu0 0.0
    %6057 = vmatpush.msra.mxu0 0.0
    %6058 = vmatpush.msra.mxu0 0.0
    %6059 = vmatpush.msra.mxu0 0.0
    %6060 = vmatpush.msra.mxu0 0.0
    %6061 = vmatpush.msra.mxu0 0.0
    %6062 = vmatpush.msra.mxu0 0.0
    %6063 = vmatpush.msra.mxu0 0.0
    %6064 = vmatpush.msra.mxu0 0.0
    %6065 = vmatpush.msra.mxu0 0.0
    %6066 = vmatpush.msra.mxu0 %v4437
    %6067 = vmatmul.f32.gmra.mxu0 %v6041
    %v6068 = vpop.f32.mrf.mxu0
    %v6069 = vadd.f32 0.0, %v6068
    %6070 = vmatmul.f32.gmra.mxu0 %v6043
    %v6071 = vpop.f32.mrf.mxu0
    %v6072 = vadd.f32 0.0, %v6071
    %6073 = vmatmul.f32.gmra.mxu0 %v6045
    %v6074 = vpop.f32.mrf.mxu0
    %v6075 = vadd.f32 0.0, %v6074
    %6076 = vmatmul.f32.gmra.mxu0 %v6047
    %v6077 = vpop.f32.mrf.mxu0
    %v6078 = vadd.f32 0.0, %v6077
    %6079 = vmatmul.f32.gmra.mxu0 %v6049
    %v6080 = vpop.f32.mrf.mxu0
    %v6081 = vadd.f32 0.0, %v6080
    %6082 = vdwg.mxu0
    %v6083 = vadd.f32 %v5517, %v6069
    %v6084 = vadd.f32 %v5520, %v6072
    %v6085 = vadd.f32 %v5523, %v6075
    %v6086 = vadd.f32 %v5526, %v6078
    %v6087 = vadd.f32 %v5529, %v6081
    %6088 = vst [vmem:[#allocation1] ss:$9 sm:$0xff] %v4386
    %s6089 = scalar_lea.vmem [#allocation1], 1
    %6090 = vst [vmem:[%s6089] ss:$9 sm:$0xff] %v4405
    %s6091 = scalar_lea.vmem [#allocation1], 2
    %6092 = vst [vmem:[%s6091] ss:$9 sm:$0xff] %v4406
    %s6093 = scalar_lea.vmem [#allocation1], 3
    %6094 = vst [vmem:[%s6093] ss:$9 sm:$0xff] %v4407
    %s6095 = scalar_lea.vmem [#allocation1], 4
    %6096 = vst [vmem:[%s6095] ss:$9 sm:$0xff] %v4408
    %s6097 = scalar_lea.vmem [#allocation1], 5
    %6098 = vst [vmem:[%s6097] ss:$9 sm:$0xff] %v4409
    %s6099 = scalar_lea.vmem [#allocation1], 6
    %6100 = vst [vmem:[%s6099] ss:$9 sm:$0xff] %v4410
    %s6101 = scalar_lea.vmem [#allocation1], 7
    %6102 = vst [vmem:[%s6101] ss:$9 sm:$0xff] %v4411
    %v6103 = vld [vmem:[#allocation1] sm:$0xff]
    %6104 = vst [vmem:[#allocation1] ss:$9 sm:$0xff] %v4389
    %6105 = vst [vmem:[%s6089] ss:$9 sm:$0xff] %v4412
    %6106 = vst [vmem:[%s6091] ss:$9 sm:$0xff] %v4413
    %6107 = vst [vmem:[%s6093] ss:$9 sm:$0xff] %v4414
    %6108 = vst [vmem:[%s6095] ss:$9 sm:$0xff] %v4415
    %6109 = vst [vmem:[%s6097] ss:$9 sm:$0xff] %v4416
    %6110 = vst [vmem:[%s6099] ss:$9 sm:$0xff] %v4417
    %6111 = vst [vmem:[%s6101] ss:$9 sm:$0xff] %v4418
    %v6112 = vld [vmem:[#allocation1] sm:$0xff]
    %6113 = vst [vmem:[#allocation1] ss:$9 sm:$0xff] %v4392
    %v6114 = vld [vmem:[#allocation1] sm:$0xff]
    %6115 = vrot.lane.b32.xlu0 %v6103, 104
    %v6116 = vpop.permute.xlu0 %6115
    %6117 = vrot.lane.b32.xlu0 %v6112, 104
    %v6118 = vpop.permute.xlu0 %6117
    %6119 = vrot.lane.b32.xlu0 %v6114, 104
    %v6120 = vpop.permute.xlu0 %6119
    %6121 = vst [vmem:[#allocation1] ss:$9 sm:$0xff] %v4386
    %s6122 = scalar_lea.vmem [#allocation1], 1
    %6123 = vst [vmem:[%s6122] ss:$9 sm:$0xff] %v4405
    %s6124 = scalar_lea.vmem [#allocation1], 2
    %6125 = vst [vmem:[%s6124] ss:$9 sm:$0xff] %v4406
    %s6126 = scalar_lea.vmem [#allocation1], 3
    %6127 = vst [vmem:[%s6126] ss:$9 sm:$0xff] %v4407
    %s6128 = scalar_lea.vmem [#allocation1], 4
    %6129 = vst [vmem:[%s6128] ss:$9 sm:$0xff] %v4408
    %s6130 = scalar_lea.vmem [#allocation1], 5
    %6131 = vst [vmem:[%s6130] ss:$9 sm:$0xff] %v4409
    %s6132 = scalar_lea.vmem [#allocation1], 6
    %6133 = vst [vmem:[%s6132] ss:$9 sm:$0xff] %v4410
    %s6134 = scalar_lea.vmem [#allocation1], 7
    %6135 = vst [vmem:[%s6134] ss:$9 sm:$0xff] %v4411
    %v6136 = vld [vmem:[#allocation1] sm:$0xff]
    %6137 = vst [vmem:[#allocation1] ss:$9 sm:$0xff] %v4389
    %6138 = vst [vmem:[%s6122] ss:$9 sm:$0xff] %v4412
    %6139 = vst [vmem:[%s6124] ss:$9 sm:$0xff] %v4413
    %6140 = vst [vmem:[%s6126] ss:$9 sm:$0xff] %v4414
    %6141 = vst [vmem:[%s6128] ss:$9 sm:$0xff] %v4415
    %6142 = vst [vmem:[%s6130] ss:$9 sm:$0xff] %v4416
    %6143 = vst [vmem:[%s6132] ss:$9 sm:$0xff] %v4417
    %6144 = vst [vmem:[%s6134] ss:$9 sm:$0xff] %v4418
    %v6145 = vld [vmem:[#allocation1] sm:$0xff]
    %6146 = vst [vmem:[#allocation1] ss:$9 sm:$0xff] %v4392
    %v6147 = vld [vmem:[#allocation1] sm:$0xff]
    %6148 = vrot.lane.b32.xlu0 %v6136, 72
    %v6149 = vpop.permute.xlu0 %6148
    %6150 = vrot.lane.b32.xlu0 %v6145, 72
    %v6151 = vpop.permute.xlu0 %6150
    %6152 = vrot.lane.b32.xlu0 %v6147, 72
    %v6153 = vpop.permute.xlu0 %6152
    %v6154 = vsel %vm1414, %v6116, 0
    %v6156 = vsel %vm1414, %v6118, 0
    %v6158 = vsel %vm1414, %v6120, 0
    %v6160 = vsel %vm1414, %v6149, 0
    %v6162 = vsel %vm1414, %v6151, 0
    %v6164 = vsel %vm1414, %v6153, 0
    %6166 = vmatpush.xpose.msra.mxu0 0.0
    %6167 = vmatpush.xpose.msra.mxu0 0.0
    %6168 = vmatpush.xpose.msra.mxu0 0.0
    %6169 = vmatpush.xpose.msra.mxu0 0.0
    %6170 = vmatpush.xpose.msra.mxu0 0.0
    %6171 = vmatpush.xpose.msra.mxu0 0.0
    %6172 = vmatpush.xpose.msra.mxu0 0.0
    %6173 = vmatpush.xpose.msra.mxu0 0.0
    %6174 = vmatpush.xpose.msra.mxu0 0.0
    %6175 = vmatpush.xpose.msra.mxu0 0.0
    %6176 = vmatpush.xpose.msra.mxu0 0.0
    %6177 = vmatpush.xpose.msra.mxu0 0.0
    %6178 = vmatpush.xpose.msra.mxu0 0.0
    %6179 = vmatpush.xpose.msra.mxu0 %v6164
    %6180 = vmatpush.xpose.msra.mxu0 %v6162
    %6181 = vmatpush.xpose.msra.mxu0 %v6160
    %6182 = vmatmul.f32.gmra.mxu0 %v6154
    %v6183 = vpop.f32.mrf.mxu0
    %v6184 = vadd.f32 0.0, %v6183
    %6185 = vmatmul.f32.gmra.mxu0 %v6156
    %v6186 = vpop.f32.mrf.mxu0
    %v6187 = vadd.f32 0.0, %v6186
    %6188 = vmatmul.f32.gmra.mxu0 %v6158
    %v6189 = vpop.f32.mrf.mxu0
    %v6190 = vadd.f32 0.0, %v6189
    %6191 = vdwg.mxu0
    %6192 = vst [vmem:[#allocation1] ss:$9 sm:$0xff] %v4419
    %s6193 = scalar_lea.vmem [#allocation1], 1
    %6194 = vst [vmem:[%s6193] ss:$9 sm:$0xff] %v4420
    %s6195 = scalar_lea.vmem [#allocation1], 2
    %6196 = vst [vmem:[%s6195] ss:$9 sm:$0xff] %v4421
    %s6197 = scalar_lea.vmem [#allocation1], 3
    %6198 = vst [vmem:[%s6197] ss:$9 sm:$0xff] %v4422
    %s6199 = scalar_lea.vmem [#allocation1], 4
    %6200 = vst [vmem:[%s6199] ss:$9 sm:$0xff] %v4423
    %s6201 = scalar_lea.vmem [#allocation1], 5
    %6202 = vst [vmem:[%s6201] ss:$9 sm:$0xff] %v4424
    %s6203 = scalar_lea.vmem [#allocation1], 6
    %6204 = vst [vmem:[%s6203] ss:$9 sm:$0xff] %v4425
    %s6205 = scalar_lea.vmem [#allocation1], 7
    %6206 = vst [vmem:[%s6205] ss:$9 sm:$0xff] %v4395
    %v6207 = vld [vmem:[#allocation1] sm:$0xff]
    %6208 = vst [vmem:[#allocation1] ss:$9 sm:$0xff] %v4426
    %6209 = vst [vmem:[%s6193] ss:$9 sm:$0xff] %v4427
    %6210 = vst [vmem:[%s6195] ss:$9 sm:$0xff] %v4428
    %6211 = vst [vmem:[%s6197] ss:$9 sm:$0xff] %v4429
    %6212 = vst [vmem:[%s6199] ss:$9 sm:$0xff] %v4430
    %6213 = vst [vmem:[%s6201] ss:$9 sm:$0xff] %v4431
    %6214 = vst [vmem:[%s6203] ss:$9 sm:$0xff] %v4432
    %6215 = vst [vmem:[%s6205] ss:$9 sm:$0xff] %v4398
    %v6216 = vld [vmem:[#allocation1] sm:$0xff]
    %6217 = vst [vmem:[#allocation1] ss:$9 sm:$0xff] %v4433
    %v6218 = vld [vmem:[#allocation1] sm:$0xff]
    %6219 = vrot.lane.b32.xlu0 %v6207, 104
    %v6220 = vpop.permute.xlu0 %6219
    %6221 = vrot.lane.b32.xlu0 %v6216, 104
    %v6222 = vpop.permute.xlu0 %6221
    %6223 = vrot.lane.b32.xlu0 %v6218, 104
    %v6224 = vpop.permute.xlu0 %6223
    %6225 = vst [vmem:[#allocation1] ss:$9 sm:$0xff] %v4419
    %s6226 = scalar_lea.vmem [#allocation1], 1
    %6227 = vst [vmem:[%s6226] ss:$9 sm:$0xff] %v4420
    %s6228 = scalar_lea.vmem [#allocation1], 2
    %6229 = vst [vmem:[%s6228] ss:$9 sm:$0xff] %v4421
    %s6230 = scalar_lea.vmem [#allocation1], 3
    %6231 = vst [vmem:[%s6230] ss:$9 sm:$0xff] %v4422
    %s6232 = scalar_lea.vmem [#allocation1], 4
    %6233 = vst [vmem:[%s6232] ss:$9 sm:$0xff] %v4423
    %s6234 = scalar_lea.vmem [#allocation1], 5
    %6235 = vst [vmem:[%s6234] ss:$9 sm:$0xff] %v4424
    %s6236 = scalar_lea.vmem [#allocation1], 6
    %6237 = vst [vmem:[%s6236] ss:$9 sm:$0xff] %v4425
    %s6238 = scalar_lea.vmem [#allocation1], 7
    %6239 = vst [vmem:[%s6238] ss:$9 sm:$0xff] %v4395
    %v6240 = vld [vmem:[#allocation1] sm:$0xff]
    %6241 = vst [vmem:[#allocation1] ss:$9 sm:$0xff] %v4426
    %6242 = vst [vmem:[%s6226] ss:$9 sm:$0xff] %v4427
    %6243 = vst [vmem:[%s6228] ss:$9 sm:$0xff] %v4428
    %6244 = vst [vmem:[%s6230] ss:$9 sm:$0xff] %v4429
    %6245 = vst [vmem:[%s6232] ss:$9 sm:$0xff] %v4430
    %6246 = vst [vmem:[%s6234] ss:$9 sm:$0xff] %v4431
    %6247 = vst [vmem:[%s6236] ss:$9 sm:$0xff] %v4432
    %6248 = vst [vmem:[%s6238] ss:$9 sm:$0xff] %v4398
    %v6249 = vld [vmem:[#allocation1] sm:$0xff]
    %6250 = vst [vmem:[#allocation1] ss:$9 sm:$0xff] %v4433
    %v6251 = vld [vmem:[#allocation1] sm:$0xff]
    %6252 = vrot.lane.b32.xlu0 %v6240, 72
    %v6253 = vpop.permute.xlu0 %6252
    %6254 = vrot.lane.b32.xlu0 %v6249, 72
    %v6255 = vpop.permute.xlu0 %6254
    %6256 = vrot.lane.b32.xlu0 %v6251, 72
    %v6257 = vpop.permute.xlu0 %6256
    %v6258 = vsel %vm1414, %v6220, 0
    %v6260 = vsel %vm1414, %v6222, 0
    %v6262 = vsel %vm1414, %v6224, 0
    %v6264 = vsel %vm1414, %v6253, 0
    %v6266 = vsel %vm1414, %v6255, 0
    %v6268 = vsel %vm1414, %v6257, 0
    %6270 = vmatpush.xpose.msra.mxu0 0.0
    %6271 = vmatpush.xpose.msra.mxu0 0.0
    %6272 = vmatpush.xpose.msra.mxu0 0.0
    %6273 = vmatpush.xpose.msra.mxu0 0.0
    %6274 = vmatpush.xpose.msra.mxu0 0.0
    %6275 = vmatpush.xpose.msra.mxu0 0.0
    %6276 = vmatpush.xpose.msra.mxu0 0.0
    %6277 = vmatpush.xpose.msra.mxu0 0.0
    %6278 = vmatpush.xpose.msra.mxu0 0.0
    %6279 = vmatpush.xpose.msra.mxu0 0.0
    %6280 = vmatpush.xpose.msra.mxu0 0.0
    %6281 = vmatpush.xpose.msra.mxu0 0.0
    %6282 = vmatpush.xpose.msra.mxu0 0.0
    %6283 = vmatpush.xpose.msra.mxu0 %v6268
    %6284 = vmatpush.xpose.msra.mxu0 %v6266
    %6285 = vmatpush.xpose.msra.mxu0 %v6264
    %6286 = vmatmul.f32.gmra.mxu0 %v6258
    %v6287 = vpop.f32.mrf.mxu0
    %v6288 = vadd.f32 0.0, %v6287
    %6289 = vmatmul.f32.gmra.mxu0 %v6260
    %v6290 = vpop.f32.mrf.mxu0
    %v6291 = vadd.f32 0.0, %v6290
    %6292 = vmatmul.f32.gmra.mxu0 %v6262
    %v6293 = vpop.f32.mrf.mxu0
    %v6294 = vadd.f32 0.0, %v6293
    %6295 = vdwg.mxu0
    %v6296 = vmul.f32 %v6184, 0.35355338
    %v6297 = vmul.f32 %v6187, 0.35355338
    %v6298 = vmul.f32 %v6190, 0.35355338
    %v6299 = vmul.f32 %v6288, 0.35355338
    %v6300 = vmul.f32 %v6291, 0.35355338
    %v6301 = vmul.f32 %v6294, 0.35355338
    %v6302 = vsel %vm1560, -3.4028235e+38, %v6296
    %v6303 = vsel %vm1561, -3.4028235e+38, %v6297
    %v6304 = vsel %vm1562, -3.4028235e+38, %v6298
    %v6305 = vsel %vm1560, -3.4028235e+38, %v6299
    %v6306 = vsel %vm1561, -3.4028235e+38, %v6300
    %v6307 = vsel %vm1562, -3.4028235e+38, %v6301
    %v6308 = vsel %vm1569, %v6302, -inf
    %6309 = vmax.xlane.f32.xlu0 %v6308
    %v6310 = vpop.xlane.xlu0 %6309
    %v6311 = vsel %vm1569, %v6303, -inf
    %6312 = vmax.xlane.f32.xlu0 %v6311
    %v6313 = vpop.xlane.xlu0 %6312
    %v6314 = vsel %vm1576, %v6304, -inf
    %6315 = vmax.xlane.f32.xlu0 %v6314
    %v6316 = vpop.xlane.xlu0 %6315
    %v6317 = vsel %vm1569, %v6305, -inf
    %6318 = vmax.xlane.f32.xlu0 %v6317
    %v6319 = vpop.xlane.xlu0 %6318
    %v6320 = vsel %vm1569, %v6306, -inf
    %6321 = vmax.xlane.f32.xlu0 %v6320
    %v6322 = vpop.xlane.xlu0 %6321
    %v6323 = vsel %vm1576, %v6307, -inf
    %6324 = vmax.xlane.f32.xlu0 %v6323
    %v6325 = vpop.xlane.xlu0 %6324
    %v6326 = vsub.f32 %v6302, %v6310
    %v6327 = vsub.f32 %v6303, %v6313
    %v6328 = vsub.f32 %v6304, %v6316
    %v6329 = vsub.f32 %v6305, %v6319
    %v6330 = vsub.f32 %v6306, %v6322
    %v6331 = vsub.f32 %v6307, %v6325
    %v6332 = vmul.f32 %v6326, 1.442695
    %v6333 = vpow.pop %v6332
    %v6334 = vmul.f32 %v6327, 1.442695
    %v6335 = vpow.pop %v6334
    %v6336 = vmul.f32 %v6328, 1.442695
    %v6337 = vpow.pop %v6336
    %v6338 = vmul.f32 %v6329, 1.442695
    %v6339 = vpow.pop %v6338
    %v6340 = vmul.f32 %v6330, 1.442695
    %v6341 = vpow.pop %v6340
    %v6342 = vmul.f32 %v6331, 1.442695
    %v6343 = vpow.pop %v6342
    %v6344 = vsel %vm1569, %v6333, 0.0
    %6345 = vadd.xlane.f32.xlu0 %v6344
    %v6346 = vpop.xlane.xlu0 %6345
    %v6347 = vsel %vm1569, %v6335, 0.0
    %6348 = vadd.xlane.f32.xlu0 %v6347
    %v6349 = vpop.xlane.xlu0 %6348
    %v6350 = vsel %vm1576, %v6337, 0.0
    %6351 = vadd.xlane.f32.xlu0 %v6350
    %v6352 = vpop.xlane.xlu0 %6351
    %v6353 = vsel %vm1569, %v6339, 0.0
    %6354 = vadd.xlane.f32.xlu0 %v6353
    %v6355 = vpop.xlane.xlu0 %6354
    %v6356 = vsel %vm1569, %v6341, 0.0
    %6357 = vadd.xlane.f32.xlu0 %v6356
    %v6358 = vpop.xlane.xlu0 %6357
    %v6359 = vsel %vm1576, %v6343, 0.0
    %6360 = vadd.xlane.f32.xlu0 %v6359
    %v6361 = vpop.xlane.xlu0 %6360
    %v6362 = vrcp.pop %v6346
    %v6363 = vrcp.pop %v6349
    %v6364 = vrcp.pop %v6352
    %v6365 = vrcp.pop %v6355
    %v6366 = vrcp.pop %v6358
    %v6367 = vrcp.pop %v6361
    %v6368 = vmul.f32 %v6333, %v6362
    %v6369 = vmul.f32 %v6335, %v6363
    %v6370 = vmul.f32 %v6337, %v6364
    %v6371 = vmul.f32 %v6339, %v6365
    %v6372 = vmul.f32 %v6341, %v6366
    %v6373 = vmul.f32 %v6343, %v6367
    %6374 = vst [vmem:[#allocation1] ss:$9 sm:$0xff] %v4386
    %s6375 = scalar_lea.vmem [#allocation1], 1
    %6376 = vst [vmem:[%s6375] ss:$9 sm:$0xff] %v4405
    %s6377 = scalar_lea.vmem [#allocation1], 2
    %6378 = vst [vmem:[%s6377] ss:$9 sm:$0xff] %v4406
    %s6379 = scalar_lea.vmem [#allocation1], 3
    %6380 = vst [vmem:[%s6379] ss:$9 sm:$0xff] %v4407
    %s6381 = scalar_lea.vmem [#allocation1], 4
    %6382 = vst [vmem:[%s6381] ss:$9 sm:$0xff] %v4408
    %s6383 = scalar_lea.vmem [#allocation1], 5
    %6384 = vst [vmem:[%s6383] ss:$9 sm:$0xff] %v4409
    %s6385 = scalar_lea.vmem [#allocation1], 6
    %6386 = vst [vmem:[%s6385] ss:$9 sm:$0xff] %v4410
    %s6387 = scalar_lea.vmem [#allocation1], 7
    %6388 = vst [vmem:[%s6387] ss:$9 sm:$0xff] %v4411
    %v6389 = vld [vmem:[#allocation1] sm:$0xff]
    %6390 = vst [vmem:[#allocation1] ss:$9 sm:$0xff] %v4389
    %6391 = vst [vmem:[%s6375] ss:$9 sm:$0xff] %v4412
    %6392 = vst [vmem:[%s6377] ss:$9 sm:$0xff] %v4413
    %6393 = vst [vmem:[%s6379] ss:$9 sm:$0xff] %v4414
    %6394 = vst [vmem:[%s6381] ss:$9 sm:$0xff] %v4415
    %6395 = vst [vmem:[%s6383] ss:$9 sm:$0xff] %v4416
    %6396 = vst [vmem:[%s6385] ss:$9 sm:$0xff] %v4417
    %6397 = vst [vmem:[%s6387] ss:$9 sm:$0xff] %v4418
    %v6398 = vld [vmem:[#allocation1] sm:$0xff]
    %6399 = vst [vmem:[#allocation1] ss:$9 sm:$0xff] %v4392
    %v6400 = vld [vmem:[#allocation1] sm:$0xff]
    %6401 = vrot.lane.b32.xlu0 %v6389, 40
    %v6402 = vpop.permute.xlu0 %6401
    %6403 = vrot.lane.b32.xlu0 %v6398, 40
    %v6404 = vpop.permute.xlu0 %6403
    %6405 = vrot.lane.b32.xlu0 %v6400, 40
    %v6406 = vpop.permute.xlu0 %6405
    %v6410 = vsel %vm1569, %v6368, 0
    %v6413 = vsel %vm1569, %v6369, 0
    %v6416 = vsel %vm1569, %v6370, 0
    %v6418 = vsel %vm90, %v6406, 0
    %6420 = vmatpush.msra.mxu0 0.0
    %6421 = vmatpush.msra.mxu0 0.0
    %6422 = vmatpush.msra.mxu0 0.0
    %6423 = vmatpush.msra.mxu0 0.0
    %6424 = vmatpush.msra.mxu0 0.0
    %6425 = vmatpush.msra.mxu0 0.0
    %6426 = vmatpush.msra.mxu0 0.0
    %6427 = vmatpush.msra.mxu0 0.0
    %6428 = vmatpush.msra.mxu0 0.0
    %6429 = vmatpush.msra.mxu0 0.0
    %6430 = vmatpush.msra.mxu0 0.0
    %6431 = vmatpush.msra.mxu0 0.0
    %6432 = vmatpush.msra.mxu0 0.0
    %6433 = vmatpush.msra.mxu0 %v6418
    %6434 = vmatpush.msra.mxu0 %v6404
    %6435 = vmatpush.msra.mxu0 %v6402
    %6436 = vmatmul.f32.gmra.mxu0 %v6410
    %v6437 = vpop.f32.mrf.mxu0
    %v6438 = vadd.f32 0.0, %v6437
    %6439 = vmatmul.f32.gmra.mxu0 %v6413
    %v6440 = vpop.f32.mrf.mxu0
    %v6441 = vadd.f32 0.0, %v6440
    %6442 = vmatmul.f32.gmra.mxu0 %v6416
    %v6443 = vpop.f32.mrf.mxu0
    %v6444 = vadd.f32 0.0, %v6443
    %6445 = vdwg.mxu0
    %6446 = vst [vmem:[#allocation1] ss:$9 sm:$0xff] %v4419
    %s6447 = scalar_lea.vmem [#allocation1], 1
    %6448 = vst [vmem:[%s6447] ss:$9 sm:$0xff] %v4420
    %s6449 = scalar_lea.vmem [#allocation1], 2
    %6450 = vst [vmem:[%s6449] ss:$9 sm:$0xff] %v4421
    %s6451 = scalar_lea.vmem [#allocation1], 3
    %6452 = vst [vmem:[%s6451] ss:$9 sm:$0xff] %v4422
    %s6453 = scalar_lea.vmem [#allocation1], 4
    %6454 = vst [vmem:[%s6453] ss:$9 sm:$0xff] %v4423
    %s6455 = scalar_lea.vmem [#allocation1], 5
    %6456 = vst [vmem:[%s6455] ss:$9 sm:$0xff] %v4424
    %s6457 = scalar_lea.vmem [#allocation1], 6
    %6458 = vst [vmem:[%s6457] ss:$9 sm:$0xff] %v4425
    %s6459 = scalar_lea.vmem [#allocation1], 7
    %6460 = vst [vmem:[%s6459] ss:$9 sm:$0xff] %v4395
    %v6461 = vld [vmem:[#allocation1] sm:$0xff]
    %6462 = vst [vmem:[#allocation1] ss:$9 sm:$0xff] %v4426
    %6463 = vst [vmem:[%s6447] ss:$9 sm:$0xff] %v4427
    %6464 = vst [vmem:[%s6449] ss:$9 sm:$0xff] %v4428
    %6465 = vst [vmem:[%s6451] ss:$9 sm:$0xff] %v4429
    %6466 = vst [vmem:[%s6453] ss:$9 sm:$0xff] %v4430
    %6467 = vst [vmem:[%s6455] ss:$9 sm:$0xff] %v4431
    %6468 = vst [vmem:[%s6457] ss:$9 sm:$0xff] %v4432
    %6469 = vst [vmem:[%s6459] ss:$9 sm:$0xff] %v4398
    %v6470 = vld [vmem:[#allocation1] sm:$0xff]
    %6471 = vst [vmem:[#allocation1] ss:$9 sm:$0xff] %v4433
    %v6472 = vld [vmem:[#allocation1] sm:$0xff]
    %6473 = vrot.lane.b32.xlu0 %v6461, 40
    %v6474 = vpop.permute.xlu0 %6473
    %6475 = vrot.lane.b32.xlu0 %v6470, 40
    %v6476 = vpop.permute.xlu0 %6475
    %6477 = vrot.lane.b32.xlu0 %v6472, 40
    %v6478 = vpop.permute.xlu0 %6477
    %v6482 = vsel %vm1569, %v6371, 0
    %v6485 = vsel %vm1569, %v6372, 0
    %v6488 = vsel %vm1569, %v6373, 0
    %v6490 = vsel %vm90, %v6478, 0
    %6492 = vmatpush.msra.mxu0 0.0
    %6493 = vmatpush.msra.mxu0 0.0
    %6494 = vmatpush.msra.mxu0 0.0
    %6495 = vmatpush.msra.mxu0 0.0
    %6496 = vmatpush.msra.mxu0 0.0
    %6497 = vmatpush.msra.mxu0 0.0
    %6498 = vmatpush.msra.mxu0 0.0
    %6499 = vmatpush.msra.mxu0 0.0
    %6500 = vmatpush.msra.mxu0 0.0
    %6501 = vmatpush.msra.mxu0 0.0
    %6502 = vmatpush.msra.mxu0 0.0
    %6503 = vmatpush.msra.mxu0 0.0
    %6504 = vmatpush.msra.mxu0 0.0
    %6505 = vmatpush.msra.mxu0 %v6490
    %6506 = vmatpush.msra.mxu0 %v6476
    %6507 = vmatpush.msra.mxu0 %v6474
    %6508 = vmatmul.f32.gmra.mxu0 %v6482
    %v6509 = vpop.f32.mrf.mxu0
    %v6510 = vadd.f32 0.0, %v6509
    %6511 = vmatmul.f32.gmra.mxu0 %v6485
    %v6512 = vpop.f32.mrf.mxu0
    %v6513 = vadd.f32 0.0, %v6512
    %6514 = vmatmul.f32.gmra.mxu0 %v6488
    %v6515 = vpop.f32.mrf.mxu0
    %v6516 = vadd.f32 0.0, %v6515
    %6517 = vdwg.mxu0
    %v6524 = vrot.slane %v6438, 1
    %v6525 = vrot.slane %v6438, 2
    %v6526 = vrot.slane %v6438, 3
    %v6527 = vrot.slane %v6438, 4
    %v6528 = vrot.slane %v6438, 5
    %v6529 = vrot.slane %v6438, 6
    %v6530 = vrot.slane %v6438, 7
    %v6531 = vrot.slane %v6441, 1
    %v6532 = vrot.slane %v6441, 2
    %v6533 = vrot.slane %v6441, 3
    %v6534 = vrot.slane %v6441, 4
    %v6535 = vrot.slane %v6441, 5
    %v6536 = vrot.slane %v6441, 6
    %v6537 = vrot.slane %v6441, 7
    %v6538 = vrot.slane %v6510, 1
    %v6539 = vrot.slane %v6510, 2
    %v6540 = vrot.slane %v6510, 3
    %v6541 = vrot.slane %v6510, 4
    %v6542 = vrot.slane %v6510, 5
    %v6543 = vrot.slane %v6510, 6
    %v6544 = vrot.slane %v6510, 7
    %v6545 = vrot.slane %v6513, 1
    %v6546 = vrot.slane %v6513, 2
    %v6547 = vrot.slane %v6513, 3
    %v6548 = vrot.slane %v6513, 4
    %v6549 = vrot.slane %v6513, 5
    %v6550 = vrot.slane %v6513, 6
    %v6551 = vrot.slane %v6513, 7
    %6552 = vst [vmem:[#allocation1] ss:$9 sm:$0xff] %v6438
    %s6553 = scalar_lea.vmem [#allocation1], 1
    %6554 = vst [vmem:[%s6553] ss:$9 sm:$0xff] %v6524
    %s6555 = scalar_lea.vmem [#allocation1], 2
    %6556 = vst [vmem:[%s6555] ss:$9 sm:$0xff] %v6525
    %s6557 = scalar_lea.vmem [#allocation1], 3
    %6558 = vst [vmem:[%s6557] ss:$9 sm:$0xff] %v6526
    %s6559 = scalar_lea.vmem [#allocation1], 4
    %6560 = vst [vmem:[%s6559] ss:$9 sm:$0xff] %v6527
    %s6561 = scalar_lea.vmem [#allocation1], 5
    %6562 = vst [vmem:[%s6561] ss:$9 sm:$0xff] %v6528
    %s6563 = scalar_lea.vmem [#allocation1], 6
    %6564 = vst [vmem:[%s6563] ss:$9 sm:$0xff] %v6529
    %s6565 = scalar_lea.vmem [#allocation1], 7
    %6566 = vst [vmem:[%s6565] ss:$9 sm:$0xff] %v6530
    %v6567 = vld [vmem:[#allocation1] sm:$0xff]
    %6568 = vst [vmem:[#allocation1] ss:$9 sm:$0xff] %v6441
    %6569 = vst [vmem:[%s6553] ss:$9 sm:$0xff] %v6531
    %6570 = vst [vmem:[%s6555] ss:$9 sm:$0xff] %v6532
    %6571 = vst [vmem:[%s6557] ss:$9 sm:$0xff] %v6533
    %6572 = vst [vmem:[%s6559] ss:$9 sm:$0xff] %v6534
    %6573 = vst [vmem:[%s6561] ss:$9 sm:$0xff] %v6535
    %6574 = vst [vmem:[%s6563] ss:$9 sm:$0xff] %v6536
    %6575 = vst [vmem:[%s6565] ss:$9 sm:$0xff] %v6537
    %v6576 = vld [vmem:[#allocation1] sm:$0xff]
    %6577 = vst [vmem:[#allocation1] ss:$9 sm:$0xff] %v6444
    %6578 = vst [vmem:[%s6553] ss:$9 sm:$0xff] %v6510
    %6579 = vst [vmem:[%s6555] ss:$9 sm:$0xff] %v6538
    %6580 = vst [vmem:[%s6557] ss:$9 sm:$0xff] %v6539
    %6581 = vst [vmem:[%s6559] ss:$9 sm:$0xff] %v6540
    %6582 = vst [vmem:[%s6561] ss:$9 sm:$0xff] %v6541
    %6583 = vst [vmem:[%s6563] ss:$9 sm:$0xff] %v6542
    %6584 = vst [vmem:[%s6565] ss:$9 sm:$0xff] %v6543
    %v6585 = vld [vmem:[#allocation1] sm:$0xff]
    %6586 = vst [vmem:[#allocation1] ss:$9 sm:$0xff] %v6544
    %6587 = vst [vmem:[%s6553] ss:$9 sm:$0xff] %v6513
    %6588 = vst [vmem:[%s6555] ss:$9 sm:$0xff] %v6545
    %6589 = vst [vmem:[%s6557] ss:$9 sm:$0xff] %v6546
    %6590 = vst [vmem:[%s6559] ss:$9 sm:$0xff] %v6547
    %6591 = vst [vmem:[%s6561] ss:$9 sm:$0xff] %v6548
    %6592 = vst [vmem:[%s6563] ss:$9 sm:$0xff] %v6549
    %6593 = vst [vmem:[%s6565] ss:$9 sm:$0xff] %v6550
    %v6594 = vld [vmem:[#allocation1] sm:$0xff]
    %6595 = vst [vmem:[#allocation1] ss:$9 sm:$0xff] %v6551
    %6596 = vst [vmem:[%s6553] ss:$9 sm:$0xff] %v6516
    %v6597 = vld [vmem:[#allocation1] sm:$0xff]
    %v6598 = vsel %vm1414, %v6567, 0
    %v6600 = vsel %vm1414, %v6576, 0
    %v6602 = vsel %vm1414, %v6585, 0
    %v6604 = vsel %vm1414, %v6594, 0
    %v6606 = vsel %vm1414, %v6597, 0
    %6608 = vmatpush.msra.mxu0 0.0
    %6609 = vmatpush.msra.mxu0 0.0
    %6610 = vmatpush.msra.mxu0 0.0
    %6611 = vmatpush.msra.mxu0 0.0
    %6612 = vmatpush.msra.mxu0 0.0
    %6613 = vmatpush.msra.mxu0 0.0
    %6614 = vmatpush.msra.mxu0 0.0
    %6615 = vmatpush.msra.mxu0 0.0
    %6616 = vmatpush.msra.mxu0 0.0
    %6617 = vmatpush.msra.mxu0 0.0
    %6618 = vmatpush.msra.mxu0 0.0
    %6619 = vmatpush.msra.mxu0 0.0
    %6620 = vmatpush.msra.mxu0 0.0
    %6621 = vmatpush.msra.mxu0 0.0
    %6622 = vmatpush.msra.mxu0 0.0
    %6623 = vmatpush.msra.mxu0 %v4438
    %6624 = vmatmul.f32.gmra.mxu0 %v6598
    %v6625 = vpop.f32.mrf.mxu0
    %v6626 = vadd.f32 0.0, %v6625
    %6627 = vmatmul.f32.gmra.mxu0 %v6600
    %v6628 = vpop.f32.mrf.mxu0
    %v6629 = vadd.f32 0.0, %v6628
    %6630 = vmatmul.f32.gmra.mxu0 %v6602
    %v6631 = vpop.f32.mrf.mxu0
    %v6632 = vadd.f32 0.0, %v6631
    %6633 = vmatmul.f32.gmra.mxu0 %v6604
    %v6634 = vpop.f32.mrf.mxu0
    %v6635 = vadd.f32 0.0, %v6634
    %6636 = vmatmul.f32.gmra.mxu0 %v6606
    %v6637 = vpop.f32.mrf.mxu0
    %v6638 = vadd.f32 0.0, %v6637
    %6639 = vdwg.mxu0
    %v6640 = vadd.f32 %v6083, %v6626
    %v6641 = vadd.f32 %v6084, %v6629
    %v6642 = vadd.f32 %v6085, %v6632
    %v6643 = vadd.f32 %v6086, %v6635
    %v6644 = vadd.f32 %v6087, %v6638
    %v6650 = vrot.slane %v6640, 1
    %v6651 = vrot.slane %v6640, 2
    %v6652 = vrot.slane %v6640, 3
    %v6653 = vrot.slane %v6640, 4
    %v6654 = vrot.slane %v6640, 5
    %v6655 = vrot.slane %v6640, 6
    %v6656 = vrot.slane %v6640, 7
    %v6657 = vrot.slane %v6641, 1
    %v6658 = vrot.slane %v6641, 2
    %v6659 = vrot.slane %v6641, 3
    %v6660 = vrot.slane %v6641, 4
    %v6661 = vrot.slane %v6641, 5
    %v6662 = vrot.slane %v6641, 6
    %v6663 = vrot.slane %v6641, 7
    %v6664 = vrot.slane %v6642, 1
    %v6665 = vrot.slane %v6642, 2
    %v6666 = vrot.slane %v6642, 3
    %v6667 = vrot.slane %v6642, 4
    %v6668 = vrot.slane %v6642, 5
    %v6669 = vrot.slane %v6642, 6
    %v6670 = vrot.slane %v6642, 7
    %v6671 = vrot.slane %v6643, 1
    %v6672 = vrot.slane %v6643, 2
    %v6673 = vrot.slane %v6643, 3
    %v6674 = vrot.slane %v6643, 4
    %v6675 = vrot.slane %v6643, 5
    %v6676 = vrot.slane %v6643, 6
    %v6677 = vrot.slane %v6643, 7
    %v6678 = vrot.slane %v6644, 1
    %v6708 = vadd.f32 %v4239, %v6640
    %v6709 = vadd.f32 %v4240, %v6650
    %v6710 = vadd.f32 %v4241, %v6651
    %v6711 = vadd.f32 %v4242, %v6652
    %v6712 = vadd.f32 %v4243, %v6653
    %v6713 = vadd.f32 %v4244, %v6654
    %v6714 = vadd.f32 %v4245, %v6655
    %v6715 = vadd.f32 %v4246, %v6656
    %v6716 = vadd.f32 %v4247, %v6641
    %v6717 = vadd.f32 %v4248, %v6657
    %v6718 = vadd.f32 %v4249, %v6658
    %v6719 = vadd.f32 %v4250, %v6659
    %v6720 = vadd.f32 %v4251, %v6660
    %v6721 = vadd.f32 %v4252, %v6661
    %v6722 = vadd.f32 %v4253, %v6662
    %v6723 = vadd.f32 %v4254, %v6663
    %v6724 = vadd.f32 %v4255, %v6642
    %v6725 = vadd.f32 %v4256, %v6664
    %v6726 = vadd.f32 %v4257, %v6665
    %v6727 = vadd.f32 %v4258, %v6666
    %v6728 = vadd.f32 %v4259, %v6667
    %v6729 = vadd.f32 %v4260, %v6668
    %v6730 = vadd.f32 %v4261, %v6669
    %v6731 = vadd.f32 %v4262, %v6670
    %v6732 = vadd.f32 %v4263, %v6643
    %v6733 = vadd.f32 %v4264, %v6671
    %v6734 = vadd.f32 %v4265, %v6672
    %v6735 = vadd.f32 %v4266, %v6673
    %v6736 = vadd.f32 %v4267, %v6674
    %v6737 = vadd.f32 %v4268, %v6675
    %v6738 = vadd.f32 %v4269, %v6676
    %v6739 = vadd.f32 %v4270, %v6677
    %v6740 = vadd.f32 %v4271, %v6644
    %v6741 = vadd.f32 %v4272, %v6678
    %s6742 = scalar_lea.vmem %s9, 1
    %v6743 = vld [vmem:[%s6742] sm:$0x1]
    %v6745 = vperm.slane %v6743, 0
    %v6747 = vrot.slane %v6745, 1
    %v6748 = vrot.slane %v6745, 2
    %v6749 = vrot.slane %v6745, 3
    %v6750 = vrot.slane %v6745, 4
    %v6751 = vrot.slane %v6745, 5
    %v6752 = vrot.slane %v6745, 6
    %v6753 = vrot.slane %v6745, 7
    %v6761 = vadd.f32 %v6708, %v6745
    %v6762 = vadd.f32 %v6709, %v6747
    %v6763 = vadd.f32 %v6710, %v6748
    %v6764 = vadd.f32 %v6711, %v6749
    %v6765 = vadd.f32 %v6712, %v6750
    %v6766 = vadd.f32 %v6713, %v6751
    %v6767 = vadd.f32 %v6714, %v6752
    %v6768 = vadd.f32 %v6715, %v6753
    %v6769 = vadd.f32 %v6716, %v6745
    %v6770 = vadd.f32 %v6717, %v6747
    %v6771 = vadd.f32 %v6718, %v6748
    %v6772 = vadd.f32 %v6719, %v6749
    %v6773 = vadd.f32 %v6720, %v6750
    %v6774 = vadd.f32 %v6721, %v6751
    %v6775 = vadd.f32 %v6722, %v6752
    %v6776 = vadd.f32 %v6723, %v6753
    %v6777 = vadd.f32 %v6724, %v6745
    %v6778 = vadd.f32 %v6725, %v6747
    %v6779 = vadd.f32 %v6726, %v6748
    %v6780 = vadd.f32 %v6727, %v6749
    %v6781 = vadd.f32 %v6728, %v6750
    %v6782 = vadd.f32 %v6729, %v6751
    %v6783 = vadd.f32 %v6730, %v6752
    %v6784 = vadd.f32 %v6731, %v6753
    %v6785 = vadd.f32 %v6732, %v6745
    %v6786 = vadd.f32 %v6733, %v6747
    %v6787 = vadd.f32 %v6734, %v6748
    %v6788 = vadd.f32 %v6735, %v6749
    %v6789 = vadd.f32 %v6736, %v6750
    %v6790 = vadd.f32 %v6737, %v6751
    %v6791 = vadd.f32 %v6738, %v6752
    %v6792 = vadd.f32 %v6739, %v6753
    %v6793 = vadd.f32 %v6740, %v6745
    %v6794 = vadd.f32 %v6741, %v6747
    %s6795 = scalar_lea.vmem %s10, 32
    %v6796 = vld [vmem:[%s6795] sm:$0xff]
    %v6797 = vld [vmem:[%s6795 + $0x8] sm:$0xff]
    %v6798 = vld [vmem:[%s6795 + $0x10] sm:$0xff]
    %v6799 = vld [vmem:[%s6795 + $0x18] sm:$0xff]
    %s6800 = scalar_lea.vmem %s11, 1
    %v6801 = vld [vmem:[%s6800] sm:$0x1]
    %v6803 = vperm.slane %v6801, 0
    %6839 = vst [vmem:[#allocation1] ss:$9 sm:$0xff] %v6761
    %s6840 = scalar_lea.vmem [#allocation1], 1
    %6841 = vst [vmem:[%s6840] ss:$9 sm:$0xff] %v6762
    %s6842 = scalar_lea.vmem [#allocation1], 2
    %6843 = vst [vmem:[%s6842] ss:$9 sm:$0xff] %v6763
    %s6844 = scalar_lea.vmem [#allocation1], 3
    %6845 = vst [vmem:[%s6844] ss:$9 sm:$0xff] %v6764
    %s6846 = scalar_lea.vmem [#allocation1], 4
    %6847 = vst [vmem:[%s6846] ss:$9 sm:$0xff] %v6765
    %s6848 = scalar_lea.vmem [#allocation1], 5
    %6849 = vst [vmem:[%s6848] ss:$9 sm:$0xff] %v6766
    %s6850 = scalar_lea.vmem [#allocation1], 6
    %6851 = vst [vmem:[%s6850] ss:$9 sm:$0xff] %v6767
    %s6852 = scalar_lea.vmem [#allocation1], 7
    %6853 = vst [vmem:[%s6852] ss:$9 sm:$0xff] %v6768
    %v6854 = vld [vmem:[#allocation1] sm:$0xff]
    %6855 = vst [vmem:[#allocation1] ss:$9 sm:$0xff] %v6769
    %6856 = vst [vmem:[%s6840] ss:$9 sm:$0xff] %v6770
    %6857 = vst [vmem:[%s6842] ss:$9 sm:$0xff] %v6771
    %6858 = vst [vmem:[%s6844] ss:$9 sm:$0xff] %v6772
    %6859 = vst [vmem:[%s6846] ss:$9 sm:$0xff] %v6773
    %6860 = vst [vmem:[%s6848] ss:$9 sm:$0xff] %v6774
    %6861 = vst [vmem:[%s6850] ss:$9 sm:$0xff] %v6775
    %6862 = vst [vmem:[%s6852] ss:$9 sm:$0xff] %v6776
    %v6863 = vld [vmem:[#allocation1] sm:$0xff]
    %6864 = vst [vmem:[#allocation1] ss:$9 sm:$0xff] %v6777
    %6865 = vst [vmem:[%s6840] ss:$9 sm:$0xff] %v6778
    %6866 = vst [vmem:[%s6842] ss:$9 sm:$0xff] %v6779
    %6867 = vst [vmem:[%s6844] ss:$9 sm:$0xff] %v6780
    %6868 = vst [vmem:[%s6846] ss:$9 sm:$0xff] %v6781
    %6869 = vst [vmem:[%s6848] ss:$9 sm:$0xff] %v6782
    %6870 = vst [vmem:[%s6850] ss:$9 sm:$0xff] %v6783
    %6871 = vst [vmem:[%s6852] ss:$9 sm:$0xff] %v6784
    %v6872 = vld [vmem:[#allocation1] sm:$0xff]
    %6873 = vst [vmem:[#allocation1] ss:$9 sm:$0xff] %v6785
    %6874 = vst [vmem:[%s6840] ss:$9 sm:$0xff] %v6786
    %6875 = vst [vmem:[%s6842] ss:$9 sm:$0xff] %v6787
    %6876 = vst [vmem:[%s6844] ss:$9 sm:$0xff] %v6788
    %6877 = vst [vmem:[%s6846] ss:$9 sm:$0xff] %v6789
    %6878 = vst [vmem:[%s6848] ss:$9 sm:$0xff] %v6790
    %6879 = vst [vmem:[%s6850] ss:$9 sm:$0xff] %v6791
    %6880 = vst [vmem:[%s6852] ss:$9 sm:$0xff] %v6792
    %v6881 = vld [vmem:[#allocation1] sm:$0xff]
    %6882 = vst [vmem:[#allocation1] ss:$9 sm:$0xff] %v6793
    %6883 = vst [vmem:[%s6840] ss:$9 sm:$0xff] %v6794
    %v6884 = vld [vmem:[#allocation1] sm:$0xff]
    %v6885 = vsel %vm1273, %v6854, 0
    %v6887 = vsel %vm1273, %v6863, 0
    %v6889 = vsel %vm1273, %v6872, 0
    %v6891 = vsel %vm1273, %v6881, 0
    %v6893 = vsel %vm1273, %v6884, 0
    %6895 = vmatpush.msra.mxu0 0.0
    %6896 = vmatpush.msra.mxu0 0.0
    %6897 = vmatpush.msra.mxu0 0.0
    %6898 = vmatpush.msra.mxu0 0.0
    %6899 = vmatpush.msra.mxu0 0.0
    %6900 = vmatpush.msra.mxu0 0.0
    %6901 = vmatpush.msra.mxu0 0.0
    %6902 = vmatpush.msra.mxu0 0.0
    %6903 = vmatpush.msra.mxu0 0.0
    %6904 = vmatpush.msra.mxu0 0.0
    %6905 = vmatpush.msra.mxu0 0.0
    %6906 = vmatpush.msra.mxu0 0.0
    %6907 = vmatpush.msra.mxu0 %v6799
    %6908 = vmatpush.msra.mxu0 %v6798
    %6909 = vmatpush.msra.mxu0 %v6797
    %6910 = vmatpush.msra.mxu0 %v6796
    %6911 = vmatmul.f32.gmra.mxu0 %v6885
    %v6912 = vpop.f32.mrf.mxu0
    %v6913 = vadd.f32 %v6803, %v6912
    %6914 = vmatmul.f32.gmra.mxu0 %v6887
    %v6915 = vpop.f32.mrf.mxu0
    %v6916 = vadd.f32 %v6803, %v6915
    %6917 = vmatmul.f32.gmra.mxu0 %v6889
    %v6918 = vpop.f32.mrf.mxu0
    %v6919 = vadd.f32 %v6803, %v6918
    %6920 = vmatmul.f32.gmra.mxu0 %v6891
    %v6921 = vpop.f32.mrf.mxu0
    %v6922 = vadd.f32 %v6803, %v6921
    %6923 = vmatmul.f32.gmra.mxu0 %v6893
    %v6924 = vpop.f32.mrf.mxu0
    %v6925 = vadd.f32 %v6803, %v6924
    %6926 = vdwg.mxu0
    %v6927 = vmul.f32 %v6913, 0.5
    %v6928 = vmul.f32 %v6916, 0.5
    %v6929 = vmul.f32 %v6919, 0.5
    %v6930 = vmul.f32 %v6922, 0.5
    %v6931 = vmul.f32 %v6925, 0.5
    %v6932 = vmul.f32 %v6913, 0.70710677
    %v6933 = vmul.f32 %v6916, 0.70710677
    %v6934 = vmul.f32 %v6919, 0.70710677
    %v6935 = vmul.f32 %v6922, 0.70710677
    %v6936 = vmul.f32 %v6925, 0.70710677
    %v6937 = vmul.f32 %v6932, %v6932
    %v6938 = vmin.f32 16.0, %v6937
    %v6939 = vmul.f32 %v6938, 2.1237322e-06
    %v6940 = vadd.f32 %v6939, 0.00028619796
    %v6941 = vmul.f32 %v6938, %v6940
    %v6942 = vadd.f32 %v6941, 0.0036580483
    %v6943 = vmul.f32 %v6938, %v6942
    %v6944 = vadd.f32 %v6943, 0.05243302
    %v6945 = vmul.f32 %v6938, %v6944
    %v6946 = vadd.f32 %v6945, 0.18741608
    %v6947 = vmul.f32 %v6938, %v6946
    %v6948 = vadd.f32 %v6947, 1.1283791
    %v6949 = vmul.f32 %v6932, %v6948
    %v6950 = vmul.f32 %v6938, 3.8918573e-05
    %v6951 = vadd.f32 %v6950, 0.001143296
    %v6952 = vmul.f32 %v6938, %v6951
    %v6953 = vadd.f32 %v6952, 0.014752088
    %v6954 = vmul.f32 %v6938, %v6953
    %v6955 = vadd.f32 %v6954, 0.112945676
    %v6956 = vmul.f32 %v6938, %v6955
    %v6957 = vadd.f32 %v6956, 0.4994258
    %v6958 = vmul.f32 %v6938, %v6957
    %v6959 = vadd.f32 %v6958, 1.0
    %v6960 = vrcp.pop %v6959
    %v6961 = vmul.f32 %v6959, %v6960
    %v6962 = vsub.f32 1.0, %v6961
    %v6963 = vmul.f32 %v6960, %v6962
    %v6964 = vadd.f32 %v6960, %v6963
    %vm6965 = vweird.f32 %v6959
    %vm6966 = vweird.f32 %v6960
    %vm6967 = vmor %vm6965, %vm6966
    %v6968 = vsel %vm6967, %v6960, %v6964
    %v6969 = vand.u32 2147483647, %v6959
    %vm6970 = vcmp.eq.f32.partialorder %v6969, 8.507059e+37
    %v6971 = vand.u32 %v6959, 2147483648
    %v6972 = vor.u32 1.1754944e-38, %v6971
    %v6973 = vsel %vm6970, %v6972, %v6968
    %v6974 = vmul.f32 %v6949, %v6973
    %v6975 = vmin.f32 %v6974, 1.0
    %v6976 = vmax.f32 %v6975, -1.0
    %v6977 = vmul.f32 %v6933, %v6933
    %v6978 = vmin.f32 16.0, %v6977
    %v6979 = vmul.f32 %v6978, 2.1237322e-06
    %v6980 = vadd.f32 %v6979, 0.00028619796
    %v6981 = vmul.f32 %v6978, %v6980
    %v6982 = vadd.f32 %v6981, 0.0036580483
    %v6983 = vmul.f32 %v6978, %v6982
    %v6984 = vadd.f32 %v6983, 0.05243302
    %v6985 = vmul.f32 %v6978, %v6984
    %v6986 = vadd.f32 %v6985, 0.18741608
    %v6987 = vmul.f32 %v6978, %v6986
    %v6988 = vadd.f32 %v6987, 1.1283791
    %v6989 = vmul.f32 %v6933, %v6988
    %v6990 = vmul.f32 %v6978, 3.8918573e-05
    %v6991 = vadd.f32 %v6990, 0.001143296
    %v6992 = vmul.f32 %v6978, %v6991
    %v6993 = vadd.f32 %v6992, 0.014752088
    %v6994 = vmul.f32 %v6978, %v6993
    %v6995 = vadd.f32 %v6994, 0.112945676
    %v6996 = vmul.f32 %v6978, %v6995
    %v6997 = vadd.f32 %v6996, 0.4994258
    %v6998 = vmul.f32 %v6978, %v6997
    %v6999 = vadd.f32 %v6998, 1.0
    %v7000 = vrcp.pop %v6999
    %v7001 = vmul.f32 %v6999, %v7000
    %v7002 = vsub.f32 1.0, %v7001
    %v7003 = vmul.f32 %v7000, %v7002
    %v7004 = vadd.f32 %v7000, %v7003
    %vm7005 = vweird.f32 %v6999
    %vm7006 = vweird.f32 %v7000
    %vm7007 = vmor %vm7005, %vm7006
    %v7008 = vsel %vm7007, %v7000, %v7004
    %v7009 = vand.u32 2147483647, %v6999
    %vm7010 = vcmp.eq.f32.partialorder %v7009, 8.507059e+37
    %v7011 = vand.u32 %v6999, 2147483648
    %v7012 = vor.u32 1.1754944e-38, %v7011
    %v7013 = vsel %vm7010, %v7012, %v7008
    %v7014 = vmul.f32 %v6989, %v7013
    %v7015 = vmin.f32 %v7014, 1.0
    %v7016 = vmax.f32 %v7015, -1.0
    %v7017 = vmul.f32 %v6934, %v6934
    %v7018 = vmin.f32 16.0, %v7017
    %v7019 = vmul.f32 %v7018, 2.1237322e-06
    %v7020 = vadd.f32 %v7019, 0.00028619796
    %v7021 = vmul.f32 %v7018, %v7020
    %v7022 = vadd.f32 %v7021, 0.0036580483
    %v7023 = vmul.f32 %v7018, %v7022
    %v7024 = vadd.f32 %v7023, 0.05243302
    %v7025 = vmul.f32 %v7018, %v7024
    %v7026 = vadd.f32 %v7025, 0.18741608
    %v7027 = vmul.f32 %v7018, %v7026
    %v7028 = vadd.f32 %v7027, 1.1283791
    %v7029 = vmul.f32 %v6934, %v7028
    %v7030 = vmul.f32 %v7018, 3.8918573e-05
    %v7031 = vadd.f32 %v7030, 0.001143296
    %v7032 = vmul.f32 %v7018, %v7031
    %v7033 = vadd.f32 %v7032, 0.014752088
    %v7034 = vmul.f32 %v7018, %v7033
    %v7035 = vadd.f32 %v7034, 0.112945676
    %v7036 = vmul.f32 %v7018, %v7035
    %v7037 = vadd.f32 %v7036, 0.4994258
    %v7038 = vmul.f32 %v7018, %v7037
    %v7039 = vadd.f32 %v7038, 1.0
    %v7040 = vrcp.pop %v7039
    %v7041 = vmul.f32 %v7039, %v7040
    %v7042 = vsub.f32 1.0, %v7041
    %v7043 = vmul.f32 %v7040, %v7042
    %v7044 = vadd.f32 %v7040, %v7043
    %vm7045 = vweird.f32 %v7039
    %vm7046 = vweird.f32 %v7040
    %vm7047 = vmor %vm7045, %vm7046
    %v7048 = vsel %vm7047, %v7040, %v7044
    %v7049 = vand.u32 2147483647, %v7039
    %vm7050 = vcmp.eq.f32.partialorder %v7049, 8.507059e+37
    %v7051 = vand.u32 %v7039, 2147483648
    %v7052 = vor.u32 1.1754944e-38, %v7051
    %v7053 = vsel %vm7050, %v7052, %v7048
    %v7054 = vmul.f32 %v7029, %v7053
    %v7055 = vmin.f32 %v7054, 1.0
    %v7056 = vmax.f32 %v7055, -1.0
    %v7057 = vmul.f32 %v6935, %v6935
    %v7058 = vmin.f32 16.0, %v7057
    %v7059 = vmul.f32 %v7058, 2.1237322e-06
    %v7060 = vadd.f32 %v7059, 0.00028619796
    %v7061 = vmul.f32 %v7058, %v7060
    %v7062 = vadd.f32 %v7061, 0.0036580483
    %v7063 = vmul.f32 %v7058, %v7062
    %v7064 = vadd.f32 %v7063, 0.05243302
    %v7065 = vmul.f32 %v7058, %v7064
    %v7066 = vadd.f32 %v7065, 0.18741608
    %v7067 = vmul.f32 %v7058, %v7066
    %v7068 = vadd.f32 %v7067, 1.1283791
    %v7069 = vmul.f32 %v6935, %v7068
    %v7070 = vmul.f32 %v7058, 3.8918573e-05
    %v7071 = vadd.f32 %v7070, 0.001143296
    %v7072 = vmul.f32 %v7058, %v7071
    %v7073 = vadd.f32 %v7072, 0.014752088
    %v7074 = vmul.f32 %v7058, %v7073
    %v7075 = vadd.f32 %v7074, 0.112945676
    %v7076 = vmul.f32 %v7058, %v7075
    %v7077 = vadd.f32 %v7076, 0.4994258
    %v7078 = vmul.f32 %v7058, %v7077
    %v7079 = vadd.f32 %v7078, 1.0
    %v7080 = vrcp.pop %v7079
    %v7081 = vmul.f32 %v7079, %v7080
    %v7082 = vsub.f32 1.0, %v7081
    %v7083 = vmul.f32 %v7080, %v7082
    %v7084 = vadd.f32 %v7080, %v7083
    %vm7085 = vweird.f32 %v7079
    %vm7086 = vweird.f32 %v7080
    %vm7087 = vmor %vm7085, %vm7086
    %v7088 = vsel %vm7087, %v7080, %v7084
    %v7089 = vand.u32 2147483647, %v7079
    %vm7090 = vcmp.eq.f32.partialorder %v7089, 8.507059e+37
    %v7091 = vand.u32 %v7079, 2147483648
    %v7092 = vor.u32 1.1754944e-38, %v7091
    %v7093 = vsel %vm7090, %v7092, %v7088
    %v7094 = vmul.f32 %v7069, %v7093
    %v7095 = vmin.f32 %v7094, 1.0
    %v7096 = vmax.f32 %v7095, -1.0
    %v7097 = vmul.f32 %v6936, %v6936
    %v7098 = vmin.f32 16.0, %v7097
    %v7099 = vmul.f32 %v7098, 2.1237322e-06
    %v7100 = vadd.f32 %v7099, 0.00028619796
    %v7101 = vmul.f32 %v7098, %v7100
    %v7102 = vadd.f32 %v7101, 0.0036580483
    %v7103 = vmul.f32 %v7098, %v7102
    %v7104 = vadd.f32 %v7103, 0.05243302
    %v7105 = vmul.f32 %v7098, %v7104
    %v7106 = vadd.f32 %v7105, 0.18741608
    %v7107 = vmul.f32 %v7098, %v7106
    %v7108 = vadd.f32 %v7107, 1.1283791
    %v7109 = vmul.f32 %v6936, %v7108
    %v7110 = vmul.f32 %v7098, 3.8918573e-05
    %v7111 = vadd.f32 %v7110, 0.001143296
    %v7112 = vmul.f32 %v7098, %v7111
    %v7113 = vadd.f32 %v7112, 0.014752088
    %v7114 = vmul.f32 %v7098, %v7113
    %v7115 = vadd.f32 %v7114, 0.112945676
    %v7116 = vmul.f32 %v7098, %v7115
    %v7117 = vadd.f32 %v7116, 0.4994258
    %v7118 = vmul.f32 %v7098, %v7117
    %v7119 = vadd.f32 %v7118, 1.0
    %v7120 = vrcp.pop %v7119
    %v7121 = vmul.f32 %v7119, %v7120
    %v7122 = vsub.f32 1.0, %v7121
    %v7123 = vmul.f32 %v7120, %v7122
    %v7124 = vadd.f32 %v7120, %v7123
    %vm7125 = vweird.f32 %v7119
    %vm7126 = vweird.f32 %v7120
    %vm7127 = vmor %vm7125, %vm7126
    %v7128 = vsel %vm7127, %v7120, %v7124
    %v7129 = vand.u32 2147483647, %v7119
    %vm7130 = vcmp.eq.f32.partialorder %v7129, 8.507059e+37
    %v7131 = vand.u32 %v7119, 2147483648
    %v7132 = vor.u32 1.1754944e-38, %v7131
    %v7133 = vsel %vm7130, %v7132, %v7128
    %v7134 = vmul.f32 %v7109, %v7133
    %v7135 = vmin.f32 %v7134, 1.0
    %v7136 = vmax.f32 %v7135, -1.0
    %v7137 = vadd.f32 %v6976, 1.0
    %v7138 = vadd.f32 %v7016, 1.0
    %v7139 = vadd.f32 %v7056, 1.0
    %v7140 = vadd.f32 %v7096, 1.0
    %v7141 = vadd.f32 %v7136, 1.0
    %v7142 = vmul.f32 %v6927, %v7137
    %v7143 = vmul.f32 %v6928, %v7138
    %v7144 = vmul.f32 %v6929, %v7139
    %v7145 = vmul.f32 %v6930, %v7140
    %v7146 = vmul.f32 %v6931, %v7141
    %s7147 = scalar_lea.vmem %s12, 64
    %v7148 = vld [vmem:[%s7147] sm:$0xff]
    %v7149 = vld [vmem:[%s7147 + $0x8] sm:$0xff]
    %v7150 = vld [vmem:[%s7147 + $0x10] sm:$0xff]
    %v7151 = vld [vmem:[%s7147 + $0x18] sm:$0xff]
    %v7152 = vld [vmem:[%s7147 + $0x20] sm:$0xff]
    %v7153 = vld [vmem:[%s7147 + $0x28] sm:$0xff]
    %v7154 = vld [vmem:[%s7147 + $0x30] sm:$0xff]
    %v7155 = vld [vmem:[%s7147 + $0x38] sm:$0xff]
    %v7157 = vsel %vm4076, %v7142, 0
    %v7160 = vsel %vm4076, %v7143, 0
    %v7163 = vsel %vm4076, %v7144, 0
    %v7166 = vsel %vm4076, %v7145, 0
    %v7169 = vsel %vm4076, %v7146, 0
    %7171 = vmatpush.msra.mxu0 0.0
    %7172 = vmatpush.msra.mxu0 0.0
    %7173 = vmatpush.msra.mxu0 0.0
    %7174 = vmatpush.msra.mxu0 0.0
    %7175 = vmatpush.msra.mxu0 0.0
    %7176 = vmatpush.msra.mxu0 0.0
    %7177 = vmatpush.msra.mxu0 0.0
    %7178 = vmatpush.msra.mxu0 0.0
    %7179 = vmatpush.msra.mxu0 %v7155
    %7180 = vmatpush.msra.mxu0 %v7154
    %7181 = vmatpush.msra.mxu0 %v7153
    %7182 = vmatpush.msra.mxu0 %v7152
    %7183 = vmatpush.msra.mxu0 %v7151
    %7184 = vmatpush.msra.mxu0 %v7150
    %7185 = vmatpush.msra.mxu0 %v7149
    %7186 = vmatpush.msra.mxu0 %v7148
    %7187 = vmatmul.f32.gmra.mxu0 %v7157
    %v7188 = vpop.f32.mrf.mxu0
    %v7189 = vadd.f32 0.0, %v7188
    %7190 = vmatmul.f32.gmra.mxu0 %v7160
    %v7191 = vpop.f32.mrf.mxu0
    %7192 = vmatmul.f32.gmra.mxu0 %v7163
    %v7193 = vpop.f32.mrf.mxu0
    %v7194 = vadd.f32 0.0, %v7193
    %7195 = vmatmul.f32.gmra.mxu0 %v7166
    %v7196 = vpop.f32.mrf.mxu0
    %7197 = vmatmul.f32.gmra.mxu0 %v7169
    %v7198 = vpop.f32.mrf.mxu0
    %7199 = vdwg.mxu0
    %v7201 = vrot.slane %v7194, 1
    %v7203 = vadd.f32 %v6761, %v7189
    %v7204 = vadd.f32 %v6778, %v7201
    %s7205 = scalar_lea.vmem %s13, 1
    %v7206 = vld [vmem:[%s7205] sm:$0x1]
    %v7208 = vperm.slane %v7206, 0
    %v7210 = vrot.slane %v7208, 1
    %v7212 = vadd.f32 %v7203, %v7208
    %v7213 = vadd.f32 %v7204, %v7210
    %v7214 = vld [vmem:[%s14] sm:$0x1]
    %v7215 = vld [vmem:[%s15] sm:$0x1]
    %7218 = vst [vmem:[#allocation1] ss:$9 sm:$0xff] %v7212
    %s7219 = scalar_lea.vmem [#allocation1], 1
    %7220 = vst [vmem:[%s7219] ss:$9 sm:$0xff] %v7213
    %v7221 = vld [vmem:[#allocation1] sm:$0xff]
    %vm7223 = vcmask 254976
    %v7224 = vsel %vm7223, %v7221, 0.0
    %7225 = vadd.xlane.f32.xlu0 %v7224
    %v7226 = vpop.xlane.xlu0 %7225
    %v7227 = vrcp.pop 32.0
    %v7228 = vmul.f32 32.0, %v7227
    %v7229 = vsub.f32 1.0, %v7228
    %v7230 = vmul.f32 %v7227, %v7229
    %v7231 = vadd.f32 %v7227, %v7230
    %vm7232 = vweird.f32 %v7227
    %v7233 = vsel %vm7232, %v7227, %v7231
    %v7234 = vmul.f32 %v7226, %v7233
    %v7236 = vperm.slane %v7234, 0
    %v7237 = vperm.slane %v7234, 1
    %v7240 = vsub.f32 %v7212, %v7236
    %v7241 = vsub.f32 %v7213, %v7237
    %v7242 = vmul.f32 %v7240, %v7240
    %v7243 = vmul.f32 %v7241, %v7241
    %7246 = vst [vmem:[#allocation1] ss:$9 sm:$0xff] %v7242
    %s7247 = scalar_lea.vmem [#allocation1], 1
    %7248 = vst [vmem:[%s7247] ss:$9 sm:$0xff] %v7243
    %v7249 = vld [vmem:[#allocation1] sm:$0xff]
    %v7251 = vsel %vm7223, %v7249, 0.0
    %7252 = vadd.xlane.f32.xlu0 %v7251
    %v7253 = vpop.xlane.xlu0 %7252
    %v7254 = vmul.f32 %v7253, %v7233
    %v7255 = vadd.f32 %v7254, 1e-05
    %v7256 = vrsqrt.pop %v7255
    %v7257 = vmul.f32 %v7256, %v7255
    %v7258 = vmul.f32 %v7257, %v7256
    %v7259 = vmul.f32 0.5, %v7258
    %v7260 = vsub.f32 1.5, %v7259
    %v7261 = vmul.f32 %v7256, %v7260
    %vm7262 = vweird.f32 %v7255
    %vm7263 = vweird.f32 %v7256
    %vm7264 = vmor %vm7262, %vm7263
    %v7265 = vsel %vm7264, %v7256, %v7261
    %v7267 = vperm.slane %v7265, 0
    %v7268 = vperm.slane %v7265, 1
    %v7271 = vmul.f32 %v7240, %v7267
    %v7272 = vmul.f32 %v7241, %v7268
    %v7274 = vperm.slane %v7214, 0
    %v7276 = vrot.slane %v7274, 1
    %v7278 = vmul.f32 %v7271, %v7274
    %v7279 = vmul.f32 %v7272, %v7276
    %v7281 = vperm.slane %v7215, 0
    %v7283 = vrot.slane %v7281, 1
    %v7285 = vadd.f32 %v7278, %v7281
    %v7286 = vadd.f32 %v7279, %v7283
    %v7287 = vld [vmem:[%s16] sm:$0xff]
    %v7288 = vld [vmem:[%s16 + $0x8] sm:$0xff]
    %v7289 = vld [vmem:[%s16 + $0x10] sm:$0xff]
    %v7290 = vld [vmem:[%s16 + $0x18] sm:$0xff]
    %v7291 = vld [vmem:[%s17] sm:$0x1]
    %v7293 = vperm.slane %v7291, 0
    %7297 = vst [vmem:[#allocation1] ss:$9 sm:$0xff] %v7285
    %s7298 = scalar_lea.vmem [#allocation1], 1
    %7299 = vst [vmem:[%s7298] ss:$9 sm:$0xff] %v7286
    %v7300 = vld [vmem:[#allocation1] sm:$0xff]
    %v7301 = vsel %vm1273, %v7300, 0
    %7303 = vmatpush.msra.mxu0 0.0
    %7304 = vmatpush.msra.mxu0 0.0
    %7305 = vmatpush.msra.mxu0 0.0
    %7306 = vmatpush.msra.mxu0 0.0
    %7307 = vmatpush.msra.mxu0 0.0
    %7308 = vmatpush.msra.mxu0 0.0
    %7309 = vmatpush.msra.mxu0 0.0
    %7310 = vmatpush.msra.mxu0 0.0
    %7311 = vmatpush.msra.mxu0 0.0
    %7312 = vmatpush.msra.mxu0 0.0
    %7313 = vmatpush.msra.mxu0 0.0
    %7314 = vmatpush.msra.mxu0 0.0
    %7315 = vmatpush.msra.mxu0 %v7290
    %7316 = vmatpush.msra.mxu0 %v7289
    %7317 = vmatpush.msra.mxu0 %v7288
    %7318 = vmatpush.msra.mxu0 %v7287
    %7319 = vmatmul.f32.gmra.mxu0 %v7301
    %v7320 = vpop.f32.mrf.mxu0
    %v7321 = vadd.f32 %v7293, %v7320
    %7322 = vdwg.mxu0
    %vm7323 = vcmask 74752
    %7324 = vst.msk [vmem:[#allocation2] sm:$0x3] %vm7323, %v7321
    // Predicated region
    $region74: #{fwd.1} parent=1 // pred_check
      _
    $region75: #{fwd.1} parent=1 // pred_check_branch
      %7326 = sbr.rel (0) target = $region77
    $region76: #{fwd.1} parent=1 // pred_region
      %7328 = vsyncadd [#allocation3], 0
      %s7330 = sshll.u32 [#allocation2], 4
      %s7331 = int_to_ptr.vmem [resolvable:$true] %s7330
      %s7332 = sshll.u32 %s18, 4
      %s7333 = int_to_ptr.hbm [resolvable:$true] %s7332
      %7335 = dma.vmem_to_hbm [thread:$0]  %s7331, 32, %s7333, [#allocation3]
    $region77: #{fwd.1} parent=1 // pred_fallthru
      _
    // Predicated region
    $region78: #{fwd.1} parent=1 // pred_check
      _
    $region79: #{fwd.1} parent=1 // pred_check_branch
      %7337 = sbr.rel (0) target = $region81
    $region80: #{fwd.1} parent=1 // pred_region
      %7339 = dma.done [#allocation3], 32
    $region81: #{fwd.1} parent=1 // pred_fallthru
      _
    %7340 = vsyncpa [#allocation3], 1

</llo_original>
